<compile_context>
chip_gen: v7x
topology: tpu7x:2x2x1
jax: 0.10.0
libtpu: 0.0.40
codegen_flags: <defaults>
</compile_context>

<pallas_src>
import numpy as np
import jax
import jax.numpy as jnp
from jax.experimental import pallas as pl
from jax.experimental.pallas import tpu as pltpu


# ----------------------------- Pallas kernel -------------------------------

def _maxpool2x2_rows(y):
    """2x2 / stride-2 max pool of an (R, W, C) value, R = batch*H (H even).

    Row pairs never cross an image boundary because every image contributes an
    even number of consecutive rows.
    """
    r, w, c = y.shape
    y = jnp.max(y.reshape(r, w // 2, 2, c), axis=2)       # pool along W
    y = jnp.max(y.reshape(r // 2, 2, w // 2, c), axis=1)  # pool along H
    return y


def cnn_fused_kernel(x_ref, w1_ref, b1_ref, w2_ref, b2_ref, w3_ref, b3_ref,
                     wf_ref, bf_ref, wh_ref, bh_ref, o_ref, a1_ref, a2_ref):
    """Whole CNNnet forward for one batch tile (BT images per grid step)."""
    f32 = jnp.float32
    bt = x_ref.shape[0]

    # ---- stage 1: conv 1->32 (valid) + pool + bias/ReLU ---------------------
    # Cin == 1, so the K=9 contraction is 9 VPU broadcast FMAs (MXU stays free).
    acc1 = jnp.zeros((bt, 8, 8, 32), f32)
    for kh in range(3):
        for kw in range(3):
            xs = x_ref[:, kh:kh + 8, kw:kw + 8, :]           # (bt, 8, 8, 1)
            wk = w1_ref[kh * 3 + kw:kh * 3 + kw + 1, :]      # (1, 32)
            acc1 = acc1 + xs * wk                            # -> (bt, 8, 8, 32)
    p1 = _maxpool2x2_rows(acc1.reshape(bt * 8, 8, 32))       # (bt*4, 4, 32)
    p1 = jnp.maximum(p1 + b1_ref[...], 0.0)                  # bias+ReLU after max

    # zero-padded stage-1 activation in VMEM scratch (pad=1 for conv2)
    a1_ref[...] = jnp.zeros_like(a1_ref)                     # (bt, 6, 6, 32)
    a1_ref[:, 1:5, 1:5, :] = p1.reshape(bt, 4, 4, 32)

    # ---- stage 2: conv 32->64 (pad=1) + pool + bias/ReLU --------------------
    # 9 shifted (bt*16,32)x(32,64) matmuls accumulated in f32.
    acc2 = jnp.zeros((bt * 16, 64), f32)
    for kh in range(3):
        for kw in range(3):
            xs = a1_ref[:, kh:kh + 4, kw:kw + 4, :].reshape(bt * 16, 32)
            wk = w2_ref[(kh * 3 + kw) * 32:(kh * 3 + kw + 1) * 32, :]
            acc2 = acc2 + jnp.dot(xs, wk, preferred_element_type=f32)
    p2 = _maxpool2x2_rows(acc2.reshape(bt * 4, 4, 64))       # (bt*2, 2, 64)
    p2 = jnp.maximum(p2 + b2_ref[...], 0.0)

    a2_ref[...] = jnp.zeros_like(a2_ref)                     # (bt, 4, 4, 64)
    a2_ref[:, 1:3, 1:3, :] = p2.reshape(bt, 2, 2, 64)

    # ---- stage 3: conv 64->128 (pad=1) + pool + bias/ReLU -------------------
    acc3 = jnp.zeros((bt * 4, 128), f32)
    for kh in range(3):
        for kw in range(3):
            xs = a2_ref[:, kh:kh + 2, kw:kw + 2, :].reshape(bt * 4, 64)
            wk = w3_ref[(kh * 3 + kw) * 64:(kh * 3 + kw + 1) * 64, :]
            acc3 = acc3 + jnp.dot(xs, wk, preferred_element_type=f32)
    # pooling the 2x2 map down to 1x1 == max over each image's 4 rows
    v = jnp.max(acc3.reshape(bt, 4, 128), axis=1)            # (bt, 128)
    v = jnp.maximum(v + b3_ref[...], 0.0)

    # TODO(synk): nn.Dropout(0.15) implemented as identity (eval mode);
    # training-mode stochastic masking is not reproduced.

    # ---- FC 128->128 + ReLU, then fused lane-dense 128->(13|13|5) heads -----
    h = jnp.dot(v, wf_ref[...], preferred_element_type=f32) + bf_ref[...]
    h = jnp.maximum(h, 0.0)
    o_ref[...] = jnp.dot(h, wh_ref[...], preferred_element_type=f32) + bh_ref[...]


# ----------------------------- wrapper --------------------------------------

def cnnnet_forward(x_nchw, p, bt=8):
    x = jnp.transpose(x_nchw, (0, 2, 3, 1)).astype(jnp.float32)  # NCHW -> NHWC
    n = x.shape[0]
    n_pad = -(-n // bt) * bt
    if n_pad != n:
        x = jnp.pad(x, ((0, n_pad - n), (0, 0), (0, 0), (0, 0)))

    # fuse the three classification heads into one lane-dense 128-wide matmul
    wh = jnp.concatenate([p['wh1'], p['wh2'], p['wh3']], axis=1)   # (128, 31)
    bh = jnp.concatenate([p['bh1'], p['bh2'], p['bh3']], axis=1)   # (1, 31)
    wh = jnp.pad(wh, ((0, 0), (0, 128 - wh.shape[1])))             # (128, 128)
    bh = jnp.pad(bh, ((0, 0), (0, 128 - bh.shape[1])))             # (1, 128)

    def resident(shape):
        # full array, same block every grid step -> stays in VMEM
        return pl.BlockSpec(shape, lambda b: (0,) * len(shape))

    flops_per_img = 2 * (64 * 9 * 32 + 16 * 288 * 64 + 4 * 576 * 128
                         + 128 * 128 + 128 * 128)
    weight_bytes = 4 * (9 * 32 + 32 + 288 * 64 + 64 + 576 * 128 + 128
                        + 128 * 128 + 128 + 128 * 128 + 128)
    cost = pl.CostEstimate(flops=n_pad * flops_per_img, transcendentals=0,
                           bytes_accessed=weight_bytes + n_pad * 4 * (100 + 128))

    out = pl.pallas_call(
        cnn_fused_kernel,
        out_shape=jax.ShapeDtypeStruct((n_pad, 128), jnp.float32),
        grid_spec=pltpu.PrefetchScalarGridSpec(
            num_scalar_prefetch=0,
            grid=(n_pad // bt,),                          # one batch tile / step
            in_specs=[
                pl.BlockSpec((bt, 10, 10, 1), lambda b: (b, 0, 0, 0)),
                resident((9, 32)),    resident((1, 32)),
                resident((288, 64)),  resident((1, 64)),
                resident((576, 128)), resident((1, 128)),
                resident((128, 128)), resident((1, 128)),
                resident((128, 128)), resident((1, 128)),
            ],
            out_specs=pl.BlockSpec((bt, 128), lambda b: (b, 0)),
            scratch_shapes=[pltpu.VMEM((bt, 6, 6, 32), jnp.float32),   # padded act1
                            pltpu.VMEM((bt, 4, 4, 64), jnp.float32)],  # padded act2
        ),
        compiler_params=pltpu.CompilerParams(
            dimension_semantics=("parallel",)),           # v7x: shard batch tiles
        cost_estimate=cost,
    )(x, p['w1'], p['b1'], p['w2'], p['b2'], p['w3'], p['b3'],
      p['wf'], p['bf'], wh, bh)

    out = out[:n]
    return out[:, :13], out[:, 13:26], out[:, 26:31]


# ----------------------------- parameters -----------------------------------

def init_params(key):
    ks = jax.random.split(key, 14)

    def conv_w(k, cout, cin):
        # PyTorch conv weight (Cout, Cin, 3, 3) -> (kh, kw, Cin, Cout)
        # -> flattened (9*Cin, Cout); rows ordered (kh, kw, ci).
        w = jax.random.normal(k, (cout, cin, 3, 3), jnp.float32) * 0.1
        return jnp.transpose(w, (2, 3, 1, 0)).reshape(9 * cin, cout)

    def lin_w(k, cin, cout):
        # PyTorch Linear weight (out, in) -> transposed to (in, out)
        return (jax.random.normal(k, (cout, cin), jnp.float32) * 0.1).T

    def bias(k, c):
        return jax.random.normal(k, (1, c), jnp.float32) * 0.01

    return dict(
        w1=conv_w(ks[0], 32, 1),    b1=bias(ks[1], 32),
        w2=conv_w(ks[2], 64, 32),   b2=bias(ks[3], 64),
        w3=conv_w(ks[4], 128, 64),  b3=bias(ks[5], 128),
        wf=lin_w(ks[6], 128, 128),  bf=bias(ks[7], 128),
        wh1=lin_w(ks[8], 128, 13),  bh1=bias(ks[9], 13),
        wh2=lin_w(ks[10], 128, 13), bh2=bias(ks[11], 13),
        wh3=lin_w(ks[12], 128, 5),  bh3=bias(ks[13], 5),
    )


# ----------------------------- pure-JAX reference ---------------------------

def reference_forward(x_nchw, p):
    def conv(x, w_mat, b, cin, cout, pad):
        w = w_mat.reshape(3, 3, cin, cout)
        y = jax.lax.conv_general_dilated(
            x, w, (1, 1), [(1, 1), (1, 1)] if pad else 'VALID',
            dimension_numbers=('NHWC', 'HWIO', 'NHWC'))
        y = jax.nn.relu(y + b.reshape(1, 1, 1, cout))
        return jax.lax.reduce_window(y, -jnp.inf, jax.lax.max,
                                     (1, 2, 2, 1), (1, 2, 2, 1), 'VALID')

    x = jnp.transpose(x_nchw, (0, 2, 3, 1))
    x = conv(x, p['w1'], p['b1'], 1, 32, False)
    x = conv(x, p['w2'], p['b2'], 32, 64, True)
    x = conv(x, p['w3'], p['b3'], 64, 128, True)
    x = x.reshape(x.shape[0], -1)
    h = jax.nn.relu(x @ p['wf'] + p['bf'])
    return (h @ p['wh1'] + p['bh1'],
            h @ p['wh2'] + p['bh2'],
            h @ p['wh3'] + p['bh3'])


# ----------------------------- main ------------------------------------------

if __name__ == "__main__":
    key = jax.random.PRNGKey(0)
    kx, kp = jax.random.split(key)
    # input spatial 10x10 so the flattened feature is exactly 128*1*1
    x = jax.random.normal(kx, (2, 1, 10, 10), jnp.float32)
    params = init_params(kp)

    outs = jax.jit(cnnnet_forward)(x, params)
    outs = jax.block_until_ready(outs)

    refs = reference_forward(x, params)
    for o, r in zip(outs, refs):
        np.testing.assert_allclose(np.asarray(o), np.asarray(r),
                                   rtol=1e-4, atol=1e-4)
    print("KERNEL_OK")
</pallas_src>

<mosaic_0001>
module attributes {stable_mosaic.version = 11 : i64} {
  func.func @cnn_fused_kernel(%arg0: i32, %arg1: memref<8x10x10x1xf32, #tpu.memory_space<vmem>>, %arg2: memref<9x32xf32, #tpu.memory_space<vmem>>, %arg3: memref<1x32xf32, #tpu.memory_space<vmem>>, %arg4: memref<288x64xf32, #tpu.memory_space<vmem>>, %arg5: memref<1x64xf32, #tpu.memory_space<vmem>>, %arg6: memref<576x128xf32, #tpu.memory_space<vmem>>, %arg7: memref<1x128xf32, #tpu.memory_space<vmem>>, %arg8: memref<128x128xf32, #tpu.memory_space<vmem>>, %arg9: memref<1x128xf32, #tpu.memory_space<vmem>>, %arg10: memref<128x128xf32, #tpu.memory_space<vmem>>, %arg11: memref<1x128xf32, #tpu.memory_space<vmem>>, %arg12: memref<8x128xf32, #tpu.memory_space<vmem>>, %arg13: memref<8x6x6x32xf32, #tpu.memory_space<vmem>>, %arg14: memref<8x4x4x64xf32, #tpu.memory_space<vmem>>) attributes {dimension_semantics = [#tpu.dimension_semantics<parallel>], iteration_bounds = array<i64: 1>, scalar_prefetch = 0 : i64, scratch_operands = 2 : i64, tpu.core_type = #tpu.core_type<tc>, window_params = [{transform_indices = @transform_0, window_bounds = array<i64: 8, 10, 10, 1>}, {pipeline_mode = #tpu.pipeline_mode<synchronous>, transform_indices = @transform_1, window_bounds = array<i64: 9, 32>}, {pipeline_mode = #tpu.pipeline_mode<synchronous>, transform_indices = @transform_2, window_bounds = array<i64: 1, 32>}, {pipeline_mode = #tpu.pipeline_mode<synchronous>, transform_indices = @transform_3, window_bounds = array<i64: 288, 64>}, {pipeline_mode = #tpu.pipeline_mode<synchronous>, transform_indices = @transform_4, window_bounds = array<i64: 1, 64>}, {pipeline_mode = #tpu.pipeline_mode<synchronous>, transform_indices = @transform_5, window_bounds = array<i64: 576, 128>}, {pipeline_mode = #tpu.pipeline_mode<synchronous>, transform_indices = @transform_6, window_bounds = array<i64: 1, 128>}, {pipeline_mode = #tpu.pipeline_mode<synchronous>, transform_indices = @transform_7, window_bounds = array<i64: 128, 128>}, {pipeline_mode = #tpu.pipeline_mode<synchronous>, transform_indices = @transform_8, window_bounds = array<i64: 1, 128>}, {pipeline_mode = #tpu.pipeline_mode<synchronous>, transform_indices = @transform_9, window_bounds = array<i64: 128, 128>}, {pipeline_mode = #tpu.pipeline_mode<synchronous>, transform_indices = @transform_10, window_bounds = array<i64: 1, 128>}, {transform_indices = @transform_11, window_bounds = array<i64: 8, 128>}]} {
    %cst = arith.constant 0.000000e+00 : f32
    %0 = vector.broadcast %cst : f32 to vector<8x8x8x32xf32>
    %c0 = arith.constant 0 : index
    %c0_0 = arith.constant 0 : index
    %c0_1 = arith.constant 0 : index
    %c0_2 = arith.constant 0 : index
    %1 = vector.load %arg1[%c0, %c0_0, %c0_1, %c0_2] : memref<8x10x10x1xf32, #tpu.memory_space<vmem>>, vector<8x8x8x1xf32>
    %c0_3 = arith.constant 0 : index
    %c0_4 = arith.constant 0 : index
    %2 = vector.load %arg2[%c0_3, %c0_4] : memref<9x32xf32, #tpu.memory_space<vmem>>, vector<1x32xf32>
    %3 = vector.shape_cast %2 : vector<1x32xf32> to vector<1x1x1x32xf32>
    %4 = vector.broadcast %1 : vector<8x8x8x1xf32> to vector<8x8x8x32xf32>
    %5 = vector.broadcast %3 : vector<1x1x1x32xf32> to vector<8x8x8x32xf32>
    %6 = arith.mulf %4, %5 : vector<8x8x8x32xf32>
    %7 = arith.addf %0, %6 : vector<8x8x8x32xf32>
    %c0_5 = arith.constant 0 : index
    %c0_6 = arith.constant 0 : index
    %c1 = arith.constant 1 : index
    %c0_7 = arith.constant 0 : index
    %8 = vector.load %arg1[%c0_5, %c0_6, %c1, %c0_7] : memref<8x10x10x1xf32, #tpu.memory_space<vmem>>, vector<8x8x8x1xf32>
    %c1_8 = arith.constant 1 : index
    %c0_9 = arith.constant 0 : index
    %9 = vector.load %arg2[%c1_8, %c0_9] : memref<9x32xf32, #tpu.memory_space<vmem>>, vector<1x32xf32>
    %10 = vector.shape_cast %9 : vector<1x32xf32> to vector<1x1x1x32xf32>
    %11 = vector.broadcast %8 : vector<8x8x8x1xf32> to vector<8x8x8x32xf32>
    %12 = vector.broadcast %10 : vector<1x1x1x32xf32> to vector<8x8x8x32xf32>
    %13 = arith.mulf %11, %12 : vector<8x8x8x32xf32>
    %14 = arith.addf %7, %13 : vector<8x8x8x32xf32>
    %c0_10 = arith.constant 0 : index
    %c0_11 = arith.constant 0 : index
    %c2 = arith.constant 2 : index
    %c0_12 = arith.constant 0 : index
    %15 = vector.load %arg1[%c0_10, %c0_11, %c2, %c0_12] : memref<8x10x10x1xf32, #tpu.memory_space<vmem>>, vector<8x8x8x1xf32>
    %c2_13 = arith.constant 2 : index
    %c0_14 = arith.constant 0 : index
    %16 = vector.load %arg2[%c2_13, %c0_14] : memref<9x32xf32, #tpu.memory_space<vmem>>, vector<1x32xf32>
    %17 = vector.shape_cast %16 : vector<1x32xf32> to vector<1x1x1x32xf32>
    %18 = vector.broadcast %15 : vector<8x8x8x1xf32> to vector<8x8x8x32xf32>
    %19 = vector.broadcast %17 : vector<1x1x1x32xf32> to vector<8x8x8x32xf32>
    %20 = arith.mulf %18, %19 : vector<8x8x8x32xf32>
    %21 = arith.addf %14, %20 : vector<8x8x8x32xf32>
    %c0_15 = arith.constant 0 : index
    %c1_16 = arith.constant 1 : index
    %c0_17 = arith.constant 0 : index
    %c0_18 = arith.constant 0 : index
    %22 = vector.load %arg1[%c0_15, %c1_16, %c0_17, %c0_18] : memref<8x10x10x1xf32, #tpu.memory_space<vmem>>, vector<8x8x8x1xf32>
    %c3 = arith.constant 3 : index
    %c0_19 = arith.constant 0 : index
    %23 = vector.load %arg2[%c3, %c0_19] : memref<9x32xf32, #tpu.memory_space<vmem>>, vector<1x32xf32>
    %24 = vector.shape_cast %23 : vector<1x32xf32> to vector<1x1x1x32xf32>
    %25 = vector.broadcast %22 : vector<8x8x8x1xf32> to vector<8x8x8x32xf32>
    %26 = vector.broadcast %24 : vector<1x1x1x32xf32> to vector<8x8x8x32xf32>
    %27 = arith.mulf %25, %26 : vector<8x8x8x32xf32>
    %28 = arith.addf %21, %27 : vector<8x8x8x32xf32>
    %c0_20 = arith.constant 0 : index
    %c1_21 = arith.constant 1 : index
    %c1_22 = arith.constant 1 : index
    %c0_23 = arith.constant 0 : index
    %29 = vector.load %arg1[%c0_20, %c1_21, %c1_22, %c0_23] : memref<8x10x10x1xf32, #tpu.memory_space<vmem>>, vector<8x8x8x1xf32>
    %c4 = arith.constant 4 : index
    %c0_24 = arith.constant 0 : index
    %30 = vector.load %arg2[%c4, %c0_24] : memref<9x32xf32, #tpu.memory_space<vmem>>, vector<1x32xf32>
    %31 = vector.shape_cast %30 : vector<1x32xf32> to vector<1x1x1x32xf32>
    %32 = vector.broadcast %29 : vector<8x8x8x1xf32> to vector<8x8x8x32xf32>
    %33 = vector.broadcast %31 : vector<1x1x1x32xf32> to vector<8x8x8x32xf32>
    %34 = arith.mulf %32, %33 : vector<8x8x8x32xf32>
    %35 = arith.addf %28, %34 : vector<8x8x8x32xf32>
    %c0_25 = arith.constant 0 : index
    %c1_26 = arith.constant 1 : index
    %c2_27 = arith.constant 2 : index
    %c0_28 = arith.constant 0 : index
    %36 = vector.load %arg1[%c0_25, %c1_26, %c2_27, %c0_28] : memref<8x10x10x1xf32, #tpu.memory_space<vmem>>, vector<8x8x8x1xf32>
    %c5 = arith.constant 5 : index
    %c0_29 = arith.constant 0 : index
    %37 = vector.load %arg2[%c5, %c0_29] : memref<9x32xf32, #tpu.memory_space<vmem>>, vector<1x32xf32>
    %38 = vector.shape_cast %37 : vector<1x32xf32> to vector<1x1x1x32xf32>
    %39 = vector.broadcast %36 : vector<8x8x8x1xf32> to vector<8x8x8x32xf32>
    %40 = vector.broadcast %38 : vector<1x1x1x32xf32> to vector<8x8x8x32xf32>
    %41 = arith.mulf %39, %40 : vector<8x8x8x32xf32>
    %42 = arith.addf %35, %41 : vector<8x8x8x32xf32>
    %c0_30 = arith.constant 0 : index
    %c2_31 = arith.constant 2 : index
    %c0_32 = arith.constant 0 : index
    %c0_33 = arith.constant 0 : index
    %43 = vector.load %arg1[%c0_30, %c2_31, %c0_32, %c0_33] : memref<8x10x10x1xf32, #tpu.memory_space<vmem>>, vector<8x8x8x1xf32>
    %c6 = arith.constant 6 : index
    %c0_34 = arith.constant 0 : index
    %44 = vector.load %arg2[%c6, %c0_34] : memref<9x32xf32, #tpu.memory_space<vmem>>, vector<1x32xf32>
    %45 = vector.shape_cast %44 : vector<1x32xf32> to vector<1x1x1x32xf32>
    %46 = vector.broadcast %43 : vector<8x8x8x1xf32> to vector<8x8x8x32xf32>
    %47 = vector.broadcast %45 : vector<1x1x1x32xf32> to vector<8x8x8x32xf32>
    %48 = arith.mulf %46, %47 : vector<8x8x8x32xf32>
    %49 = arith.addf %42, %48 : vector<8x8x8x32xf32>
    %c0_35 = arith.constant 0 : index
    %c2_36 = arith.constant 2 : index
    %c1_37 = arith.constant 1 : index
    %c0_38 = arith.constant 0 : index
    %50 = vector.load %arg1[%c0_35, %c2_36, %c1_37, %c0_38] : memref<8x10x10x1xf32, #tpu.memory_space<vmem>>, vector<8x8x8x1xf32>
    %c7 = arith.constant 7 : index
    %c0_39 = arith.constant 0 : index
    %51 = vector.load %arg2[%c7, %c0_39] : memref<9x32xf32, #tpu.memory_space<vmem>>, vector<1x32xf32>
    %52 = vector.shape_cast %51 : vector<1x32xf32> to vector<1x1x1x32xf32>
    %53 = vector.broadcast %50 : vector<8x8x8x1xf32> to vector<8x8x8x32xf32>
    %54 = vector.broadcast %52 : vector<1x1x1x32xf32> to vector<8x8x8x32xf32>
    %55 = arith.mulf %53, %54 : vector<8x8x8x32xf32>
    %56 = arith.addf %49, %55 : vector<8x8x8x32xf32>
    %c0_40 = arith.constant 0 : index
    %c2_41 = arith.constant 2 : index
    %c2_42 = arith.constant 2 : index
    %c0_43 = arith.constant 0 : index
    %57 = vector.load %arg1[%c0_40, %c2_41, %c2_42, %c0_43] : memref<8x10x10x1xf32, #tpu.memory_space<vmem>>, vector<8x8x8x1xf32>
    %c8 = arith.constant 8 : index
    %c0_44 = arith.constant 0 : index
    %58 = vector.load %arg2[%c8, %c0_44] : memref<9x32xf32, #tpu.memory_space<vmem>>, vector<1x32xf32>
    %59 = vector.shape_cast %58 : vector<1x32xf32> to vector<1x1x1x32xf32>
    %60 = vector.broadcast %57 : vector<8x8x8x1xf32> to vector<8x8x8x32xf32>
    %61 = vector.broadcast %59 : vector<1x1x1x32xf32> to vector<8x8x8x32xf32>
    %62 = arith.mulf %60, %61 : vector<8x8x8x32xf32>
    %63 = arith.addf %56, %62 : vector<8x8x8x32xf32>
    %64 = vector.shape_cast %63 : vector<8x8x8x32xf32> to vector<64x8x32xf32>
    %65 = vector.shape_cast %64 : vector<64x8x32xf32> to vector<64x4x2x32xf32>
    %cst_45 = arith.constant dense<0xFF800000> : vector<64x4x32xf32>
    %66 = vector.multi_reduction <maximumf>, %65, %cst_45 [2] : vector<64x4x2x32xf32> to vector<64x4x32xf32>
    %67 = vector.shape_cast %66 : vector<64x4x32xf32> to vector<32x2x4x32xf32>
    %cst_46 = arith.constant dense<0xFF800000> : vector<32x4x32xf32>
    %68 = vector.multi_reduction <maximumf>, %67, %cst_46 [1] : vector<32x2x4x32xf32> to vector<32x4x32xf32>
    %c0_47 = arith.constant 0 : index
    %c0_48 = arith.constant 0 : index
    %69 = vector.load %arg3[%c0_47, %c0_48] : memref<1x32xf32, #tpu.memory_space<vmem>>, vector<1x32xf32>
    %70 = vector.shape_cast %69 : vector<1x32xf32> to vector<1x1x32xf32>
    %71 = vector.broadcast %70 : vector<1x1x32xf32> to vector<32x4x32xf32>
    %72 = arith.addf %68, %71 : vector<32x4x32xf32>
    %cst_49 = arith.constant 0.000000e+00 : f32
    %73 = vector.broadcast %cst_49 : f32 to vector<32x4x32xf32>
    %74 = arith.maximumf %72, %73 : vector<32x4x32xf32>
    %cst_50 = arith.constant 0.000000e+00 : f32
    %75 = vector.broadcast %cst_50 : f32 to vector<8x6x6x32xf32>
    %c0_51 = arith.constant 0 : index
    %c0_52 = arith.constant 0 : index
    %c0_53 = arith.constant 0 : index
    %c0_54 = arith.constant 0 : index
    %76 = vector.load %arg13[%c0_51, %c0_52, %c0_53, %c0_54] : memref<8x6x6x32xf32, #tpu.memory_space<vmem>>, vector<8x6x6x32xf32>
    tpu.vector_store %arg13[%c0_51, %c0_52, %c0_53, %c0_54], %75 {strides = array<i32>} : memref<8x6x6x32xf32, #tpu.memory_space<vmem>>, vector<8x6x6x32xf32>,
    %77 = vector.shape_cast %74 : vector<32x4x32xf32> to vector<8x4x4x32xf32>
    %c0_55 = arith.constant 0 : index
    %c1_56 = arith.constant 1 : index
    %c1_57 = arith.constant 1 : index
    %c0_58 = arith.constant 0 : index
    %78 = vector.load %arg13[%c0_55, %c1_56, %c1_57, %c0_58] : memref<8x6x6x32xf32, #tpu.memory_space<vmem>>, vector<8x4x4x32xf32>
    tpu.vector_store %arg13[%c0_55, %c1_56, %c1_57, %c0_58], %77 {strides = array<i32>} : memref<8x6x6x32xf32, #tpu.memory_space<vmem>>, vector<8x4x4x32xf32>,
    %cst_59 = arith.constant 0.000000e+00 : f32
    %79 = vector.broadcast %cst_59 : f32 to vector<128x64xf32>
    %c0_60 = arith.constant 0 : index
    %c0_61 = arith.constant 0 : index
    %c0_62 = arith.constant 0 : index
    %c0_63 = arith.constant 0 : index
    %80 = vector.load %arg13[%c0_60, %c0_61, %c0_62, %c0_63] : memref<8x6x6x32xf32, #tpu.memory_space<vmem>>, vector<8x4x4x32xf32>
    %81 = vector.shape_cast %80 : vector<8x4x4x32xf32> to vector<128x32xf32>
    %c0_64 = arith.constant 0 : index
    %c0_65 = arith.constant 0 : index
    %82 = vector.load %arg4[%c0_64, %c0_65] : memref<288x64xf32, #tpu.memory_space<vmem>>, vector<32x64xf32>
    %cst_66 = arith.constant dense<0.000000e+00> : vector<128x64xf32>
    %83 = tpu.matmul %81, %82, %cst_66 {dimension_numbers = #tpu.dot_dimension_numbers<[1], [0], [0], [1], [0, 0, 1, 1], [], []>} : vector<128x32xf32>, vector<32x64xf32>, vector<128x64xf32> -> vector<128x64xf32>
    %84 = arith.addf %79, %83 : vector<128x64xf32>
    %c0_67 = arith.constant 0 : index
    %c0_68 = arith.constant 0 : index
    %c1_69 = arith.constant 1 : index
    %c0_70 = arith.constant 0 : index
    %85 = vector.load %arg13[%c0_67, %c0_68, %c1_69, %c0_70] : memref<8x6x6x32xf32, #tpu.memory_space<vmem>>, vector<8x4x4x32xf32>
    %86 = vector.shape_cast %85 : vector<8x4x4x32xf32> to vector<128x32xf32>
    %c32 = arith.constant 32 : index
    %c0_71 = arith.constant 0 : index
    %87 = vector.load %arg4[%c32, %c0_71] : memref<288x64xf32, #tpu.memory_space<vmem>>, vector<32x64xf32>
    %cst_72 = arith.constant dense<0.000000e+00> : vector<128x64xf32>
    %88 = tpu.matmul %86, %87, %cst_72 {dimension_numbers = #tpu.dot_dimension_numbers<[1], [0], [0], [1], [0, 0, 1, 1], [], []>} : vector<128x32xf32>, vector<32x64xf32>, vector<128x64xf32> -> vector<128x64xf32>
    %89 = arith.addf %84, %88 : vector<128x64xf32>
    %c0_73 = arith.constant 0 : index
    %c0_74 = arith.constant 0 : index
    %c2_75 = arith.constant 2 : index
    %c0_76 = arith.constant 0 : index
    %90 = vector.load %arg13[%c0_73, %c0_74, %c2_75, %c0_76] : memref<8x6x6x32xf32, #tpu.memory_space<vmem>>, vector<8x4x4x32xf32>
    %91 = vector.shape_cast %90 : vector<8x4x4x32xf32> to vector<128x32xf32>
    %c64 = arith.constant 64 : index
    %c0_77 = arith.constant 0 : index
    %92 = vector.load %arg4[%c64, %c0_77] : memref<288x64xf32, #tpu.memory_space<vmem>>, vector<32x64xf32>
    %cst_78 = arith.constant dense<0.000000e+00> : vector<128x64xf32>
    %93 = tpu.matmul %91, %92, %cst_78 {dimension_numbers = #tpu.dot_dimension_numbers<[1], [0], [0], [1], [0, 0, 1, 1], [], []>} : vector<128x32xf32>, vector<32x64xf32>, vector<128x64xf32> -> vector<128x64xf32>
    %94 = arith.addf %89, %93 : vector<128x64xf32>
    %c0_79 = arith.constant 0 : index
    %c1_80 = arith.constant 1 : index
    %c0_81 = arith.constant 0 : index
    %c0_82 = arith.constant 0 : index
    %95 = vector.load %arg13[%c0_79, %c1_80, %c0_81, %c0_82] : memref<8x6x6x32xf32, #tpu.memory_space<vmem>>, vector<8x4x4x32xf32>
    %96 = vector.shape_cast %95 : vector<8x4x4x32xf32> to vector<128x32xf32>
    %c96 = arith.constant 96 : index
    %c0_83 = arith.constant 0 : index
    %97 = vector.load %arg4[%c96, %c0_83] : memref<288x64xf32, #tpu.memory_space<vmem>>, vector<32x64xf32>
    %cst_84 = arith.constant dense<0.000000e+00> : vector<128x64xf32>
    %98 = tpu.matmul %96, %97, %cst_84 {dimension_numbers = #tpu.dot_dimension_numbers<[1], [0], [0], [1], [0, 0, 1, 1], [], []>} : vector<128x32xf32>, vector<32x64xf32>, vector<128x64xf32> -> vector<128x64xf32>
    %99 = arith.addf %94, %98 : vector<128x64xf32>
    %c0_85 = arith.constant 0 : index
    %c1_86 = arith.constant 1 : index
    %c1_87 = arith.constant 1 : index
    %c0_88 = arith.constant 0 : index
    %100 = vector.load %arg13[%c0_85, %c1_86, %c1_87, %c0_88] : memref<8x6x6x32xf32, #tpu.memory_space<vmem>>, vector<8x4x4x32xf32>
    %101 = vector.shape_cast %100 : vector<8x4x4x32xf32> to vector<128x32xf32>
    %c128 = arith.constant 128 : index
    %c0_89 = arith.constant 0 : index
    %102 = vector.load %arg4[%c128, %c0_89] : memref<288x64xf32, #tpu.memory_space<vmem>>, vector<32x64xf32>
    %cst_90 = arith.constant dense<0.000000e+00> : vector<128x64xf32>
    %103 = tpu.matmul %101, %102, %cst_90 {dimension_numbers = #tpu.dot_dimension_numbers<[1], [0], [0], [1], [0, 0, 1, 1], [], []>} : vector<128x32xf32>, vector<32x64xf32>, vector<128x64xf32> -> vector<128x64xf32>
    %104 = arith.addf %99, %103 : vector<128x64xf32>
    %c0_91 = arith.constant 0 : index
    %c1_92 = arith.constant 1 : index
    %c2_93 = arith.constant 2 : index
    %c0_94 = arith.constant 0 : index
    %105 = vector.load %arg13[%c0_91, %c1_92, %c2_93, %c0_94] : memref<8x6x6x32xf32, #tpu.memory_space<vmem>>, vector<8x4x4x32xf32>
    %106 = vector.shape_cast %105 : vector<8x4x4x32xf32> to vector<128x32xf32>
    %c160 = arith.constant 160 : index
    %c0_95 = arith.constant 0 : index
    %107 = vector.load %arg4[%c160, %c0_95] : memref<288x64xf32, #tpu.memory_space<vmem>>, vector<32x64xf32>
    %cst_96 = arith.constant dense<0.000000e+00> : vector<128x64xf32>
    %108 = tpu.matmul %106, %107, %cst_96 {dimension_numbers = #tpu.dot_dimension_numbers<[1], [0], [0], [1], [0, 0, 1, 1], [], []>} : vector<128x32xf32>, vector<32x64xf32>, vector<128x64xf32> -> vector<128x64xf32>
    %109 = arith.addf %104, %108 : vector<128x64xf32>
    %c0_97 = arith.constant 0 : index
    %c2_98 = arith.constant 2 : index
    %c0_99 = arith.constant 0 : index
    %c0_100 = arith.constant 0 : index
    %110 = vector.load %arg13[%c0_97, %c2_98, %c0_99, %c0_100] : memref<8x6x6x32xf32, #tpu.memory_space<vmem>>, vector<8x4x4x32xf32>
    %111 = vector.shape_cast %110 : vector<8x4x4x32xf32> to vector<128x32xf32>
    %c192 = arith.constant 192 : index
    %c0_101 = arith.constant 0 : index
    %112 = vector.load %arg4[%c192, %c0_101] : memref<288x64xf32, #tpu.memory_space<vmem>>, vector<32x64xf32>
    %cst_102 = arith.constant dense<0.000000e+00> : vector<128x64xf32>
    %113 = tpu.matmul %111, %112, %cst_102 {dimension_numbers = #tpu.dot_dimension_numbers<[1], [0], [0], [1], [0, 0, 1, 1], [], []>} : vector<128x32xf32>, vector<32x64xf32>, vector<128x64xf32> -> vector<128x64xf32>
    %114 = arith.addf %109, %113 : vector<128x64xf32>
    %c0_103 = arith.constant 0 : index
    %c2_104 = arith.constant 2 : index
    %c1_105 = arith.constant 1 : index
    %c0_106 = arith.constant 0 : index
    %115 = vector.load %arg13[%c0_103, %c2_104, %c1_105, %c0_106] : memref<8x6x6x32xf32, #tpu.memory_space<vmem>>, vector<8x4x4x32xf32>
    %116 = vector.shape_cast %115 : vector<8x4x4x32xf32> to vector<128x32xf32>
    %c224 = arith.constant 224 : index
    %c0_107 = arith.constant 0 : index
    %117 = vector.load %arg4[%c224, %c0_107] : memref<288x64xf32, #tpu.memory_space<vmem>>, vector<32x64xf32>
    %cst_108 = arith.constant dense<0.000000e+00> : vector<128x64xf32>
    %118 = tpu.matmul %116, %117, %cst_108 {dimension_numbers = #tpu.dot_dimension_numbers<[1], [0], [0], [1], [0, 0, 1, 1], [], []>} : vector<128x32xf32>, vector<32x64xf32>, vector<128x64xf32> -> vector<128x64xf32>
    %119 = arith.addf %114, %118 : vector<128x64xf32>
    %c0_109 = arith.constant 0 : index
    %c2_110 = arith.constant 2 : index
    %c2_111 = arith.constant 2 : index
    %c0_112 = arith.constant 0 : index
    %120 = vector.load %arg13[%c0_109, %c2_110, %c2_111, %c0_112] : memref<8x6x6x32xf32, #tpu.memory_space<vmem>>, vector<8x4x4x32xf32>
    %121 = vector.shape_cast %120 : vector<8x4x4x32xf32> to vector<128x32xf32>
    %c256 = arith.constant 256 : index
    %c0_113 = arith.constant 0 : index
    %122 = vector.load %arg4[%c256, %c0_113] : memref<288x64xf32, #tpu.memory_space<vmem>>, vector<32x64xf32>
    %cst_114 = arith.constant dense<0.000000e+00> : vector<128x64xf32>
    %123 = tpu.matmul %121, %122, %cst_114 {dimension_numbers = #tpu.dot_dimension_numbers<[1], [0], [0], [1], [0, 0, 1, 1], [], []>} : vector<128x32xf32>, vector<32x64xf32>, vector<128x64xf32> -> vector<128x64xf32>
    %124 = arith.addf %119, %123 : vector<128x64xf32>
    %125 = vector.shape_cast %124 : vector<128x64xf32> to vector<32x4x64xf32>
    %126 = vector.shape_cast %125 : vector<32x4x64xf32> to vector<32x2x2x64xf32>
    %cst_115 = arith.constant dense<0xFF800000> : vector<32x2x64xf32>
    %127 = vector.multi_reduction <maximumf>, %126, %cst_115 [2] : vector<32x2x2x64xf32> to vector<32x2x64xf32>
    %128 = vector.shape_cast %127 : vector<32x2x64xf32> to vector<16x2x2x64xf32>
    %cst_116 = arith.constant dense<0xFF800000> : vector<16x2x64xf32>
    %129 = vector.multi_reduction <maximumf>, %128, %cst_116 [1] : vector<16x2x2x64xf32> to vector<16x2x64xf32>
    %c0_117 = arith.constant 0 : index
    %c0_118 = arith.constant 0 : index
    %130 = vector.load %arg5[%c0_117, %c0_118] : memref<1x64xf32, #tpu.memory_space<vmem>>, vector<1x64xf32>
    %131 = vector.shape_cast %130 : vector<1x64xf32> to vector<1x1x64xf32>
    %132 = vector.broadcast %131 : vector<1x1x64xf32> to vector<16x2x64xf32>
    %133 = arith.addf %129, %132 : vector<16x2x64xf32>
    %cst_119 = arith.constant 0.000000e+00 : f32
    %134 = vector.broadcast %cst_119 : f32 to vector<16x2x64xf32>
    %135 = arith.maximumf %133, %134 : vector<16x2x64xf32>
    %cst_120 = arith.constant 0.000000e+00 : f32
    %136 = vector.broadcast %cst_120 : f32 to vector<8x4x4x64xf32>
    %c0_121 = arith.constant 0 : index
    %c0_122 = arith.constant 0 : index
    %c0_123 = arith.constant 0 : index
    %c0_124 = arith.constant 0 : index
    %137 = vector.load %arg14[%c0_121, %c0_122, %c0_123, %c0_124] : memref<8x4x4x64xf32, #tpu.memory_space<vmem>>, vector<8x4x4x64xf32>
    tpu.vector_store %arg14[%c0_121, %c0_122, %c0_123, %c0_124], %136 {strides = array<i32>} : memref<8x4x4x64xf32, #tpu.memory_space<vmem>>, vector<8x4x4x64xf32>,
    %138 = vector.shape_cast %135 : vector<16x2x64xf32> to vector<8x2x2x64xf32>
    %c0_125 = arith.constant 0 : index
    %c1_126 = arith.constant 1 : index
    %c1_127 = arith.constant 1 : index
    %c0_128 = arith.constant 0 : index
    %139 = vector.load %arg14[%c0_125, %c1_126, %c1_127, %c0_128] : memref<8x4x4x64xf32, #tpu.memory_space<vmem>>, vector<8x2x2x64xf32>
    tpu.vector_store %arg14[%c0_125, %c1_126, %c1_127, %c0_128], %138 {strides = array<i32>} : memref<8x4x4x64xf32, #tpu.memory_space<vmem>>, vector<8x2x2x64xf32>,
    %cst_129 = arith.constant 0.000000e+00 : f32
    %140 = vector.broadcast %cst_129 : f32 to vector<32x128xf32>
    %c0_130 = arith.constant 0 : index
    %c0_131 = arith.constant 0 : index
    %c0_132 = arith.constant 0 : index
    %c0_133 = arith.constant 0 : index
    %141 = vector.load %arg14[%c0_130, %c0_131, %c0_132, %c0_133] : memref<8x4x4x64xf32, #tpu.memory_space<vmem>>, vector<8x2x2x64xf32>
    %142 = vector.shape_cast %141 : vector<8x2x2x64xf32> to vector<32x64xf32>
    %c0_134 = arith.constant 0 : index
    %c0_135 = arith.constant 0 : index
    %143 = vector.load %arg6[%c0_134, %c0_135] : memref<576x128xf32, #tpu.memory_space<vmem>>, vector<64x128xf32>
    %cst_136 = arith.constant dense<0.000000e+00> : vector<32x128xf32>
    %144 = tpu.matmul %142, %143, %cst_136 {dimension_numbers = #tpu.dot_dimension_numbers<[1], [0], [0], [1], [0, 0, 1, 1], [], []>} : vector<32x64xf32>, vector<64x128xf32>, vector<32x128xf32> -> vector<32x128xf32>
    %145 = arith.addf %140, %144 : vector<32x128xf32>
    %c0_137 = arith.constant 0 : index
    %c0_138 = arith.constant 0 : index
    %c1_139 = arith.constant 1 : index
    %c0_140 = arith.constant 0 : index
    %146 = vector.load %arg14[%c0_137, %c0_138, %c1_139, %c0_140] : memref<8x4x4x64xf32, #tpu.memory_space<vmem>>, vector<8x2x2x64xf32>
    %147 = vector.shape_cast %146 : vector<8x2x2x64xf32> to vector<32x64xf32>
    %c64_141 = arith.constant 64 : index
    %c0_142 = arith.constant 0 : index
    %148 = vector.load %arg6[%c64_141, %c0_142] : memref<576x128xf32, #tpu.memory_space<vmem>>, vector<64x128xf32>
    %cst_143 = arith.constant dense<0.000000e+00> : vector<32x128xf32>
    %149 = tpu.matmul %147, %148, %cst_143 {dimension_numbers = #tpu.dot_dimension_numbers<[1], [0], [0], [1], [0, 0, 1, 1], [], []>} : vector<32x64xf32>, vector<64x128xf32>, vector<32x128xf32> -> vector<32x128xf32>
    %150 = arith.addf %145, %149 : vector<32x128xf32>
    %c0_144 = arith.constant 0 : index
    %c0_145 = arith.constant 0 : index
    %c2_146 = arith.constant 2 : index
    %c0_147 = arith.constant 0 : index
    %151 = vector.load %arg14[%c0_144, %c0_145, %c2_146, %c0_147] : memref<8x4x4x64xf32, #tpu.memory_space<vmem>>, vector<8x2x2x64xf32>
    %152 = vector.shape_cast %151 : vector<8x2x2x64xf32> to vector<32x64xf32>
    %c128_148 = arith.constant 128 : index
    %c0_149 = arith.constant 0 : index
    %153 = vector.load %arg6[%c128_148, %c0_149] : memref<576x128xf32, #tpu.memory_space<vmem>>, vector<64x128xf32>
    %cst_150 = arith.constant dense<0.000000e+00> : vector<32x128xf32>
    %154 = tpu.matmul %152, %153, %cst_150 {dimension_numbers = #tpu.dot_dimension_numbers<[1], [0], [0], [1], [0, 0, 1, 1], [], []>} : vector<32x64xf32>, vector<64x128xf32>, vector<32x128xf32> -> vector<32x128xf32>
    %155 = arith.addf %150, %154 : vector<32x128xf32>
    %c0_151 = arith.constant 0 : index
    %c1_152 = arith.constant 1 : index
    %c0_153 = arith.constant 0 : index
    %c0_154 = arith.constant 0 : index
    %156 = vector.load %arg14[%c0_151, %c1_152, %c0_153, %c0_154] : memref<8x4x4x64xf32, #tpu.memory_space<vmem>>, vector<8x2x2x64xf32>
    %157 = vector.shape_cast %156 : vector<8x2x2x64xf32> to vector<32x64xf32>
    %c192_155 = arith.constant 192 : index
    %c0_156 = arith.constant 0 : index
    %158 = vector.load %arg6[%c192_155, %c0_156] : memref<576x128xf32, #tpu.memory_space<vmem>>, vector<64x128xf32>
    %cst_157 = arith.constant dense<0.000000e+00> : vector<32x128xf32>
    %159 = tpu.matmul %157, %158, %cst_157 {dimension_numbers = #tpu.dot_dimension_numbers<[1], [0], [0], [1], [0, 0, 1, 1], [], []>} : vector<32x64xf32>, vector<64x128xf32>, vector<32x128xf32> -> vector<32x128xf32>
    %160 = arith.addf %155, %159 : vector<32x128xf32>
    %c0_158 = arith.constant 0 : index
    %c1_159 = arith.constant 1 : index
    %c1_160 = arith.constant 1 : index
    %c0_161 = arith.constant 0 : index
    %161 = vector.load %arg14[%c0_158, %c1_159, %c1_160, %c0_161] : memref<8x4x4x64xf32, #tpu.memory_space<vmem>>, vector<8x2x2x64xf32>
    %162 = vector.shape_cast %161 : vector<8x2x2x64xf32> to vector<32x64xf32>
    %c256_162 = arith.constant 256 : index
    %c0_163 = arith.constant 0 : index
    %163 = vector.load %arg6[%c256_162, %c0_163] : memref<576x128xf32, #tpu.memory_space<vmem>>, vector<64x128xf32>
    %cst_164 = arith.constant dense<0.000000e+00> : vector<32x128xf32>
    %164 = tpu.matmul %162, %163, %cst_164 {dimension_numbers = #tpu.dot_dimension_numbers<[1], [0], [0], [1], [0, 0, 1, 1], [], []>} : vector<32x64xf32>, vector<64x128xf32>, vector<32x128xf32> -> vector<32x128xf32>
    %165 = arith.addf %160, %164 : vector<32x128xf32>
    %c0_165 = arith.constant 0 : index
    %c1_166 = arith.constant 1 : index
    %c2_167 = arith.constant 2 : index
    %c0_168 = arith.constant 0 : index
    %166 = vector.load %arg14[%c0_165, %c1_166, %c2_167, %c0_168] : memref<8x4x4x64xf32, #tpu.memory_space<vmem>>, vector<8x2x2x64xf32>
    %167 = vector.shape_cast %166 : vector<8x2x2x64xf32> to vector<32x64xf32>
    %c320 = arith.constant 320 : index
    %c0_169 = arith.constant 0 : index
    %168 = vector.load %arg6[%c320, %c0_169] : memref<576x128xf32, #tpu.memory_space<vmem>>, vector<64x128xf32>
    %cst_170 = arith.constant dense<0.000000e+00> : vector<32x128xf32>
    %169 = tpu.matmul %167, %168, %cst_170 {dimension_numbers = #tpu.dot_dimension_numbers<[1], [0], [0], [1], [0, 0, 1, 1], [], []>} : vector<32x64xf32>, vector<64x128xf32>, vector<32x128xf32> -> vector<32x128xf32>
    %170 = arith.addf %165, %169 : vector<32x128xf32>
    %c0_171 = arith.constant 0 : index
    %c2_172 = arith.constant 2 : index
    %c0_173 = arith.constant 0 : index
    %c0_174 = arith.constant 0 : index
    %171 = vector.load %arg14[%c0_171, %c2_172, %c0_173, %c0_174] : memref<8x4x4x64xf32, #tpu.memory_space<vmem>>, vector<8x2x2x64xf32>
    %172 = vector.shape_cast %171 : vector<8x2x2x64xf32> to vector<32x64xf32>
    %c384 = arith.constant 384 : index
    %c0_175 = arith.constant 0 : index
    %173 = vector.load %arg6[%c384, %c0_175] : memref<576x128xf32, #tpu.memory_space<vmem>>, vector<64x128xf32>
    %cst_176 = arith.constant dense<0.000000e+00> : vector<32x128xf32>
    %174 = tpu.matmul %172, %173, %cst_176 {dimension_numbers = #tpu.dot_dimension_numbers<[1], [0], [0], [1], [0, 0, 1, 1], [], []>} : vector<32x64xf32>, vector<64x128xf32>, vector<32x128xf32> -> vector<32x128xf32>
    %175 = arith.addf %170, %174 : vector<32x128xf32>
    %c0_177 = arith.constant 0 : index
    %c2_178 = arith.constant 2 : index
    %c1_179 = arith.constant 1 : index
    %c0_180 = arith.constant 0 : index
    %176 = vector.load %arg14[%c0_177, %c2_178, %c1_179, %c0_180] : memref<8x4x4x64xf32, #tpu.memory_space<vmem>>, vector<8x2x2x64xf32>
    %177 = vector.shape_cast %176 : vector<8x2x2x64xf32> to vector<32x64xf32>
    %c448 = arith.constant 448 : index
    %c0_181 = arith.constant 0 : index
    %178 = vector.load %arg6[%c448, %c0_181] : memref<576x128xf32, #tpu.memory_space<vmem>>, vector<64x128xf32>
    %cst_182 = arith.constant dense<0.000000e+00> : vector<32x128xf32>
    %179 = tpu.matmul %177, %178, %cst_182 {dimension_numbers = #tpu.dot_dimension_numbers<[1], [0], [0], [1], [0, 0, 1, 1], [], []>} : vector<32x64xf32>, vector<64x128xf32>, vector<32x128xf32> -> vector<32x128xf32>
    %180 = arith.addf %175, %179 : vector<32x128xf32>
    %c0_183 = arith.constant 0 : index
    %c2_184 = arith.constant 2 : index
    %c2_185 = arith.constant 2 : index
    %c0_186 = arith.constant 0 : index
    %181 = vector.load %arg14[%c0_183, %c2_184, %c2_185, %c0_186] : memref<8x4x4x64xf32, #tpu.memory_space<vmem>>, vector<8x2x2x64xf32>
    %182 = vector.shape_cast %181 : vector<8x2x2x64xf32> to vector<32x64xf32>
    %c512 = arith.constant 512 : index
    %c0_187 = arith.constant 0 : index
    %183 = vector.load %arg6[%c512, %c0_187] : memref<576x128xf32, #tpu.memory_space<vmem>>, vector<64x128xf32>
    %cst_188 = arith.constant dense<0.000000e+00> : vector<32x128xf32>
    %184 = tpu.matmul %182, %183, %cst_188 {dimension_numbers = #tpu.dot_dimension_numbers<[1], [0], [0], [1], [0, 0, 1, 1], [], []>} : vector<32x64xf32>, vector<64x128xf32>, vector<32x128xf32> -> vector<32x128xf32>
    %185 = arith.addf %180, %184 : vector<32x128xf32>
    %186 = vector.shape_cast %185 : vector<32x128xf32> to vector<8x4x128xf32>
    %cst_189 = arith.constant dense<0xFF800000> : vector<8x128xf32>
    %187 = vector.multi_reduction <maximumf>, %186, %cst_189 [1] : vector<8x4x128xf32> to vector<8x128xf32>
    %c0_190 = arith.constant 0 : index
    %c0_191 = arith.constant 0 : index
    %188 = vector.load %arg7[%c0_190, %c0_191] : memref<1x128xf32, #tpu.memory_space<vmem>>, vector<1x128xf32>
    %189 = vector.broadcast %188 : vector<1x128xf32> to vector<8x128xf32>
    %190 = arith.addf %187, %189 : vector<8x128xf32>
    %cst_192 = arith.constant 0.000000e+00 : f32
    %191 = vector.broadcast %cst_192 : f32 to vector<8x128xf32>
    %192 = arith.maximumf %190, %191 : vector<8x128xf32>
    %c0_193 = arith.constant 0 : index
    %c0_194 = arith.constant 0 : index
    %193 = vector.load %arg8[%c0_193, %c0_194] : memref<128x128xf32, #tpu.memory_space<vmem>>, vector<128x128xf32>
    %cst_195 = arith.constant dense<0.000000e+00> : vector<8x128xf32>
    %194 = tpu.matmul %192, %193, %cst_195 {dimension_numbers = #tpu.dot_dimension_numbers<[1], [0], [0], [1], [0, 0, 1, 1], [], []>} : vector<8x128xf32>, vector<128x128xf32>, vector<8x128xf32> -> vector<8x128xf32>
    %c0_196 = arith.constant 0 : index
    %c0_197 = arith.constant 0 : index
    %195 = vector.load %arg9[%c0_196, %c0_197] : memref<1x128xf32, #tpu.memory_space<vmem>>, vector<1x128xf32>
    %196 = vector.broadcast %195 : vector<1x128xf32> to vector<8x128xf32>
    %197 = arith.addf %194, %196 : vector<8x128xf32>
    %cst_198 = arith.constant 0.000000e+00 : f32
    %198 = vector.broadcast %cst_198 : f32 to vector<8x128xf32>
    %199 = arith.maximumf %197, %198 : vector<8x128xf32>
    %c0_199 = arith.constant 0 : index
    %c0_200 = arith.constant 0 : index
    %200 = vector.load %arg10[%c0_199, %c0_200] : memref<128x128xf32, #tpu.memory_space<vmem>>, vector<128x128xf32>
    %cst_201 = arith.constant dense<0.000000e+00> : vector<8x128xf32>
    %201 = tpu.matmul %199, %200, %cst_201 {dimension_numbers = #tpu.dot_dimension_numbers<[1], [0], [0], [1], [0, 0, 1, 1], [], []>} : vector<8x128xf32>, vector<128x128xf32>, vector<8x128xf32> -> vector<8x128xf32>
    %c0_202 = arith.constant 0 : index
    %c0_203 = arith.constant 0 : index
    %202 = vector.load %arg11[%c0_202, %c0_203] : memref<1x128xf32, #tpu.memory_space<vmem>>, vector<1x128xf32>
    %203 = vector.broadcast %202 : vector<1x128xf32> to vector<8x128xf32>
    %204 = arith.addf %201, %203 : vector<8x128xf32>
    %c0_204 = arith.constant 0 : index
    %c0_205 = arith.constant 0 : index
    %205 = vector.load %arg12[%c0_204, %c0_205] : memref<8x128xf32, #tpu.memory_space<vmem>>, vector<8x128xf32>
    tpu.vector_store %arg12[%c0_204, %c0_205], %204 {strides = array<i32>} : memref<8x128xf32, #tpu.memory_space<vmem>>, vector<8x128xf32>,
    return
  }
  func.func @transform_0(%arg0: i32) -> (i32, i32, i32, i32) {
    %c0_i32 = arith.constant 0 : i32
    %c0_i32_0 = arith.constant 0 : i32
    %c0_i32_1 = arith.constant 0 : i32
    %c0_i32_2 = arith.constant 0 : i32
    return %arg0, %c0_i32, %c0_i32_0, %c0_i32_1 : i32, i32, i32, i32
  }
  func.func @transform_1(%arg0: i32) -> (i32, i32) {
    %c0_i32 = arith.constant 0 : i32
    %c0_i32_0 = arith.constant 0 : i32
    %c0_i32_1 = arith.constant 0 : i32
    return %c0_i32, %c0_i32_0 : i32, i32
  }
  func.func @transform_2(%arg0: i32) -> (i32, i32) {
    %c0_i32 = arith.constant 0 : i32
    %c0_i32_0 = arith.constant 0 : i32
    %c0_i32_1 = arith.constant 0 : i32
    return %c0_i32, %c0_i32_0 : i32, i32
  }
  func.func @transform_3(%arg0: i32) -> (i32, i32) {
    %c0_i32 = arith.constant 0 : i32
    %c0_i32_0 = arith.constant 0 : i32
    %c0_i32_1 = arith.constant 0 : i32
    return %c0_i32, %c0_i32_0 : i32, i32
  }
  func.func @transform_4(%arg0: i32) -> (i32, i32) {
    %c0_i32 = arith.constant 0 : i32
    %c0_i32_0 = arith.constant 0 : i32
    %c0_i32_1 = arith.constant 0 : i32
    return %c0_i32, %c0_i32_0 : i32, i32
  }
  func.func @transform_5(%arg0: i32) -> (i32, i32) {
    %c0_i32 = arith.constant 0 : i32
    %c0_i32_0 = arith.constant 0 : i32
    %c0_i32_1 = arith.constant 0 : i32
    return %c0_i32, %c0_i32_0 : i32, i32
  }
  func.func @transform_6(%arg0: i32) -> (i32, i32) {
    %c0_i32 = arith.constant 0 : i32
    %c0_i32_0 = arith.constant 0 : i32
    %c0_i32_1 = arith.constant 0 : i32
    return %c0_i32, %c0_i32_0 : i32, i32
  }
  func.func @transform_7(%arg0: i32) -> (i32, i32) {
    %c0_i32 = arith.constant 0 : i32
    %c0_i32_0 = arith.constant 0 : i32
    %c0_i32_1 = arith.constant 0 : i32
    return %c0_i32, %c0_i32_0 : i32, i32
  }
  func.func @transform_8(%arg0: i32) -> (i32, i32) {
    %c0_i32 = arith.constant 0 : i32
    %c0_i32_0 = arith.constant 0 : i32
    %c0_i32_1 = arith.constant 0 : i32
    return %c0_i32, %c0_i32_0 : i32, i32
  }
  func.func @transform_9(%arg0: i32) -> (i32, i32) {
    %c0_i32 = arith.constant 0 : i32
    %c0_i32_0 = arith.constant 0 : i32
    %c0_i32_1 = arith.constant 0 : i32
    return %c0_i32, %c0_i32_0 : i32, i32
  }
  func.func @transform_10(%arg0: i32) -> (i32, i32) {
    %c0_i32 = arith.constant 0 : i32
    %c0_i32_0 = arith.constant 0 : i32
    %c0_i32_1 = arith.constant 0 : i32
    return %c0_i32, %c0_i32_0 : i32, i32
  }
  func.func @transform_11(%arg0: i32) -> (i32, i32) {
    %c0_i32 = arith.constant 0 : i32
    %c0_i32_0 = arith.constant 0 : i32
    return %arg0, %c0_i32 : i32, i32
  }
}

</mosaic_0001>

<llo_original>
// kernel: cnnnet_forward.1
$region0: #{cnnnet_forward.1}
  #allocation0 [shape = 'u32[]', space=smem, size = 0x4, offset = 0x4, fixed_abs, tag = 'smem constant byte address 0x4 - core index']
  #allocation1 [shape = 'u32[144,128]{1,0:T(1,128)}', space=vmem, size = 0x12000, scoped, tag = 'internal scratch']
  #allocation2 [shape = 'f32[8,6,6,32]{3,2,1,0:T(8,128)}', space=vmem, size = 0x30000, scoped, tag = 'scratch operand']
  #allocation3 [shape = 'f32[8,4,4,64]{3,2,1,0:T(4,128)}', space=vmem, size = 0x10000, scoped, tag = 'scratch operand']
  %s0 = inlined_call_operand.vmem [shape: f32[8,10,10,1], index: 0, kind: input, shape index: {}]
  %s1 = inlined_call_operand.vmem [shape: f32[9,32], index: 1, kind: input, shape index: {}]
  %s2 = inlined_call_operand.vmem [shape: f32[1,32], index: 2, kind: input, shape index: {}]
  %s3 = inlined_call_operand.vmem [shape: f32[288,64], index: 3, kind: input, shape index: {}]
  %s4 = inlined_call_operand.vmem [shape: f32[1,64], index: 4, kind: input, shape index: {}]
  %s5 = inlined_call_operand.vmem [shape: f32[576,128], index: 5, kind: input, shape index: {}]
  %s6 = inlined_call_operand.vmem [shape: f32[1,128], index: 6, kind: input, shape index: {}]
  %s7 = inlined_call_operand.vmem [shape: f32[128,128], index: 7, kind: input, shape index: {}]
  %s8 = inlined_call_operand.vmem [shape: f32[1,128], index: 8, kind: input, shape index: {}]
  %s9 = inlined_call_operand.vmem [shape: f32[128,128], index: 9, kind: input, shape index: {}]
  %s10 = inlined_call_operand.vmem [shape: f32[1,128], index: 10, kind: input, shape index: {}]
  %s11 = inlined_call_operand.vmem [shape: f32[8,128], index: 11, kind: output, shape index: {}]
  %s12 = sld [smem:[#allocation0]]
  $region54: #{cnnnet_forward.1} parent=0
    _
  %s14 = ssub.s32 1, %s12
  %s15 = scalar_select 0, %s14, %s12
  // Predicated region
  $region2: #{cnnnet_forward.1} parent=0 // pred_check
    _
  $region3: #{cnnnet_forward.1} parent=0 // pred_check_branch
    %17 = sbr.rel (0) target = $region5
  $region4: #{cnnnet_forward.1} parent=0 // pred_region
    _
  $region5: #{cnnnet_forward.1} parent=0 // pred_fallthru
    _
  // Predicated region
  $region6: #{cnnnet_forward.1} parent=0 // pred_check
    _
  $region7: #{cnnnet_forward.1} parent=0 // pred_check_branch
    %19 = sbr.rel (0) target = $region9
  $region8: #{cnnnet_forward.1} parent=0 // pred_region
    _
  $region9: #{cnnnet_forward.1} parent=0 // pred_fallthru
    _
  // Predicated region
  $region10: #{cnnnet_forward.1} parent=0 // pred_check
    _
  $region11: #{cnnnet_forward.1} parent=0 // pred_check_branch
    %21 = sbr.rel (0) target = $region13
  $region12: #{cnnnet_forward.1} parent=0 // pred_region
    _
  $region13: #{cnnnet_forward.1} parent=0 // pred_fallthru
    _
  // Predicated region
  $region14: #{cnnnet_forward.1} parent=0 // pred_check
    _
  $region15: #{cnnnet_forward.1} parent=0 // pred_check_branch
    %23 = sbr.rel (0) target = $region17
  $region16: #{cnnnet_forward.1} parent=0 // pred_region
    _
  $region17: #{cnnnet_forward.1} parent=0 // pred_fallthru
    _
  // Predicated region
  $region18: #{cnnnet_forward.1} parent=0 // pred_check
    _
  $region19: #{cnnnet_forward.1} parent=0 // pred_check_branch
    %25 = sbr.rel (0) target = $region21
  $region20: #{cnnnet_forward.1} parent=0 // pred_region
    _
  $region21: #{cnnnet_forward.1} parent=0 // pred_fallthru
    _
  // Predicated region
  $region22: #{cnnnet_forward.1} parent=0 // pred_check
    _
  $region23: #{cnnnet_forward.1} parent=0 // pred_check_branch
    %27 = sbr.rel (0) target = $region25
  $region24: #{cnnnet_forward.1} parent=0 // pred_region
    _
  $region25: #{cnnnet_forward.1} parent=0 // pred_fallthru
    _
  // Predicated region
  $region26: #{cnnnet_forward.1} parent=0 // pred_check
    _
  $region27: #{cnnnet_forward.1} parent=0 // pred_check_branch
    %29 = sbr.rel (0) target = $region29
  $region28: #{cnnnet_forward.1} parent=0 // pred_region
    _
  $region29: #{cnnnet_forward.1} parent=0 // pred_fallthru
    _
  // Predicated region
  $region30: #{cnnnet_forward.1} parent=0 // pred_check
    _
  $region31: #{cnnnet_forward.1} parent=0 // pred_check_branch
    %31 = sbr.rel (0) target = $region33
  $region32: #{cnnnet_forward.1} parent=0 // pred_region
    _
  $region33: #{cnnnet_forward.1} parent=0 // pred_fallthru
    _
  // Predicated region
  $region34: #{cnnnet_forward.1} parent=0 // pred_check
    _
  $region35: #{cnnnet_forward.1} parent=0 // pred_check_branch
    %33 = sbr.rel (0) target = $region37
  $region36: #{cnnnet_forward.1} parent=0 // pred_region
    _
  $region37: #{cnnnet_forward.1} parent=0 // pred_fallthru
    _
  // Predicated region
  $region38: #{cnnnet_forward.1} parent=0 // pred_check
    _
  $region39: #{cnnnet_forward.1} parent=0 // pred_check_branch
    %35 = sbr.rel (0) target = $region41
  $region40: #{cnnnet_forward.1} parent=0 // pred_region
    _
  $region41: #{cnnnet_forward.1} parent=0 // pred_fallthru
    _
  // Predicated region
  $region42: #{cnnnet_forward.1} parent=0 // pred_check
    _
  $region43: #{cnnnet_forward.1} parent=0 // pred_check_branch
    %37 = sbr.rel (0) target = $region45
  $region44: #{cnnnet_forward.1} parent=0 // pred_region
    _
  $region45: #{cnnnet_forward.1} parent=0 // pred_fallthru
    _
  %v38 = vld [vmem:[%s0] sm:$0xff]
  %v39 = vld [vmem:[%s0 + $0x10] sm:$0xff]
  %v40 = vld [vmem:[%s0 + $0x20] sm:$0xff]
  %v41 = vld [vmem:[%s0 + $0x30] sm:$0xff]
  %v42 = vld [vmem:[%s0 + $0x40] sm:$0xff]
  %v43 = vld [vmem:[%s0 + $0x50] sm:$0xff]
  %v44 = vld [vmem:[%s0 + $0x60] sm:$0xff]
  %v45 = vld [vmem:[%s0 + $0x70] sm:$0xff]
  %v46 = vld [vmem:[%s0 + $0xa0] sm:$0xff]
  %v47 = vld [vmem:[%s0 + $0xb0] sm:$0xff]
  %v48 = vld [vmem:[%s0 + $0xc0] sm:$0xff]
  %v49 = vld [vmem:[%s0 + $0xd0] sm:$0xff]
  %v50 = vld [vmem:[%s0 + $0xe0] sm:$0xff]
  %v51 = vld [vmem:[%s0 + $0xf0] sm:$0xff]
  %v52 = vld [vmem:[%s0 + $0x100] sm:$0xff]
  %v53 = vld [vmem:[%s0 + $0x110] sm:$0xff]
  %v54 = vld [vmem:[%s0 + $0x140] sm:$0xff]
  %v55 = vld [vmem:[%s0 + $0x150] sm:$0xff]
  %v56 = vld [vmem:[%s0 + $0x160] sm:$0xff]
  %v57 = vld [vmem:[%s0 + $0x170] sm:$0xff]
  %v58 = vld [vmem:[%s0 + $0x180] sm:$0xff]
  %v59 = vld [vmem:[%s0 + $0x190] sm:$0xff]
  %v60 = vld [vmem:[%s0 + $0x1a0] sm:$0xff]
  %v61 = vld [vmem:[%s0 + $0x1b0] sm:$0xff]
  %v62 = vld [vmem:[%s0 + $0x1e0] sm:$0xff]
  %v63 = vld [vmem:[%s0 + $0x1f0] sm:$0xff]
  %v64 = vld [vmem:[%s0 + $0x200] sm:$0xff]
  %v65 = vld [vmem:[%s0 + $0x210] sm:$0xff]
  %v66 = vld [vmem:[%s0 + $0x220] sm:$0xff]
  %v67 = vld [vmem:[%s0 + $0x230] sm:$0xff]
  %v68 = vld [vmem:[%s0 + $0x240] sm:$0xff]
  %v69 = vld [vmem:[%s0 + $0x250] sm:$0xff]
  %v70 = vld [vmem:[%s0 + $0x280] sm:$0xff]
  %v71 = vld [vmem:[%s0 + $0x290] sm:$0xff]
  %v72 = vld [vmem:[%s0 + $0x2a0] sm:$0xff]
  %v73 = vld [vmem:[%s0 + $0x2b0] sm:$0xff]
  %v74 = vld [vmem:[%s0 + $0x2c0] sm:$0xff]
  %v75 = vld [vmem:[%s0 + $0x2d0] sm:$0xff]
  %v76 = vld [vmem:[%s0 + $0x2e0] sm:$0xff]
  %v77 = vld [vmem:[%s0 + $0x2f0] sm:$0xff]
  %v78 = vld [vmem:[%s0 + $0x320] sm:$0xff]
  %v79 = vld [vmem:[%s0 + $0x330] sm:$0xff]
  %v80 = vld [vmem:[%s0 + $0x340] sm:$0xff]
  %v81 = vld [vmem:[%s0 + $0x350] sm:$0xff]
  %v82 = vld [vmem:[%s0 + $0x360] sm:$0xff]
  %v83 = vld [vmem:[%s0 + $0x370] sm:$0xff]
  %v84 = vld [vmem:[%s0 + $0x380] sm:$0xff]
  %v85 = vld [vmem:[%s0 + $0x390] sm:$0xff]
  %v86 = vld [vmem:[%s0 + $0x3c0] sm:$0xff]
  %v87 = vld [vmem:[%s0 + $0x3d0] sm:$0xff]
  %v88 = vld [vmem:[%s0 + $0x3e0] sm:$0xff]
  %v89 = vld [vmem:[%s0 + $0x3f0] sm:$0xff]
  %v90 = vld [vmem:[%s0 + $0x400] sm:$0xff]
  %v91 = vld [vmem:[%s0 + $0x410] sm:$0xff]
  %v92 = vld [vmem:[%s0 + $0x420] sm:$0xff]
  %v93 = vld [vmem:[%s0 + $0x430] sm:$0xff]
  %v94 = vld [vmem:[%s0 + $0x460] sm:$0xff]
  %v95 = vld [vmem:[%s0 + $0x470] sm:$0xff]
  %v96 = vld [vmem:[%s0 + $0x480] sm:$0xff]
  %v97 = vld [vmem:[%s0 + $0x490] sm:$0xff]
  %v98 = vld [vmem:[%s0 + $0x4a0] sm:$0xff]
  %v99 = vld [vmem:[%s0 + $0x4b0] sm:$0xff]
  %v100 = vld [vmem:[%s0 + $0x4c0] sm:$0xff]
  %v101 = vld [vmem:[%s0 + $0x4d0] sm:$0xff]
  %v102 = vld [vmem:[%s1] sm:$0x1]
  %104 = vset.pattern.permute.xlu0 0
  %105 = vperm.xlu0 %104, %v38
  %v106 = vpop.permute.xlu0 %105
  %109 = vset.pattern.permute.xlu0 0
  %110 = vperm.xlu0 %109, %v39
  %v111 = vpop.permute.xlu0 %110
  %114 = vset.pattern.permute.xlu0 0
  %115 = vperm.xlu0 %114, %v40
  %v116 = vpop.permute.xlu0 %115
  %119 = vset.pattern.permute.xlu0 0
  %120 = vperm.xlu0 %119, %v41
  %v121 = vpop.permute.xlu0 %120
  %124 = vset.pattern.permute.xlu0 0
  %125 = vperm.xlu0 %124, %v42
  %v126 = vpop.permute.xlu0 %125
  %129 = vset.pattern.permute.xlu0 0
  %130 = vperm.xlu0 %129, %v43
  %v131 = vpop.permute.xlu0 %130
  %134 = vset.pattern.permute.xlu0 0
  %135 = vperm.xlu0 %134, %v44
  %v136 = vpop.permute.xlu0 %135
  %139 = vset.pattern.permute.xlu0 0
  %140 = vperm.xlu0 %139, %v45
  %v141 = vpop.permute.xlu0 %140
  %144 = vset.pattern.permute.xlu0 0
  %145 = vperm.xlu0 %144, %v46
  %v146 = vpop.permute.xlu0 %145
  %149 = vset.pattern.permute.xlu0 0
  %150 = vperm.xlu0 %149, %v47
  %v151 = vpop.permute.xlu0 %150
  %154 = vset.pattern.permute.xlu0 0
  %155 = vperm.xlu0 %154, %v48
  %v156 = vpop.permute.xlu0 %155
  %159 = vset.pattern.permute.xlu0 0
  %160 = vperm.xlu0 %159, %v49
  %v161 = vpop.permute.xlu0 %160
  %164 = vset.pattern.permute.xlu0 0
  %165 = vperm.xlu0 %164, %v50
  %v166 = vpop.permute.xlu0 %165
  %169 = vset.pattern.permute.xlu0 0
  %170 = vperm.xlu0 %169, %v51
  %v171 = vpop.permute.xlu0 %170
  %174 = vset.pattern.permute.xlu0 0
  %175 = vperm.xlu0 %174, %v52
  %v176 = vpop.permute.xlu0 %175
  %179 = vset.pattern.permute.xlu0 0
  %180 = vperm.xlu0 %179, %v53
  %v181 = vpop.permute.xlu0 %180
  %184 = vset.pattern.permute.xlu0 0
  %185 = vperm.xlu0 %184, %v54
  %v186 = vpop.permute.xlu0 %185
  %189 = vset.pattern.permute.xlu0 0
  %190 = vperm.xlu0 %189, %v55
  %v191 = vpop.permute.xlu0 %190
  %194 = vset.pattern.permute.xlu0 0
  %195 = vperm.xlu0 %194, %v56
  %v196 = vpop.permute.xlu0 %195
  %199 = vset.pattern.permute.xlu0 0
  %200 = vperm.xlu0 %199, %v57
  %v201 = vpop.permute.xlu0 %200
  %204 = vset.pattern.permute.xlu0 0
  %205 = vperm.xlu0 %204, %v58
  %v206 = vpop.permute.xlu0 %205
  %209 = vset.pattern.permute.xlu0 0
  %210 = vperm.xlu0 %209, %v59
  %v211 = vpop.permute.xlu0 %210
  %214 = vset.pattern.permute.xlu0 0
  %215 = vperm.xlu0 %214, %v60
  %v216 = vpop.permute.xlu0 %215
  %219 = vset.pattern.permute.xlu0 0
  %220 = vperm.xlu0 %219, %v61
  %v221 = vpop.permute.xlu0 %220
  %224 = vset.pattern.permute.xlu0 0
  %225 = vperm.xlu0 %224, %v62
  %v226 = vpop.permute.xlu0 %225
  %229 = vset.pattern.permute.xlu0 0
  %230 = vperm.xlu0 %229, %v63
  %v231 = vpop.permute.xlu0 %230
  %234 = vset.pattern.permute.xlu0 0
  %235 = vperm.xlu0 %234, %v64
  %v236 = vpop.permute.xlu0 %235
  %239 = vset.pattern.permute.xlu0 0
  %240 = vperm.xlu0 %239, %v65
  %v241 = vpop.permute.xlu0 %240
  %244 = vset.pattern.permute.xlu0 0
  %245 = vperm.xlu0 %244, %v66
  %v246 = vpop.permute.xlu0 %245
  %249 = vset.pattern.permute.xlu0 0
  %250 = vperm.xlu0 %249, %v67
  %v251 = vpop.permute.xlu0 %250
  %254 = vset.pattern.permute.xlu0 0
  %255 = vperm.xlu0 %254, %v68
  %v256 = vpop.permute.xlu0 %255
  %259 = vset.pattern.permute.xlu0 0
  %260 = vperm.xlu0 %259, %v69
  %v261 = vpop.permute.xlu0 %260
  %264 = vset.pattern.permute.xlu0 0
  %265 = vperm.xlu0 %264, %v70
  %v266 = vpop.permute.xlu0 %265
  %269 = vset.pattern.permute.xlu0 0
  %270 = vperm.xlu0 %269, %v71
  %v271 = vpop.permute.xlu0 %270
  %274 = vset.pattern.permute.xlu0 0
  %275 = vperm.xlu0 %274, %v72
  %v276 = vpop.permute.xlu0 %275
  %279 = vset.pattern.permute.xlu0 0
  %280 = vperm.xlu0 %279, %v73
  %v281 = vpop.permute.xlu0 %280
  %284 = vset.pattern.permute.xlu0 0
  %285 = vperm.xlu0 %284, %v74
  %v286 = vpop.permute.xlu0 %285
  %289 = vset.pattern.permute.xlu0 0
  %290 = vperm.xlu0 %289, %v75
  %v291 = vpop.permute.xlu0 %290
  %294 = vset.pattern.permute.xlu0 0
  %295 = vperm.xlu0 %294, %v76
  %v296 = vpop.permute.xlu0 %295
  %299 = vset.pattern.permute.xlu0 0
  %300 = vperm.xlu0 %299, %v77
  %v301 = vpop.permute.xlu0 %300
  %304 = vset.pattern.permute.xlu0 0
  %305 = vperm.xlu0 %304, %v78
  %v306 = vpop.permute.xlu0 %305
  %309 = vset.pattern.permute.xlu0 0
  %310 = vperm.xlu0 %309, %v79
  %v311 = vpop.permute.xlu0 %310
  %314 = vset.pattern.permute.xlu0 0
  %315 = vperm.xlu0 %314, %v80
  %v316 = vpop.permute.xlu0 %315
  %319 = vset.pattern.permute.xlu0 0
  %320 = vperm.xlu0 %319, %v81
  %v321 = vpop.permute.xlu0 %320
  %324 = vset.pattern.permute.xlu0 0
  %325 = vperm.xlu0 %324, %v82
  %v326 = vpop.permute.xlu0 %325
  %329 = vset.pattern.permute.xlu0 0
  %330 = vperm.xlu0 %329, %v83
  %v331 = vpop.permute.xlu0 %330
  %334 = vset.pattern.permute.xlu0 0
  %335 = vperm.xlu0 %334, %v84
  %v336 = vpop.permute.xlu0 %335
  %339 = vset.pattern.permute.xlu0 0
  %340 = vperm.xlu0 %339, %v85
  %v341 = vpop.permute.xlu0 %340
  %344 = vset.pattern.permute.xlu0 0
  %345 = vperm.xlu0 %344, %v86
  %v346 = vpop.permute.xlu0 %345
  %349 = vset.pattern.permute.xlu0 0
  %350 = vperm.xlu0 %349, %v87
  %v351 = vpop.permute.xlu0 %350
  %354 = vset.pattern.permute.xlu0 0
  %355 = vperm.xlu0 %354, %v88
  %v356 = vpop.permute.xlu0 %355
  %359 = vset.pattern.permute.xlu0 0
  %360 = vperm.xlu0 %359, %v89
  %v361 = vpop.permute.xlu0 %360
  %364 = vset.pattern.permute.xlu0 0
  %365 = vperm.xlu0 %364, %v90
  %v366 = vpop.permute.xlu0 %365
  %369 = vset.pattern.permute.xlu0 0
  %370 = vperm.xlu0 %369, %v91
  %v371 = vpop.permute.xlu0 %370
  %374 = vset.pattern.permute.xlu0 0
  %375 = vperm.xlu0 %374, %v92
  %v376 = vpop.permute.xlu0 %375
  %379 = vset.pattern.permute.xlu0 0
  %380 = vperm.xlu0 %379, %v93
  %v381 = vpop.permute.xlu0 %380
  %384 = vset.pattern.permute.xlu0 0
  %385 = vperm.xlu0 %384, %v94
  %v386 = vpop.permute.xlu0 %385
  %389 = vset.pattern.permute.xlu0 0
  %390 = vperm.xlu0 %389, %v95
  %v391 = vpop.permute.xlu0 %390
  %394 = vset.pattern.permute.xlu0 0
  %395 = vperm.xlu0 %394, %v96
  %v396 = vpop.permute.xlu0 %395
  %399 = vset.pattern.permute.xlu0 0
  %400 = vperm.xlu0 %399, %v97
  %v401 = vpop.permute.xlu0 %400
  %404 = vset.pattern.permute.xlu0 0
  %405 = vperm.xlu0 %404, %v98
  %v406 = vpop.permute.xlu0 %405
  %409 = vset.pattern.permute.xlu0 0
  %410 = vperm.xlu0 %409, %v99
  %v411 = vpop.permute.xlu0 %410
  %414 = vset.pattern.permute.xlu0 0
  %415 = vperm.xlu0 %414, %v100
  %v416 = vpop.permute.xlu0 %415
  %419 = vset.pattern.permute.xlu0 0
  %420 = vperm.xlu0 %419, %v101
  %v421 = vpop.permute.xlu0 %420
  %v423 = vlaneseq
  %v424 = vshrl.u32 %v423, 7
  %v425 = vsub.s32 0, %v424
  %v426 = vrot.slane %v102, %v425
  %v427 = vmul.f32 %v106, %v426
  %v428 = vmul.f32 %v111, %v426
  %v429 = vmul.f32 %v116, %v426
  %v430 = vmul.f32 %v121, %v426
  %v431 = vmul.f32 %v126, %v426
  %v432 = vmul.f32 %v131, %v426
  %v433 = vmul.f32 %v136, %v426
  %v434 = vmul.f32 %v141, %v426
  %v435 = vmul.f32 %v146, %v426
  %v436 = vmul.f32 %v151, %v426
  %v437 = vmul.f32 %v156, %v426
  %v438 = vmul.f32 %v161, %v426
  %v439 = vmul.f32 %v166, %v426
  %v440 = vmul.f32 %v171, %v426
  %v441 = vmul.f32 %v176, %v426
  %v442 = vmul.f32 %v181, %v426
  %v443 = vmul.f32 %v186, %v426
  %v444 = vmul.f32 %v191, %v426
  %v445 = vmul.f32 %v196, %v426
  %v446 = vmul.f32 %v201, %v426
  %v447 = vmul.f32 %v206, %v426
  %v448 = vmul.f32 %v211, %v426
  %v449 = vmul.f32 %v216, %v426
  %v450 = vmul.f32 %v221, %v426
  %v451 = vmul.f32 %v226, %v426
  %v452 = vmul.f32 %v231, %v426
  %v453 = vmul.f32 %v236, %v426
  %v454 = vmul.f32 %v241, %v426
  %v455 = vmul.f32 %v246, %v426
  %v456 = vmul.f32 %v251, %v426
  %v457 = vmul.f32 %v256, %v426
  %v458 = vmul.f32 %v261, %v426
  %v459 = vmul.f32 %v266, %v426
  %v460 = vmul.f32 %v271, %v426
  %v461 = vmul.f32 %v276, %v426
  %v462 = vmul.f32 %v281, %v426
  %v463 = vmul.f32 %v286, %v426
  %v464 = vmul.f32 %v291, %v426
  %v465 = vmul.f32 %v296, %v426
  %v466 = vmul.f32 %v301, %v426
  %v467 = vmul.f32 %v306, %v426
  %v468 = vmul.f32 %v311, %v426
  %v469 = vmul.f32 %v316, %v426
  %v470 = vmul.f32 %v321, %v426
  %v471 = vmul.f32 %v326, %v426
  %v472 = vmul.f32 %v331, %v426
  %v473 = vmul.f32 %v336, %v426
  %v474 = vmul.f32 %v341, %v426
  %v475 = vmul.f32 %v346, %v426
  %v476 = vmul.f32 %v351, %v426
  %v477 = vmul.f32 %v356, %v426
  %v478 = vmul.f32 %v361, %v426
  %v479 = vmul.f32 %v366, %v426
  %v480 = vmul.f32 %v371, %v426
  %v481 = vmul.f32 %v376, %v426
  %v482 = vmul.f32 %v381, %v426
  %v483 = vmul.f32 %v386, %v426
  %v484 = vmul.f32 %v391, %v426
  %v485 = vmul.f32 %v396, %v426
  %v486 = vmul.f32 %v401, %v426
  %v487 = vmul.f32 %v406, %v426
  %v488 = vmul.f32 %v411, %v426
  %v489 = vmul.f32 %v416, %v426
  %v490 = vmul.f32 %v421, %v426
  %v491 = vadd.f32 %v427, 0.0
  %v492 = vadd.f32 %v428, 0.0
  %v493 = vadd.f32 %v429, 0.0
  %v494 = vadd.f32 %v430, 0.0
  %v495 = vadd.f32 %v431, 0.0
  %v496 = vadd.f32 %v432, 0.0
  %v497 = vadd.f32 %v433, 0.0
  %v498 = vadd.f32 %v434, 0.0
  %v499 = vadd.f32 %v435, 0.0
  %v500 = vadd.f32 %v436, 0.0
  %v501 = vadd.f32 %v437, 0.0
  %v502 = vadd.f32 %v438, 0.0
  %v503 = vadd.f32 %v439, 0.0
  %v504 = vadd.f32 %v440, 0.0
  %v505 = vadd.f32 %v441, 0.0
  %v506 = vadd.f32 %v442, 0.0
  %v507 = vadd.f32 %v443, 0.0
  %v508 = vadd.f32 %v444, 0.0
  %v509 = vadd.f32 %v445, 0.0
  %v510 = vadd.f32 %v446, 0.0
  %v511 = vadd.f32 %v447, 0.0
  %v512 = vadd.f32 %v448, 0.0
  %v513 = vadd.f32 %v449, 0.0
  %v514 = vadd.f32 %v450, 0.0
  %v515 = vadd.f32 %v451, 0.0
  %v516 = vadd.f32 %v452, 0.0
  %v517 = vadd.f32 %v453, 0.0
  %v518 = vadd.f32 %v454, 0.0
  %v519 = vadd.f32 %v455, 0.0
  %v520 = vadd.f32 %v456, 0.0
  %v521 = vadd.f32 %v457, 0.0
  %v522 = vadd.f32 %v458, 0.0
  %v523 = vadd.f32 %v459, 0.0
  %v524 = vadd.f32 %v460, 0.0
  %v525 = vadd.f32 %v461, 0.0
  %v526 = vadd.f32 %v462, 0.0
  %v527 = vadd.f32 %v463, 0.0
  %v528 = vadd.f32 %v464, 0.0
  %v529 = vadd.f32 %v465, 0.0
  %v530 = vadd.f32 %v466, 0.0
  %v531 = vadd.f32 %v467, 0.0
  %v532 = vadd.f32 %v468, 0.0
  %v533 = vadd.f32 %v469, 0.0
  %v534 = vadd.f32 %v470, 0.0
  %v535 = vadd.f32 %v471, 0.0
  %v536 = vadd.f32 %v472, 0.0
  %v537 = vadd.f32 %v473, 0.0
  %v538 = vadd.f32 %v474, 0.0
  %v539 = vadd.f32 %v475, 0.0
  %v540 = vadd.f32 %v476, 0.0
  %v541 = vadd.f32 %v477, 0.0
  %v542 = vadd.f32 %v478, 0.0
  %v543 = vadd.f32 %v479, 0.0
  %v544 = vadd.f32 %v480, 0.0
  %v545 = vadd.f32 %v481, 0.0
  %v546 = vadd.f32 %v482, 0.0
  %v547 = vadd.f32 %v483, 0.0
  %v548 = vadd.f32 %v484, 0.0
  %v549 = vadd.f32 %v485, 0.0
  %v550 = vadd.f32 %v486, 0.0
  %v551 = vadd.f32 %v487, 0.0
  %v552 = vadd.f32 %v488, 0.0
  %v553 = vadd.f32 %v489, 0.0
  %v554 = vadd.f32 %v490, 0.0
  %v555 = vld [vmem:[%s0 + $0x1] sm:$0xff]
  %v556 = vld [vmem:[%s0 + $0x11] sm:$0xff]
  %v557 = vld [vmem:[%s0 + $0x21] sm:$0xff]
  %v558 = vld [vmem:[%s0 + $0x31] sm:$0xff]
  %v559 = vld [vmem:[%s0 + $0x41] sm:$0xff]
  %v560 = vld [vmem:[%s0 + $0x51] sm:$0xff]
  %v561 = vld [vmem:[%s0 + $0x61] sm:$0xff]
  %v562 = vld [vmem:[%s0 + $0x71] sm:$0xff]
  %v563 = vld [vmem:[%s0 + $0xa1] sm:$0xff]
  %v564 = vld [vmem:[%s0 + $0xb1] sm:$0xff]
  %v565 = vld [vmem:[%s0 + $0xc1] sm:$0xff]
  %v566 = vld [vmem:[%s0 + $0xd1] sm:$0xff]
  %v567 = vld [vmem:[%s0 + $0xe1] sm:$0xff]
  %v568 = vld [vmem:[%s0 + $0xf1] sm:$0xff]
  %v569 = vld [vmem:[%s0 + $0x101] sm:$0xff]
  %v570 = vld [vmem:[%s0 + $0x111] sm:$0xff]
  %v571 = vld [vmem:[%s0 + $0x141] sm:$0xff]
  %v572 = vld [vmem:[%s0 + $0x151] sm:$0xff]
  %v573 = vld [vmem:[%s0 + $0x161] sm:$0xff]
  %v574 = vld [vmem:[%s0 + $0x171] sm:$0xff]
  %v575 = vld [vmem:[%s0 + $0x181] sm:$0xff]
  %v576 = vld [vmem:[%s0 + $0x191] sm:$0xff]
  %v577 = vld [vmem:[%s0 + $0x1a1] sm:$0xff]
  %v578 = vld [vmem:[%s0 + $0x1b1] sm:$0xff]
  %v579 = vld [vmem:[%s0 + $0x1e1] sm:$0xff]
  %v580 = vld [vmem:[%s0 + $0x1f1] sm:$0xff]
  %v581 = vld [vmem:[%s0 + $0x201] sm:$0xff]
  %v582 = vld [vmem:[%s0 + $0x211] sm:$0xff]
  %v583 = vld [vmem:[%s0 + $0x221] sm:$0xff]
  %v584 = vld [vmem:[%s0 + $0x231] sm:$0xff]
  %v585 = vld [vmem:[%s0 + $0x241] sm:$0xff]
  %v586 = vld [vmem:[%s0 + $0x251] sm:$0xff]
  %v587 = vld [vmem:[%s0 + $0x281] sm:$0xff]
  %v588 = vld [vmem:[%s0 + $0x291] sm:$0xff]
  %v589 = vld [vmem:[%s0 + $0x2a1] sm:$0xff]
  %v590 = vld [vmem:[%s0 + $0x2b1] sm:$0xff]
  %v591 = vld [vmem:[%s0 + $0x2c1] sm:$0xff]
  %v592 = vld [vmem:[%s0 + $0x2d1] sm:$0xff]
  %v593 = vld [vmem:[%s0 + $0x2e1] sm:$0xff]
  %v594 = vld [vmem:[%s0 + $0x2f1] sm:$0xff]
  %v595 = vld [vmem:[%s0 + $0x321] sm:$0xff]
  %v596 = vld [vmem:[%s0 + $0x331] sm:$0xff]
  %v597 = vld [vmem:[%s0 + $0x341] sm:$0xff]
  %v598 = vld [vmem:[%s0 + $0x351] sm:$0xff]
  %v599 = vld [vmem:[%s0 + $0x361] sm:$0xff]
  %v600 = vld [vmem:[%s0 + $0x371] sm:$0xff]
  %v601 = vld [vmem:[%s0 + $0x381] sm:$0xff]
  %v602 = vld [vmem:[%s0 + $0x391] sm:$0xff]
  %v603 = vld [vmem:[%s0 + $0x3c1] sm:$0xff]
  %v604 = vld [vmem:[%s0 + $0x3d1] sm:$0xff]
  %v605 = vld [vmem:[%s0 + $0x3e1] sm:$0xff]
  %v606 = vld [vmem:[%s0 + $0x3f1] sm:$0xff]
  %v607 = vld [vmem:[%s0 + $0x401] sm:$0xff]
  %v608 = vld [vmem:[%s0 + $0x411] sm:$0xff]
  %v609 = vld [vmem:[%s0 + $0x421] sm:$0xff]
  %v610 = vld [vmem:[%s0 + $0x431] sm:$0xff]
  %v611 = vld [vmem:[%s0 + $0x461] sm:$0xff]
  %v612 = vld [vmem:[%s0 + $0x471] sm:$0xff]
  %v613 = vld [vmem:[%s0 + $0x481] sm:$0xff]
  %v614 = vld [vmem:[%s0 + $0x491] sm:$0xff]
  %v615 = vld [vmem:[%s0 + $0x4a1] sm:$0xff]
  %v616 = vld [vmem:[%s0 + $0x4b1] sm:$0xff]
  %v617 = vld [vmem:[%s0 + $0x4c1] sm:$0xff]
  %v618 = vld [vmem:[%s0 + $0x4d1] sm:$0xff]
  %v619 = vld [vmem:[%s1 + $0x1] sm:$0x1]
  %621 = vset.pattern.permute.xlu0 0
  %622 = vperm.xlu0 %621, %v555
  %v623 = vpop.permute.xlu0 %622
  %626 = vset.pattern.permute.xlu0 0
  %627 = vperm.xlu0 %626, %v556
  %v628 = vpop.permute.xlu0 %627
  %631 = vset.pattern.permute.xlu0 0
  %632 = vperm.xlu0 %631, %v557
  %v633 = vpop.permute.xlu0 %632
  %636 = vset.pattern.permute.xlu0 0
  %637 = vperm.xlu0 %636, %v558
  %v638 = vpop.permute.xlu0 %637
  %641 = vset.pattern.permute.xlu0 0
  %642 = vperm.xlu0 %641, %v559
  %v643 = vpop.permute.xlu0 %642
  %646 = vset.pattern.permute.xlu0 0
  %647 = vperm.xlu0 %646, %v560
  %v648 = vpop.permute.xlu0 %647
  %651 = vset.pattern.permute.xlu0 0
  %652 = vperm.xlu0 %651, %v561
  %v653 = vpop.permute.xlu0 %652
  %656 = vset.pattern.permute.xlu0 0
  %657 = vperm.xlu0 %656, %v562
  %v658 = vpop.permute.xlu0 %657
  %661 = vset.pattern.permute.xlu0 0
  %662 = vperm.xlu0 %661, %v563
  %v663 = vpop.permute.xlu0 %662
  %666 = vset.pattern.permute.xlu0 0
  %667 = vperm.xlu0 %666, %v564
  %v668 = vpop.permute.xlu0 %667
  %671 = vset.pattern.permute.xlu0 0
  %672 = vperm.xlu0 %671, %v565
  %v673 = vpop.permute.xlu0 %672
  %676 = vset.pattern.permute.xlu0 0
  %677 = vperm.xlu0 %676, %v566
  %v678 = vpop.permute.xlu0 %677
  %681 = vset.pattern.permute.xlu0 0
  %682 = vperm.xlu0 %681, %v567
  %v683 = vpop.permute.xlu0 %682
  %686 = vset.pattern.permute.xlu0 0
  %687 = vperm.xlu0 %686, %v568
  %v688 = vpop.permute.xlu0 %687
  %691 = vset.pattern.permute.xlu0 0
  %692 = vperm.xlu0 %691, %v569
  %v693 = vpop.permute.xlu0 %692
  %696 = vset.pattern.permute.xlu0 0
  %697 = vperm.xlu0 %696, %v570
  %v698 = vpop.permute.xlu0 %697
  %701 = vset.pattern.permute.xlu0 0
  %702 = vperm.xlu0 %701, %v571
  %v703 = vpop.permute.xlu0 %702
  %706 = vset.pattern.permute.xlu0 0
  %707 = vperm.xlu0 %706, %v572
  %v708 = vpop.permute.xlu0 %707
  %711 = vset.pattern.permute.xlu0 0
  %712 = vperm.xlu0 %711, %v573
  %v713 = vpop.permute.xlu0 %712
  %716 = vset.pattern.permute.xlu0 0
  %717 = vperm.xlu0 %716, %v574
  %v718 = vpop.permute.xlu0 %717
  %721 = vset.pattern.permute.xlu0 0
  %722 = vperm.xlu0 %721, %v575
  %v723 = vpop.permute.xlu0 %722
  %726 = vset.pattern.permute.xlu0 0
  %727 = vperm.xlu0 %726, %v576
  %v728 = vpop.permute.xlu0 %727
  %731 = vset.pattern.permute.xlu0 0
  %732 = vperm.xlu0 %731, %v577
  %v733 = vpop.permute.xlu0 %732
  %736 = vset.pattern.permute.xlu0 0
  %737 = vperm.xlu0 %736, %v578
  %v738 = vpop.permute.xlu0 %737
  %741 = vset.pattern.permute.xlu0 0
  %742 = vperm.xlu0 %741, %v579
  %v743 = vpop.permute.xlu0 %742
  %746 = vset.pattern.permute.xlu0 0
  %747 = vperm.xlu0 %746, %v580
  %v748 = vpop.permute.xlu0 %747
  %751 = vset.pattern.permute.xlu0 0
  %752 = vperm.xlu0 %751, %v581
  %v753 = vpop.permute.xlu0 %752
  %756 = vset.pattern.permute.xlu0 0
  %757 = vperm.xlu0 %756, %v582
  %v758 = vpop.permute.xlu0 %757
  %761 = vset.pattern.permute.xlu0 0
  %762 = vperm.xlu0 %761, %v583
  %v763 = vpop.permute.xlu0 %762
  %766 = vset.pattern.permute.xlu0 0
  %767 = vperm.xlu0 %766, %v584
  %v768 = vpop.permute.xlu0 %767
  %771 = vset.pattern.permute.xlu0 0
  %772 = vperm.xlu0 %771, %v585
  %v773 = vpop.permute.xlu0 %772
  %776 = vset.pattern.permute.xlu0 0
  %777 = vperm.xlu0 %776, %v586
  %v778 = vpop.permute.xlu0 %777
  %781 = vset.pattern.permute.xlu0 0
  %782 = vperm.xlu0 %781, %v587
  %v783 = vpop.permute.xlu0 %782
  %786 = vset.pattern.permute.xlu0 0
  %787 = vperm.xlu0 %786, %v588
  %v788 = vpop.permute.xlu0 %787
  %791 = vset.pattern.permute.xlu0 0
  %792 = vperm.xlu0 %791, %v589
  %v793 = vpop.permute.xlu0 %792
  %796 = vset.pattern.permute.xlu0 0
  %797 = vperm.xlu0 %796, %v590
  %v798 = vpop.permute.xlu0 %797
  %801 = vset.pattern.permute.xlu0 0
  %802 = vperm.xlu0 %801, %v591
  %v803 = vpop.permute.xlu0 %802
  %806 = vset.pattern.permute.xlu0 0
  %807 = vperm.xlu0 %806, %v592
  %v808 = vpop.permute.xlu0 %807
  %811 = vset.pattern.permute.xlu0 0
  %812 = vperm.xlu0 %811, %v593
  %v813 = vpop.permute.xlu0 %812
  %816 = vset.pattern.permute.xlu0 0
  %817 = vperm.xlu0 %816, %v594
  %v818 = vpop.permute.xlu0 %817
  %821 = vset.pattern.permute.xlu0 0
  %822 = vperm.xlu0 %821, %v595
  %v823 = vpop.permute.xlu0 %822
  %826 = vset.pattern.permute.xlu0 0
  %827 = vperm.xlu0 %826, %v596
  %v828 = vpop.permute.xlu0 %827
  %831 = vset.pattern.permute.xlu0 0
  %832 = vperm.xlu0 %831, %v597
  %v833 = vpop.permute.xlu0 %832
  %836 = vset.pattern.permute.xlu0 0
  %837 = vperm.xlu0 %836, %v598
  %v838 = vpop.permute.xlu0 %837
  %841 = vset.pattern.permute.xlu0 0
  %842 = vperm.xlu0 %841, %v599
  %v843 = vpop.permute.xlu0 %842
  %846 = vset.pattern.permute.xlu0 0
  %847 = vperm.xlu0 %846, %v600
  %v848 = vpop.permute.xlu0 %847
  %851 = vset.pattern.permute.xlu0 0
  %852 = vperm.xlu0 %851, %v601
  %v853 = vpop.permute.xlu0 %852
  %856 = vset.pattern.permute.xlu0 0
  %857 = vperm.xlu0 %856, %v602
  %v858 = vpop.permute.xlu0 %857
  %861 = vset.pattern.permute.xlu0 0
  %862 = vperm.xlu0 %861, %v603
  %v863 = vpop.permute.xlu0 %862
  %866 = vset.pattern.permute.xlu0 0
  %867 = vperm.xlu0 %866, %v604
  %v868 = vpop.permute.xlu0 %867
  %871 = vset.pattern.permute.xlu0 0
  %872 = vperm.xlu0 %871, %v605
  %v873 = vpop.permute.xlu0 %872
  %876 = vset.pattern.permute.xlu0 0
  %877 = vperm.xlu0 %876, %v606
  %v878 = vpop.permute.xlu0 %877
  %881 = vset.pattern.permute.xlu0 0
  %882 = vperm.xlu0 %881, %v607
  %v883 = vpop.permute.xlu0 %882
  %886 = vset.pattern.permute.xlu0 0
  %887 = vperm.xlu0 %886, %v608
  %v888 = vpop.permute.xlu0 %887
  %891 = vset.pattern.permute.xlu0 0
  %892 = vperm.xlu0 %891, %v609
  %v893 = vpop.permute.xlu0 %892
  %896 = vset.pattern.permute.xlu0 0
  %897 = vperm.xlu0 %896, %v610
  %v898 = vpop.permute.xlu0 %897
  %901 = vset.pattern.permute.xlu0 0
  %902 = vperm.xlu0 %901, %v611
  %v903 = vpop.permute.xlu0 %902
  %906 = vset.pattern.permute.xlu0 0
  %907 = vperm.xlu0 %906, %v612
  %v908 = vpop.permute.xlu0 %907
  %911 = vset.pattern.permute.xlu0 0
  %912 = vperm.xlu0 %911, %v613
  %v913 = vpop.permute.xlu0 %912
  %916 = vset.pattern.permute.xlu0 0
  %917 = vperm.xlu0 %916, %v614
  %v918 = vpop.permute.xlu0 %917
  %921 = vset.pattern.permute.xlu0 0
  %922 = vperm.xlu0 %921, %v615
  %v923 = vpop.permute.xlu0 %922
  %926 = vset.pattern.permute.xlu0 0
  %927 = vperm.xlu0 %926, %v616
  %v928 = vpop.permute.xlu0 %927
  %931 = vset.pattern.permute.xlu0 0
  %932 = vperm.xlu0 %931, %v617
  %v933 = vpop.permute.xlu0 %932
  %936 = vset.pattern.permute.xlu0 0
  %937 = vperm.xlu0 %936, %v618
  %v938 = vpop.permute.xlu0 %937
  %v940 = vlaneseq
  %v941 = vshrl.u32 %v940, 7
  %v942 = vsub.s32 0, %v941
  %v943 = vrot.slane %v619, %v942
  %v944 = vmul.f32 %v623, %v943
  %v945 = vmul.f32 %v628, %v943
  %v946 = vmul.f32 %v633, %v943
  %v947 = vmul.f32 %v638, %v943
  %v948 = vmul.f32 %v643, %v943
  %v949 = vmul.f32 %v648, %v943
  %v950 = vmul.f32 %v653, %v943
  %v951 = vmul.f32 %v658, %v943
  %v952 = vmul.f32 %v663, %v943
  %v953 = vmul.f32 %v668, %v943
  %v954 = vmul.f32 %v673, %v943
  %v955 = vmul.f32 %v678, %v943
  %v956 = vmul.f32 %v683, %v943
  %v957 = vmul.f32 %v688, %v943
  %v958 = vmul.f32 %v693, %v943
  %v959 = vmul.f32 %v698, %v943
  %v960 = vmul.f32 %v703, %v943
  %v961 = vmul.f32 %v708, %v943
  %v962 = vmul.f32 %v713, %v943
  %v963 = vmul.f32 %v718, %v943
  %v964 = vmul.f32 %v723, %v943
  %v965 = vmul.f32 %v728, %v943
  %v966 = vmul.f32 %v733, %v943
  %v967 = vmul.f32 %v738, %v943
  %v968 = vmul.f32 %v743, %v943
  %v969 = vmul.f32 %v748, %v943
  %v970 = vmul.f32 %v753, %v943
  %v971 = vmul.f32 %v758, %v943
  %v972 = vmul.f32 %v763, %v943
  %v973 = vmul.f32 %v768, %v943
  %v974 = vmul.f32 %v773, %v943
  %v975 = vmul.f32 %v778, %v943
  %v976 = vmul.f32 %v783, %v943
  %v977 = vmul.f32 %v788, %v943
  %v978 = vmul.f32 %v793, %v943
  %v979 = vmul.f32 %v798, %v943
  %v980 = vmul.f32 %v803, %v943
  %v981 = vmul.f32 %v808, %v943
  %v982 = vmul.f32 %v813, %v943
  %v983 = vmul.f32 %v818, %v943
  %v984 = vmul.f32 %v823, %v943
  %v985 = vmul.f32 %v828, %v943
  %v986 = vmul.f32 %v833, %v943
  %v987 = vmul.f32 %v838, %v943
  %v988 = vmul.f32 %v843, %v943
  %v989 = vmul.f32 %v848, %v943
  %v990 = vmul.f32 %v853, %v943
  %v991 = vmul.f32 %v858, %v943
  %v992 = vmul.f32 %v863, %v943
  %v993 = vmul.f32 %v868, %v943
  %v994 = vmul.f32 %v873, %v943
  %v995 = vmul.f32 %v878, %v943
  %v996 = vmul.f32 %v883, %v943
  %v997 = vmul.f32 %v888, %v943
  %v998 = vmul.f32 %v893, %v943
  %v999 = vmul.f32 %v898, %v943
  %v1000 = vmul.f32 %v903, %v943
  %v1001 = vmul.f32 %v908, %v943
  %v1002 = vmul.f32 %v913, %v943
  %v1003 = vmul.f32 %v918, %v943
  %v1004 = vmul.f32 %v923, %v943
  %v1005 = vmul.f32 %v928, %v943
  %v1006 = vmul.f32 %v933, %v943
  %v1007 = vmul.f32 %v938, %v943
  %v1008 = vadd.f32 %v491, %v944
  %v1009 = vadd.f32 %v492, %v945
  %v1010 = vadd.f32 %v493, %v946
  %v1011 = vadd.f32 %v494, %v947
  %v1012 = vadd.f32 %v495, %v948
  %v1013 = vadd.f32 %v496, %v949
  %v1014 = vadd.f32 %v497, %v950
  %v1015 = vadd.f32 %v498, %v951
  %v1016 = vadd.f32 %v499, %v952
  %v1017 = vadd.f32 %v500, %v953
  %v1018 = vadd.f32 %v501, %v954
  %v1019 = vadd.f32 %v502, %v955
  %v1020 = vadd.f32 %v503, %v956
  %v1021 = vadd.f32 %v504, %v957
  %v1022 = vadd.f32 %v505, %v958
  %v1023 = vadd.f32 %v506, %v959
  %v1024 = vadd.f32 %v507, %v960
  %v1025 = vadd.f32 %v508, %v961
  %v1026 = vadd.f32 %v509, %v962
  %v1027 = vadd.f32 %v510, %v963
  %v1028 = vadd.f32 %v511, %v964
  %v1029 = vadd.f32 %v512, %v965
  %v1030 = vadd.f32 %v513, %v966
  %v1031 = vadd.f32 %v514, %v967
  %v1032 = vadd.f32 %v515, %v968
  %v1033 = vadd.f32 %v516, %v969
  %v1034 = vadd.f32 %v517, %v970
  %v1035 = vadd.f32 %v518, %v971
  %v1036 = vadd.f32 %v519, %v972
  %v1037 = vadd.f32 %v520, %v973
  %v1038 = vadd.f32 %v521, %v974
  %v1039 = vadd.f32 %v522, %v975
  %v1040 = vadd.f32 %v523, %v976
  %v1041 = vadd.f32 %v524, %v977
  %v1042 = vadd.f32 %v525, %v978
  %v1043 = vadd.f32 %v526, %v979
  %v1044 = vadd.f32 %v527, %v980
  %v1045 = vadd.f32 %v528, %v981
  %v1046 = vadd.f32 %v529, %v982
  %v1047 = vadd.f32 %v530, %v983
  %v1048 = vadd.f32 %v531, %v984
  %v1049 = vadd.f32 %v532, %v985
  %v1050 = vadd.f32 %v533, %v986
  %v1051 = vadd.f32 %v534, %v987
  %v1052 = vadd.f32 %v535, %v988
  %v1053 = vadd.f32 %v536, %v989
  %v1054 = vadd.f32 %v537, %v990
  %v1055 = vadd.f32 %v538, %v991
  %v1056 = vadd.f32 %v539, %v992
  %v1057 = vadd.f32 %v540, %v993
  %v1058 = vadd.f32 %v541, %v994
  %v1059 = vadd.f32 %v542, %v995
  %v1060 = vadd.f32 %v543, %v996
  %v1061 = vadd.f32 %v544, %v997
  %v1062 = vadd.f32 %v545, %v998
  %v1063 = vadd.f32 %v546, %v999
  %v1064 = vadd.f32 %v547, %v1000
  %v1065 = vadd.f32 %v548, %v1001
  %v1066 = vadd.f32 %v549, %v1002
  %v1067 = vadd.f32 %v550, %v1003
  %v1068 = vadd.f32 %v551, %v1004
  %v1069 = vadd.f32 %v552, %v1005
  %v1070 = vadd.f32 %v553, %v1006
  %v1071 = vadd.f32 %v554, %v1007
  %v1072 = vld [vmem:[%s0 + $0x2] sm:$0xff]
  %v1073 = vld [vmem:[%s0 + $0x12] sm:$0xff]
  %v1074 = vld [vmem:[%s0 + $0x22] sm:$0xff]
  %v1075 = vld [vmem:[%s0 + $0x32] sm:$0xff]
  %v1076 = vld [vmem:[%s0 + $0x42] sm:$0xff]
  %v1077 = vld [vmem:[%s0 + $0x52] sm:$0xff]
  %v1078 = vld [vmem:[%s0 + $0x62] sm:$0xff]
  %v1079 = vld [vmem:[%s0 + $0x72] sm:$0xff]
  %v1080 = vld [vmem:[%s0 + $0xa2] sm:$0xff]
  %v1081 = vld [vmem:[%s0 + $0xb2] sm:$0xff]
  %v1082 = vld [vmem:[%s0 + $0xc2] sm:$0xff]
  %v1083 = vld [vmem:[%s0 + $0xd2] sm:$0xff]
  %v1084 = vld [vmem:[%s0 + $0xe2] sm:$0xff]
  %v1085 = vld [vmem:[%s0 + $0xf2] sm:$0xff]
  %v1086 = vld [vmem:[%s0 + $0x102] sm:$0xff]
  %v1087 = vld [vmem:[%s0 + $0x112] sm:$0xff]
  %v1088 = vld [vmem:[%s0 + $0x142] sm:$0xff]
  %v1089 = vld [vmem:[%s0 + $0x152] sm:$0xff]
  %v1090 = vld [vmem:[%s0 + $0x162] sm:$0xff]
  %v1091 = vld [vmem:[%s0 + $0x172] sm:$0xff]
  %v1092 = vld [vmem:[%s0 + $0x182] sm:$0xff]
  %v1093 = vld [vmem:[%s0 + $0x192] sm:$0xff]
  %v1094 = vld [vmem:[%s0 + $0x1a2] sm:$0xff]
  %v1095 = vld [vmem:[%s0 + $0x1b2] sm:$0xff]
  %v1096 = vld [vmem:[%s0 + $0x1e2] sm:$0xff]
  %v1097 = vld [vmem:[%s0 + $0x1f2] sm:$0xff]
  %v1098 = vld [vmem:[%s0 + $0x202] sm:$0xff]
  %v1099 = vld [vmem:[%s0 + $0x212] sm:$0xff]
  %v1100 = vld [vmem:[%s0 + $0x222] sm:$0xff]
  %v1101 = vld [vmem:[%s0 + $0x232] sm:$0xff]
  %v1102 = vld [vmem:[%s0 + $0x242] sm:$0xff]
  %v1103 = vld [vmem:[%s0 + $0x252] sm:$0xff]
  %v1104 = vld [vmem:[%s0 + $0x282] sm:$0xff]
  %v1105 = vld [vmem:[%s0 + $0x292] sm:$0xff]
  %v1106 = vld [vmem:[%s0 + $0x2a2] sm:$0xff]
  %v1107 = vld [vmem:[%s0 + $0x2b2] sm:$0xff]
  %v1108 = vld [vmem:[%s0 + $0x2c2] sm:$0xff]
  %v1109 = vld [vmem:[%s0 + $0x2d2] sm:$0xff]
  %v1110 = vld [vmem:[%s0 + $0x2e2] sm:$0xff]
  %v1111 = vld [vmem:[%s0 + $0x2f2] sm:$0xff]
  %v1112 = vld [vmem:[%s0 + $0x322] sm:$0xff]
  %v1113 = vld [vmem:[%s0 + $0x332] sm:$0xff]
  %v1114 = vld [vmem:[%s0 + $0x342] sm:$0xff]
  %v1115 = vld [vmem:[%s0 + $0x352] sm:$0xff]
  %v1116 = vld [vmem:[%s0 + $0x362] sm:$0xff]
  %v1117 = vld [vmem:[%s0 + $0x372] sm:$0xff]
  %v1118 = vld [vmem:[%s0 + $0x382] sm:$0xff]
  %v1119 = vld [vmem:[%s0 + $0x392] sm:$0xff]
  %v1120 = vld [vmem:[%s0 + $0x3c2] sm:$0xff]
  %v1121 = vld [vmem:[%s0 + $0x3d2] sm:$0xff]
  %v1122 = vld [vmem:[%s0 + $0x3e2] sm:$0xff]
  %v1123 = vld [vmem:[%s0 + $0x3f2] sm:$0xff]
  %v1124 = vld [vmem:[%s0 + $0x402] sm:$0xff]
  %v1125 = vld [vmem:[%s0 + $0x412] sm:$0xff]
  %v1126 = vld [vmem:[%s0 + $0x422] sm:$0xff]
  %v1127 = vld [vmem:[%s0 + $0x432] sm:$0xff]
  %v1128 = vld [vmem:[%s0 + $0x462] sm:$0xff]
  %v1129 = vld [vmem:[%s0 + $0x472] sm:$0xff]
  %v1130 = vld [vmem:[%s0 + $0x482] sm:$0xff]
  %v1131 = vld [vmem:[%s0 + $0x492] sm:$0xff]
  %v1132 = vld [vmem:[%s0 + $0x4a2] sm:$0xff]
  %v1133 = vld [vmem:[%s0 + $0x4b2] sm:$0xff]
  %v1134 = vld [vmem:[%s0 + $0x4c2] sm:$0xff]
  %v1135 = vld [vmem:[%s0 + $0x4d2] sm:$0xff]
  %v1136 = vld [vmem:[%s1 + $0x2] sm:$0x1]
  %1138 = vset.pattern.permute.xlu0 0
  %1139 = vperm.xlu0 %1138, %v1072
  %v1140 = vpop.permute.xlu0 %1139
  %1143 = vset.pattern.permute.xlu0 0
  %1144 = vperm.xlu0 %1143, %v1073
  %v1145 = vpop.permute.xlu0 %1144
  %1148 = vset.pattern.permute.xlu0 0
  %1149 = vperm.xlu0 %1148, %v1074
  %v1150 = vpop.permute.xlu0 %1149
  %1153 = vset.pattern.permute.xlu0 0
  %1154 = vperm.xlu0 %1153, %v1075
  %v1155 = vpop.permute.xlu0 %1154
  %1158 = vset.pattern.permute.xlu0 0
  %1159 = vperm.xlu0 %1158, %v1076
  %v1160 = vpop.permute.xlu0 %1159
  %1163 = vset.pattern.permute.xlu0 0
  %1164 = vperm.xlu0 %1163, %v1077
  %v1165 = vpop.permute.xlu0 %1164
  %1168 = vset.pattern.permute.xlu0 0
  %1169 = vperm.xlu0 %1168, %v1078
  %v1170 = vpop.permute.xlu0 %1169
  %1173 = vset.pattern.permute.xlu0 0
  %1174 = vperm.xlu0 %1173, %v1079
  %v1175 = vpop.permute.xlu0 %1174
  %1178 = vset.pattern.permute.xlu0 0
  %1179 = vperm.xlu0 %1178, %v1080
  %v1180 = vpop.permute.xlu0 %1179
  %1183 = vset.pattern.permute.xlu0 0
  %1184 = vperm.xlu0 %1183, %v1081
  %v1185 = vpop.permute.xlu0 %1184
  %1188 = vset.pattern.permute.xlu0 0
  %1189 = vperm.xlu0 %1188, %v1082
  %v1190 = vpop.permute.xlu0 %1189
  %1193 = vset.pattern.permute.xlu0 0
  %1194 = vperm.xlu0 %1193, %v1083
  %v1195 = vpop.permute.xlu0 %1194
  %1198 = vset.pattern.permute.xlu0 0
  %1199 = vperm.xlu0 %1198, %v1084
  %v1200 = vpop.permute.xlu0 %1199
  %1203 = vset.pattern.permute.xlu0 0
  %1204 = vperm.xlu0 %1203, %v1085
  %v1205 = vpop.permute.xlu0 %1204
  %1208 = vset.pattern.permute.xlu0 0
  %1209 = vperm.xlu0 %1208, %v1086
  %v1210 = vpop.permute.xlu0 %1209
  %1213 = vset.pattern.permute.xlu0 0
  %1214 = vperm.xlu0 %1213, %v1087
  %v1215 = vpop.permute.xlu0 %1214
  %1218 = vset.pattern.permute.xlu0 0
  %1219 = vperm.xlu0 %1218, %v1088
  %v1220 = vpop.permute.xlu0 %1219
  %1223 = vset.pattern.permute.xlu0 0
  %1224 = vperm.xlu0 %1223, %v1089
  %v1225 = vpop.permute.xlu0 %1224
  %1228 = vset.pattern.permute.xlu0 0
  %1229 = vperm.xlu0 %1228, %v1090
  %v1230 = vpop.permute.xlu0 %1229
  %1233 = vset.pattern.permute.xlu0 0
  %1234 = vperm.xlu0 %1233, %v1091
  %v1235 = vpop.permute.xlu0 %1234
  %1238 = vset.pattern.permute.xlu0 0
  %1239 = vperm.xlu0 %1238, %v1092
  %v1240 = vpop.permute.xlu0 %1239
  %1243 = vset.pattern.permute.xlu0 0
  %1244 = vperm.xlu0 %1243, %v1093
  %v1245 = vpop.permute.xlu0 %1244
  %1248 = vset.pattern.permute.xlu0 0
  %1249 = vperm.xlu0 %1248, %v1094
  %v1250 = vpop.permute.xlu0 %1249
  %1253 = vset.pattern.permute.xlu0 0
  %1254 = vperm.xlu0 %1253, %v1095
  %v1255 = vpop.permute.xlu0 %1254
  %1258 = vset.pattern.permute.xlu0 0
  %1259 = vperm.xlu0 %1258, %v1096
  %v1260 = vpop.permute.xlu0 %1259
  %1263 = vset.pattern.permute.xlu0 0
  %1264 = vperm.xlu0 %1263, %v1097
  %v1265 = vpop.permute.xlu0 %1264
  %1268 = vset.pattern.permute.xlu0 0
  %1269 = vperm.xlu0 %1268, %v1098
  %v1270 = vpop.permute.xlu0 %1269
  %1273 = vset.pattern.permute.xlu0 0
  %1274 = vperm.xlu0 %1273, %v1099
  %v1275 = vpop.permute.xlu0 %1274
  %1278 = vset.pattern.permute.xlu0 0
  %1279 = vperm.xlu0 %1278, %v1100
  %v1280 = vpop.permute.xlu0 %1279
  %1283 = vset.pattern.permute.xlu0 0
  %1284 = vperm.xlu0 %1283, %v1101
  %v1285 = vpop.permute.xlu0 %1284
  %1288 = vset.pattern.permute.xlu0 0
  %1289 = vperm.xlu0 %1288, %v1102
  %v1290 = vpop.permute.xlu0 %1289
  %1293 = vset.pattern.permute.xlu0 0
  %1294 = vperm.xlu0 %1293, %v1103
  %v1295 = vpop.permute.xlu0 %1294
  %1298 = vset.pattern.permute.xlu0 0
  %1299 = vperm.xlu0 %1298, %v1104
  %v1300 = vpop.permute.xlu0 %1299
  %1303 = vset.pattern.permute.xlu0 0
  %1304 = vperm.xlu0 %1303, %v1105
  %v1305 = vpop.permute.xlu0 %1304
  %1308 = vset.pattern.permute.xlu0 0
  %1309 = vperm.xlu0 %1308, %v1106
  %v1310 = vpop.permute.xlu0 %1309
  %1313 = vset.pattern.permute.xlu0 0
  %1314 = vperm.xlu0 %1313, %v1107
  %v1315 = vpop.permute.xlu0 %1314
  %1318 = vset.pattern.permute.xlu0 0
  %1319 = vperm.xlu0 %1318, %v1108
  %v1320 = vpop.permute.xlu0 %1319
  %1323 = vset.pattern.permute.xlu0 0
  %1324 = vperm.xlu0 %1323, %v1109
  %v1325 = vpop.permute.xlu0 %1324
  %1328 = vset.pattern.permute.xlu0 0
  %1329 = vperm.xlu0 %1328, %v1110
  %v1330 = vpop.permute.xlu0 %1329
  %1333 = vset.pattern.permute.xlu0 0
  %1334 = vperm.xlu0 %1333, %v1111
  %v1335 = vpop.permute.xlu0 %1334
  %1338 = vset.pattern.permute.xlu0 0
  %1339 = vperm.xlu0 %1338, %v1112
  %v1340 = vpop.permute.xlu0 %1339
  %1343 = vset.pattern.permute.xlu0 0
  %1344 = vperm.xlu0 %1343, %v1113
  %v1345 = vpop.permute.xlu0 %1344
  %1348 = vset.pattern.permute.xlu0 0
  %1349 = vperm.xlu0 %1348, %v1114
  %v1350 = vpop.permute.xlu0 %1349
  %1353 = vset.pattern.permute.xlu0 0
  %1354 = vperm.xlu0 %1353, %v1115
  %v1355 = vpop.permute.xlu0 %1354
  %1358 = vset.pattern.permute.xlu0 0
  %1359 = vperm.xlu0 %1358, %v1116
  %v1360 = vpop.permute.xlu0 %1359
  %1363 = vset.pattern.permute.xlu0 0
  %1364 = vperm.xlu0 %1363, %v1117
  %v1365 = vpop.permute.xlu0 %1364
  %1368 = vset.pattern.permute.xlu0 0
  %1369 = vperm.xlu0 %1368, %v1118
  %v1370 = vpop.permute.xlu0 %1369
  %1373 = vset.pattern.permute.xlu0 0
  %1374 = vperm.xlu0 %1373, %v1119
  %v1375 = vpop.permute.xlu0 %1374
  %1378 = vset.pattern.permute.xlu0 0
  %1379 = vperm.xlu0 %1378, %v1120
  %v1380 = vpop.permute.xlu0 %1379
  %1383 = vset.pattern.permute.xlu0 0
  %1384 = vperm.xlu0 %1383, %v1121
  %v1385 = vpop.permute.xlu0 %1384
  %1388 = vset.pattern.permute.xlu0 0
  %1389 = vperm.xlu0 %1388, %v1122
  %v1390 = vpop.permute.xlu0 %1389
  %1393 = vset.pattern.permute.xlu0 0
  %1394 = vperm.xlu0 %1393, %v1123
  %v1395 = vpop.permute.xlu0 %1394
  %1398 = vset.pattern.permute.xlu0 0
  %1399 = vperm.xlu0 %1398, %v1124
  %v1400 = vpop.permute.xlu0 %1399
  %1403 = vset.pattern.permute.xlu0 0
  %1404 = vperm.xlu0 %1403, %v1125
  %v1405 = vpop.permute.xlu0 %1404
  %1408 = vset.pattern.permute.xlu0 0
  %1409 = vperm.xlu0 %1408, %v1126
  %v1410 = vpop.permute.xlu0 %1409
  %1413 = vset.pattern.permute.xlu0 0
  %1414 = vperm.xlu0 %1413, %v1127
  %v1415 = vpop.permute.xlu0 %1414
  %1418 = vset.pattern.permute.xlu0 0
  %1419 = vperm.xlu0 %1418, %v1128
  %v1420 = vpop.permute.xlu0 %1419
  %1423 = vset.pattern.permute.xlu0 0
  %1424 = vperm.xlu0 %1423, %v1129
  %v1425 = vpop.permute.xlu0 %1424
  %1428 = vset.pattern.permute.xlu0 0
  %1429 = vperm.xlu0 %1428, %v1130
  %v1430 = vpop.permute.xlu0 %1429
  %1433 = vset.pattern.permute.xlu0 0
  %1434 = vperm.xlu0 %1433, %v1131
  %v1435 = vpop.permute.xlu0 %1434
  %1438 = vset.pattern.permute.xlu0 0
  %1439 = vperm.xlu0 %1438, %v1132
  %v1440 = vpop.permute.xlu0 %1439
  %1443 = vset.pattern.permute.xlu0 0
  %1444 = vperm.xlu0 %1443, %v1133
  %v1445 = vpop.permute.xlu0 %1444
  %1448 = vset.pattern.permute.xlu0 0
  %1449 = vperm.xlu0 %1448, %v1134
  %v1450 = vpop.permute.xlu0 %1449
  %1453 = vset.pattern.permute.xlu0 0
  %1454 = vperm.xlu0 %1453, %v1135
  %v1455 = vpop.permute.xlu0 %1454
  %v1457 = vlaneseq
  %v1458 = vshrl.u32 %v1457, 7
  %v1459 = vsub.s32 0, %v1458
  %v1460 = vrot.slane %v1136, %v1459
  %v1461 = vmul.f32 %v1140, %v1460
  %v1462 = vmul.f32 %v1145, %v1460
  %v1463 = vmul.f32 %v1150, %v1460
  %v1464 = vmul.f32 %v1155, %v1460
  %v1465 = vmul.f32 %v1160, %v1460
  %v1466 = vmul.f32 %v1165, %v1460
  %v1467 = vmul.f32 %v1170, %v1460
  %v1468 = vmul.f32 %v1175, %v1460
  %v1469 = vmul.f32 %v1180, %v1460
  %v1470 = vmul.f32 %v1185, %v1460
  %v1471 = vmul.f32 %v1190, %v1460
  %v1472 = vmul.f32 %v1195, %v1460
  %v1473 = vmul.f32 %v1200, %v1460
  %v1474 = vmul.f32 %v1205, %v1460
  %v1475 = vmul.f32 %v1210, %v1460
  %v1476 = vmul.f32 %v1215, %v1460
  %v1477 = vmul.f32 %v1220, %v1460
  %v1478 = vmul.f32 %v1225, %v1460
  %v1479 = vmul.f32 %v1230, %v1460
  %v1480 = vmul.f32 %v1235, %v1460
  %v1481 = vmul.f32 %v1240, %v1460
  %v1482 = vmul.f32 %v1245, %v1460
  %v1483 = vmul.f32 %v1250, %v1460
  %v1484 = vmul.f32 %v1255, %v1460
  %v1485 = vmul.f32 %v1260, %v1460
  %v1486 = vmul.f32 %v1265, %v1460
  %v1487 = vmul.f32 %v1270, %v1460
  %v1488 = vmul.f32 %v1275, %v1460
  %v1489 = vmul.f32 %v1280, %v1460
  %v1490 = vmul.f32 %v1285, %v1460
  %v1491 = vmul.f32 %v1290, %v1460
  %v1492 = vmul.f32 %v1295, %v1460
  %v1493 = vmul.f32 %v1300, %v1460
  %v1494 = vmul.f32 %v1305, %v1460
  %v1495 = vmul.f32 %v1310, %v1460
  %v1496 = vmul.f32 %v1315, %v1460
  %v1497 = vmul.f32 %v1320, %v1460
  %v1498 = vmul.f32 %v1325, %v1460
  %v1499 = vmul.f32 %v1330, %v1460
  %v1500 = vmul.f32 %v1335, %v1460
  %v1501 = vmul.f32 %v1340, %v1460
  %v1502 = vmul.f32 %v1345, %v1460
  %v1503 = vmul.f32 %v1350, %v1460
  %v1504 = vmul.f32 %v1355, %v1460
  %v1505 = vmul.f32 %v1360, %v1460
  %v1506 = vmul.f32 %v1365, %v1460
  %v1507 = vmul.f32 %v1370, %v1460
  %v1508 = vmul.f32 %v1375, %v1460
  %v1509 = vmul.f32 %v1380, %v1460
  %v1510 = vmul.f32 %v1385, %v1460
  %v1511 = vmul.f32 %v1390, %v1460
  %v1512 = vmul.f32 %v1395, %v1460
  %v1513 = vmul.f32 %v1400, %v1460
  %v1514 = vmul.f32 %v1405, %v1460
  %v1515 = vmul.f32 %v1410, %v1460
  %v1516 = vmul.f32 %v1415, %v1460
  %v1517 = vmul.f32 %v1420, %v1460
  %v1518 = vmul.f32 %v1425, %v1460
  %v1519 = vmul.f32 %v1430, %v1460
  %v1520 = vmul.f32 %v1435, %v1460
  %v1521 = vmul.f32 %v1440, %v1460
  %v1522 = vmul.f32 %v1445, %v1460
  %v1523 = vmul.f32 %v1450, %v1460
  %v1524 = vmul.f32 %v1455, %v1460
  %v1525 = vadd.f32 %v1008, %v1461
  %v1526 = vadd.f32 %v1009, %v1462
  %v1527 = vadd.f32 %v1010, %v1463
  %v1528 = vadd.f32 %v1011, %v1464
  %v1529 = vadd.f32 %v1012, %v1465
  %v1530 = vadd.f32 %v1013, %v1466
  %v1531 = vadd.f32 %v1014, %v1467
  %v1532 = vadd.f32 %v1015, %v1468
  %v1533 = vadd.f32 %v1016, %v1469
  %v1534 = vadd.f32 %v1017, %v1470
  %v1535 = vadd.f32 %v1018, %v1471
  %v1536 = vadd.f32 %v1019, %v1472
  %v1537 = vadd.f32 %v1020, %v1473
  %v1538 = vadd.f32 %v1021, %v1474
  %v1539 = vadd.f32 %v1022, %v1475
  %v1540 = vadd.f32 %v1023, %v1476
  %v1541 = vadd.f32 %v1024, %v1477
  %v1542 = vadd.f32 %v1025, %v1478
  %v1543 = vadd.f32 %v1026, %v1479
  %v1544 = vadd.f32 %v1027, %v1480
  %v1545 = vadd.f32 %v1028, %v1481
  %v1546 = vadd.f32 %v1029, %v1482
  %v1547 = vadd.f32 %v1030, %v1483
  %v1548 = vadd.f32 %v1031, %v1484
  %v1549 = vadd.f32 %v1032, %v1485
  %v1550 = vadd.f32 %v1033, %v1486
  %v1551 = vadd.f32 %v1034, %v1487
  %v1552 = vadd.f32 %v1035, %v1488
  %v1553 = vadd.f32 %v1036, %v1489
  %v1554 = vadd.f32 %v1037, %v1490
  %v1555 = vadd.f32 %v1038, %v1491
  %v1556 = vadd.f32 %v1039, %v1492
  %v1557 = vadd.f32 %v1040, %v1493
  %v1558 = vadd.f32 %v1041, %v1494
  %v1559 = vadd.f32 %v1042, %v1495
  %v1560 = vadd.f32 %v1043, %v1496
  %v1561 = vadd.f32 %v1044, %v1497
  %v1562 = vadd.f32 %v1045, %v1498
  %v1563 = vadd.f32 %v1046, %v1499
  %v1564 = vadd.f32 %v1047, %v1500
  %v1565 = vadd.f32 %v1048, %v1501
  %v1566 = vadd.f32 %v1049, %v1502
  %v1567 = vadd.f32 %v1050, %v1503
  %v1568 = vadd.f32 %v1051, %v1504
  %v1569 = vadd.f32 %v1052, %v1505
  %v1570 = vadd.f32 %v1053, %v1506
  %v1571 = vadd.f32 %v1054, %v1507
  %v1572 = vadd.f32 %v1055, %v1508
  %v1573 = vadd.f32 %v1056, %v1509
  %v1574 = vadd.f32 %v1057, %v1510
  %v1575 = vadd.f32 %v1058, %v1511
  %v1576 = vadd.f32 %v1059, %v1512
  %v1577 = vadd.f32 %v1060, %v1513
  %v1578 = vadd.f32 %v1061, %v1514
  %v1579 = vadd.f32 %v1062, %v1515
  %v1580 = vadd.f32 %v1063, %v1516
  %v1581 = vadd.f32 %v1064, %v1517
  %v1582 = vadd.f32 %v1065, %v1518
  %v1583 = vadd.f32 %v1066, %v1519
  %v1584 = vadd.f32 %v1067, %v1520
  %v1585 = vadd.f32 %v1068, %v1521
  %v1586 = vadd.f32 %v1069, %v1522
  %v1587 = vadd.f32 %v1070, %v1523
  %v1588 = vadd.f32 %v1071, %v1524
  %s1589 = scalar_lea.vmem %s0, 16
  %v1590 = vld [vmem:[%s1589] sm:$0xff]
  %v1591 = vld [vmem:[%s1589 + $0x10] sm:$0xff]
  %v1592 = vld [vmem:[%s1589 + $0x20] sm:$0xff]
  %v1593 = vld [vmem:[%s1589 + $0x30] sm:$0xff]
  %v1594 = vld [vmem:[%s1589 + $0x40] sm:$0xff]
  %v1595 = vld [vmem:[%s1589 + $0x50] sm:$0xff]
  %v1596 = vld [vmem:[%s1589 + $0x60] sm:$0xff]
  %v1597 = vld [vmem:[%s1589 + $0x70] sm:$0xff]
  %v1598 = vld [vmem:[%s1589 + $0xa0] sm:$0xff]
  %v1599 = vld [vmem:[%s1589 + $0xb0] sm:$0xff]
  %v1600 = vld [vmem:[%s1589 + $0xc0] sm:$0xff]
  %v1601 = vld [vmem:[%s1589 + $0xd0] sm:$0xff]
  %v1602 = vld [vmem:[%s1589 + $0xe0] sm:$0xff]
  %v1603 = vld [vmem:[%s1589 + $0xf0] sm:$0xff]
  %v1604 = vld [vmem:[%s1589 + $0x100] sm:$0xff]
  %v1605 = vld [vmem:[%s1589 + $0x110] sm:$0xff]
  %v1606 = vld [vmem:[%s1589 + $0x140] sm:$0xff]
  %v1607 = vld [vmem:[%s1589 + $0x150] sm:$0xff]
  %v1608 = vld [vmem:[%s1589 + $0x160] sm:$0xff]
  %v1609 = vld [vmem:[%s1589 + $0x170] sm:$0xff]
  %v1610 = vld [vmem:[%s1589 + $0x180] sm:$0xff]
  %v1611 = vld [vmem:[%s1589 + $0x190] sm:$0xff]
  %v1612 = vld [vmem:[%s1589 + $0x1a0] sm:$0xff]
  %v1613 = vld [vmem:[%s1589 + $0x1b0] sm:$0xff]
  %v1614 = vld [vmem:[%s1589 + $0x1e0] sm:$0xff]
  %v1615 = vld [vmem:[%s1589 + $0x1f0] sm:$0xff]
  %v1616 = vld [vmem:[%s1589 + $0x200] sm:$0xff]
  %v1617 = vld [vmem:[%s1589 + $0x210] sm:$0xff]
  %v1618 = vld [vmem:[%s1589 + $0x220] sm:$0xff]
  %v1619 = vld [vmem:[%s1589 + $0x230] sm:$0xff]
  %v1620 = vld [vmem:[%s1589 + $0x240] sm:$0xff]
  %v1621 = vld [vmem:[%s1589 + $0x250] sm:$0xff]
  %v1622 = vld [vmem:[%s1589 + $0x280] sm:$0xff]
  %v1623 = vld [vmem:[%s1589 + $0x290] sm:$0xff]
  %v1624 = vld [vmem:[%s1589 + $0x2a0] sm:$0xff]
  %v1625 = vld [vmem:[%s1589 + $0x2b0] sm:$0xff]
  %v1626 = vld [vmem:[%s1589 + $0x2c0] sm:$0xff]
  %v1627 = vld [vmem:[%s1589 + $0x2d0] sm:$0xff]
  %v1628 = vld [vmem:[%s1589 + $0x2e0] sm:$0xff]
  %v1629 = vld [vmem:[%s1589 + $0x2f0] sm:$0xff]
  %v1630 = vld [vmem:[%s1589 + $0x320] sm:$0xff]
  %v1631 = vld [vmem:[%s1589 + $0x330] sm:$0xff]
  %v1632 = vld [vmem:[%s1589 + $0x340] sm:$0xff]
  %v1633 = vld [vmem:[%s1589 + $0x350] sm:$0xff]
  %v1634 = vld [vmem:[%s1589 + $0x360] sm:$0xff]
  %v1635 = vld [vmem:[%s1589 + $0x370] sm:$0xff]
  %v1636 = vld [vmem:[%s1589 + $0x380] sm:$0xff]
  %v1637 = vld [vmem:[%s1589 + $0x390] sm:$0xff]
  %v1638 = vld [vmem:[%s1589 + $0x3c0] sm:$0xff]
  %v1639 = vld [vmem:[%s1589 + $0x3d0] sm:$0xff]
  %v1640 = vld [vmem:[%s1589 + $0x3e0] sm:$0xff]
  %v1641 = vld [vmem:[%s1589 + $0x3f0] sm:$0xff]
  %v1642 = vld [vmem:[%s1589 + $0x400] sm:$0xff]
  %v1643 = vld [vmem:[%s1589 + $0x410] sm:$0xff]
  %v1644 = vld [vmem:[%s1589 + $0x420] sm:$0xff]
  %v1645 = vld [vmem:[%s1589 + $0x430] sm:$0xff]
  %v1646 = vld [vmem:[%s1589 + $0x460] sm:$0xff]
  %v1647 = vld [vmem:[%s1589 + $0x470] sm:$0xff]
  %v1648 = vld [vmem:[%s1589 + $0x480] sm:$0xff]
  %v1649 = vld [vmem:[%s1589 + $0x490] sm:$0xff]
  %v1650 = vld [vmem:[%s1589 + $0x4a0] sm:$0xff]
  %v1651 = vld [vmem:[%s1589 + $0x4b0] sm:$0xff]
  %v1652 = vld [vmem:[%s1589 + $0x4c0] sm:$0xff]
  %v1653 = vld [vmem:[%s1589 + $0x4d0] sm:$0xff]
  %v1654 = vld [vmem:[%s1 + $0x3] sm:$0x1]
  %1656 = vset.pattern.permute.xlu0 0
  %1657 = vperm.xlu0 %1656, %v1590
  %v1658 = vpop.permute.xlu0 %1657
  %1661 = vset.pattern.permute.xlu0 0
  %1662 = vperm.xlu0 %1661, %v1591
  %v1663 = vpop.permute.xlu0 %1662
  %1666 = vset.pattern.permute.xlu0 0
  %1667 = vperm.xlu0 %1666, %v1592
  %v1668 = vpop.permute.xlu0 %1667
  %1671 = vset.pattern.permute.xlu0 0
  %1672 = vperm.xlu0 %1671, %v1593
  %v1673 = vpop.permute.xlu0 %1672
  %1676 = vset.pattern.permute.xlu0 0
  %1677 = vperm.xlu0 %1676, %v1594
  %v1678 = vpop.permute.xlu0 %1677
  %1681 = vset.pattern.permute.xlu0 0
  %1682 = vperm.xlu0 %1681, %v1595
  %v1683 = vpop.permute.xlu0 %1682
  %1686 = vset.pattern.permute.xlu0 0
  %1687 = vperm.xlu0 %1686, %v1596
  %v1688 = vpop.permute.xlu0 %1687
  %1691 = vset.pattern.permute.xlu0 0
  %1692 = vperm.xlu0 %1691, %v1597
  %v1693 = vpop.permute.xlu0 %1692
  %1696 = vset.pattern.permute.xlu0 0
  %1697 = vperm.xlu0 %1696, %v1598
  %v1698 = vpop.permute.xlu0 %1697
  %1701 = vset.pattern.permute.xlu0 0
  %1702 = vperm.xlu0 %1701, %v1599
  %v1703 = vpop.permute.xlu0 %1702
  %1706 = vset.pattern.permute.xlu0 0
  %1707 = vperm.xlu0 %1706, %v1600
  %v1708 = vpop.permute.xlu0 %1707
  %1711 = vset.pattern.permute.xlu0 0
  %1712 = vperm.xlu0 %1711, %v1601
  %v1713 = vpop.permute.xlu0 %1712
  %1716 = vset.pattern.permute.xlu0 0
  %1717 = vperm.xlu0 %1716, %v1602
  %v1718 = vpop.permute.xlu0 %1717
  %1721 = vset.pattern.permute.xlu0 0
  %1722 = vperm.xlu0 %1721, %v1603
  %v1723 = vpop.permute.xlu0 %1722
  %1726 = vset.pattern.permute.xlu0 0
  %1727 = vperm.xlu0 %1726, %v1604
  %v1728 = vpop.permute.xlu0 %1727
  %1731 = vset.pattern.permute.xlu0 0
  %1732 = vperm.xlu0 %1731, %v1605
  %v1733 = vpop.permute.xlu0 %1732
  %1736 = vset.pattern.permute.xlu0 0
  %1737 = vperm.xlu0 %1736, %v1606
  %v1738 = vpop.permute.xlu0 %1737
  %1741 = vset.pattern.permute.xlu0 0
  %1742 = vperm.xlu0 %1741, %v1607
  %v1743 = vpop.permute.xlu0 %1742
  %1746 = vset.pattern.permute.xlu0 0
  %1747 = vperm.xlu0 %1746, %v1608
  %v1748 = vpop.permute.xlu0 %1747
  %1751 = vset.pattern.permute.xlu0 0
  %1752 = vperm.xlu0 %1751, %v1609
  %v1753 = vpop.permute.xlu0 %1752
  %1756 = vset.pattern.permute.xlu0 0
  %1757 = vperm.xlu0 %1756, %v1610
  %v1758 = vpop.permute.xlu0 %1757
  %1761 = vset.pattern.permute.xlu0 0
  %1762 = vperm.xlu0 %1761, %v1611
  %v1763 = vpop.permute.xlu0 %1762
  %1766 = vset.pattern.permute.xlu0 0
  %1767 = vperm.xlu0 %1766, %v1612
  %v1768 = vpop.permute.xlu0 %1767
  %1771 = vset.pattern.permute.xlu0 0
  %1772 = vperm.xlu0 %1771, %v1613
  %v1773 = vpop.permute.xlu0 %1772
  %1776 = vset.pattern.permute.xlu0 0
  %1777 = vperm.xlu0 %1776, %v1614
  %v1778 = vpop.permute.xlu0 %1777
  %1781 = vset.pattern.permute.xlu0 0
  %1782 = vperm.xlu0 %1781, %v1615
  %v1783 = vpop.permute.xlu0 %1782
  %1786 = vset.pattern.permute.xlu0 0
  %1787 = vperm.xlu0 %1786, %v1616
  %v1788 = vpop.permute.xlu0 %1787
  %1791 = vset.pattern.permute.xlu0 0
  %1792 = vperm.xlu0 %1791, %v1617
  %v1793 = vpop.permute.xlu0 %1792
  %1796 = vset.pattern.permute.xlu0 0
  %1797 = vperm.xlu0 %1796, %v1618
  %v1798 = vpop.permute.xlu0 %1797
  %1801 = vset.pattern.permute.xlu0 0
  %1802 = vperm.xlu0 %1801, %v1619
  %v1803 = vpop.permute.xlu0 %1802
  %1806 = vset.pattern.permute.xlu0 0
  %1807 = vperm.xlu0 %1806, %v1620
  %v1808 = vpop.permute.xlu0 %1807
  %1811 = vset.pattern.permute.xlu0 0
  %1812 = vperm.xlu0 %1811, %v1621
  %v1813 = vpop.permute.xlu0 %1812
  %1816 = vset.pattern.permute.xlu0 0
  %1817 = vperm.xlu0 %1816, %v1622
  %v1818 = vpop.permute.xlu0 %1817
  %1821 = vset.pattern.permute.xlu0 0
  %1822 = vperm.xlu0 %1821, %v1623
  %v1823 = vpop.permute.xlu0 %1822
  %1826 = vset.pattern.permute.xlu0 0
  %1827 = vperm.xlu0 %1826, %v1624
  %v1828 = vpop.permute.xlu0 %1827
  %1831 = vset.pattern.permute.xlu0 0
  %1832 = vperm.xlu0 %1831, %v1625
  %v1833 = vpop.permute.xlu0 %1832
  %1836 = vset.pattern.permute.xlu0 0
  %1837 = vperm.xlu0 %1836, %v1626
  %v1838 = vpop.permute.xlu0 %1837
  %1841 = vset.pattern.permute.xlu0 0
  %1842 = vperm.xlu0 %1841, %v1627
  %v1843 = vpop.permute.xlu0 %1842
  %1846 = vset.pattern.permute.xlu0 0
  %1847 = vperm.xlu0 %1846, %v1628
  %v1848 = vpop.permute.xlu0 %1847
  %1851 = vset.pattern.permute.xlu0 0
  %1852 = vperm.xlu0 %1851, %v1629
  %v1853 = vpop.permute.xlu0 %1852
  %1856 = vset.pattern.permute.xlu0 0
  %1857 = vperm.xlu0 %1856, %v1630
  %v1858 = vpop.permute.xlu0 %1857
  %1861 = vset.pattern.permute.xlu0 0
  %1862 = vperm.xlu0 %1861, %v1631
  %v1863 = vpop.permute.xlu0 %1862
  %1866 = vset.pattern.permute.xlu0 0
  %1867 = vperm.xlu0 %1866, %v1632
  %v1868 = vpop.permute.xlu0 %1867
  %1871 = vset.pattern.permute.xlu0 0
  %1872 = vperm.xlu0 %1871, %v1633
  %v1873 = vpop.permute.xlu0 %1872
  %1876 = vset.pattern.permute.xlu0 0
  %1877 = vperm.xlu0 %1876, %v1634
  %v1878 = vpop.permute.xlu0 %1877
  %1881 = vset.pattern.permute.xlu0 0
  %1882 = vperm.xlu0 %1881, %v1635
  %v1883 = vpop.permute.xlu0 %1882
  %1886 = vset.pattern.permute.xlu0 0
  %1887 = vperm.xlu0 %1886, %v1636
  %v1888 = vpop.permute.xlu0 %1887
  %1891 = vset.pattern.permute.xlu0 0
  %1892 = vperm.xlu0 %1891, %v1637
  %v1893 = vpop.permute.xlu0 %1892
  %1896 = vset.pattern.permute.xlu0 0
  %1897 = vperm.xlu0 %1896, %v1638
  %v1898 = vpop.permute.xlu0 %1897
  %1901 = vset.pattern.permute.xlu0 0
  %1902 = vperm.xlu0 %1901, %v1639
  %v1903 = vpop.permute.xlu0 %1902
  %1906 = vset.pattern.permute.xlu0 0
  %1907 = vperm.xlu0 %1906, %v1640
  %v1908 = vpop.permute.xlu0 %1907
  %1911 = vset.pattern.permute.xlu0 0
  %1912 = vperm.xlu0 %1911, %v1641
  %v1913 = vpop.permute.xlu0 %1912
  %1916 = vset.pattern.permute.xlu0 0
  %1917 = vperm.xlu0 %1916, %v1642
  %v1918 = vpop.permute.xlu0 %1917
  %1921 = vset.pattern.permute.xlu0 0
  %1922 = vperm.xlu0 %1921, %v1643
  %v1923 = vpop.permute.xlu0 %1922
  %1926 = vset.pattern.permute.xlu0 0
  %1927 = vperm.xlu0 %1926, %v1644
  %v1928 = vpop.permute.xlu0 %1927
  %1931 = vset.pattern.permute.xlu0 0
  %1932 = vperm.xlu0 %1931, %v1645
  %v1933 = vpop.permute.xlu0 %1932
  %1936 = vset.pattern.permute.xlu0 0
  %1937 = vperm.xlu0 %1936, %v1646
  %v1938 = vpop.permute.xlu0 %1937
  %1941 = vset.pattern.permute.xlu0 0
  %1942 = vperm.xlu0 %1941, %v1647
  %v1943 = vpop.permute.xlu0 %1942
  %1946 = vset.pattern.permute.xlu0 0
  %1947 = vperm.xlu0 %1946, %v1648
  %v1948 = vpop.permute.xlu0 %1947
  %1951 = vset.pattern.permute.xlu0 0
  %1952 = vperm.xlu0 %1951, %v1649
  %v1953 = vpop.permute.xlu0 %1952
  %1956 = vset.pattern.permute.xlu0 0
  %1957 = vperm.xlu0 %1956, %v1650
  %v1958 = vpop.permute.xlu0 %1957
  %1961 = vset.pattern.permute.xlu0 0
  %1962 = vperm.xlu0 %1961, %v1651
  %v1963 = vpop.permute.xlu0 %1962
  %1966 = vset.pattern.permute.xlu0 0
  %1967 = vperm.xlu0 %1966, %v1652
  %v1968 = vpop.permute.xlu0 %1967
  %1971 = vset.pattern.permute.xlu0 0
  %1972 = vperm.xlu0 %1971, %v1653
  %v1973 = vpop.permute.xlu0 %1972
  %v1975 = vlaneseq
  %v1976 = vshrl.u32 %v1975, 7
  %v1977 = vsub.s32 0, %v1976
  %v1978 = vrot.slane %v1654, %v1977
  %v1979 = vmul.f32 %v1658, %v1978
  %v1980 = vmul.f32 %v1663, %v1978
  %v1981 = vmul.f32 %v1668, %v1978
  %v1982 = vmul.f32 %v1673, %v1978
  %v1983 = vmul.f32 %v1678, %v1978
  %v1984 = vmul.f32 %v1683, %v1978
  %v1985 = vmul.f32 %v1688, %v1978
  %v1986 = vmul.f32 %v1693, %v1978
  %v1987 = vmul.f32 %v1698, %v1978
  %v1988 = vmul.f32 %v1703, %v1978
  %v1989 = vmul.f32 %v1708, %v1978
  %v1990 = vmul.f32 %v1713, %v1978
  %v1991 = vmul.f32 %v1718, %v1978
  %v1992 = vmul.f32 %v1723, %v1978
  %v1993 = vmul.f32 %v1728, %v1978
  %v1994 = vmul.f32 %v1733, %v1978
  %v1995 = vmul.f32 %v1738, %v1978
  %v1996 = vmul.f32 %v1743, %v1978
  %v1997 = vmul.f32 %v1748, %v1978
  %v1998 = vmul.f32 %v1753, %v1978
  %v1999 = vmul.f32 %v1758, %v1978
  %v2000 = vmul.f32 %v1763, %v1978
  %v2001 = vmul.f32 %v1768, %v1978
  %v2002 = vmul.f32 %v1773, %v1978
  %v2003 = vmul.f32 %v1778, %v1978
  %v2004 = vmul.f32 %v1783, %v1978
  %v2005 = vmul.f32 %v1788, %v1978
  %v2006 = vmul.f32 %v1793, %v1978
  %v2007 = vmul.f32 %v1798, %v1978
  %v2008 = vmul.f32 %v1803, %v1978
  %v2009 = vmul.f32 %v1808, %v1978
  %v2010 = vmul.f32 %v1813, %v1978
  %v2011 = vmul.f32 %v1818, %v1978
  %v2012 = vmul.f32 %v1823, %v1978
  %v2013 = vmul.f32 %v1828, %v1978
  %v2014 = vmul.f32 %v1833, %v1978
  %v2015 = vmul.f32 %v1838, %v1978
  %v2016 = vmul.f32 %v1843, %v1978
  %v2017 = vmul.f32 %v1848, %v1978
  %v2018 = vmul.f32 %v1853, %v1978
  %v2019 = vmul.f32 %v1858, %v1978
  %v2020 = vmul.f32 %v1863, %v1978
  %v2021 = vmul.f32 %v1868, %v1978
  %v2022 = vmul.f32 %v1873, %v1978
  %v2023 = vmul.f32 %v1878, %v1978
  %v2024 = vmul.f32 %v1883, %v1978
  %v2025 = vmul.f32 %v1888, %v1978
  %v2026 = vmul.f32 %v1893, %v1978
  %v2027 = vmul.f32 %v1898, %v1978
  %v2028 = vmul.f32 %v1903, %v1978
  %v2029 = vmul.f32 %v1908, %v1978
  %v2030 = vmul.f32 %v1913, %v1978
  %v2031 = vmul.f32 %v1918, %v1978
  %v2032 = vmul.f32 %v1923, %v1978
  %v2033 = vmul.f32 %v1928, %v1978
  %v2034 = vmul.f32 %v1933, %v1978
  %v2035 = vmul.f32 %v1938, %v1978
  %v2036 = vmul.f32 %v1943, %v1978
  %v2037 = vmul.f32 %v1948, %v1978
  %v2038 = vmul.f32 %v1953, %v1978
  %v2039 = vmul.f32 %v1958, %v1978
  %v2040 = vmul.f32 %v1963, %v1978
  %v2041 = vmul.f32 %v1968, %v1978
  %v2042 = vmul.f32 %v1973, %v1978
  %v2043 = vadd.f32 %v1525, %v1979
  %v2044 = vadd.f32 %v1526, %v1980
  %v2045 = vadd.f32 %v1527, %v1981
  %v2046 = vadd.f32 %v1528, %v1982
  %v2047 = vadd.f32 %v1529, %v1983
  %v2048 = vadd.f32 %v1530, %v1984
  %v2049 = vadd.f32 %v1531, %v1985
  %v2050 = vadd.f32 %v1532, %v1986
  %v2051 = vadd.f32 %v1533, %v1987
  %v2052 = vadd.f32 %v1534, %v1988
  %v2053 = vadd.f32 %v1535, %v1989
  %v2054 = vadd.f32 %v1536, %v1990
  %v2055 = vadd.f32 %v1537, %v1991
  %v2056 = vadd.f32 %v1538, %v1992
  %v2057 = vadd.f32 %v1539, %v1993
  %v2058 = vadd.f32 %v1540, %v1994
  %v2059 = vadd.f32 %v1541, %v1995
  %v2060 = vadd.f32 %v1542, %v1996
  %v2061 = vadd.f32 %v1543, %v1997
  %v2062 = vadd.f32 %v1544, %v1998
  %v2063 = vadd.f32 %v1545, %v1999
  %v2064 = vadd.f32 %v1546, %v2000
  %v2065 = vadd.f32 %v1547, %v2001
  %v2066 = vadd.f32 %v1548, %v2002
  %v2067 = vadd.f32 %v1549, %v2003
  %v2068 = vadd.f32 %v1550, %v2004
  %v2069 = vadd.f32 %v1551, %v2005
  %v2070 = vadd.f32 %v1552, %v2006
  %v2071 = vadd.f32 %v1553, %v2007
  %v2072 = vadd.f32 %v1554, %v2008
  %v2073 = vadd.f32 %v1555, %v2009
  %v2074 = vadd.f32 %v1556, %v2010
  %v2075 = vadd.f32 %v1557, %v2011
  %v2076 = vadd.f32 %v1558, %v2012
  %v2077 = vadd.f32 %v1559, %v2013
  %v2078 = vadd.f32 %v1560, %v2014
  %v2079 = vadd.f32 %v1561, %v2015
  %v2080 = vadd.f32 %v1562, %v2016
  %v2081 = vadd.f32 %v1563, %v2017
  %v2082 = vadd.f32 %v1564, %v2018
  %v2083 = vadd.f32 %v1565, %v2019
  %v2084 = vadd.f32 %v1566, %v2020
  %v2085 = vadd.f32 %v1567, %v2021
  %v2086 = vadd.f32 %v1568, %v2022
  %v2087 = vadd.f32 %v1569, %v2023
  %v2088 = vadd.f32 %v1570, %v2024
  %v2089 = vadd.f32 %v1571, %v2025
  %v2090 = vadd.f32 %v1572, %v2026
  %v2091 = vadd.f32 %v1573, %v2027
  %v2092 = vadd.f32 %v1574, %v2028
  %v2093 = vadd.f32 %v1575, %v2029
  %v2094 = vadd.f32 %v1576, %v2030
  %v2095 = vadd.f32 %v1577, %v2031
  %v2096 = vadd.f32 %v1578, %v2032
  %v2097 = vadd.f32 %v1579, %v2033
  %v2098 = vadd.f32 %v1580, %v2034
  %v2099 = vadd.f32 %v1581, %v2035
  %v2100 = vadd.f32 %v1582, %v2036
  %v2101 = vadd.f32 %v1583, %v2037
  %v2102 = vadd.f32 %v1584, %v2038
  %v2103 = vadd.f32 %v1585, %v2039
  %v2104 = vadd.f32 %v1586, %v2040
  %v2105 = vadd.f32 %v1587, %v2041
  %v2106 = vadd.f32 %v1588, %v2042
  %v2107 = vld [vmem:[%s1589 + $0x1] sm:$0xff]
  %v2108 = vld [vmem:[%s1589 + $0x11] sm:$0xff]
  %v2109 = vld [vmem:[%s1589 + $0x21] sm:$0xff]
  %v2110 = vld [vmem:[%s1589 + $0x31] sm:$0xff]
  %v2111 = vld [vmem:[%s1589 + $0x41] sm:$0xff]
  %v2112 = vld [vmem:[%s1589 + $0x51] sm:$0xff]
  %v2113 = vld [vmem:[%s1589 + $0x61] sm:$0xff]
  %v2114 = vld [vmem:[%s1589 + $0x71] sm:$0xff]
  %v2115 = vld [vmem:[%s1589 + $0xa1] sm:$0xff]
  %v2116 = vld [vmem:[%s1589 + $0xb1] sm:$0xff]
  %v2117 = vld [vmem:[%s1589 + $0xc1] sm:$0xff]
  %v2118 = vld [vmem:[%s1589 + $0xd1] sm:$0xff]
  %v2119 = vld [vmem:[%s1589 + $0xe1] sm:$0xff]
  %v2120 = vld [vmem:[%s1589 + $0xf1] sm:$0xff]
  %v2121 = vld [vmem:[%s1589 + $0x101] sm:$0xff]
  %v2122 = vld [vmem:[%s1589 + $0x111] sm:$0xff]
  %v2123 = vld [vmem:[%s1589 + $0x141] sm:$0xff]
  %v2124 = vld [vmem:[%s1589 + $0x151] sm:$0xff]
  %v2125 = vld [vmem:[%s1589 + $0x161] sm:$0xff]
  %v2126 = vld [vmem:[%s1589 + $0x171] sm:$0xff]
  %v2127 = vld [vmem:[%s1589 + $0x181] sm:$0xff]
  %v2128 = vld [vmem:[%s1589 + $0x191] sm:$0xff]
  %v2129 = vld [vmem:[%s1589 + $0x1a1] sm:$0xff]
  %v2130 = vld [vmem:[%s1589 + $0x1b1] sm:$0xff]
  %v2131 = vld [vmem:[%s1589 + $0x1e1] sm:$0xff]
  %v2132 = vld [vmem:[%s1589 + $0x1f1] sm:$0xff]
  %v2133 = vld [vmem:[%s1589 + $0x201] sm:$0xff]
  %v2134 = vld [vmem:[%s1589 + $0x211] sm:$0xff]
  %v2135 = vld [vmem:[%s1589 + $0x221] sm:$0xff]
  %v2136 = vld [vmem:[%s1589 + $0x231] sm:$0xff]
  %v2137 = vld [vmem:[%s1589 + $0x241] sm:$0xff]
  %v2138 = vld [vmem:[%s1589 + $0x251] sm:$0xff]
  %v2139 = vld [vmem:[%s1589 + $0x281] sm:$0xff]
  %v2140 = vld [vmem:[%s1589 + $0x291] sm:$0xff]
  %v2141 = vld [vmem:[%s1589 + $0x2a1] sm:$0xff]
  %v2142 = vld [vmem:[%s1589 + $0x2b1] sm:$0xff]
  %v2143 = vld [vmem:[%s1589 + $0x2c1] sm:$0xff]
  %v2144 = vld [vmem:[%s1589 + $0x2d1] sm:$0xff]
  %v2145 = vld [vmem:[%s1589 + $0x2e1] sm:$0xff]
  %v2146 = vld [vmem:[%s1589 + $0x2f1] sm:$0xff]
  %v2147 = vld [vmem:[%s1589 + $0x321] sm:$0xff]
  %v2148 = vld [vmem:[%s1589 + $0x331] sm:$0xff]
  %v2149 = vld [vmem:[%s1589 + $0x341] sm:$0xff]
  %v2150 = vld [vmem:[%s1589 + $0x351] sm:$0xff]
  %v2151 = vld [vmem:[%s1589 + $0x361] sm:$0xff]
  %v2152 = vld [vmem:[%s1589 + $0x371] sm:$0xff]
  %v2153 = vld [vmem:[%s1589 + $0x381] sm:$0xff]
  %v2154 = vld [vmem:[%s1589 + $0x391] sm:$0xff]
  %v2155 = vld [vmem:[%s1589 + $0x3c1] sm:$0xff]
  %v2156 = vld [vmem:[%s1589 + $0x3d1] sm:$0xff]
  %v2157 = vld [vmem:[%s1589 + $0x3e1] sm:$0xff]
  %v2158 = vld [vmem:[%s1589 + $0x3f1] sm:$0xff]
  %v2159 = vld [vmem:[%s1589 + $0x401] sm:$0xff]
  %v2160 = vld [vmem:[%s1589 + $0x411] sm:$0xff]
  %v2161 = vld [vmem:[%s1589 + $0x421] sm:$0xff]
  %v2162 = vld [vmem:[%s1589 + $0x431] sm:$0xff]
  %v2163 = vld [vmem:[%s1589 + $0x461] sm:$0xff]
  %v2164 = vld [vmem:[%s1589 + $0x471] sm:$0xff]
  %v2165 = vld [vmem:[%s1589 + $0x481] sm:$0xff]
  %v2166 = vld [vmem:[%s1589 + $0x491] sm:$0xff]
  %v2167 = vld [vmem:[%s1589 + $0x4a1] sm:$0xff]
  %v2168 = vld [vmem:[%s1589 + $0x4b1] sm:$0xff]
  %v2169 = vld [vmem:[%s1589 + $0x4c1] sm:$0xff]
  %v2170 = vld [vmem:[%s1589 + $0x4d1] sm:$0xff]
  %v2171 = vld [vmem:[%s1 + $0x4] sm:$0x1]
  %2173 = vset.pattern.permute.xlu0 0
  %2174 = vperm.xlu0 %2173, %v2107
  %v2175 = vpop.permute.xlu0 %2174
  %2178 = vset.pattern.permute.xlu0 0
  %2179 = vperm.xlu0 %2178, %v2108
  %v2180 = vpop.permute.xlu0 %2179
  %2183 = vset.pattern.permute.xlu0 0
  %2184 = vperm.xlu0 %2183, %v2109
  %v2185 = vpop.permute.xlu0 %2184
  %2188 = vset.pattern.permute.xlu0 0
  %2189 = vperm.xlu0 %2188, %v2110
  %v2190 = vpop.permute.xlu0 %2189
  %2193 = vset.pattern.permute.xlu0 0
  %2194 = vperm.xlu0 %2193, %v2111
  %v2195 = vpop.permute.xlu0 %2194
  %2198 = vset.pattern.permute.xlu0 0
  %2199 = vperm.xlu0 %2198, %v2112
  %v2200 = vpop.permute.xlu0 %2199
  %2203 = vset.pattern.permute.xlu0 0
  %2204 = vperm.xlu0 %2203, %v2113
  %v2205 = vpop.permute.xlu0 %2204
  %2208 = vset.pattern.permute.xlu0 0
  %2209 = vperm.xlu0 %2208, %v2114
  %v2210 = vpop.permute.xlu0 %2209
  %2213 = vset.pattern.permute.xlu0 0
  %2214 = vperm.xlu0 %2213, %v2115
  %v2215 = vpop.permute.xlu0 %2214
  %2218 = vset.pattern.permute.xlu0 0
  %2219 = vperm.xlu0 %2218, %v2116
  %v2220 = vpop.permute.xlu0 %2219
  %2223 = vset.pattern.permute.xlu0 0
  %2224 = vperm.xlu0 %2223, %v2117
  %v2225 = vpop.permute.xlu0 %2224
  %2228 = vset.pattern.permute.xlu0 0
  %2229 = vperm.xlu0 %2228, %v2118
  %v2230 = vpop.permute.xlu0 %2229
  %2233 = vset.pattern.permute.xlu0 0
  %2234 = vperm.xlu0 %2233, %v2119
  %v2235 = vpop.permute.xlu0 %2234
  %2238 = vset.pattern.permute.xlu0 0
  %2239 = vperm.xlu0 %2238, %v2120
  %v2240 = vpop.permute.xlu0 %2239
  %2243 = vset.pattern.permute.xlu0 0
  %2244 = vperm.xlu0 %2243, %v2121
  %v2245 = vpop.permute.xlu0 %2244
  %2248 = vset.pattern.permute.xlu0 0
  %2249 = vperm.xlu0 %2248, %v2122
  %v2250 = vpop.permute.xlu0 %2249
  %2253 = vset.pattern.permute.xlu0 0
  %2254 = vperm.xlu0 %2253, %v2123
  %v2255 = vpop.permute.xlu0 %2254
  %2258 = vset.pattern.permute.xlu0 0
  %2259 = vperm.xlu0 %2258, %v2124
  %v2260 = vpop.permute.xlu0 %2259
  %2263 = vset.pattern.permute.xlu0 0
  %2264 = vperm.xlu0 %2263, %v2125
  %v2265 = vpop.permute.xlu0 %2264
  %2268 = vset.pattern.permute.xlu0 0
  %2269 = vperm.xlu0 %2268, %v2126
  %v2270 = vpop.permute.xlu0 %2269
  %2273 = vset.pattern.permute.xlu0 0
  %2274 = vperm.xlu0 %2273, %v2127
  %v2275 = vpop.permute.xlu0 %2274
  %2278 = vset.pattern.permute.xlu0 0
  %2279 = vperm.xlu0 %2278, %v2128
  %v2280 = vpop.permute.xlu0 %2279
  %2283 = vset.pattern.permute.xlu0 0
  %2284 = vperm.xlu0 %2283, %v2129
  %v2285 = vpop.permute.xlu0 %2284
  %2288 = vset.pattern.permute.xlu0 0
  %2289 = vperm.xlu0 %2288, %v2130
  %v2290 = vpop.permute.xlu0 %2289
  %2293 = vset.pattern.permute.xlu0 0
  %2294 = vperm.xlu0 %2293, %v2131
  %v2295 = vpop.permute.xlu0 %2294
  %2298 = vset.pattern.permute.xlu0 0
  %2299 = vperm.xlu0 %2298, %v2132
  %v2300 = vpop.permute.xlu0 %2299
  %2303 = vset.pattern.permute.xlu0 0
  %2304 = vperm.xlu0 %2303, %v2133
  %v2305 = vpop.permute.xlu0 %2304
  %2308 = vset.pattern.permute.xlu0 0
  %2309 = vperm.xlu0 %2308, %v2134
  %v2310 = vpop.permute.xlu0 %2309
  %2313 = vset.pattern.permute.xlu0 0
  %2314 = vperm.xlu0 %2313, %v2135
  %v2315 = vpop.permute.xlu0 %2314
  %2318 = vset.pattern.permute.xlu0 0
  %2319 = vperm.xlu0 %2318, %v2136
  %v2320 = vpop.permute.xlu0 %2319
  %2323 = vset.pattern.permute.xlu0 0
  %2324 = vperm.xlu0 %2323, %v2137
  %v2325 = vpop.permute.xlu0 %2324
  %2328 = vset.pattern.permute.xlu0 0
  %2329 = vperm.xlu0 %2328, %v2138
  %v2330 = vpop.permute.xlu0 %2329
  %2333 = vset.pattern.permute.xlu0 0
  %2334 = vperm.xlu0 %2333, %v2139
  %v2335 = vpop.permute.xlu0 %2334
  %2338 = vset.pattern.permute.xlu0 0
  %2339 = vperm.xlu0 %2338, %v2140
  %v2340 = vpop.permute.xlu0 %2339
  %2343 = vset.pattern.permute.xlu0 0
  %2344 = vperm.xlu0 %2343, %v2141
  %v2345 = vpop.permute.xlu0 %2344
  %2348 = vset.pattern.permute.xlu0 0
  %2349 = vperm.xlu0 %2348, %v2142
  %v2350 = vpop.permute.xlu0 %2349
  %2353 = vset.pattern.permute.xlu0 0
  %2354 = vperm.xlu0 %2353, %v2143
  %v2355 = vpop.permute.xlu0 %2354
  %2358 = vset.pattern.permute.xlu0 0
  %2359 = vperm.xlu0 %2358, %v2144
  %v2360 = vpop.permute.xlu0 %2359
  %2363 = vset.pattern.permute.xlu0 0
  %2364 = vperm.xlu0 %2363, %v2145
  %v2365 = vpop.permute.xlu0 %2364
  %2368 = vset.pattern.permute.xlu0 0
  %2369 = vperm.xlu0 %2368, %v2146
  %v2370 = vpop.permute.xlu0 %2369
  %2373 = vset.pattern.permute.xlu0 0
  %2374 = vperm.xlu0 %2373, %v2147
  %v2375 = vpop.permute.xlu0 %2374
  %2378 = vset.pattern.permute.xlu0 0
  %2379 = vperm.xlu0 %2378, %v2148
  %v2380 = vpop.permute.xlu0 %2379
  %2383 = vset.pattern.permute.xlu0 0
  %2384 = vperm.xlu0 %2383, %v2149
  %v2385 = vpop.permute.xlu0 %2384
  %2388 = vset.pattern.permute.xlu0 0
  %2389 = vperm.xlu0 %2388, %v2150
  %v2390 = vpop.permute.xlu0 %2389
  %2393 = vset.pattern.permute.xlu0 0
  %2394 = vperm.xlu0 %2393, %v2151
  %v2395 = vpop.permute.xlu0 %2394
  %2398 = vset.pattern.permute.xlu0 0
  %2399 = vperm.xlu0 %2398, %v2152
  %v2400 = vpop.permute.xlu0 %2399
  %2403 = vset.pattern.permute.xlu0 0
  %2404 = vperm.xlu0 %2403, %v2153
  %v2405 = vpop.permute.xlu0 %2404
  %2408 = vset.pattern.permute.xlu0 0
  %2409 = vperm.xlu0 %2408, %v2154
  %v2410 = vpop.permute.xlu0 %2409
  %2413 = vset.pattern.permute.xlu0 0
  %2414 = vperm.xlu0 %2413, %v2155
  %v2415 = vpop.permute.xlu0 %2414
  %2418 = vset.pattern.permute.xlu0 0
  %2419 = vperm.xlu0 %2418, %v2156
  %v2420 = vpop.permute.xlu0 %2419
  %2423 = vset.pattern.permute.xlu0 0
  %2424 = vperm.xlu0 %2423, %v2157
  %v2425 = vpop.permute.xlu0 %2424
  %2428 = vset.pattern.permute.xlu0 0
  %2429 = vperm.xlu0 %2428, %v2158
  %v2430 = vpop.permute.xlu0 %2429
  %2433 = vset.pattern.permute.xlu0 0
  %2434 = vperm.xlu0 %2433, %v2159
  %v2435 = vpop.permute.xlu0 %2434
  %2438 = vset.pattern.permute.xlu0 0
  %2439 = vperm.xlu0 %2438, %v2160
  %v2440 = vpop.permute.xlu0 %2439
  %2443 = vset.pattern.permute.xlu0 0
  %2444 = vperm.xlu0 %2443, %v2161
  %v2445 = vpop.permute.xlu0 %2444
  %2448 = vset.pattern.permute.xlu0 0
  %2449 = vperm.xlu0 %2448, %v2162
  %v2450 = vpop.permute.xlu0 %2449
  %2453 = vset.pattern.permute.xlu0 0
  %2454 = vperm.xlu0 %2453, %v2163
  %v2455 = vpop.permute.xlu0 %2454
  %2458 = vset.pattern.permute.xlu0 0
  %2459 = vperm.xlu0 %2458, %v2164
  %v2460 = vpop.permute.xlu0 %2459
  %2463 = vset.pattern.permute.xlu0 0
  %2464 = vperm.xlu0 %2463, %v2165
  %v2465 = vpop.permute.xlu0 %2464
  %2468 = vset.pattern.permute.xlu0 0
  %2469 = vperm.xlu0 %2468, %v2166
  %v2470 = vpop.permute.xlu0 %2469
  %2473 = vset.pattern.permute.xlu0 0
  %2474 = vperm.xlu0 %2473, %v2167
  %v2475 = vpop.permute.xlu0 %2474
  %2478 = vset.pattern.permute.xlu0 0
  %2479 = vperm.xlu0 %2478, %v2168
  %v2480 = vpop.permute.xlu0 %2479
  %2483 = vset.pattern.permute.xlu0 0
  %2484 = vperm.xlu0 %2483, %v2169
  %v2485 = vpop.permute.xlu0 %2484
  %2488 = vset.pattern.permute.xlu0 0
  %2489 = vperm.xlu0 %2488, %v2170
  %v2490 = vpop.permute.xlu0 %2489
  %v2492 = vlaneseq
  %v2493 = vshrl.u32 %v2492, 7
  %v2494 = vsub.s32 0, %v2493
  %v2495 = vrot.slane %v2171, %v2494
  %v2496 = vmul.f32 %v2175, %v2495
  %v2497 = vmul.f32 %v2180, %v2495
  %v2498 = vmul.f32 %v2185, %v2495
  %v2499 = vmul.f32 %v2190, %v2495
  %v2500 = vmul.f32 %v2195, %v2495
  %v2501 = vmul.f32 %v2200, %v2495
  %v2502 = vmul.f32 %v2205, %v2495
  %v2503 = vmul.f32 %v2210, %v2495
  %v2504 = vmul.f32 %v2215, %v2495
  %v2505 = vmul.f32 %v2220, %v2495
  %v2506 = vmul.f32 %v2225, %v2495
  %v2507 = vmul.f32 %v2230, %v2495
  %v2508 = vmul.f32 %v2235, %v2495
  %v2509 = vmul.f32 %v2240, %v2495
  %v2510 = vmul.f32 %v2245, %v2495
  %v2511 = vmul.f32 %v2250, %v2495
  %v2512 = vmul.f32 %v2255, %v2495
  %v2513 = vmul.f32 %v2260, %v2495
  %v2514 = vmul.f32 %v2265, %v2495
  %v2515 = vmul.f32 %v2270, %v2495
  %v2516 = vmul.f32 %v2275, %v2495
  %v2517 = vmul.f32 %v2280, %v2495
  %v2518 = vmul.f32 %v2285, %v2495
  %v2519 = vmul.f32 %v2290, %v2495
  %v2520 = vmul.f32 %v2295, %v2495
  %v2521 = vmul.f32 %v2300, %v2495
  %v2522 = vmul.f32 %v2305, %v2495
  %v2523 = vmul.f32 %v2310, %v2495
  %v2524 = vmul.f32 %v2315, %v2495
  %v2525 = vmul.f32 %v2320, %v2495
  %v2526 = vmul.f32 %v2325, %v2495
  %v2527 = vmul.f32 %v2330, %v2495
  %v2528 = vmul.f32 %v2335, %v2495
  %v2529 = vmul.f32 %v2340, %v2495
  %v2530 = vmul.f32 %v2345, %v2495
  %v2531 = vmul.f32 %v2350, %v2495
  %v2532 = vmul.f32 %v2355, %v2495
  %v2533 = vmul.f32 %v2360, %v2495
  %v2534 = vmul.f32 %v2365, %v2495
  %v2535 = vmul.f32 %v2370, %v2495
  %v2536 = vmul.f32 %v2375, %v2495
  %v2537 = vmul.f32 %v2380, %v2495
  %v2538 = vmul.f32 %v2385, %v2495
  %v2539 = vmul.f32 %v2390, %v2495
  %v2540 = vmul.f32 %v2395, %v2495
  %v2541 = vmul.f32 %v2400, %v2495
  %v2542 = vmul.f32 %v2405, %v2495
  %v2543 = vmul.f32 %v2410, %v2495
  %v2544 = vmul.f32 %v2415, %v2495
  %v2545 = vmul.f32 %v2420, %v2495
  %v2546 = vmul.f32 %v2425, %v2495
  %v2547 = vmul.f32 %v2430, %v2495
  %v2548 = vmul.f32 %v2435, %v2495
  %v2549 = vmul.f32 %v2440, %v2495
  %v2550 = vmul.f32 %v2445, %v2495
  %v2551 = vmul.f32 %v2450, %v2495
  %v2552 = vmul.f32 %v2455, %v2495
  %v2553 = vmul.f32 %v2460, %v2495
  %v2554 = vmul.f32 %v2465, %v2495
  %v2555 = vmul.f32 %v2470, %v2495
  %v2556 = vmul.f32 %v2475, %v2495
  %v2557 = vmul.f32 %v2480, %v2495
  %v2558 = vmul.f32 %v2485, %v2495
  %v2559 = vmul.f32 %v2490, %v2495
  %v2560 = vadd.f32 %v2043, %v2496
  %v2561 = vadd.f32 %v2044, %v2497
  %v2562 = vadd.f32 %v2045, %v2498
  %v2563 = vadd.f32 %v2046, %v2499
  %v2564 = vadd.f32 %v2047, %v2500
  %v2565 = vadd.f32 %v2048, %v2501
  %v2566 = vadd.f32 %v2049, %v2502
  %v2567 = vadd.f32 %v2050, %v2503
  %v2568 = vadd.f32 %v2051, %v2504
  %v2569 = vadd.f32 %v2052, %v2505
  %v2570 = vadd.f32 %v2053, %v2506
  %v2571 = vadd.f32 %v2054, %v2507
  %v2572 = vadd.f32 %v2055, %v2508
  %v2573 = vadd.f32 %v2056, %v2509
  %v2574 = vadd.f32 %v2057, %v2510
  %v2575 = vadd.f32 %v2058, %v2511
  %v2576 = vadd.f32 %v2059, %v2512
  %v2577 = vadd.f32 %v2060, %v2513
  %v2578 = vadd.f32 %v2061, %v2514
  %v2579 = vadd.f32 %v2062, %v2515
  %v2580 = vadd.f32 %v2063, %v2516
  %v2581 = vadd.f32 %v2064, %v2517
  %v2582 = vadd.f32 %v2065, %v2518
  %v2583 = vadd.f32 %v2066, %v2519
  %v2584 = vadd.f32 %v2067, %v2520
  %v2585 = vadd.f32 %v2068, %v2521
  %v2586 = vadd.f32 %v2069, %v2522
  %v2587 = vadd.f32 %v2070, %v2523
  %v2588 = vadd.f32 %v2071, %v2524
  %v2589 = vadd.f32 %v2072, %v2525
  %v2590 = vadd.f32 %v2073, %v2526
  %v2591 = vadd.f32 %v2074, %v2527
  %v2592 = vadd.f32 %v2075, %v2528
  %v2593 = vadd.f32 %v2076, %v2529
  %v2594 = vadd.f32 %v2077, %v2530
  %v2595 = vadd.f32 %v2078, %v2531
  %v2596 = vadd.f32 %v2079, %v2532
  %v2597 = vadd.f32 %v2080, %v2533
  %v2598 = vadd.f32 %v2081, %v2534
  %v2599 = vadd.f32 %v2082, %v2535
  %v2600 = vadd.f32 %v2083, %v2536
  %v2601 = vadd.f32 %v2084, %v2537
  %v2602 = vadd.f32 %v2085, %v2538
  %v2603 = vadd.f32 %v2086, %v2539
  %v2604 = vadd.f32 %v2087, %v2540
  %v2605 = vadd.f32 %v2088, %v2541
  %v2606 = vadd.f32 %v2089, %v2542
  %v2607 = vadd.f32 %v2090, %v2543
  %v2608 = vadd.f32 %v2091, %v2544
  %v2609 = vadd.f32 %v2092, %v2545
  %v2610 = vadd.f32 %v2093, %v2546
  %v2611 = vadd.f32 %v2094, %v2547
  %v2612 = vadd.f32 %v2095, %v2548
  %v2613 = vadd.f32 %v2096, %v2549
  %v2614 = vadd.f32 %v2097, %v2550
  %v2615 = vadd.f32 %v2098, %v2551
  %v2616 = vadd.f32 %v2099, %v2552
  %v2617 = vadd.f32 %v2100, %v2553
  %v2618 = vadd.f32 %v2101, %v2554
  %v2619 = vadd.f32 %v2102, %v2555
  %v2620 = vadd.f32 %v2103, %v2556
  %v2621 = vadd.f32 %v2104, %v2557
  %v2622 = vadd.f32 %v2105, %v2558
  %v2623 = vadd.f32 %v2106, %v2559
  %v2624 = vld [vmem:[%s1589 + $0x2] sm:$0xff]
  %v2625 = vld [vmem:[%s1589 + $0x12] sm:$0xff]
  %v2626 = vld [vmem:[%s1589 + $0x22] sm:$0xff]
  %v2627 = vld [vmem:[%s1589 + $0x32] sm:$0xff]
  %v2628 = vld [vmem:[%s1589 + $0x42] sm:$0xff]
  %v2629 = vld [vmem:[%s1589 + $0x52] sm:$0xff]
  %v2630 = vld [vmem:[%s1589 + $0x62] sm:$0xff]
  %v2631 = vld [vmem:[%s1589 + $0x72] sm:$0xff]
  %v2632 = vld [vmem:[%s1589 + $0xa2] sm:$0xff]
  %v2633 = vld [vmem:[%s1589 + $0xb2] sm:$0xff]
  %v2634 = vld [vmem:[%s1589 + $0xc2] sm:$0xff]
  %v2635 = vld [vmem:[%s1589 + $0xd2] sm:$0xff]
  %v2636 = vld [vmem:[%s1589 + $0xe2] sm:$0xff]
  %v2637 = vld [vmem:[%s1589 + $0xf2] sm:$0xff]
  %v2638 = vld [vmem:[%s1589 + $0x102] sm:$0xff]
  %v2639 = vld [vmem:[%s1589 + $0x112] sm:$0xff]
  %v2640 = vld [vmem:[%s1589 + $0x142] sm:$0xff]
  %v2641 = vld [vmem:[%s1589 + $0x152] sm:$0xff]
  %v2642 = vld [vmem:[%s1589 + $0x162] sm:$0xff]
  %v2643 = vld [vmem:[%s1589 + $0x172] sm:$0xff]
  %v2644 = vld [vmem:[%s1589 + $0x182] sm:$0xff]
  %v2645 = vld [vmem:[%s1589 + $0x192] sm:$0xff]
  %v2646 = vld [vmem:[%s1589 + $0x1a2] sm:$0xff]
  %v2647 = vld [vmem:[%s1589 + $0x1b2] sm:$0xff]
  %v2648 = vld [vmem:[%s1589 + $0x1e2] sm:$0xff]
  %v2649 = vld [vmem:[%s1589 + $0x1f2] sm:$0xff]
  %v2650 = vld [vmem:[%s1589 + $0x202] sm:$0xff]
  %v2651 = vld [vmem:[%s1589 + $0x212] sm:$0xff]
  %v2652 = vld [vmem:[%s1589 + $0x222] sm:$0xff]
  %v2653 = vld [vmem:[%s1589 + $0x232] sm:$0xff]
  %v2654 = vld [vmem:[%s1589 + $0x242] sm:$0xff]
  %v2655 = vld [vmem:[%s1589 + $0x252] sm:$0xff]
  %v2656 = vld [vmem:[%s1589 + $0x282] sm:$0xff]
  %v2657 = vld [vmem:[%s1589 + $0x292] sm:$0xff]
  %v2658 = vld [vmem:[%s1589 + $0x2a2] sm:$0xff]
  %v2659 = vld [vmem:[%s1589 + $0x2b2] sm:$0xff]
  %v2660 = vld [vmem:[%s1589 + $0x2c2] sm:$0xff]
  %v2661 = vld [vmem:[%s1589 + $0x2d2] sm:$0xff]
  %v2662 = vld [vmem:[%s1589 + $0x2e2] sm:$0xff]
  %v2663 = vld [vmem:[%s1589 + $0x2f2] sm:$0xff]
  %v2664 = vld [vmem:[%s1589 + $0x322] sm:$0xff]
  %v2665 = vld [vmem:[%s1589 + $0x332] sm:$0xff]
  %v2666 = vld [vmem:[%s1589 + $0x342] sm:$0xff]
  %v2667 = vld [vmem:[%s1589 + $0x352] sm:$0xff]
  %v2668 = vld [vmem:[%s1589 + $0x362] sm:$0xff]
  %v2669 = vld [vmem:[%s1589 + $0x372] sm:$0xff]
  %v2670 = vld [vmem:[%s1589 + $0x382] sm:$0xff]
  %v2671 = vld [vmem:[%s1589 + $0x392] sm:$0xff]
  %v2672 = vld [vmem:[%s1589 + $0x3c2] sm:$0xff]
  %v2673 = vld [vmem:[%s1589 + $0x3d2] sm:$0xff]
  %v2674 = vld [vmem:[%s1589 + $0x3e2] sm:$0xff]
  %v2675 = vld [vmem:[%s1589 + $0x3f2] sm:$0xff]
  %v2676 = vld [vmem:[%s1589 + $0x402] sm:$0xff]
  %v2677 = vld [vmem:[%s1589 + $0x412] sm:$0xff]
  %v2678 = vld [vmem:[%s1589 + $0x422] sm:$0xff]
  %v2679 = vld [vmem:[%s1589 + $0x432] sm:$0xff]
  %v2680 = vld [vmem:[%s1589 + $0x462] sm:$0xff]
  %v2681 = vld [vmem:[%s1589 + $0x472] sm:$0xff]
  %v2682 = vld [vmem:[%s1589 + $0x482] sm:$0xff]
  %v2683 = vld [vmem:[%s1589 + $0x492] sm:$0xff]
  %v2684 = vld [vmem:[%s1589 + $0x4a2] sm:$0xff]
  %v2685 = vld [vmem:[%s1589 + $0x4b2] sm:$0xff]
  %v2686 = vld [vmem:[%s1589 + $0x4c2] sm:$0xff]
  %v2687 = vld [vmem:[%s1589 + $0x4d2] sm:$0xff]
  %v2688 = vld [vmem:[%s1 + $0x5] sm:$0x1]
  %2690 = vset.pattern.permute.xlu0 0
  %2691 = vperm.xlu0 %2690, %v2624
  %v2692 = vpop.permute.xlu0 %2691
  %2695 = vset.pattern.permute.xlu0 0
  %2696 = vperm.xlu0 %2695, %v2625
  %v2697 = vpop.permute.xlu0 %2696
  %2700 = vset.pattern.permute.xlu0 0
  %2701 = vperm.xlu0 %2700, %v2626
  %v2702 = vpop.permute.xlu0 %2701
  %2705 = vset.pattern.permute.xlu0 0
  %2706 = vperm.xlu0 %2705, %v2627
  %v2707 = vpop.permute.xlu0 %2706
  %2710 = vset.pattern.permute.xlu0 0
  %2711 = vperm.xlu0 %2710, %v2628
  %v2712 = vpop.permute.xlu0 %2711
  %2715 = vset.pattern.permute.xlu0 0
  %2716 = vperm.xlu0 %2715, %v2629
  %v2717 = vpop.permute.xlu0 %2716
  %2720 = vset.pattern.permute.xlu0 0
  %2721 = vperm.xlu0 %2720, %v2630
  %v2722 = vpop.permute.xlu0 %2721
  %2725 = vset.pattern.permute.xlu0 0
  %2726 = vperm.xlu0 %2725, %v2631
  %v2727 = vpop.permute.xlu0 %2726
  %2730 = vset.pattern.permute.xlu0 0
  %2731 = vperm.xlu0 %2730, %v2632
  %v2732 = vpop.permute.xlu0 %2731
  %2735 = vset.pattern.permute.xlu0 0
  %2736 = vperm.xlu0 %2735, %v2633
  %v2737 = vpop.permute.xlu0 %2736
  %2740 = vset.pattern.permute.xlu0 0
  %2741 = vperm.xlu0 %2740, %v2634
  %v2742 = vpop.permute.xlu0 %2741
  %2745 = vset.pattern.permute.xlu0 0
  %2746 = vperm.xlu0 %2745, %v2635
  %v2747 = vpop.permute.xlu0 %2746
  %2750 = vset.pattern.permute.xlu0 0
  %2751 = vperm.xlu0 %2750, %v2636
  %v2752 = vpop.permute.xlu0 %2751
  %2755 = vset.pattern.permute.xlu0 0
  %2756 = vperm.xlu0 %2755, %v2637
  %v2757 = vpop.permute.xlu0 %2756
  %2760 = vset.pattern.permute.xlu0 0
  %2761 = vperm.xlu0 %2760, %v2638
  %v2762 = vpop.permute.xlu0 %2761
  %2765 = vset.pattern.permute.xlu0 0
  %2766 = vperm.xlu0 %2765, %v2639
  %v2767 = vpop.permute.xlu0 %2766
  %2770 = vset.pattern.permute.xlu0 0
  %2771 = vperm.xlu0 %2770, %v2640
  %v2772 = vpop.permute.xlu0 %2771
  %2775 = vset.pattern.permute.xlu0 0
  %2776 = vperm.xlu0 %2775, %v2641
  %v2777 = vpop.permute.xlu0 %2776
  %2780 = vset.pattern.permute.xlu0 0
  %2781 = vperm.xlu0 %2780, %v2642
  %v2782 = vpop.permute.xlu0 %2781
  %2785 = vset.pattern.permute.xlu0 0
  %2786 = vperm.xlu0 %2785, %v2643
  %v2787 = vpop.permute.xlu0 %2786
  %2790 = vset.pattern.permute.xlu0 0
  %2791 = vperm.xlu0 %2790, %v2644
  %v2792 = vpop.permute.xlu0 %2791
  %2795 = vset.pattern.permute.xlu0 0
  %2796 = vperm.xlu0 %2795, %v2645
  %v2797 = vpop.permute.xlu0 %2796
  %2800 = vset.pattern.permute.xlu0 0
  %2801 = vperm.xlu0 %2800, %v2646
  %v2802 = vpop.permute.xlu0 %2801
  %2805 = vset.pattern.permute.xlu0 0
  %2806 = vperm.xlu0 %2805, %v2647
  %v2807 = vpop.permute.xlu0 %2806
  %2810 = vset.pattern.permute.xlu0 0
  %2811 = vperm.xlu0 %2810, %v2648
  %v2812 = vpop.permute.xlu0 %2811
  %2815 = vset.pattern.permute.xlu0 0
  %2816 = vperm.xlu0 %2815, %v2649
  %v2817 = vpop.permute.xlu0 %2816
  %2820 = vset.pattern.permute.xlu0 0
  %2821 = vperm.xlu0 %2820, %v2650
  %v2822 = vpop.permute.xlu0 %2821
  %2825 = vset.pattern.permute.xlu0 0
  %2826 = vperm.xlu0 %2825, %v2651
  %v2827 = vpop.permute.xlu0 %2826
  %2830 = vset.pattern.permute.xlu0 0
  %2831 = vperm.xlu0 %2830, %v2652
  %v2832 = vpop.permute.xlu0 %2831
  %2835 = vset.pattern.permute.xlu0 0
  %2836 = vperm.xlu0 %2835, %v2653
  %v2837 = vpop.permute.xlu0 %2836
  %2840 = vset.pattern.permute.xlu0 0
  %2841 = vperm.xlu0 %2840, %v2654
  %v2842 = vpop.permute.xlu0 %2841
  %2845 = vset.pattern.permute.xlu0 0
  %2846 = vperm.xlu0 %2845, %v2655
  %v2847 = vpop.permute.xlu0 %2846
  %2850 = vset.pattern.permute.xlu0 0
  %2851 = vperm.xlu0 %2850, %v2656
  %v2852 = vpop.permute.xlu0 %2851
  %2855 = vset.pattern.permute.xlu0 0
  %2856 = vperm.xlu0 %2855, %v2657
  %v2857 = vpop.permute.xlu0 %2856
  %2860 = vset.pattern.permute.xlu0 0
  %2861 = vperm.xlu0 %2860, %v2658
  %v2862 = vpop.permute.xlu0 %2861
  %2865 = vset.pattern.permute.xlu0 0
  %2866 = vperm.xlu0 %2865, %v2659
  %v2867 = vpop.permute.xlu0 %2866
  %2870 = vset.pattern.permute.xlu0 0
  %2871 = vperm.xlu0 %2870, %v2660
  %v2872 = vpop.permute.xlu0 %2871
  %2875 = vset.pattern.permute.xlu0 0
  %2876 = vperm.xlu0 %2875, %v2661
  %v2877 = vpop.permute.xlu0 %2876
  %2880 = vset.pattern.permute.xlu0 0
  %2881 = vperm.xlu0 %2880, %v2662
  %v2882 = vpop.permute.xlu0 %2881
  %2885 = vset.pattern.permute.xlu0 0
  %2886 = vperm.xlu0 %2885, %v2663
  %v2887 = vpop.permute.xlu0 %2886
  %2890 = vset.pattern.permute.xlu0 0
  %2891 = vperm.xlu0 %2890, %v2664
  %v2892 = vpop.permute.xlu0 %2891
  %2895 = vset.pattern.permute.xlu0 0
  %2896 = vperm.xlu0 %2895, %v2665
  %v2897 = vpop.permute.xlu0 %2896
  %2900 = vset.pattern.permute.xlu0 0
  %2901 = vperm.xlu0 %2900, %v2666
  %v2902 = vpop.permute.xlu0 %2901
  %2905 = vset.pattern.permute.xlu0 0
  %2906 = vperm.xlu0 %2905, %v2667
  %v2907 = vpop.permute.xlu0 %2906
  %2910 = vset.pattern.permute.xlu0 0
  %2911 = vperm.xlu0 %2910, %v2668
  %v2912 = vpop.permute.xlu0 %2911
  %2915 = vset.pattern.permute.xlu0 0
  %2916 = vperm.xlu0 %2915, %v2669
  %v2917 = vpop.permute.xlu0 %2916
  %2920 = vset.pattern.permute.xlu0 0
  %2921 = vperm.xlu0 %2920, %v2670
  %v2922 = vpop.permute.xlu0 %2921
  %2925 = vset.pattern.permute.xlu0 0
  %2926 = vperm.xlu0 %2925, %v2671
  %v2927 = vpop.permute.xlu0 %2926
  %2930 = vset.pattern.permute.xlu0 0
  %2931 = vperm.xlu0 %2930, %v2672
  %v2932 = vpop.permute.xlu0 %2931
  %2935 = vset.pattern.permute.xlu0 0
  %2936 = vperm.xlu0 %2935, %v2673
  %v2937 = vpop.permute.xlu0 %2936
  %2940 = vset.pattern.permute.xlu0 0
  %2941 = vperm.xlu0 %2940, %v2674
  %v2942 = vpop.permute.xlu0 %2941
  %2945 = vset.pattern.permute.xlu0 0
  %2946 = vperm.xlu0 %2945, %v2675
  %v2947 = vpop.permute.xlu0 %2946
  %2950 = vset.pattern.permute.xlu0 0
  %2951 = vperm.xlu0 %2950, %v2676
  %v2952 = vpop.permute.xlu0 %2951
  %2955 = vset.pattern.permute.xlu0 0
  %2956 = vperm.xlu0 %2955, %v2677
  %v2957 = vpop.permute.xlu0 %2956
  %2960 = vset.pattern.permute.xlu0 0
  %2961 = vperm.xlu0 %2960, %v2678
  %v2962 = vpop.permute.xlu0 %2961
  %2965 = vset.pattern.permute.xlu0 0
  %2966 = vperm.xlu0 %2965, %v2679
  %v2967 = vpop.permute.xlu0 %2966
  %2970 = vset.pattern.permute.xlu0 0
  %2971 = vperm.xlu0 %2970, %v2680
  %v2972 = vpop.permute.xlu0 %2971
  %2975 = vset.pattern.permute.xlu0 0
  %2976 = vperm.xlu0 %2975, %v2681
  %v2977 = vpop.permute.xlu0 %2976
  %2980 = vset.pattern.permute.xlu0 0
  %2981 = vperm.xlu0 %2980, %v2682
  %v2982 = vpop.permute.xlu0 %2981
  %2985 = vset.pattern.permute.xlu0 0
  %2986 = vperm.xlu0 %2985, %v2683
  %v2987 = vpop.permute.xlu0 %2986
  %2990 = vset.pattern.permute.xlu0 0
  %2991 = vperm.xlu0 %2990, %v2684
  %v2992 = vpop.permute.xlu0 %2991
  %2995 = vset.pattern.permute.xlu0 0
  %2996 = vperm.xlu0 %2995, %v2685
  %v2997 = vpop.permute.xlu0 %2996
  %3000 = vset.pattern.permute.xlu0 0
  %3001 = vperm.xlu0 %3000, %v2686
  %v3002 = vpop.permute.xlu0 %3001
  %3005 = vset.pattern.permute.xlu0 0
  %3006 = vperm.xlu0 %3005, %v2687
  %v3007 = vpop.permute.xlu0 %3006
  %v3009 = vlaneseq
  %v3010 = vshrl.u32 %v3009, 7
  %v3011 = vsub.s32 0, %v3010
  %v3012 = vrot.slane %v2688, %v3011
  %v3013 = vmul.f32 %v2692, %v3012
  %v3014 = vmul.f32 %v2697, %v3012
  %v3015 = vmul.f32 %v2702, %v3012
  %v3016 = vmul.f32 %v2707, %v3012
  %v3017 = vmul.f32 %v2712, %v3012
  %v3018 = vmul.f32 %v2717, %v3012
  %v3019 = vmul.f32 %v2722, %v3012
  %v3020 = vmul.f32 %v2727, %v3012
  %v3021 = vmul.f32 %v2732, %v3012
  %v3022 = vmul.f32 %v2737, %v3012
  %v3023 = vmul.f32 %v2742, %v3012
  %v3024 = vmul.f32 %v2747, %v3012
  %v3025 = vmul.f32 %v2752, %v3012
  %v3026 = vmul.f32 %v2757, %v3012
  %v3027 = vmul.f32 %v2762, %v3012
  %v3028 = vmul.f32 %v2767, %v3012
  %v3029 = vmul.f32 %v2772, %v3012
  %v3030 = vmul.f32 %v2777, %v3012
  %v3031 = vmul.f32 %v2782, %v3012
  %v3032 = vmul.f32 %v2787, %v3012
  %v3033 = vmul.f32 %v2792, %v3012
  %v3034 = vmul.f32 %v2797, %v3012
  %v3035 = vmul.f32 %v2802, %v3012
  %v3036 = vmul.f32 %v2807, %v3012
  %v3037 = vmul.f32 %v2812, %v3012
  %v3038 = vmul.f32 %v2817, %v3012
  %v3039 = vmul.f32 %v2822, %v3012
  %v3040 = vmul.f32 %v2827, %v3012
  %v3041 = vmul.f32 %v2832, %v3012
  %v3042 = vmul.f32 %v2837, %v3012
  %v3043 = vmul.f32 %v2842, %v3012
  %v3044 = vmul.f32 %v2847, %v3012
  %v3045 = vmul.f32 %v2852, %v3012
  %v3046 = vmul.f32 %v2857, %v3012
  %v3047 = vmul.f32 %v2862, %v3012
  %v3048 = vmul.f32 %v2867, %v3012
  %v3049 = vmul.f32 %v2872, %v3012
  %v3050 = vmul.f32 %v2877, %v3012
  %v3051 = vmul.f32 %v2882, %v3012
  %v3052 = vmul.f32 %v2887, %v3012
  %v3053 = vmul.f32 %v2892, %v3012
  %v3054 = vmul.f32 %v2897, %v3012
  %v3055 = vmul.f32 %v2902, %v3012
  %v3056 = vmul.f32 %v2907, %v3012
  %v3057 = vmul.f32 %v2912, %v3012
  %v3058 = vmul.f32 %v2917, %v3012
  %v3059 = vmul.f32 %v2922, %v3012
  %v3060 = vmul.f32 %v2927, %v3012
  %v3061 = vmul.f32 %v2932, %v3012
  %v3062 = vmul.f32 %v2937, %v3012
  %v3063 = vmul.f32 %v2942, %v3012
  %v3064 = vmul.f32 %v2947, %v3012
  %v3065 = vmul.f32 %v2952, %v3012
  %v3066 = vmul.f32 %v2957, %v3012
  %v3067 = vmul.f32 %v2962, %v3012
  %v3068 = vmul.f32 %v2967, %v3012
  %v3069 = vmul.f32 %v2972, %v3012
  %v3070 = vmul.f32 %v2977, %v3012
  %v3071 = vmul.f32 %v2982, %v3012
  %v3072 = vmul.f32 %v2987, %v3012
  %v3073 = vmul.f32 %v2992, %v3012
  %v3074 = vmul.f32 %v2997, %v3012
  %v3075 = vmul.f32 %v3002, %v3012
  %v3076 = vmul.f32 %v3007, %v3012
  %v3077 = vadd.f32 %v2560, %v3013
  %v3078 = vadd.f32 %v2561, %v3014
  %v3079 = vadd.f32 %v2562, %v3015
  %v3080 = vadd.f32 %v2563, %v3016
  %v3081 = vadd.f32 %v2564, %v3017
  %v3082 = vadd.f32 %v2565, %v3018
  %v3083 = vadd.f32 %v2566, %v3019
  %v3084 = vadd.f32 %v2567, %v3020
  %v3085 = vadd.f32 %v2568, %v3021
  %v3086 = vadd.f32 %v2569, %v3022
  %v3087 = vadd.f32 %v2570, %v3023
  %v3088 = vadd.f32 %v2571, %v3024
  %v3089 = vadd.f32 %v2572, %v3025
  %v3090 = vadd.f32 %v2573, %v3026
  %v3091 = vadd.f32 %v2574, %v3027
  %v3092 = vadd.f32 %v2575, %v3028
  %v3093 = vadd.f32 %v2576, %v3029
  %v3094 = vadd.f32 %v2577, %v3030
  %v3095 = vadd.f32 %v2578, %v3031
  %v3096 = vadd.f32 %v2579, %v3032
  %v3097 = vadd.f32 %v2580, %v3033
  %v3098 = vadd.f32 %v2581, %v3034
  %v3099 = vadd.f32 %v2582, %v3035
  %v3100 = vadd.f32 %v2583, %v3036
  %v3101 = vadd.f32 %v2584, %v3037
  %v3102 = vadd.f32 %v2585, %v3038
  %v3103 = vadd.f32 %v2586, %v3039
  %v3104 = vadd.f32 %v2587, %v3040
  %v3105 = vadd.f32 %v2588, %v3041
  %v3106 = vadd.f32 %v2589, %v3042
  %v3107 = vadd.f32 %v2590, %v3043
  %v3108 = vadd.f32 %v2591, %v3044
  %v3109 = vadd.f32 %v2592, %v3045
  %v3110 = vadd.f32 %v2593, %v3046
  %v3111 = vadd.f32 %v2594, %v3047
  %v3112 = vadd.f32 %v2595, %v3048
  %v3113 = vadd.f32 %v2596, %v3049
  %v3114 = vadd.f32 %v2597, %v3050
  %v3115 = vadd.f32 %v2598, %v3051
  %v3116 = vadd.f32 %v2599, %v3052
  %v3117 = vadd.f32 %v2600, %v3053
  %v3118 = vadd.f32 %v2601, %v3054
  %v3119 = vadd.f32 %v2602, %v3055
  %v3120 = vadd.f32 %v2603, %v3056
  %v3121 = vadd.f32 %v2604, %v3057
  %v3122 = vadd.f32 %v2605, %v3058
  %v3123 = vadd.f32 %v2606, %v3059
  %v3124 = vadd.f32 %v2607, %v3060
  %v3125 = vadd.f32 %v2608, %v3061
  %v3126 = vadd.f32 %v2609, %v3062
  %v3127 = vadd.f32 %v2610, %v3063
  %v3128 = vadd.f32 %v2611, %v3064
  %v3129 = vadd.f32 %v2612, %v3065
  %v3130 = vadd.f32 %v2613, %v3066
  %v3131 = vadd.f32 %v2614, %v3067
  %v3132 = vadd.f32 %v2615, %v3068
  %v3133 = vadd.f32 %v2616, %v3069
  %v3134 = vadd.f32 %v2617, %v3070
  %v3135 = vadd.f32 %v2618, %v3071
  %v3136 = vadd.f32 %v2619, %v3072
  %v3137 = vadd.f32 %v2620, %v3073
  %v3138 = vadd.f32 %v2621, %v3074
  %v3139 = vadd.f32 %v2622, %v3075
  %v3140 = vadd.f32 %v2623, %v3076
  %s3141 = scalar_lea.vmem %s0, 32
  %v3142 = vld [vmem:[%s3141] sm:$0xff]
  %v3143 = vld [vmem:[%s3141 + $0x10] sm:$0xff]
  %v3144 = vld [vmem:[%s3141 + $0x20] sm:$0xff]
  %v3145 = vld [vmem:[%s3141 + $0x30] sm:$0xff]
  %v3146 = vld [vmem:[%s3141 + $0x40] sm:$0xff]
  %v3147 = vld [vmem:[%s3141 + $0x50] sm:$0xff]
  %v3148 = vld [vmem:[%s3141 + $0x60] sm:$0xff]
  %v3149 = vld [vmem:[%s3141 + $0x70] sm:$0xff]
  %v3150 = vld [vmem:[%s3141 + $0xa0] sm:$0xff]
  %v3151 = vld [vmem:[%s3141 + $0xb0] sm:$0xff]
  %v3152 = vld [vmem:[%s3141 + $0xc0] sm:$0xff]
  %v3153 = vld [vmem:[%s3141 + $0xd0] sm:$0xff]
  %v3154 = vld [vmem:[%s3141 + $0xe0] sm:$0xff]
  %v3155 = vld [vmem:[%s3141 + $0xf0] sm:$0xff]
  %v3156 = vld [vmem:[%s3141 + $0x100] sm:$0xff]
  %v3157 = vld [vmem:[%s3141 + $0x110] sm:$0xff]
  %v3158 = vld [vmem:[%s3141 + $0x140] sm:$0xff]
  %v3159 = vld [vmem:[%s3141 + $0x150] sm:$0xff]
  %v3160 = vld [vmem:[%s3141 + $0x160] sm:$0xff]
  %v3161 = vld [vmem:[%s3141 + $0x170] sm:$0xff]
  %v3162 = vld [vmem:[%s3141 + $0x180] sm:$0xff]
  %v3163 = vld [vmem:[%s3141 + $0x190] sm:$0xff]
  %v3164 = vld [vmem:[%s3141 + $0x1a0] sm:$0xff]
  %v3165 = vld [vmem:[%s3141 + $0x1b0] sm:$0xff]
  %v3166 = vld [vmem:[%s3141 + $0x1e0] sm:$0xff]
  %v3167 = vld [vmem:[%s3141 + $0x1f0] sm:$0xff]
  %v3168 = vld [vmem:[%s3141 + $0x200] sm:$0xff]
  %v3169 = vld [vmem:[%s3141 + $0x210] sm:$0xff]
  %v3170 = vld [vmem:[%s3141 + $0x220] sm:$0xff]
  %v3171 = vld [vmem:[%s3141 + $0x230] sm:$0xff]
  %v3172 = vld [vmem:[%s3141 + $0x240] sm:$0xff]
  %v3173 = vld [vmem:[%s3141 + $0x250] sm:$0xff]
  %v3174 = vld [vmem:[%s3141 + $0x280] sm:$0xff]
  %v3175 = vld [vmem:[%s3141 + $0x290] sm:$0xff]
  %v3176 = vld [vmem:[%s3141 + $0x2a0] sm:$0xff]
  %v3177 = vld [vmem:[%s3141 + $0x2b0] sm:$0xff]
  %v3178 = vld [vmem:[%s3141 + $0x2c0] sm:$0xff]
  %v3179 = vld [vmem:[%s3141 + $0x2d0] sm:$0xff]
  %v3180 = vld [vmem:[%s3141 + $0x2e0] sm:$0xff]
  %v3181 = vld [vmem:[%s3141 + $0x2f0] sm:$0xff]
  %v3182 = vld [vmem:[%s3141 + $0x320] sm:$0xff]
  %v3183 = vld [vmem:[%s3141 + $0x330] sm:$0xff]
  %v3184 = vld [vmem:[%s3141 + $0x340] sm:$0xff]
  %v3185 = vld [vmem:[%s3141 + $0x350] sm:$0xff]
  %v3186 = vld [vmem:[%s3141 + $0x360] sm:$0xff]
  %v3187 = vld [vmem:[%s3141 + $0x370] sm:$0xff]
  %v3188 = vld [vmem:[%s3141 + $0x380] sm:$0xff]
  %v3189 = vld [vmem:[%s3141 + $0x390] sm:$0xff]
  %v3190 = vld [vmem:[%s3141 + $0x3c0] sm:$0xff]
  %v3191 = vld [vmem:[%s3141 + $0x3d0] sm:$0xff]
  %v3192 = vld [vmem:[%s3141 + $0x3e0] sm:$0xff]
  %v3193 = vld [vmem:[%s3141 + $0x3f0] sm:$0xff]
  %v3194 = vld [vmem:[%s3141 + $0x400] sm:$0xff]
  %v3195 = vld [vmem:[%s3141 + $0x410] sm:$0xff]
  %v3196 = vld [vmem:[%s3141 + $0x420] sm:$0xff]
  %v3197 = vld [vmem:[%s3141 + $0x430] sm:$0xff]
  %v3198 = vld [vmem:[%s3141 + $0x460] sm:$0xff]
  %v3199 = vld [vmem:[%s3141 + $0x470] sm:$0xff]
  %v3200 = vld [vmem:[%s3141 + $0x480] sm:$0xff]
  %v3201 = vld [vmem:[%s3141 + $0x490] sm:$0xff]
  %v3202 = vld [vmem:[%s3141 + $0x4a0] sm:$0xff]
  %v3203 = vld [vmem:[%s3141 + $0x4b0] sm:$0xff]
  %v3204 = vld [vmem:[%s3141 + $0x4c0] sm:$0xff]
  %v3205 = vld [vmem:[%s3141 + $0x4d0] sm:$0xff]
  %v3206 = vld [vmem:[%s1 + $0x6] sm:$0x1]
  %3208 = vset.pattern.permute.xlu0 0
  %3209 = vperm.xlu0 %3208, %v3142
  %v3210 = vpop.permute.xlu0 %3209
  %3213 = vset.pattern.permute.xlu0 0
  %3214 = vperm.xlu0 %3213, %v3143
  %v3215 = vpop.permute.xlu0 %3214
  %3218 = vset.pattern.permute.xlu0 0
  %3219 = vperm.xlu0 %3218, %v3144
  %v3220 = vpop.permute.xlu0 %3219
  %3223 = vset.pattern.permute.xlu0 0
  %3224 = vperm.xlu0 %3223, %v3145
  %v3225 = vpop.permute.xlu0 %3224
  %3228 = vset.pattern.permute.xlu0 0
  %3229 = vperm.xlu0 %3228, %v3146
  %v3230 = vpop.permute.xlu0 %3229
  %3233 = vset.pattern.permute.xlu0 0
  %3234 = vperm.xlu0 %3233, %v3147
  %v3235 = vpop.permute.xlu0 %3234
  %3238 = vset.pattern.permute.xlu0 0
  %3239 = vperm.xlu0 %3238, %v3148
  %v3240 = vpop.permute.xlu0 %3239
  %3243 = vset.pattern.permute.xlu0 0
  %3244 = vperm.xlu0 %3243, %v3149
  %v3245 = vpop.permute.xlu0 %3244
  %3248 = vset.pattern.permute.xlu0 0
  %3249 = vperm.xlu0 %3248, %v3150
  %v3250 = vpop.permute.xlu0 %3249
  %3253 = vset.pattern.permute.xlu0 0
  %3254 = vperm.xlu0 %3253, %v3151
  %v3255 = vpop.permute.xlu0 %3254
  %3258 = vset.pattern.permute.xlu0 0
  %3259 = vperm.xlu0 %3258, %v3152
  %v3260 = vpop.permute.xlu0 %3259
  %3263 = vset.pattern.permute.xlu0 0
  %3264 = vperm.xlu0 %3263, %v3153
  %v3265 = vpop.permute.xlu0 %3264
  %3268 = vset.pattern.permute.xlu0 0
  %3269 = vperm.xlu0 %3268, %v3154
  %v3270 = vpop.permute.xlu0 %3269
  %3273 = vset.pattern.permute.xlu0 0
  %3274 = vperm.xlu0 %3273, %v3155
  %v3275 = vpop.permute.xlu0 %3274
  %3278 = vset.pattern.permute.xlu0 0
  %3279 = vperm.xlu0 %3278, %v3156
  %v3280 = vpop.permute.xlu0 %3279
  %3283 = vset.pattern.permute.xlu0 0
  %3284 = vperm.xlu0 %3283, %v3157
  %v3285 = vpop.permute.xlu0 %3284
  %3288 = vset.pattern.permute.xlu0 0
  %3289 = vperm.xlu0 %3288, %v3158
  %v3290 = vpop.permute.xlu0 %3289
  %3293 = vset.pattern.permute.xlu0 0
  %3294 = vperm.xlu0 %3293, %v3159
  %v3295 = vpop.permute.xlu0 %3294
  %3298 = vset.pattern.permute.xlu0 0
  %3299 = vperm.xlu0 %3298, %v3160
  %v3300 = vpop.permute.xlu0 %3299
  %3303 = vset.pattern.permute.xlu0 0
  %3304 = vperm.xlu0 %3303, %v3161
  %v3305 = vpop.permute.xlu0 %3304
  %3308 = vset.pattern.permute.xlu0 0
  %3309 = vperm.xlu0 %3308, %v3162
  %v3310 = vpop.permute.xlu0 %3309
  %3313 = vset.pattern.permute.xlu0 0
  %3314 = vperm.xlu0 %3313, %v3163
  %v3315 = vpop.permute.xlu0 %3314
  %3318 = vset.pattern.permute.xlu0 0
  %3319 = vperm.xlu0 %3318, %v3164
  %v3320 = vpop.permute.xlu0 %3319
  %3323 = vset.pattern.permute.xlu0 0
  %3324 = vperm.xlu0 %3323, %v3165
  %v3325 = vpop.permute.xlu0 %3324
  %3328 = vset.pattern.permute.xlu0 0
  %3329 = vperm.xlu0 %3328, %v3166
  %v3330 = vpop.permute.xlu0 %3329
  %3333 = vset.pattern.permute.xlu0 0
  %3334 = vperm.xlu0 %3333, %v3167
  %v3335 = vpop.permute.xlu0 %3334
  %3338 = vset.pattern.permute.xlu0 0
  %3339 = vperm.xlu0 %3338, %v3168
  %v3340 = vpop.permute.xlu0 %3339
  %3343 = vset.pattern.permute.xlu0 0
  %3344 = vperm.xlu0 %3343, %v3169
  %v3345 = vpop.permute.xlu0 %3344
  %3348 = vset.pattern.permute.xlu0 0
  %3349 = vperm.xlu0 %3348, %v3170
  %v3350 = vpop.permute.xlu0 %3349
  %3353 = vset.pattern.permute.xlu0 0
  %3354 = vperm.xlu0 %3353, %v3171
  %v3355 = vpop.permute.xlu0 %3354
  %3358 = vset.pattern.permute.xlu0 0
  %3359 = vperm.xlu0 %3358, %v3172
  %v3360 = vpop.permute.xlu0 %3359
  %3363 = vset.pattern.permute.xlu0 0
  %3364 = vperm.xlu0 %3363, %v3173
  %v3365 = vpop.permute.xlu0 %3364
  %3368 = vset.pattern.permute.xlu0 0
  %3369 = vperm.xlu0 %3368, %v3174
  %v3370 = vpop.permute.xlu0 %3369
  %3373 = vset.pattern.permute.xlu0 0
  %3374 = vperm.xlu0 %3373, %v3175
  %v3375 = vpop.permute.xlu0 %3374
  %3378 = vset.pattern.permute.xlu0 0
  %3379 = vperm.xlu0 %3378, %v3176
  %v3380 = vpop.permute.xlu0 %3379
  %3383 = vset.pattern.permute.xlu0 0
  %3384 = vperm.xlu0 %3383, %v3177
  %v3385 = vpop.permute.xlu0 %3384
  %3388 = vset.pattern.permute.xlu0 0
  %3389 = vperm.xlu0 %3388, %v3178
  %v3390 = vpop.permute.xlu0 %3389
  %3393 = vset.pattern.permute.xlu0 0
  %3394 = vperm.xlu0 %3393, %v3179
  %v3395 = vpop.permute.xlu0 %3394
  %3398 = vset.pattern.permute.xlu0 0
  %3399 = vperm.xlu0 %3398, %v3180
  %v3400 = vpop.permute.xlu0 %3399
  %3403 = vset.pattern.permute.xlu0 0
  %3404 = vperm.xlu0 %3403, %v3181
  %v3405 = vpop.permute.xlu0 %3404
  %3408 = vset.pattern.permute.xlu0 0
  %3409 = vperm.xlu0 %3408, %v3182
  %v3410 = vpop.permute.xlu0 %3409
  %3413 = vset.pattern.permute.xlu0 0
  %3414 = vperm.xlu0 %3413, %v3183
  %v3415 = vpop.permute.xlu0 %3414
  %3418 = vset.pattern.permute.xlu0 0
  %3419 = vperm.xlu0 %3418, %v3184
  %v3420 = vpop.permute.xlu0 %3419
  %3423 = vset.pattern.permute.xlu0 0
  %3424 = vperm.xlu0 %3423, %v3185
  %v3425 = vpop.permute.xlu0 %3424
  %3428 = vset.pattern.permute.xlu0 0
  %3429 = vperm.xlu0 %3428, %v3186
  %v3430 = vpop.permute.xlu0 %3429
  %3433 = vset.pattern.permute.xlu0 0
  %3434 = vperm.xlu0 %3433, %v3187
  %v3435 = vpop.permute.xlu0 %3434
  %3438 = vset.pattern.permute.xlu0 0
  %3439 = vperm.xlu0 %3438, %v3188
  %v3440 = vpop.permute.xlu0 %3439
  %3443 = vset.pattern.permute.xlu0 0
  %3444 = vperm.xlu0 %3443, %v3189
  %v3445 = vpop.permute.xlu0 %3444
  %3448 = vset.pattern.permute.xlu0 0
  %3449 = vperm.xlu0 %3448, %v3190
  %v3450 = vpop.permute.xlu0 %3449
  %3453 = vset.pattern.permute.xlu0 0
  %3454 = vperm.xlu0 %3453, %v3191
  %v3455 = vpop.permute.xlu0 %3454
  %3458 = vset.pattern.permute.xlu0 0
  %3459 = vperm.xlu0 %3458, %v3192
  %v3460 = vpop.permute.xlu0 %3459
  %3463 = vset.pattern.permute.xlu0 0
  %3464 = vperm.xlu0 %3463, %v3193
  %v3465 = vpop.permute.xlu0 %3464
  %3468 = vset.pattern.permute.xlu0 0
  %3469 = vperm.xlu0 %3468, %v3194
  %v3470 = vpop.permute.xlu0 %3469
  %3473 = vset.pattern.permute.xlu0 0
  %3474 = vperm.xlu0 %3473, %v3195
  %v3475 = vpop.permute.xlu0 %3474
  %3478 = vset.pattern.permute.xlu0 0
  %3479 = vperm.xlu0 %3478, %v3196
  %v3480 = vpop.permute.xlu0 %3479
  %3483 = vset.pattern.permute.xlu0 0
  %3484 = vperm.xlu0 %3483, %v3197
  %v3485 = vpop.permute.xlu0 %3484
  %3488 = vset.pattern.permute.xlu0 0
  %3489 = vperm.xlu0 %3488, %v3198
  %v3490 = vpop.permute.xlu0 %3489
  %3493 = vset.pattern.permute.xlu0 0
  %3494 = vperm.xlu0 %3493, %v3199
  %v3495 = vpop.permute.xlu0 %3494
  %3498 = vset.pattern.permute.xlu0 0
  %3499 = vperm.xlu0 %3498, %v3200
  %v3500 = vpop.permute.xlu0 %3499
  %3503 = vset.pattern.permute.xlu0 0
  %3504 = vperm.xlu0 %3503, %v3201
  %v3505 = vpop.permute.xlu0 %3504
  %3508 = vset.pattern.permute.xlu0 0
  %3509 = vperm.xlu0 %3508, %v3202
  %v3510 = vpop.permute.xlu0 %3509
  %3513 = vset.pattern.permute.xlu0 0
  %3514 = vperm.xlu0 %3513, %v3203
  %v3515 = vpop.permute.xlu0 %3514
  %3518 = vset.pattern.permute.xlu0 0
  %3519 = vperm.xlu0 %3518, %v3204
  %v3520 = vpop.permute.xlu0 %3519
  %3523 = vset.pattern.permute.xlu0 0
  %3524 = vperm.xlu0 %3523, %v3205
  %v3525 = vpop.permute.xlu0 %3524
  %v3527 = vlaneseq
  %v3528 = vshrl.u32 %v3527, 7
  %v3529 = vsub.s32 0, %v3528
  %v3530 = vrot.slane %v3206, %v3529
  %v3531 = vmul.f32 %v3210, %v3530
  %v3532 = vmul.f32 %v3215, %v3530
  %v3533 = vmul.f32 %v3220, %v3530
  %v3534 = vmul.f32 %v3225, %v3530
  %v3535 = vmul.f32 %v3230, %v3530
  %v3536 = vmul.f32 %v3235, %v3530
  %v3537 = vmul.f32 %v3240, %v3530
  %v3538 = vmul.f32 %v3245, %v3530
  %v3539 = vmul.f32 %v3250, %v3530
  %v3540 = vmul.f32 %v3255, %v3530
  %v3541 = vmul.f32 %v3260, %v3530
  %v3542 = vmul.f32 %v3265, %v3530
  %v3543 = vmul.f32 %v3270, %v3530
  %v3544 = vmul.f32 %v3275, %v3530
  %v3545 = vmul.f32 %v3280, %v3530
  %v3546 = vmul.f32 %v3285, %v3530
  %v3547 = vmul.f32 %v3290, %v3530
  %v3548 = vmul.f32 %v3295, %v3530
  %v3549 = vmul.f32 %v3300, %v3530
  %v3550 = vmul.f32 %v3305, %v3530
  %v3551 = vmul.f32 %v3310, %v3530
  %v3552 = vmul.f32 %v3315, %v3530
  %v3553 = vmul.f32 %v3320, %v3530
  %v3554 = vmul.f32 %v3325, %v3530
  %v3555 = vmul.f32 %v3330, %v3530
  %v3556 = vmul.f32 %v3335, %v3530
  %v3557 = vmul.f32 %v3340, %v3530
  %v3558 = vmul.f32 %v3345, %v3530
  %v3559 = vmul.f32 %v3350, %v3530
  %v3560 = vmul.f32 %v3355, %v3530
  %v3561 = vmul.f32 %v3360, %v3530
  %v3562 = vmul.f32 %v3365, %v3530
  %v3563 = vmul.f32 %v3370, %v3530
  %v3564 = vmul.f32 %v3375, %v3530
  %v3565 = vmul.f32 %v3380, %v3530
  %v3566 = vmul.f32 %v3385, %v3530
  %v3567 = vmul.f32 %v3390, %v3530
  %v3568 = vmul.f32 %v3395, %v3530
  %v3569 = vmul.f32 %v3400, %v3530
  %v3570 = vmul.f32 %v3405, %v3530
  %v3571 = vmul.f32 %v3410, %v3530
  %v3572 = vmul.f32 %v3415, %v3530
  %v3573 = vmul.f32 %v3420, %v3530
  %v3574 = vmul.f32 %v3425, %v3530
  %v3575 = vmul.f32 %v3430, %v3530
  %v3576 = vmul.f32 %v3435, %v3530
  %v3577 = vmul.f32 %v3440, %v3530
  %v3578 = vmul.f32 %v3445, %v3530
  %v3579 = vmul.f32 %v3450, %v3530
  %v3580 = vmul.f32 %v3455, %v3530
  %v3581 = vmul.f32 %v3460, %v3530
  %v3582 = vmul.f32 %v3465, %v3530
  %v3583 = vmul.f32 %v3470, %v3530
  %v3584 = vmul.f32 %v3475, %v3530
  %v3585 = vmul.f32 %v3480, %v3530
  %v3586 = vmul.f32 %v3485, %v3530
  %v3587 = vmul.f32 %v3490, %v3530
  %v3588 = vmul.f32 %v3495, %v3530
  %v3589 = vmul.f32 %v3500, %v3530
  %v3590 = vmul.f32 %v3505, %v3530
  %v3591 = vmul.f32 %v3510, %v3530
  %v3592 = vmul.f32 %v3515, %v3530
  %v3593 = vmul.f32 %v3520, %v3530
  %v3594 = vmul.f32 %v3525, %v3530
  %v3595 = vadd.f32 %v3077, %v3531
  %v3596 = vadd.f32 %v3078, %v3532
  %v3597 = vadd.f32 %v3079, %v3533
  %v3598 = vadd.f32 %v3080, %v3534
  %v3599 = vadd.f32 %v3081, %v3535
  %v3600 = vadd.f32 %v3082, %v3536
  %v3601 = vadd.f32 %v3083, %v3537
  %v3602 = vadd.f32 %v3084, %v3538
  %v3603 = vadd.f32 %v3085, %v3539
  %v3604 = vadd.f32 %v3086, %v3540
  %v3605 = vadd.f32 %v3087, %v3541
  %v3606 = vadd.f32 %v3088, %v3542
  %v3607 = vadd.f32 %v3089, %v3543
  %v3608 = vadd.f32 %v3090, %v3544
  %v3609 = vadd.f32 %v3091, %v3545
  %v3610 = vadd.f32 %v3092, %v3546
  %v3611 = vadd.f32 %v3093, %v3547
  %v3612 = vadd.f32 %v3094, %v3548
  %v3613 = vadd.f32 %v3095, %v3549
  %v3614 = vadd.f32 %v3096, %v3550
  %v3615 = vadd.f32 %v3097, %v3551
  %v3616 = vadd.f32 %v3098, %v3552
  %v3617 = vadd.f32 %v3099, %v3553
  %v3618 = vadd.f32 %v3100, %v3554
  %v3619 = vadd.f32 %v3101, %v3555
  %v3620 = vadd.f32 %v3102, %v3556
  %v3621 = vadd.f32 %v3103, %v3557
  %v3622 = vadd.f32 %v3104, %v3558
  %v3623 = vadd.f32 %v3105, %v3559
  %v3624 = vadd.f32 %v3106, %v3560
  %v3625 = vadd.f32 %v3107, %v3561
  %v3626 = vadd.f32 %v3108, %v3562
  %v3627 = vadd.f32 %v3109, %v3563
  %v3628 = vadd.f32 %v3110, %v3564
  %v3629 = vadd.f32 %v3111, %v3565
  %v3630 = vadd.f32 %v3112, %v3566
  %v3631 = vadd.f32 %v3113, %v3567
  %v3632 = vadd.f32 %v3114, %v3568
  %v3633 = vadd.f32 %v3115, %v3569
  %v3634 = vadd.f32 %v3116, %v3570
  %v3635 = vadd.f32 %v3117, %v3571
  %v3636 = vadd.f32 %v3118, %v3572
  %v3637 = vadd.f32 %v3119, %v3573
  %v3638 = vadd.f32 %v3120, %v3574
  %v3639 = vadd.f32 %v3121, %v3575
  %v3640 = vadd.f32 %v3122, %v3576
  %v3641 = vadd.f32 %v3123, %v3577
  %v3642 = vadd.f32 %v3124, %v3578
  %v3643 = vadd.f32 %v3125, %v3579
  %v3644 = vadd.f32 %v3126, %v3580
  %v3645 = vadd.f32 %v3127, %v3581
  %v3646 = vadd.f32 %v3128, %v3582
  %v3647 = vadd.f32 %v3129, %v3583
  %v3648 = vadd.f32 %v3130, %v3584
  %v3649 = vadd.f32 %v3131, %v3585
  %v3650 = vadd.f32 %v3132, %v3586
  %v3651 = vadd.f32 %v3133, %v3587
  %v3652 = vadd.f32 %v3134, %v3588
  %v3653 = vadd.f32 %v3135, %v3589
  %v3654 = vadd.f32 %v3136, %v3590
  %v3655 = vadd.f32 %v3137, %v3591
  %v3656 = vadd.f32 %v3138, %v3592
  %v3657 = vadd.f32 %v3139, %v3593
  %v3658 = vadd.f32 %v3140, %v3594
  %v3659 = vld [vmem:[%s3141 + $0x1] sm:$0xff]
  %v3660 = vld [vmem:[%s3141 + $0x11] sm:$0xff]
  %v3661 = vld [vmem:[%s3141 + $0x21] sm:$0xff]
  %v3662 = vld [vmem:[%s3141 + $0x31] sm:$0xff]
  %v3663 = vld [vmem:[%s3141 + $0x41] sm:$0xff]
  %v3664 = vld [vmem:[%s3141 + $0x51] sm:$0xff]
  %v3665 = vld [vmem:[%s3141 + $0x61] sm:$0xff]
  %v3666 = vld [vmem:[%s3141 + $0x71] sm:$0xff]
  %v3667 = vld [vmem:[%s3141 + $0xa1] sm:$0xff]
  %v3668 = vld [vmem:[%s3141 + $0xb1] sm:$0xff]
  %v3669 = vld [vmem:[%s3141 + $0xc1] sm:$0xff]
  %v3670 = vld [vmem:[%s3141 + $0xd1] sm:$0xff]
  %v3671 = vld [vmem:[%s3141 + $0xe1] sm:$0xff]
  %v3672 = vld [vmem:[%s3141 + $0xf1] sm:$0xff]
  %v3673 = vld [vmem:[%s3141 + $0x101] sm:$0xff]
  %v3674 = vld [vmem:[%s3141 + $0x111] sm:$0xff]
  %v3675 = vld [vmem:[%s3141 + $0x141] sm:$0xff]
  %v3676 = vld [vmem:[%s3141 + $0x151] sm:$0xff]
  %v3677 = vld [vmem:[%s3141 + $0x161] sm:$0xff]
  %v3678 = vld [vmem:[%s3141 + $0x171] sm:$0xff]
  %v3679 = vld [vmem:[%s3141 + $0x181] sm:$0xff]
  %v3680 = vld [vmem:[%s3141 + $0x191] sm:$0xff]
  %v3681 = vld [vmem:[%s3141 + $0x1a1] sm:$0xff]
  %v3682 = vld [vmem:[%s3141 + $0x1b1] sm:$0xff]
  %v3683 = vld [vmem:[%s3141 + $0x1e1] sm:$0xff]
  %v3684 = vld [vmem:[%s3141 + $0x1f1] sm:$0xff]
  %v3685 = vld [vmem:[%s3141 + $0x201] sm:$0xff]
  %v3686 = vld [vmem:[%s3141 + $0x211] sm:$0xff]
  %v3687 = vld [vmem:[%s3141 + $0x221] sm:$0xff]
  %v3688 = vld [vmem:[%s3141 + $0x231] sm:$0xff]
  %v3689 = vld [vmem:[%s3141 + $0x241] sm:$0xff]
  %v3690 = vld [vmem:[%s3141 + $0x251] sm:$0xff]
  %v3691 = vld [vmem:[%s3141 + $0x281] sm:$0xff]
  %v3692 = vld [vmem:[%s3141 + $0x291] sm:$0xff]
  %v3693 = vld [vmem:[%s3141 + $0x2a1] sm:$0xff]
  %v3694 = vld [vmem:[%s3141 + $0x2b1] sm:$0xff]
  %v3695 = vld [vmem:[%s3141 + $0x2c1] sm:$0xff]
  %v3696 = vld [vmem:[%s3141 + $0x2d1] sm:$0xff]
  %v3697 = vld [vmem:[%s3141 + $0x2e1] sm:$0xff]
  %v3698 = vld [vmem:[%s3141 + $0x2f1] sm:$0xff]
  %v3699 = vld [vmem:[%s3141 + $0x321] sm:$0xff]
  %v3700 = vld [vmem:[%s3141 + $0x331] sm:$0xff]
  %v3701 = vld [vmem:[%s3141 + $0x341] sm:$0xff]
  %v3702 = vld [vmem:[%s3141 + $0x351] sm:$0xff]
  %v3703 = vld [vmem:[%s3141 + $0x361] sm:$0xff]
  %v3704 = vld [vmem:[%s3141 + $0x371] sm:$0xff]
  %v3705 = vld [vmem:[%s3141 + $0x381] sm:$0xff]
  %v3706 = vld [vmem:[%s3141 + $0x391] sm:$0xff]
  %v3707 = vld [vmem:[%s3141 + $0x3c1] sm:$0xff]
  %v3708 = vld [vmem:[%s3141 + $0x3d1] sm:$0xff]
  %v3709 = vld [vmem:[%s3141 + $0x3e1] sm:$0xff]
  %v3710 = vld [vmem:[%s3141 + $0x3f1] sm:$0xff]
  %v3711 = vld [vmem:[%s3141 + $0x401] sm:$0xff]
  %v3712 = vld [vmem:[%s3141 + $0x411] sm:$0xff]
  %v3713 = vld [vmem:[%s3141 + $0x421] sm:$0xff]
  %v3714 = vld [vmem:[%s3141 + $0x431] sm:$0xff]
  %v3715 = vld [vmem:[%s3141 + $0x461] sm:$0xff]
  %v3716 = vld [vmem:[%s3141 + $0x471] sm:$0xff]
  %v3717 = vld [vmem:[%s3141 + $0x481] sm:$0xff]
  %v3718 = vld [vmem:[%s3141 + $0x491] sm:$0xff]
  %v3719 = vld [vmem:[%s3141 + $0x4a1] sm:$0xff]
  %v3720 = vld [vmem:[%s3141 + $0x4b1] sm:$0xff]
  %v3721 = vld [vmem:[%s3141 + $0x4c1] sm:$0xff]
  %v3722 = vld [vmem:[%s3141 + $0x4d1] sm:$0xff]
  %v3723 = vld [vmem:[%s1 + $0x7] sm:$0x1]
  %3725 = vset.pattern.permute.xlu0 0
  %3726 = vperm.xlu0 %3725, %v3659
  %v3727 = vpop.permute.xlu0 %3726
  %3730 = vset.pattern.permute.xlu0 0
  %3731 = vperm.xlu0 %3730, %v3660
  %v3732 = vpop.permute.xlu0 %3731
  %3735 = vset.pattern.permute.xlu0 0
  %3736 = vperm.xlu0 %3735, %v3661
  %v3737 = vpop.permute.xlu0 %3736
  %3740 = vset.pattern.permute.xlu0 0
  %3741 = vperm.xlu0 %3740, %v3662
  %v3742 = vpop.permute.xlu0 %3741
  %3745 = vset.pattern.permute.xlu0 0
  %3746 = vperm.xlu0 %3745, %v3663
  %v3747 = vpop.permute.xlu0 %3746
  %3750 = vset.pattern.permute.xlu0 0
  %3751 = vperm.xlu0 %3750, %v3664
  %v3752 = vpop.permute.xlu0 %3751
  %3755 = vset.pattern.permute.xlu0 0
  %3756 = vperm.xlu0 %3755, %v3665
  %v3757 = vpop.permute.xlu0 %3756
  %3760 = vset.pattern.permute.xlu0 0
  %3761 = vperm.xlu0 %3760, %v3666
  %v3762 = vpop.permute.xlu0 %3761
  %3765 = vset.pattern.permute.xlu0 0
  %3766 = vperm.xlu0 %3765, %v3667
  %v3767 = vpop.permute.xlu0 %3766
  %3770 = vset.pattern.permute.xlu0 0
  %3771 = vperm.xlu0 %3770, %v3668
  %v3772 = vpop.permute.xlu0 %3771
  %3775 = vset.pattern.permute.xlu0 0
  %3776 = vperm.xlu0 %3775, %v3669
  %v3777 = vpop.permute.xlu0 %3776
  %3780 = vset.pattern.permute.xlu0 0
  %3781 = vperm.xlu0 %3780, %v3670
  %v3782 = vpop.permute.xlu0 %3781
  %3785 = vset.pattern.permute.xlu0 0
  %3786 = vperm.xlu0 %3785, %v3671
  %v3787 = vpop.permute.xlu0 %3786
  %3790 = vset.pattern.permute.xlu0 0
  %3791 = vperm.xlu0 %3790, %v3672
  %v3792 = vpop.permute.xlu0 %3791
  %3795 = vset.pattern.permute.xlu0 0
  %3796 = vperm.xlu0 %3795, %v3673
  %v3797 = vpop.permute.xlu0 %3796
  %3800 = vset.pattern.permute.xlu0 0
  %3801 = vperm.xlu0 %3800, %v3674
  %v3802 = vpop.permute.xlu0 %3801
  %3805 = vset.pattern.permute.xlu0 0
  %3806 = vperm.xlu0 %3805, %v3675
  %v3807 = vpop.permute.xlu0 %3806
  %3810 = vset.pattern.permute.xlu0 0
  %3811 = vperm.xlu0 %3810, %v3676
  %v3812 = vpop.permute.xlu0 %3811
  %3815 = vset.pattern.permute.xlu0 0
  %3816 = vperm.xlu0 %3815, %v3677
  %v3817 = vpop.permute.xlu0 %3816
  %3820 = vset.pattern.permute.xlu0 0
  %3821 = vperm.xlu0 %3820, %v3678
  %v3822 = vpop.permute.xlu0 %3821
  %3825 = vset.pattern.permute.xlu0 0
  %3826 = vperm.xlu0 %3825, %v3679
  %v3827 = vpop.permute.xlu0 %3826
  %3830 = vset.pattern.permute.xlu0 0
  %3831 = vperm.xlu0 %3830, %v3680
  %v3832 = vpop.permute.xlu0 %3831
  %3835 = vset.pattern.permute.xlu0 0
  %3836 = vperm.xlu0 %3835, %v3681
  %v3837 = vpop.permute.xlu0 %3836
  %3840 = vset.pattern.permute.xlu0 0
  %3841 = vperm.xlu0 %3840, %v3682
  %v3842 = vpop.permute.xlu0 %3841
  %3845 = vset.pattern.permute.xlu0 0
  %3846 = vperm.xlu0 %3845, %v3683
  %v3847 = vpop.permute.xlu0 %3846
  %3850 = vset.pattern.permute.xlu0 0
  %3851 = vperm.xlu0 %3850, %v3684
  %v3852 = vpop.permute.xlu0 %3851
  %3855 = vset.pattern.permute.xlu0 0
  %3856 = vperm.xlu0 %3855, %v3685
  %v3857 = vpop.permute.xlu0 %3856
  %3860 = vset.pattern.permute.xlu0 0
  %3861 = vperm.xlu0 %3860, %v3686
  %v3862 = vpop.permute.xlu0 %3861
  %3865 = vset.pattern.permute.xlu0 0
  %3866 = vperm.xlu0 %3865, %v3687
  %v3867 = vpop.permute.xlu0 %3866
  %3870 = vset.pattern.permute.xlu0 0
  %3871 = vperm.xlu0 %3870, %v3688
  %v3872 = vpop.permute.xlu0 %3871
  %3875 = vset.pattern.permute.xlu0 0
  %3876 = vperm.xlu0 %3875, %v3689
  %v3877 = vpop.permute.xlu0 %3876
  %3880 = vset.pattern.permute.xlu0 0
  %3881 = vperm.xlu0 %3880, %v3690
  %v3882 = vpop.permute.xlu0 %3881
  %3885 = vset.pattern.permute.xlu0 0
  %3886 = vperm.xlu0 %3885, %v3691
  %v3887 = vpop.permute.xlu0 %3886
  %3890 = vset.pattern.permute.xlu0 0
  %3891 = vperm.xlu0 %3890, %v3692
  %v3892 = vpop.permute.xlu0 %3891
  %3895 = vset.pattern.permute.xlu0 0
  %3896 = vperm.xlu0 %3895, %v3693
  %v3897 = vpop.permute.xlu0 %3896
  %3900 = vset.pattern.permute.xlu0 0
  %3901 = vperm.xlu0 %3900, %v3694
  %v3902 = vpop.permute.xlu0 %3901
  %3905 = vset.pattern.permute.xlu0 0
  %3906 = vperm.xlu0 %3905, %v3695
  %v3907 = vpop.permute.xlu0 %3906
  %3910 = vset.pattern.permute.xlu0 0
  %3911 = vperm.xlu0 %3910, %v3696
  %v3912 = vpop.permute.xlu0 %3911
  %3915 = vset.pattern.permute.xlu0 0
  %3916 = vperm.xlu0 %3915, %v3697
  %v3917 = vpop.permute.xlu0 %3916
  %3920 = vset.pattern.permute.xlu0 0
  %3921 = vperm.xlu0 %3920, %v3698
  %v3922 = vpop.permute.xlu0 %3921
  %3925 = vset.pattern.permute.xlu0 0
  %3926 = vperm.xlu0 %3925, %v3699
  %v3927 = vpop.permute.xlu0 %3926
  %3930 = vset.pattern.permute.xlu0 0
  %3931 = vperm.xlu0 %3930, %v3700
  %v3932 = vpop.permute.xlu0 %3931
  %3935 = vset.pattern.permute.xlu0 0
  %3936 = vperm.xlu0 %3935, %v3701
  %v3937 = vpop.permute.xlu0 %3936
  %3940 = vset.pattern.permute.xlu0 0
  %3941 = vperm.xlu0 %3940, %v3702
  %v3942 = vpop.permute.xlu0 %3941
  %3945 = vset.pattern.permute.xlu0 0
  %3946 = vperm.xlu0 %3945, %v3703
  %v3947 = vpop.permute.xlu0 %3946
  %3950 = vset.pattern.permute.xlu0 0
  %3951 = vperm.xlu0 %3950, %v3704
  %v3952 = vpop.permute.xlu0 %3951
  %3955 = vset.pattern.permute.xlu0 0
  %3956 = vperm.xlu0 %3955, %v3705
  %v3957 = vpop.permute.xlu0 %3956
  %3960 = vset.pattern.permute.xlu0 0
  %3961 = vperm.xlu0 %3960, %v3706
  %v3962 = vpop.permute.xlu0 %3961
  %3965 = vset.pattern.permute.xlu0 0
  %3966 = vperm.xlu0 %3965, %v3707
  %v3967 = vpop.permute.xlu0 %3966
  %3970 = vset.pattern.permute.xlu0 0
  %3971 = vperm.xlu0 %3970, %v3708
  %v3972 = vpop.permute.xlu0 %3971
  %3975 = vset.pattern.permute.xlu0 0
  %3976 = vperm.xlu0 %3975, %v3709
  %v3977 = vpop.permute.xlu0 %3976
  %3980 = vset.pattern.permute.xlu0 0
  %3981 = vperm.xlu0 %3980, %v3710
  %v3982 = vpop.permute.xlu0 %3981
  %3985 = vset.pattern.permute.xlu0 0
  %3986 = vperm.xlu0 %3985, %v3711
  %v3987 = vpop.permute.xlu0 %3986
  %3990 = vset.pattern.permute.xlu0 0
  %3991 = vperm.xlu0 %3990, %v3712
  %v3992 = vpop.permute.xlu0 %3991
  %3995 = vset.pattern.permute.xlu0 0
  %3996 = vperm.xlu0 %3995, %v3713
  %v3997 = vpop.permute.xlu0 %3996
  %4000 = vset.pattern.permute.xlu0 0
  %4001 = vperm.xlu0 %4000, %v3714
  %v4002 = vpop.permute.xlu0 %4001
  %4005 = vset.pattern.permute.xlu0 0
  %4006 = vperm.xlu0 %4005, %v3715
  %v4007 = vpop.permute.xlu0 %4006
  %4010 = vset.pattern.permute.xlu0 0
  %4011 = vperm.xlu0 %4010, %v3716
  %v4012 = vpop.permute.xlu0 %4011
  %4015 = vset.pattern.permute.xlu0 0
  %4016 = vperm.xlu0 %4015, %v3717
  %v4017 = vpop.permute.xlu0 %4016
  %4020 = vset.pattern.permute.xlu0 0
  %4021 = vperm.xlu0 %4020, %v3718
  %v4022 = vpop.permute.xlu0 %4021
  %4025 = vset.pattern.permute.xlu0 0
  %4026 = vperm.xlu0 %4025, %v3719
  %v4027 = vpop.permute.xlu0 %4026
  %4030 = vset.pattern.permute.xlu0 0
  %4031 = vperm.xlu0 %4030, %v3720
  %v4032 = vpop.permute.xlu0 %4031
  %4035 = vset.pattern.permute.xlu0 0
  %4036 = vperm.xlu0 %4035, %v3721
  %v4037 = vpop.permute.xlu0 %4036
  %4040 = vset.pattern.permute.xlu0 0
  %4041 = vperm.xlu0 %4040, %v3722
  %v4042 = vpop.permute.xlu0 %4041
  %v4044 = vlaneseq
  %v4045 = vshrl.u32 %v4044, 7
  %v4046 = vsub.s32 0, %v4045
  %v4047 = vrot.slane %v3723, %v4046
  %v4048 = vmul.f32 %v3727, %v4047
  %v4049 = vmul.f32 %v3732, %v4047
  %v4050 = vmul.f32 %v3737, %v4047
  %v4051 = vmul.f32 %v3742, %v4047
  %v4052 = vmul.f32 %v3747, %v4047
  %v4053 = vmul.f32 %v3752, %v4047
  %v4054 = vmul.f32 %v3757, %v4047
  %v4055 = vmul.f32 %v3762, %v4047
  %v4056 = vmul.f32 %v3767, %v4047
  %v4057 = vmul.f32 %v3772, %v4047
  %v4058 = vmul.f32 %v3777, %v4047
  %v4059 = vmul.f32 %v3782, %v4047
  %v4060 = vmul.f32 %v3787, %v4047
  %v4061 = vmul.f32 %v3792, %v4047
  %v4062 = vmul.f32 %v3797, %v4047
  %v4063 = vmul.f32 %v3802, %v4047
  %v4064 = vmul.f32 %v3807, %v4047
  %v4065 = vmul.f32 %v3812, %v4047
  %v4066 = vmul.f32 %v3817, %v4047
  %v4067 = vmul.f32 %v3822, %v4047
  %v4068 = vmul.f32 %v3827, %v4047
  %v4069 = vmul.f32 %v3832, %v4047
  %v4070 = vmul.f32 %v3837, %v4047
  %v4071 = vmul.f32 %v3842, %v4047
  %v4072 = vmul.f32 %v3847, %v4047
  %v4073 = vmul.f32 %v3852, %v4047
  %v4074 = vmul.f32 %v3857, %v4047
  %v4075 = vmul.f32 %v3862, %v4047
  %v4076 = vmul.f32 %v3867, %v4047
  %v4077 = vmul.f32 %v3872, %v4047
  %v4078 = vmul.f32 %v3877, %v4047
  %v4079 = vmul.f32 %v3882, %v4047
  %v4080 = vmul.f32 %v3887, %v4047
  %v4081 = vmul.f32 %v3892, %v4047
  %v4082 = vmul.f32 %v3897, %v4047
  %v4083 = vmul.f32 %v3902, %v4047
  %v4084 = vmul.f32 %v3907, %v4047
  %v4085 = vmul.f32 %v3912, %v4047
  %v4086 = vmul.f32 %v3917, %v4047
  %v4087 = vmul.f32 %v3922, %v4047
  %v4088 = vmul.f32 %v3927, %v4047
  %v4089 = vmul.f32 %v3932, %v4047
  %v4090 = vmul.f32 %v3937, %v4047
  %v4091 = vmul.f32 %v3942, %v4047
  %v4092 = vmul.f32 %v3947, %v4047
  %v4093 = vmul.f32 %v3952, %v4047
  %v4094 = vmul.f32 %v3957, %v4047
  %v4095 = vmul.f32 %v3962, %v4047
  %v4096 = vmul.f32 %v3967, %v4047
  %v4097 = vmul.f32 %v3972, %v4047
  %v4098 = vmul.f32 %v3977, %v4047
  %v4099 = vmul.f32 %v3982, %v4047
  %v4100 = vmul.f32 %v3987, %v4047
  %v4101 = vmul.f32 %v3992, %v4047
  %v4102 = vmul.f32 %v3997, %v4047
  %v4103 = vmul.f32 %v4002, %v4047
  %v4104 = vmul.f32 %v4007, %v4047
  %v4105 = vmul.f32 %v4012, %v4047
  %v4106 = vmul.f32 %v4017, %v4047
  %v4107 = vmul.f32 %v4022, %v4047
  %v4108 = vmul.f32 %v4027, %v4047
  %v4109 = vmul.f32 %v4032, %v4047
  %v4110 = vmul.f32 %v4037, %v4047
  %v4111 = vmul.f32 %v4042, %v4047
  %v4112 = vadd.f32 %v3595, %v4048
  %v4113 = vadd.f32 %v3596, %v4049
  %v4114 = vadd.f32 %v3597, %v4050
  %v4115 = vadd.f32 %v3598, %v4051
  %v4116 = vadd.f32 %v3599, %v4052
  %v4117 = vadd.f32 %v3600, %v4053
  %v4118 = vadd.f32 %v3601, %v4054
  %v4119 = vadd.f32 %v3602, %v4055
  %v4120 = vadd.f32 %v3603, %v4056
  %v4121 = vadd.f32 %v3604, %v4057
  %v4122 = vadd.f32 %v3605, %v4058
  %v4123 = vadd.f32 %v3606, %v4059
  %v4124 = vadd.f32 %v3607, %v4060
  %v4125 = vadd.f32 %v3608, %v4061
  %v4126 = vadd.f32 %v3609, %v4062
  %v4127 = vadd.f32 %v3610, %v4063
  %v4128 = vadd.f32 %v3611, %v4064
  %v4129 = vadd.f32 %v3612, %v4065
  %v4130 = vadd.f32 %v3613, %v4066
  %v4131 = vadd.f32 %v3614, %v4067
  %v4132 = vadd.f32 %v3615, %v4068
  %v4133 = vadd.f32 %v3616, %v4069
  %v4134 = vadd.f32 %v3617, %v4070
  %v4135 = vadd.f32 %v3618, %v4071
  %v4136 = vadd.f32 %v3619, %v4072
  %v4137 = vadd.f32 %v3620, %v4073
  %v4138 = vadd.f32 %v3621, %v4074
  %v4139 = vadd.f32 %v3622, %v4075
  %v4140 = vadd.f32 %v3623, %v4076
  %v4141 = vadd.f32 %v3624, %v4077
  %v4142 = vadd.f32 %v3625, %v4078
  %v4143 = vadd.f32 %v3626, %v4079
  %v4144 = vadd.f32 %v3627, %v4080
  %v4145 = vadd.f32 %v3628, %v4081
  %v4146 = vadd.f32 %v3629, %v4082
  %v4147 = vadd.f32 %v3630, %v4083
  %v4148 = vadd.f32 %v3631, %v4084
  %v4149 = vadd.f32 %v3632, %v4085
  %v4150 = vadd.f32 %v3633, %v4086
  %v4151 = vadd.f32 %v3634, %v4087
  %v4152 = vadd.f32 %v3635, %v4088
  %v4153 = vadd.f32 %v3636, %v4089
  %v4154 = vadd.f32 %v3637, %v4090
  %v4155 = vadd.f32 %v3638, %v4091
  %v4156 = vadd.f32 %v3639, %v4092
  %v4157 = vadd.f32 %v3640, %v4093
  %v4158 = vadd.f32 %v3641, %v4094
  %v4159 = vadd.f32 %v3642, %v4095
  %v4160 = vadd.f32 %v3643, %v4096
  %v4161 = vadd.f32 %v3644, %v4097
  %v4162 = vadd.f32 %v3645, %v4098
  %v4163 = vadd.f32 %v3646, %v4099
  %v4164 = vadd.f32 %v3647, %v4100
  %v4165 = vadd.f32 %v3648, %v4101
  %v4166 = vadd.f32 %v3649, %v4102
  %v4167 = vadd.f32 %v3650, %v4103
  %v4168 = vadd.f32 %v3651, %v4104
  %v4169 = vadd.f32 %v3652, %v4105
  %v4170 = vadd.f32 %v3653, %v4106
  %v4171 = vadd.f32 %v3654, %v4107
  %v4172 = vadd.f32 %v3655, %v4108
  %v4173 = vadd.f32 %v3656, %v4109
  %v4174 = vadd.f32 %v3657, %v4110
  %v4175 = vadd.f32 %v3658, %v4111
  %v4176 = vld [vmem:[%s3141 + $0x2] sm:$0xff]
  %v4177 = vld [vmem:[%s3141 + $0x12] sm:$0xff]
  %v4178 = vld [vmem:[%s3141 + $0x22] sm:$0xff]
  %v4179 = vld [vmem:[%s3141 + $0x32] sm:$0xff]
  %v4180 = vld [vmem:[%s3141 + $0x42] sm:$0xff]
  %v4181 = vld [vmem:[%s3141 + $0x52] sm:$0xff]
  %v4182 = vld [vmem:[%s3141 + $0x62] sm:$0xff]
  %v4183 = vld [vmem:[%s3141 + $0x72] sm:$0xff]
  %v4184 = vld [vmem:[%s3141 + $0xa2] sm:$0xff]
  %v4185 = vld [vmem:[%s3141 + $0xb2] sm:$0xff]
  %v4186 = vld [vmem:[%s3141 + $0xc2] sm:$0xff]
  %v4187 = vld [vmem:[%s3141 + $0xd2] sm:$0xff]
  %v4188 = vld [vmem:[%s3141 + $0xe2] sm:$0xff]
  %v4189 = vld [vmem:[%s3141 + $0xf2] sm:$0xff]
  %v4190 = vld [vmem:[%s3141 + $0x102] sm:$0xff]
  %v4191 = vld [vmem:[%s3141 + $0x112] sm:$0xff]
  %v4192 = vld [vmem:[%s3141 + $0x142] sm:$0xff]
  %v4193 = vld [vmem:[%s3141 + $0x152] sm:$0xff]
  %v4194 = vld [vmem:[%s3141 + $0x162] sm:$0xff]
  %v4195 = vld [vmem:[%s3141 + $0x172] sm:$0xff]
  %v4196 = vld [vmem:[%s3141 + $0x182] sm:$0xff]
  %v4197 = vld [vmem:[%s3141 + $0x192] sm:$0xff]
  %v4198 = vld [vmem:[%s3141 + $0x1a2] sm:$0xff]
  %v4199 = vld [vmem:[%s3141 + $0x1b2] sm:$0xff]
  %v4200 = vld [vmem:[%s3141 + $0x1e2] sm:$0xff]
  %v4201 = vld [vmem:[%s3141 + $0x1f2] sm:$0xff]
  %v4202 = vld [vmem:[%s3141 + $0x202] sm:$0xff]
  %v4203 = vld [vmem:[%s3141 + $0x212] sm:$0xff]
  %v4204 = vld [vmem:[%s3141 + $0x222] sm:$0xff]
  %v4205 = vld [vmem:[%s3141 + $0x232] sm:$0xff]
  %v4206 = vld [vmem:[%s3141 + $0x242] sm:$0xff]
  %v4207 = vld [vmem:[%s3141 + $0x252] sm:$0xff]
  %v4208 = vld [vmem:[%s3141 + $0x282] sm:$0xff]
  %v4209 = vld [vmem:[%s3141 + $0x292] sm:$0xff]
  %v4210 = vld [vmem:[%s3141 + $0x2a2] sm:$0xff]
  %v4211 = vld [vmem:[%s3141 + $0x2b2] sm:$0xff]
  %v4212 = vld [vmem:[%s3141 + $0x2c2] sm:$0xff]
  %v4213 = vld [vmem:[%s3141 + $0x2d2] sm:$0xff]
  %v4214 = vld [vmem:[%s3141 + $0x2e2] sm:$0xff]
  %v4215 = vld [vmem:[%s3141 + $0x2f2] sm:$0xff]
  %v4216 = vld [vmem:[%s3141 + $0x322] sm:$0xff]
  %v4217 = vld [vmem:[%s3141 + $0x332] sm:$0xff]
  %v4218 = vld [vmem:[%s3141 + $0x342] sm:$0xff]
  %v4219 = vld [vmem:[%s3141 + $0x352] sm:$0xff]
  %v4220 = vld [vmem:[%s3141 + $0x362] sm:$0xff]
  %v4221 = vld [vmem:[%s3141 + $0x372] sm:$0xff]
  %v4222 = vld [vmem:[%s3141 + $0x382] sm:$0xff]
  %v4223 = vld [vmem:[%s3141 + $0x392] sm:$0xff]
  %v4224 = vld [vmem:[%s3141 + $0x3c2] sm:$0xff]
  %v4225 = vld [vmem:[%s3141 + $0x3d2] sm:$0xff]
  %v4226 = vld [vmem:[%s3141 + $0x3e2] sm:$0xff]
  %v4227 = vld [vmem:[%s3141 + $0x3f2] sm:$0xff]
  %v4228 = vld [vmem:[%s3141 + $0x402] sm:$0xff]
  %v4229 = vld [vmem:[%s3141 + $0x412] sm:$0xff]
  %v4230 = vld [vmem:[%s3141 + $0x422] sm:$0xff]
  %v4231 = vld [vmem:[%s3141 + $0x432] sm:$0xff]
  %v4232 = vld [vmem:[%s3141 + $0x462] sm:$0xff]
  %v4233 = vld [vmem:[%s3141 + $0x472] sm:$0xff]
  %v4234 = vld [vmem:[%s3141 + $0x482] sm:$0xff]
  %v4235 = vld [vmem:[%s3141 + $0x492] sm:$0xff]
  %v4236 = vld [vmem:[%s3141 + $0x4a2] sm:$0xff]
  %v4237 = vld [vmem:[%s3141 + $0x4b2] sm:$0xff]
  %v4238 = vld [vmem:[%s3141 + $0x4c2] sm:$0xff]
  %v4239 = vld [vmem:[%s3141 + $0x4d2] sm:$0xff]
  %v4240 = vld [vmem:[%s1 + $0x8] sm:$0x1]
  %4242 = vset.pattern.permute.xlu0 0
  %4243 = vperm.xlu0 %4242, %v4176
  %v4244 = vpop.permute.xlu0 %4243
  %4247 = vset.pattern.permute.xlu0 0
  %4248 = vperm.xlu0 %4247, %v4177
  %v4249 = vpop.permute.xlu0 %4248
  %4252 = vset.pattern.permute.xlu0 0
  %4253 = vperm.xlu0 %4252, %v4178
  %v4254 = vpop.permute.xlu0 %4253
  %4257 = vset.pattern.permute.xlu0 0
  %4258 = vperm.xlu0 %4257, %v4179
  %v4259 = vpop.permute.xlu0 %4258
  %4262 = vset.pattern.permute.xlu0 0
  %4263 = vperm.xlu0 %4262, %v4180
  %v4264 = vpop.permute.xlu0 %4263
  %4267 = vset.pattern.permute.xlu0 0
  %4268 = vperm.xlu0 %4267, %v4181
  %v4269 = vpop.permute.xlu0 %4268
  %4272 = vset.pattern.permute.xlu0 0
  %4273 = vperm.xlu0 %4272, %v4182
  %v4274 = vpop.permute.xlu0 %4273
  %4277 = vset.pattern.permute.xlu0 0
  %4278 = vperm.xlu0 %4277, %v4183
  %v4279 = vpop.permute.xlu0 %4278
  %4282 = vset.pattern.permute.xlu0 0
  %4283 = vperm.xlu0 %4282, %v4184
  %v4284 = vpop.permute.xlu0 %4283
  %4287 = vset.pattern.permute.xlu0 0
  %4288 = vperm.xlu0 %4287, %v4185
  %v4289 = vpop.permute.xlu0 %4288
  %4292 = vset.pattern.permute.xlu0 0
  %4293 = vperm.xlu0 %4292, %v4186
  %v4294 = vpop.permute.xlu0 %4293
  %4297 = vset.pattern.permute.xlu0 0
  %4298 = vperm.xlu0 %4297, %v4187
  %v4299 = vpop.permute.xlu0 %4298
  %4302 = vset.pattern.permute.xlu0 0
  %4303 = vperm.xlu0 %4302, %v4188
  %v4304 = vpop.permute.xlu0 %4303
  %4307 = vset.pattern.permute.xlu0 0
  %4308 = vperm.xlu0 %4307, %v4189
  %v4309 = vpop.permute.xlu0 %4308
  %4312 = vset.pattern.permute.xlu0 0
  %4313 = vperm.xlu0 %4312, %v4190
  %v4314 = vpop.permute.xlu0 %4313
  %4317 = vset.pattern.permute.xlu0 0
  %4318 = vperm.xlu0 %4317, %v4191
  %v4319 = vpop.permute.xlu0 %4318
  %4322 = vset.pattern.permute.xlu0 0
  %4323 = vperm.xlu0 %4322, %v4192
  %v4324 = vpop.permute.xlu0 %4323
  %4327 = vset.pattern.permute.xlu0 0
  %4328 = vperm.xlu0 %4327, %v4193
  %v4329 = vpop.permute.xlu0 %4328
  %4332 = vset.pattern.permute.xlu0 0
  %4333 = vperm.xlu0 %4332, %v4194
  %v4334 = vpop.permute.xlu0 %4333
  %4337 = vset.pattern.permute.xlu0 0
  %4338 = vperm.xlu0 %4337, %v4195
  %v4339 = vpop.permute.xlu0 %4338
  %4342 = vset.pattern.permute.xlu0 0
  %4343 = vperm.xlu0 %4342, %v4196
  %v4344 = vpop.permute.xlu0 %4343
  %4347 = vset.pattern.permute.xlu0 0
  %4348 = vperm.xlu0 %4347, %v4197
  %v4349 = vpop.permute.xlu0 %4348
  %4352 = vset.pattern.permute.xlu0 0
  %4353 = vperm.xlu0 %4352, %v4198
  %v4354 = vpop.permute.xlu0 %4353
  %4357 = vset.pattern.permute.xlu0 0
  %4358 = vperm.xlu0 %4357, %v4199
  %v4359 = vpop.permute.xlu0 %4358
  %4362 = vset.pattern.permute.xlu0 0
  %4363 = vperm.xlu0 %4362, %v4200
  %v4364 = vpop.permute.xlu0 %4363
  %4367 = vset.pattern.permute.xlu0 0
  %4368 = vperm.xlu0 %4367, %v4201
  %v4369 = vpop.permute.xlu0 %4368
  %4372 = vset.pattern.permute.xlu0 0
  %4373 = vperm.xlu0 %4372, %v4202
  %v4374 = vpop.permute.xlu0 %4373
  %4377 = vset.pattern.permute.xlu0 0
  %4378 = vperm.xlu0 %4377, %v4203
  %v4379 = vpop.permute.xlu0 %4378
  %4382 = vset.pattern.permute.xlu0 0
  %4383 = vperm.xlu0 %4382, %v4204
  %v4384 = vpop.permute.xlu0 %4383
  %4387 = vset.pattern.permute.xlu0 0
  %4388 = vperm.xlu0 %4387, %v4205
  %v4389 = vpop.permute.xlu0 %4388
  %4392 = vset.pattern.permute.xlu0 0
  %4393 = vperm.xlu0 %4392, %v4206
  %v4394 = vpop.permute.xlu0 %4393
  %4397 = vset.pattern.permute.xlu0 0
  %4398 = vperm.xlu0 %4397, %v4207
  %v4399 = vpop.permute.xlu0 %4398
  %4402 = vset.pattern.permute.xlu0 0
  %4403 = vperm.xlu0 %4402, %v4208
  %v4404 = vpop.permute.xlu0 %4403
  %4407 = vset.pattern.permute.xlu0 0
  %4408 = vperm.xlu0 %4407, %v4209
  %v4409 = vpop.permute.xlu0 %4408
  %4412 = vset.pattern.permute.xlu0 0
  %4413 = vperm.xlu0 %4412, %v4210
  %v4414 = vpop.permute.xlu0 %4413
  %4417 = vset.pattern.permute.xlu0 0
  %4418 = vperm.xlu0 %4417, %v4211
  %v4419 = vpop.permute.xlu0 %4418
  %4422 = vset.pattern.permute.xlu0 0
  %4423 = vperm.xlu0 %4422, %v4212
  %v4424 = vpop.permute.xlu0 %4423
  %4427 = vset.pattern.permute.xlu0 0
  %4428 = vperm.xlu0 %4427, %v4213
  %v4429 = vpop.permute.xlu0 %4428
  %4432 = vset.pattern.permute.xlu0 0
  %4433 = vperm.xlu0 %4432, %v4214
  %v4434 = vpop.permute.xlu0 %4433
  %4437 = vset.pattern.permute.xlu0 0
  %4438 = vperm.xlu0 %4437, %v4215
  %v4439 = vpop.permute.xlu0 %4438
  %4442 = vset.pattern.permute.xlu0 0
  %4443 = vperm.xlu0 %4442, %v4216
  %v4444 = vpop.permute.xlu0 %4443
  %4447 = vset.pattern.permute.xlu0 0
  %4448 = vperm.xlu0 %4447, %v4217
  %v4449 = vpop.permute.xlu0 %4448
  %4452 = vset.pattern.permute.xlu0 0
  %4453 = vperm.xlu0 %4452, %v4218
  %v4454 = vpop.permute.xlu0 %4453
  %4457 = vset.pattern.permute.xlu0 0
  %4458 = vperm.xlu0 %4457, %v4219
  %v4459 = vpop.permute.xlu0 %4458
  %4462 = vset.pattern.permute.xlu0 0
  %4463 = vperm.xlu0 %4462, %v4220
  %v4464 = vpop.permute.xlu0 %4463
  %4467 = vset.pattern.permute.xlu0 0
  %4468 = vperm.xlu0 %4467, %v4221
  %v4469 = vpop.permute.xlu0 %4468
  %4472 = vset.pattern.permute.xlu0 0
  %4473 = vperm.xlu0 %4472, %v4222
  %v4474 = vpop.permute.xlu0 %4473
  %4477 = vset.pattern.permute.xlu0 0
  %4478 = vperm.xlu0 %4477, %v4223
  %v4479 = vpop.permute.xlu0 %4478
  %4482 = vset.pattern.permute.xlu0 0
  %4483 = vperm.xlu0 %4482, %v4224
  %v4484 = vpop.permute.xlu0 %4483
  %4487 = vset.pattern.permute.xlu0 0
  %4488 = vperm.xlu0 %4487, %v4225
  %v4489 = vpop.permute.xlu0 %4488
  %4492 = vset.pattern.permute.xlu0 0
  %4493 = vperm.xlu0 %4492, %v4226
  %v4494 = vpop.permute.xlu0 %4493
  %4497 = vset.pattern.permute.xlu0 0
  %4498 = vperm.xlu0 %4497, %v4227
  %v4499 = vpop.permute.xlu0 %4498
  %4502 = vset.pattern.permute.xlu0 0
  %4503 = vperm.xlu0 %4502, %v4228
  %v4504 = vpop.permute.xlu0 %4503
  %4507 = vset.pattern.permute.xlu0 0
  %4508 = vperm.xlu0 %4507, %v4229
  %v4509 = vpop.permute.xlu0 %4508
  %4512 = vset.pattern.permute.xlu0 0
  %4513 = vperm.xlu0 %4512, %v4230
  %v4514 = vpop.permute.xlu0 %4513
  %4517 = vset.pattern.permute.xlu0 0
  %4518 = vperm.xlu0 %4517, %v4231
  %v4519 = vpop.permute.xlu0 %4518
  %4522 = vset.pattern.permute.xlu0 0
  %4523 = vperm.xlu0 %4522, %v4232
  %v4524 = vpop.permute.xlu0 %4523
  %4527 = vset.pattern.permute.xlu0 0
  %4528 = vperm.xlu0 %4527, %v4233
  %v4529 = vpop.permute.xlu0 %4528
  %4532 = vset.pattern.permute.xlu0 0
  %4533 = vperm.xlu0 %4532, %v4234
  %v4534 = vpop.permute.xlu0 %4533
  %4537 = vset.pattern.permute.xlu0 0
  %4538 = vperm.xlu0 %4537, %v4235
  %v4539 = vpop.permute.xlu0 %4538
  %4542 = vset.pattern.permute.xlu0 0
  %4543 = vperm.xlu0 %4542, %v4236
  %v4544 = vpop.permute.xlu0 %4543
  %4547 = vset.pattern.permute.xlu0 0
  %4548 = vperm.xlu0 %4547, %v4237
  %v4549 = vpop.permute.xlu0 %4548
  %4552 = vset.pattern.permute.xlu0 0
  %4553 = vperm.xlu0 %4552, %v4238
  %v4554 = vpop.permute.xlu0 %4553
  %4557 = vset.pattern.permute.xlu0 0
  %4558 = vperm.xlu0 %4557, %v4239
  %v4559 = vpop.permute.xlu0 %4558
  %v4561 = vlaneseq
  %v4562 = vshrl.u32 %v4561, 7
  %v4563 = vsub.s32 0, %v4562
  %v4564 = vrot.slane %v4240, %v4563
  %v4565 = vmul.f32 %v4244, %v4564
  %v4566 = vmul.f32 %v4249, %v4564
  %v4567 = vmul.f32 %v4254, %v4564
  %v4568 = vmul.f32 %v4259, %v4564
  %v4569 = vmul.f32 %v4264, %v4564
  %v4570 = vmul.f32 %v4269, %v4564
  %v4571 = vmul.f32 %v4274, %v4564
  %v4572 = vmul.f32 %v4279, %v4564
  %v4573 = vmul.f32 %v4284, %v4564
  %v4574 = vmul.f32 %v4289, %v4564
  %v4575 = vmul.f32 %v4294, %v4564
  %v4576 = vmul.f32 %v4299, %v4564
  %v4577 = vmul.f32 %v4304, %v4564
  %v4578 = vmul.f32 %v4309, %v4564
  %v4579 = vmul.f32 %v4314, %v4564
  %v4580 = vmul.f32 %v4319, %v4564
  %v4581 = vmul.f32 %v4324, %v4564
  %v4582 = vmul.f32 %v4329, %v4564
  %v4583 = vmul.f32 %v4334, %v4564
  %v4584 = vmul.f32 %v4339, %v4564
  %v4585 = vmul.f32 %v4344, %v4564
  %v4586 = vmul.f32 %v4349, %v4564
  %v4587 = vmul.f32 %v4354, %v4564
  %v4588 = vmul.f32 %v4359, %v4564
  %v4589 = vmul.f32 %v4364, %v4564
  %v4590 = vmul.f32 %v4369, %v4564
  %v4591 = vmul.f32 %v4374, %v4564
  %v4592 = vmul.f32 %v4379, %v4564
  %v4593 = vmul.f32 %v4384, %v4564
  %v4594 = vmul.f32 %v4389, %v4564
  %v4595 = vmul.f32 %v4394, %v4564
  %v4596 = vmul.f32 %v4399, %v4564
  %v4597 = vmul.f32 %v4404, %v4564
  %v4598 = vmul.f32 %v4409, %v4564
  %v4599 = vmul.f32 %v4414, %v4564
  %v4600 = vmul.f32 %v4419, %v4564
  %v4601 = vmul.f32 %v4424, %v4564
  %v4602 = vmul.f32 %v4429, %v4564
  %v4603 = vmul.f32 %v4434, %v4564
  %v4604 = vmul.f32 %v4439, %v4564
  %v4605 = vmul.f32 %v4444, %v4564
  %v4606 = vmul.f32 %v4449, %v4564
  %v4607 = vmul.f32 %v4454, %v4564
  %v4608 = vmul.f32 %v4459, %v4564
  %v4609 = vmul.f32 %v4464, %v4564
  %v4610 = vmul.f32 %v4469, %v4564
  %v4611 = vmul.f32 %v4474, %v4564
  %v4612 = vmul.f32 %v4479, %v4564
  %v4613 = vmul.f32 %v4484, %v4564
  %v4614 = vmul.f32 %v4489, %v4564
  %v4615 = vmul.f32 %v4494, %v4564
  %v4616 = vmul.f32 %v4499, %v4564
  %v4617 = vmul.f32 %v4504, %v4564
  %v4618 = vmul.f32 %v4509, %v4564
  %v4619 = vmul.f32 %v4514, %v4564
  %v4620 = vmul.f32 %v4519, %v4564
  %v4621 = vmul.f32 %v4524, %v4564
  %v4622 = vmul.f32 %v4529, %v4564
  %v4623 = vmul.f32 %v4534, %v4564
  %v4624 = vmul.f32 %v4539, %v4564
  %v4625 = vmul.f32 %v4544, %v4564
  %v4626 = vmul.f32 %v4549, %v4564
  %v4627 = vmul.f32 %v4554, %v4564
  %v4628 = vmul.f32 %v4559, %v4564
  %v4629 = vadd.f32 %v4112, %v4565
  %v4630 = vadd.f32 %v4113, %v4566
  %v4631 = vadd.f32 %v4114, %v4567
  %v4632 = vadd.f32 %v4115, %v4568
  %v4633 = vadd.f32 %v4116, %v4569
  %v4634 = vadd.f32 %v4117, %v4570
  %v4635 = vadd.f32 %v4118, %v4571
  %v4636 = vadd.f32 %v4119, %v4572
  %v4637 = vadd.f32 %v4120, %v4573
  %v4638 = vadd.f32 %v4121, %v4574
  %v4639 = vadd.f32 %v4122, %v4575
  %v4640 = vadd.f32 %v4123, %v4576
  %v4641 = vadd.f32 %v4124, %v4577
  %v4642 = vadd.f32 %v4125, %v4578
  %v4643 = vadd.f32 %v4126, %v4579
  %v4644 = vadd.f32 %v4127, %v4580
  %v4645 = vadd.f32 %v4128, %v4581
  %v4646 = vadd.f32 %v4129, %v4582
  %v4647 = vadd.f32 %v4130, %v4583
  %v4648 = vadd.f32 %v4131, %v4584
  %v4649 = vadd.f32 %v4132, %v4585
  %v4650 = vadd.f32 %v4133, %v4586
  %v4651 = vadd.f32 %v4134, %v4587
  %v4652 = vadd.f32 %v4135, %v4588
  %v4653 = vadd.f32 %v4136, %v4589
  %v4654 = vadd.f32 %v4137, %v4590
  %v4655 = vadd.f32 %v4138, %v4591
  %v4656 = vadd.f32 %v4139, %v4592
  %v4657 = vadd.f32 %v4140, %v4593
  %v4658 = vadd.f32 %v4141, %v4594
  %v4659 = vadd.f32 %v4142, %v4595
  %v4660 = vadd.f32 %v4143, %v4596
  %v4661 = vadd.f32 %v4144, %v4597
  %v4662 = vadd.f32 %v4145, %v4598
  %v4663 = vadd.f32 %v4146, %v4599
  %v4664 = vadd.f32 %v4147, %v4600
  %v4665 = vadd.f32 %v4148, %v4601
  %v4666 = vadd.f32 %v4149, %v4602
  %v4667 = vadd.f32 %v4150, %v4603
  %v4668 = vadd.f32 %v4151, %v4604
  %v4669 = vadd.f32 %v4152, %v4605
  %v4670 = vadd.f32 %v4153, %v4606
  %v4671 = vadd.f32 %v4154, %v4607
  %v4672 = vadd.f32 %v4155, %v4608
  %v4673 = vadd.f32 %v4156, %v4609
  %v4674 = vadd.f32 %v4157, %v4610
  %v4675 = vadd.f32 %v4158, %v4611
  %v4676 = vadd.f32 %v4159, %v4612
  %v4677 = vadd.f32 %v4160, %v4613
  %v4678 = vadd.f32 %v4161, %v4614
  %v4679 = vadd.f32 %v4162, %v4615
  %v4680 = vadd.f32 %v4163, %v4616
  %v4681 = vadd.f32 %v4164, %v4617
  %v4682 = vadd.f32 %v4165, %v4618
  %v4683 = vadd.f32 %v4166, %v4619
  %v4684 = vadd.f32 %v4167, %v4620
  %v4685 = vadd.f32 %v4168, %v4621
  %v4686 = vadd.f32 %v4169, %v4622
  %v4687 = vadd.f32 %v4170, %v4623
  %v4688 = vadd.f32 %v4171, %v4624
  %v4689 = vadd.f32 %v4172, %v4625
  %v4690 = vadd.f32 %v4173, %v4626
  %v4691 = vadd.f32 %v4174, %v4627
  %v4692 = vadd.f32 %v4175, %v4628
  %v4757 = vcombine.high %v4629, %v4629
  %v4759 = vunpack.c.l.s4 1983009808
  %v4760 = vunpack.c.0.s8 %v4759
  %v4761 = vlaneseq
  %v4762 = vshrl.u32 %v4761, 7
  %v4763 = vsub.s32 %v4760, %v4762
  %v4764 = vrot.slane %v4629, %v4763
  %v4766 = vunpack.c.l.s4 1983009808
  %v4767 = vunpack.c.0.s8 %v4766
  %v4768 = vlaneseq
  %v4769 = vshrl.u32 %v4768, 7
  %v4770 = vsub.s32 %v4767, %v4769
  %v4771 = vrot.slane %v4757, %v4770
  %v4772 = vcombine.high %v4764, %v4764
  %v4773 = vcombine.high %v4771, %v4771
  %v4774 = vcombine.high %v4630, %v4630
  %v4776 = vunpack.c.l.s4 1983009808
  %v4777 = vunpack.c.0.s8 %v4776
  %v4778 = vlaneseq
  %v4779 = vshrl.u32 %v4778, 7
  %v4780 = vsub.s32 %v4777, %v4779
  %v4781 = vrot.slane %v4630, %v4780
  %v4783 = vunpack.c.l.s4 1983009808
  %v4784 = vunpack.c.0.s8 %v4783
  %v4785 = vlaneseq
  %v4786 = vshrl.u32 %v4785, 7
  %v4787 = vsub.s32 %v4784, %v4786
  %v4788 = vrot.slane %v4774, %v4787
  %v4789 = vcombine.high %v4781, %v4781
  %v4790 = vcombine.high %v4788, %v4788
  %v4791 = vcombine.high %v4631, %v4631
  %v4793 = vunpack.c.l.s4 1983009808
  %v4794 = vunpack.c.0.s8 %v4793
  %v4795 = vlaneseq
  %v4796 = vshrl.u32 %v4795, 7
  %v4797 = vsub.s32 %v4794, %v4796
  %v4798 = vrot.slane %v4631, %v4797
  %v4800 = vunpack.c.l.s4 1983009808
  %v4801 = vunpack.c.0.s8 %v4800
  %v4802 = vlaneseq
  %v4803 = vshrl.u32 %v4802, 7
  %v4804 = vsub.s32 %v4801, %v4803
  %v4805 = vrot.slane %v4791, %v4804
  %v4806 = vcombine.high %v4798, %v4798
  %v4807 = vcombine.high %v4805, %v4805
  %v4808 = vcombine.high %v4632, %v4632
  %v4810 = vunpack.c.l.s4 1983009808
  %v4811 = vunpack.c.0.s8 %v4810
  %v4812 = vlaneseq
  %v4813 = vshrl.u32 %v4812, 7
  %v4814 = vsub.s32 %v4811, %v4813
  %v4815 = vrot.slane %v4632, %v4814
  %v4817 = vunpack.c.l.s4 1983009808
  %v4818 = vunpack.c.0.s8 %v4817
  %v4819 = vlaneseq
  %v4820 = vshrl.u32 %v4819, 7
  %v4821 = vsub.s32 %v4818, %v4820
  %v4822 = vrot.slane %v4808, %v4821
  %v4823 = vcombine.high %v4815, %v4815
  %v4824 = vcombine.high %v4822, %v4822
  %v4825 = vcombine.high %v4633, %v4633
  %v4827 = vunpack.c.l.s4 1983009808
  %v4828 = vunpack.c.0.s8 %v4827
  %v4829 = vlaneseq
  %v4830 = vshrl.u32 %v4829, 7
  %v4831 = vsub.s32 %v4828, %v4830
  %v4832 = vrot.slane %v4633, %v4831
  %v4834 = vunpack.c.l.s4 1983009808
  %v4835 = vunpack.c.0.s8 %v4834
  %v4836 = vlaneseq
  %v4837 = vshrl.u32 %v4836, 7
  %v4838 = vsub.s32 %v4835, %v4837
  %v4839 = vrot.slane %v4825, %v4838
  %v4840 = vcombine.high %v4832, %v4832
  %v4841 = vcombine.high %v4839, %v4839
  %v4842 = vcombine.high %v4634, %v4634
  %v4844 = vunpack.c.l.s4 1983009808
  %v4845 = vunpack.c.0.s8 %v4844
  %v4846 = vlaneseq
  %v4847 = vshrl.u32 %v4846, 7
  %v4848 = vsub.s32 %v4845, %v4847
  %v4849 = vrot.slane %v4634, %v4848
  %v4851 = vunpack.c.l.s4 1983009808
  %v4852 = vunpack.c.0.s8 %v4851
  %v4853 = vlaneseq
  %v4854 = vshrl.u32 %v4853, 7
  %v4855 = vsub.s32 %v4852, %v4854
  %v4856 = vrot.slane %v4842, %v4855
  %v4857 = vcombine.high %v4849, %v4849
  %v4858 = vcombine.high %v4856, %v4856
  %v4859 = vcombine.high %v4635, %v4635
  %v4861 = vunpack.c.l.s4 1983009808
  %v4862 = vunpack.c.0.s8 %v4861
  %v4863 = vlaneseq
  %v4864 = vshrl.u32 %v4863, 7
  %v4865 = vsub.s32 %v4862, %v4864
  %v4866 = vrot.slane %v4635, %v4865
  %v4868 = vunpack.c.l.s4 1983009808
  %v4869 = vunpack.c.0.s8 %v4868
  %v4870 = vlaneseq
  %v4871 = vshrl.u32 %v4870, 7
  %v4872 = vsub.s32 %v4869, %v4871
  %v4873 = vrot.slane %v4859, %v4872
  %v4874 = vcombine.high %v4866, %v4866
  %v4875 = vcombine.high %v4873, %v4873
  %v4876 = vcombine.high %v4636, %v4636
  %v4878 = vunpack.c.l.s4 1983009808
  %v4879 = vunpack.c.0.s8 %v4878
  %v4880 = vlaneseq
  %v4881 = vshrl.u32 %v4880, 7
  %v4882 = vsub.s32 %v4879, %v4881
  %v4883 = vrot.slane %v4636, %v4882
  %v4885 = vunpack.c.l.s4 1983009808
  %v4886 = vunpack.c.0.s8 %v4885
  %v4887 = vlaneseq
  %v4888 = vshrl.u32 %v4887, 7
  %v4889 = vsub.s32 %v4886, %v4888
  %v4890 = vrot.slane %v4876, %v4889
  %v4891 = vcombine.high %v4883, %v4883
  %v4892 = vcombine.high %v4890, %v4890
  %v4893 = vcombine.high %v4637, %v4637
  %v4895 = vunpack.c.l.s4 1983009808
  %v4896 = vunpack.c.0.s8 %v4895
  %v4897 = vlaneseq
  %v4898 = vshrl.u32 %v4897, 7
  %v4899 = vsub.s32 %v4896, %v4898
  %v4900 = vrot.slane %v4637, %v4899
  %v4902 = vunpack.c.l.s4 1983009808
  %v4903 = vunpack.c.0.s8 %v4902
  %v4904 = vlaneseq
  %v4905 = vshrl.u32 %v4904, 7
  %v4906 = vsub.s32 %v4903, %v4905
  %v4907 = vrot.slane %v4893, %v4906
  %v4908 = vcombine.high %v4900, %v4900
  %v4909 = vcombine.high %v4907, %v4907
  %v4910 = vcombine.high %v4638, %v4638
  %v4912 = vunpack.c.l.s4 1983009808
  %v4913 = vunpack.c.0.s8 %v4912
  %v4914 = vlaneseq
  %v4915 = vshrl.u32 %v4914, 7
  %v4916 = vsub.s32 %v4913, %v4915
  %v4917 = vrot.slane %v4638, %v4916
  %v4919 = vunpack.c.l.s4 1983009808
  %v4920 = vunpack.c.0.s8 %v4919
  %v4921 = vlaneseq
  %v4922 = vshrl.u32 %v4921, 7
  %v4923 = vsub.s32 %v4920, %v4922
  %v4924 = vrot.slane %v4910, %v4923
  %v4925 = vcombine.high %v4917, %v4917
  %v4926 = vcombine.high %v4924, %v4924
  %v4927 = vcombine.high %v4639, %v4639
  %v4929 = vunpack.c.l.s4 1983009808
  %v4930 = vunpack.c.0.s8 %v4929
  %v4931 = vlaneseq
  %v4932 = vshrl.u32 %v4931, 7
  %v4933 = vsub.s32 %v4930, %v4932
  %v4934 = vrot.slane %v4639, %v4933
  %v4936 = vunpack.c.l.s4 1983009808
  %v4937 = vunpack.c.0.s8 %v4936
  %v4938 = vlaneseq
  %v4939 = vshrl.u32 %v4938, 7
  %v4940 = vsub.s32 %v4937, %v4939
  %v4941 = vrot.slane %v4927, %v4940
  %v4942 = vcombine.high %v4934, %v4934
  %v4943 = vcombine.high %v4941, %v4941
  %v4944 = vcombine.high %v4640, %v4640
  %v4946 = vunpack.c.l.s4 1983009808
  %v4947 = vunpack.c.0.s8 %v4946
  %v4948 = vlaneseq
  %v4949 = vshrl.u32 %v4948, 7
  %v4950 = vsub.s32 %v4947, %v4949
  %v4951 = vrot.slane %v4640, %v4950
  %v4953 = vunpack.c.l.s4 1983009808
  %v4954 = vunpack.c.0.s8 %v4953
  %v4955 = vlaneseq
  %v4956 = vshrl.u32 %v4955, 7
  %v4957 = vsub.s32 %v4954, %v4956
  %v4958 = vrot.slane %v4944, %v4957
  %v4959 = vcombine.high %v4951, %v4951
  %v4960 = vcombine.high %v4958, %v4958
  %v4961 = vcombine.high %v4641, %v4641
  %v4963 = vunpack.c.l.s4 1983009808
  %v4964 = vunpack.c.0.s8 %v4963
  %v4965 = vlaneseq
  %v4966 = vshrl.u32 %v4965, 7
  %v4967 = vsub.s32 %v4964, %v4966
  %v4968 = vrot.slane %v4641, %v4967
  %v4970 = vunpack.c.l.s4 1983009808
  %v4971 = vunpack.c.0.s8 %v4970
  %v4972 = vlaneseq
  %v4973 = vshrl.u32 %v4972, 7
  %v4974 = vsub.s32 %v4971, %v4973
  %v4975 = vrot.slane %v4961, %v4974
  %v4976 = vcombine.high %v4968, %v4968
  %v4977 = vcombine.high %v4975, %v4975
  %v4978 = vcombine.high %v4642, %v4642
  %v4980 = vunpack.c.l.s4 1983009808
  %v4981 = vunpack.c.0.s8 %v4980
  %v4982 = vlaneseq
  %v4983 = vshrl.u32 %v4982, 7
  %v4984 = vsub.s32 %v4981, %v4983
  %v4985 = vrot.slane %v4642, %v4984
  %v4987 = vunpack.c.l.s4 1983009808
  %v4988 = vunpack.c.0.s8 %v4987
  %v4989 = vlaneseq
  %v4990 = vshrl.u32 %v4989, 7
  %v4991 = vsub.s32 %v4988, %v4990
  %v4992 = vrot.slane %v4978, %v4991
  %v4993 = vcombine.high %v4985, %v4985
  %v4994 = vcombine.high %v4992, %v4992
  %v4995 = vcombine.high %v4643, %v4643
  %v4997 = vunpack.c.l.s4 1983009808
  %v4998 = vunpack.c.0.s8 %v4997
  %v4999 = vlaneseq
  %v5000 = vshrl.u32 %v4999, 7
  %v5001 = vsub.s32 %v4998, %v5000
  %v5002 = vrot.slane %v4643, %v5001
  %v5004 = vunpack.c.l.s4 1983009808
  %v5005 = vunpack.c.0.s8 %v5004
  %v5006 = vlaneseq
  %v5007 = vshrl.u32 %v5006, 7
  %v5008 = vsub.s32 %v5005, %v5007
  %v5009 = vrot.slane %v4995, %v5008
  %v5010 = vcombine.high %v5002, %v5002
  %v5011 = vcombine.high %v5009, %v5009
  %v5012 = vcombine.high %v4644, %v4644
  %v5014 = vunpack.c.l.s4 1983009808
  %v5015 = vunpack.c.0.s8 %v5014
  %v5016 = vlaneseq
  %v5017 = vshrl.u32 %v5016, 7
  %v5018 = vsub.s32 %v5015, %v5017
  %v5019 = vrot.slane %v4644, %v5018
  %v5021 = vunpack.c.l.s4 1983009808
  %v5022 = vunpack.c.0.s8 %v5021
  %v5023 = vlaneseq
  %v5024 = vshrl.u32 %v5023, 7
  %v5025 = vsub.s32 %v5022, %v5024
  %v5026 = vrot.slane %v5012, %v5025
  %v5027 = vcombine.high %v5019, %v5019
  %v5028 = vcombine.high %v5026, %v5026
  %v5029 = vcombine.high %v4645, %v4645
  %v5031 = vunpack.c.l.s4 1983009808
  %v5032 = vunpack.c.0.s8 %v5031
  %v5033 = vlaneseq
  %v5034 = vshrl.u32 %v5033, 7
  %v5035 = vsub.s32 %v5032, %v5034
  %v5036 = vrot.slane %v4645, %v5035
  %v5038 = vunpack.c.l.s4 1983009808
  %v5039 = vunpack.c.0.s8 %v5038
  %v5040 = vlaneseq
  %v5041 = vshrl.u32 %v5040, 7
  %v5042 = vsub.s32 %v5039, %v5041
  %v5043 = vrot.slane %v5029, %v5042
  %v5044 = vcombine.high %v5036, %v5036
  %v5045 = vcombine.high %v5043, %v5043
  %v5046 = vcombine.high %v4646, %v4646
  %v5048 = vunpack.c.l.s4 1983009808
  %v5049 = vunpack.c.0.s8 %v5048
  %v5050 = vlaneseq
  %v5051 = vshrl.u32 %v5050, 7
  %v5052 = vsub.s32 %v5049, %v5051
  %v5053 = vrot.slane %v4646, %v5052
  %v5055 = vunpack.c.l.s4 1983009808
  %v5056 = vunpack.c.0.s8 %v5055
  %v5057 = vlaneseq
  %v5058 = vshrl.u32 %v5057, 7
  %v5059 = vsub.s32 %v5056, %v5058
  %v5060 = vrot.slane %v5046, %v5059
  %v5061 = vcombine.high %v5053, %v5053
  %v5062 = vcombine.high %v5060, %v5060
  %v5063 = vcombine.high %v4647, %v4647
  %v5065 = vunpack.c.l.s4 1983009808
  %v5066 = vunpack.c.0.s8 %v5065
  %v5067 = vlaneseq
  %v5068 = vshrl.u32 %v5067, 7
  %v5069 = vsub.s32 %v5066, %v5068
  %v5070 = vrot.slane %v4647, %v5069
  %v5072 = vunpack.c.l.s4 1983009808
  %v5073 = vunpack.c.0.s8 %v5072
  %v5074 = vlaneseq
  %v5075 = vshrl.u32 %v5074, 7
  %v5076 = vsub.s32 %v5073, %v5075
  %v5077 = vrot.slane %v5063, %v5076
  %v5078 = vcombine.high %v5070, %v5070
  %v5079 = vcombine.high %v5077, %v5077
  %v5080 = vcombine.high %v4648, %v4648
  %v5082 = vunpack.c.l.s4 1983009808
  %v5083 = vunpack.c.0.s8 %v5082
  %v5084 = vlaneseq
  %v5085 = vshrl.u32 %v5084, 7
  %v5086 = vsub.s32 %v5083, %v5085
  %v5087 = vrot.slane %v4648, %v5086
  %v5089 = vunpack.c.l.s4 1983009808
  %v5090 = vunpack.c.0.s8 %v5089
  %v5091 = vlaneseq
  %v5092 = vshrl.u32 %v5091, 7
  %v5093 = vsub.s32 %v5090, %v5092
  %v5094 = vrot.slane %v5080, %v5093
  %v5095 = vcombine.high %v5087, %v5087
  %v5096 = vcombine.high %v5094, %v5094
  %v5097 = vcombine.high %v4649, %v4649
  %v5099 = vunpack.c.l.s4 1983009808
  %v5100 = vunpack.c.0.s8 %v5099
  %v5101 = vlaneseq
  %v5102 = vshrl.u32 %v5101, 7
  %v5103 = vsub.s32 %v5100, %v5102
  %v5104 = vrot.slane %v4649, %v5103
  %v5106 = vunpack.c.l.s4 1983009808
  %v5107 = vunpack.c.0.s8 %v5106
  %v5108 = vlaneseq
  %v5109 = vshrl.u32 %v5108, 7
  %v5110 = vsub.s32 %v5107, %v5109
  %v5111 = vrot.slane %v5097, %v5110
  %v5112 = vcombine.high %v5104, %v5104
  %v5113 = vcombine.high %v5111, %v5111
  %v5114 = vcombine.high %v4650, %v4650
  %v5116 = vunpack.c.l.s4 1983009808
  %v5117 = vunpack.c.0.s8 %v5116
  %v5118 = vlaneseq
  %v5119 = vshrl.u32 %v5118, 7
  %v5120 = vsub.s32 %v5117, %v5119
  %v5121 = vrot.slane %v4650, %v5120
  %v5123 = vunpack.c.l.s4 1983009808
  %v5124 = vunpack.c.0.s8 %v5123
  %v5125 = vlaneseq
  %v5126 = vshrl.u32 %v5125, 7
  %v5127 = vsub.s32 %v5124, %v5126
  %v5128 = vrot.slane %v5114, %v5127
  %v5129 = vcombine.high %v5121, %v5121
  %v5130 = vcombine.high %v5128, %v5128
  %v5131 = vcombine.high %v4651, %v4651
  %v5133 = vunpack.c.l.s4 1983009808
  %v5134 = vunpack.c.0.s8 %v5133
  %v5135 = vlaneseq
  %v5136 = vshrl.u32 %v5135, 7
  %v5137 = vsub.s32 %v5134, %v5136
  %v5138 = vrot.slane %v4651, %v5137
  %v5140 = vunpack.c.l.s4 1983009808
  %v5141 = vunpack.c.0.s8 %v5140
  %v5142 = vlaneseq
  %v5143 = vshrl.u32 %v5142, 7
  %v5144 = vsub.s32 %v5141, %v5143
  %v5145 = vrot.slane %v5131, %v5144
  %v5146 = vcombine.high %v5138, %v5138
  %v5147 = vcombine.high %v5145, %v5145
  %v5148 = vcombine.high %v4652, %v4652
  %v5150 = vunpack.c.l.s4 1983009808
  %v5151 = vunpack.c.0.s8 %v5150
  %v5152 = vlaneseq
  %v5153 = vshrl.u32 %v5152, 7
  %v5154 = vsub.s32 %v5151, %v5153
  %v5155 = vrot.slane %v4652, %v5154
  %v5157 = vunpack.c.l.s4 1983009808
  %v5158 = vunpack.c.0.s8 %v5157
  %v5159 = vlaneseq
  %v5160 = vshrl.u32 %v5159, 7
  %v5161 = vsub.s32 %v5158, %v5160
  %v5162 = vrot.slane %v5148, %v5161
  %v5163 = vcombine.high %v5155, %v5155
  %v5164 = vcombine.high %v5162, %v5162
  %v5165 = vcombine.high %v4653, %v4653
  %v5167 = vunpack.c.l.s4 1983009808
  %v5168 = vunpack.c.0.s8 %v5167
  %v5169 = vlaneseq
  %v5170 = vshrl.u32 %v5169, 7
  %v5171 = vsub.s32 %v5168, %v5170
  %v5172 = vrot.slane %v4653, %v5171
  %v5174 = vunpack.c.l.s4 1983009808
  %v5175 = vunpack.c.0.s8 %v5174
  %v5176 = vlaneseq
  %v5177 = vshrl.u32 %v5176, 7
  %v5178 = vsub.s32 %v5175, %v5177
  %v5179 = vrot.slane %v5165, %v5178
  %v5180 = vcombine.high %v5172, %v5172
  %v5181 = vcombine.high %v5179, %v5179
  %v5182 = vcombine.high %v4654, %v4654
  %v5184 = vunpack.c.l.s4 1983009808
  %v5185 = vunpack.c.0.s8 %v5184
  %v5186 = vlaneseq
  %v5187 = vshrl.u32 %v5186, 7
  %v5188 = vsub.s32 %v5185, %v5187
  %v5189 = vrot.slane %v4654, %v5188
  %v5191 = vunpack.c.l.s4 1983009808
  %v5192 = vunpack.c.0.s8 %v5191
  %v5193 = vlaneseq
  %v5194 = vshrl.u32 %v5193, 7
  %v5195 = vsub.s32 %v5192, %v5194
  %v5196 = vrot.slane %v5182, %v5195
  %v5197 = vcombine.high %v5189, %v5189
  %v5198 = vcombine.high %v5196, %v5196
  %v5199 = vcombine.high %v4655, %v4655
  %v5201 = vunpack.c.l.s4 1983009808
  %v5202 = vunpack.c.0.s8 %v5201
  %v5203 = vlaneseq
  %v5204 = vshrl.u32 %v5203, 7
  %v5205 = vsub.s32 %v5202, %v5204
  %v5206 = vrot.slane %v4655, %v5205
  %v5208 = vunpack.c.l.s4 1983009808
  %v5209 = vunpack.c.0.s8 %v5208
  %v5210 = vlaneseq
  %v5211 = vshrl.u32 %v5210, 7
  %v5212 = vsub.s32 %v5209, %v5211
  %v5213 = vrot.slane %v5199, %v5212
  %v5214 = vcombine.high %v5206, %v5206
  %v5215 = vcombine.high %v5213, %v5213
  %v5216 = vcombine.high %v4656, %v4656
  %v5218 = vunpack.c.l.s4 1983009808
  %v5219 = vunpack.c.0.s8 %v5218
  %v5220 = vlaneseq
  %v5221 = vshrl.u32 %v5220, 7
  %v5222 = vsub.s32 %v5219, %v5221
  %v5223 = vrot.slane %v4656, %v5222
  %v5225 = vunpack.c.l.s4 1983009808
  %v5226 = vunpack.c.0.s8 %v5225
  %v5227 = vlaneseq
  %v5228 = vshrl.u32 %v5227, 7
  %v5229 = vsub.s32 %v5226, %v5228
  %v5230 = vrot.slane %v5216, %v5229
  %v5231 = vcombine.high %v5223, %v5223
  %v5232 = vcombine.high %v5230, %v5230
  %v5233 = vcombine.high %v4657, %v4657
  %v5235 = vunpack.c.l.s4 1983009808
  %v5236 = vunpack.c.0.s8 %v5235
  %v5237 = vlaneseq
  %v5238 = vshrl.u32 %v5237, 7
  %v5239 = vsub.s32 %v5236, %v5238
  %v5240 = vrot.slane %v4657, %v5239
  %v5242 = vunpack.c.l.s4 1983009808
  %v5243 = vunpack.c.0.s8 %v5242
  %v5244 = vlaneseq
  %v5245 = vshrl.u32 %v5244, 7
  %v5246 = vsub.s32 %v5243, %v5245
  %v5247 = vrot.slane %v5233, %v5246
  %v5248 = vcombine.high %v5240, %v5240
  %v5249 = vcombine.high %v5247, %v5247
  %v5250 = vcombine.high %v4658, %v4658
  %v5252 = vunpack.c.l.s4 1983009808
  %v5253 = vunpack.c.0.s8 %v5252
  %v5254 = vlaneseq
  %v5255 = vshrl.u32 %v5254, 7
  %v5256 = vsub.s32 %v5253, %v5255
  %v5257 = vrot.slane %v4658, %v5256
  %v5259 = vunpack.c.l.s4 1983009808
  %v5260 = vunpack.c.0.s8 %v5259
  %v5261 = vlaneseq
  %v5262 = vshrl.u32 %v5261, 7
  %v5263 = vsub.s32 %v5260, %v5262
  %v5264 = vrot.slane %v5250, %v5263
  %v5265 = vcombine.high %v5257, %v5257
  %v5266 = vcombine.high %v5264, %v5264
  %v5267 = vcombine.high %v4659, %v4659
  %v5269 = vunpack.c.l.s4 1983009808
  %v5270 = vunpack.c.0.s8 %v5269
  %v5271 = vlaneseq
  %v5272 = vshrl.u32 %v5271, 7
  %v5273 = vsub.s32 %v5270, %v5272
  %v5274 = vrot.slane %v4659, %v5273
  %v5276 = vunpack.c.l.s4 1983009808
  %v5277 = vunpack.c.0.s8 %v5276
  %v5278 = vlaneseq
  %v5279 = vshrl.u32 %v5278, 7
  %v5280 = vsub.s32 %v5277, %v5279
  %v5281 = vrot.slane %v5267, %v5280
  %v5282 = vcombine.high %v5274, %v5274
  %v5283 = vcombine.high %v5281, %v5281
  %v5284 = vcombine.high %v4660, %v4660
  %v5286 = vunpack.c.l.s4 1983009808
  %v5287 = vunpack.c.0.s8 %v5286
  %v5288 = vlaneseq
  %v5289 = vshrl.u32 %v5288, 7
  %v5290 = vsub.s32 %v5287, %v5289
  %v5291 = vrot.slane %v4660, %v5290
  %v5293 = vunpack.c.l.s4 1983009808
  %v5294 = vunpack.c.0.s8 %v5293
  %v5295 = vlaneseq
  %v5296 = vshrl.u32 %v5295, 7
  %v5297 = vsub.s32 %v5294, %v5296
  %v5298 = vrot.slane %v5284, %v5297
  %v5299 = vcombine.high %v5291, %v5291
  %v5300 = vcombine.high %v5298, %v5298
  %v5301 = vcombine.high %v4661, %v4661
  %v5303 = vunpack.c.l.s4 1983009808
  %v5304 = vunpack.c.0.s8 %v5303
  %v5305 = vlaneseq
  %v5306 = vshrl.u32 %v5305, 7
  %v5307 = vsub.s32 %v5304, %v5306
  %v5308 = vrot.slane %v4661, %v5307
  %v5310 = vunpack.c.l.s4 1983009808
  %v5311 = vunpack.c.0.s8 %v5310
  %v5312 = vlaneseq
  %v5313 = vshrl.u32 %v5312, 7
  %v5314 = vsub.s32 %v5311, %v5313
  %v5315 = vrot.slane %v5301, %v5314
  %v5316 = vcombine.high %v5308, %v5308
  %v5317 = vcombine.high %v5315, %v5315
  %v5318 = vcombine.high %v4662, %v4662
  %v5320 = vunpack.c.l.s4 1983009808
  %v5321 = vunpack.c.0.s8 %v5320
  %v5322 = vlaneseq
  %v5323 = vshrl.u32 %v5322, 7
  %v5324 = vsub.s32 %v5321, %v5323
  %v5325 = vrot.slane %v4662, %v5324
  %v5327 = vunpack.c.l.s4 1983009808
  %v5328 = vunpack.c.0.s8 %v5327
  %v5329 = vlaneseq
  %v5330 = vshrl.u32 %v5329, 7
  %v5331 = vsub.s32 %v5328, %v5330
  %v5332 = vrot.slane %v5318, %v5331
  %v5333 = vcombine.high %v5325, %v5325
  %v5334 = vcombine.high %v5332, %v5332
  %v5335 = vcombine.high %v4663, %v4663
  %v5337 = vunpack.c.l.s4 1983009808
  %v5338 = vunpack.c.0.s8 %v5337
  %v5339 = vlaneseq
  %v5340 = vshrl.u32 %v5339, 7
  %v5341 = vsub.s32 %v5338, %v5340
  %v5342 = vrot.slane %v4663, %v5341
  %v5344 = vunpack.c.l.s4 1983009808
  %v5345 = vunpack.c.0.s8 %v5344
  %v5346 = vlaneseq
  %v5347 = vshrl.u32 %v5346, 7
  %v5348 = vsub.s32 %v5345, %v5347
  %v5349 = vrot.slane %v5335, %v5348
  %v5350 = vcombine.high %v5342, %v5342
  %v5351 = vcombine.high %v5349, %v5349
  %v5352 = vcombine.high %v4664, %v4664
  %v5354 = vunpack.c.l.s4 1983009808
  %v5355 = vunpack.c.0.s8 %v5354
  %v5356 = vlaneseq
  %v5357 = vshrl.u32 %v5356, 7
  %v5358 = vsub.s32 %v5355, %v5357
  %v5359 = vrot.slane %v4664, %v5358
  %v5361 = vunpack.c.l.s4 1983009808
  %v5362 = vunpack.c.0.s8 %v5361
  %v5363 = vlaneseq
  %v5364 = vshrl.u32 %v5363, 7
  %v5365 = vsub.s32 %v5362, %v5364
  %v5366 = vrot.slane %v5352, %v5365
  %v5367 = vcombine.high %v5359, %v5359
  %v5368 = vcombine.high %v5366, %v5366
  %v5369 = vcombine.high %v4665, %v4665
  %v5371 = vunpack.c.l.s4 1983009808
  %v5372 = vunpack.c.0.s8 %v5371
  %v5373 = vlaneseq
  %v5374 = vshrl.u32 %v5373, 7
  %v5375 = vsub.s32 %v5372, %v5374
  %v5376 = vrot.slane %v4665, %v5375
  %v5378 = vunpack.c.l.s4 1983009808
  %v5379 = vunpack.c.0.s8 %v5378
  %v5380 = vlaneseq
  %v5381 = vshrl.u32 %v5380, 7
  %v5382 = vsub.s32 %v5379, %v5381
  %v5383 = vrot.slane %v5369, %v5382
  %v5384 = vcombine.high %v5376, %v5376
  %v5385 = vcombine.high %v5383, %v5383
  %v5386 = vcombine.high %v4666, %v4666
  %v5388 = vunpack.c.l.s4 1983009808
  %v5389 = vunpack.c.0.s8 %v5388
  %v5390 = vlaneseq
  %v5391 = vshrl.u32 %v5390, 7
  %v5392 = vsub.s32 %v5389, %v5391
  %v5393 = vrot.slane %v4666, %v5392
  %v5395 = vunpack.c.l.s4 1983009808
  %v5396 = vunpack.c.0.s8 %v5395
  %v5397 = vlaneseq
  %v5398 = vshrl.u32 %v5397, 7
  %v5399 = vsub.s32 %v5396, %v5398
  %v5400 = vrot.slane %v5386, %v5399
  %v5401 = vcombine.high %v5393, %v5393
  %v5402 = vcombine.high %v5400, %v5400
  %v5403 = vcombine.high %v4667, %v4667
  %v5405 = vunpack.c.l.s4 1983009808
  %v5406 = vunpack.c.0.s8 %v5405
  %v5407 = vlaneseq
  %v5408 = vshrl.u32 %v5407, 7
  %v5409 = vsub.s32 %v5406, %v5408
  %v5410 = vrot.slane %v4667, %v5409
  %v5412 = vunpack.c.l.s4 1983009808
  %v5413 = vunpack.c.0.s8 %v5412
  %v5414 = vlaneseq
  %v5415 = vshrl.u32 %v5414, 7
  %v5416 = vsub.s32 %v5413, %v5415
  %v5417 = vrot.slane %v5403, %v5416
  %v5418 = vcombine.high %v5410, %v5410
  %v5419 = vcombine.high %v5417, %v5417
  %v5420 = vcombine.high %v4668, %v4668
  %v5422 = vunpack.c.l.s4 1983009808
  %v5423 = vunpack.c.0.s8 %v5422
  %v5424 = vlaneseq
  %v5425 = vshrl.u32 %v5424, 7
  %v5426 = vsub.s32 %v5423, %v5425
  %v5427 = vrot.slane %v4668, %v5426
  %v5429 = vunpack.c.l.s4 1983009808
  %v5430 = vunpack.c.0.s8 %v5429
  %v5431 = vlaneseq
  %v5432 = vshrl.u32 %v5431, 7
  %v5433 = vsub.s32 %v5430, %v5432
  %v5434 = vrot.slane %v5420, %v5433
  %v5435 = vcombine.high %v5427, %v5427
  %v5436 = vcombine.high %v5434, %v5434
  %v5437 = vcombine.high %v4669, %v4669
  %v5439 = vunpack.c.l.s4 1983009808
  %v5440 = vunpack.c.0.s8 %v5439
  %v5441 = vlaneseq
  %v5442 = vshrl.u32 %v5441, 7
  %v5443 = vsub.s32 %v5440, %v5442
  %v5444 = vrot.slane %v4669, %v5443
  %v5446 = vunpack.c.l.s4 1983009808
  %v5447 = vunpack.c.0.s8 %v5446
  %v5448 = vlaneseq
  %v5449 = vshrl.u32 %v5448, 7
  %v5450 = vsub.s32 %v5447, %v5449
  %v5451 = vrot.slane %v5437, %v5450
  %v5452 = vcombine.high %v5444, %v5444
  %v5453 = vcombine.high %v5451, %v5451
  %v5454 = vcombine.high %v4670, %v4670
  %v5456 = vunpack.c.l.s4 1983009808
  %v5457 = vunpack.c.0.s8 %v5456
  %v5458 = vlaneseq
  %v5459 = vshrl.u32 %v5458, 7
  %v5460 = vsub.s32 %v5457, %v5459
  %v5461 = vrot.slane %v4670, %v5460
  %v5463 = vunpack.c.l.s4 1983009808
  %v5464 = vunpack.c.0.s8 %v5463
  %v5465 = vlaneseq
  %v5466 = vshrl.u32 %v5465, 7
  %v5467 = vsub.s32 %v5464, %v5466
  %v5468 = vrot.slane %v5454, %v5467
  %v5469 = vcombine.high %v5461, %v5461
  %v5470 = vcombine.high %v5468, %v5468
  %v5471 = vcombine.high %v4671, %v4671
  %v5473 = vunpack.c.l.s4 1983009808
  %v5474 = vunpack.c.0.s8 %v5473
  %v5475 = vlaneseq
  %v5476 = vshrl.u32 %v5475, 7
  %v5477 = vsub.s32 %v5474, %v5476
  %v5478 = vrot.slane %v4671, %v5477
  %v5480 = vunpack.c.l.s4 1983009808
  %v5481 = vunpack.c.0.s8 %v5480
  %v5482 = vlaneseq
  %v5483 = vshrl.u32 %v5482, 7
  %v5484 = vsub.s32 %v5481, %v5483
  %v5485 = vrot.slane %v5471, %v5484
  %v5486 = vcombine.high %v5478, %v5478
  %v5487 = vcombine.high %v5485, %v5485
  %v5488 = vcombine.high %v4672, %v4672
  %v5490 = vunpack.c.l.s4 1983009808
  %v5491 = vunpack.c.0.s8 %v5490
  %v5492 = vlaneseq
  %v5493 = vshrl.u32 %v5492, 7
  %v5494 = vsub.s32 %v5491, %v5493
  %v5495 = vrot.slane %v4672, %v5494
  %v5497 = vunpack.c.l.s4 1983009808
  %v5498 = vunpack.c.0.s8 %v5497
  %v5499 = vlaneseq
  %v5500 = vshrl.u32 %v5499, 7
  %v5501 = vsub.s32 %v5498, %v5500
  %v5502 = vrot.slane %v5488, %v5501
  %v5503 = vcombine.high %v5495, %v5495
  %v5504 = vcombine.high %v5502, %v5502
  %v5505 = vcombine.high %v4673, %v4673
  %v5507 = vunpack.c.l.s4 1983009808
  %v5508 = vunpack.c.0.s8 %v5507
  %v5509 = vlaneseq
  %v5510 = vshrl.u32 %v5509, 7
  %v5511 = vsub.s32 %v5508, %v5510
  %v5512 = vrot.slane %v4673, %v5511
  %v5514 = vunpack.c.l.s4 1983009808
  %v5515 = vunpack.c.0.s8 %v5514
  %v5516 = vlaneseq
  %v5517 = vshrl.u32 %v5516, 7
  %v5518 = vsub.s32 %v5515, %v5517
  %v5519 = vrot.slane %v5505, %v5518
  %v5520 = vcombine.high %v5512, %v5512
  %v5521 = vcombine.high %v5519, %v5519
  %v5522 = vcombine.high %v4674, %v4674
  %v5524 = vunpack.c.l.s4 1983009808
  %v5525 = vunpack.c.0.s8 %v5524
  %v5526 = vlaneseq
  %v5527 = vshrl.u32 %v5526, 7
  %v5528 = vsub.s32 %v5525, %v5527
  %v5529 = vrot.slane %v4674, %v5528
  %v5531 = vunpack.c.l.s4 1983009808
  %v5532 = vunpack.c.0.s8 %v5531
  %v5533 = vlaneseq
  %v5534 = vshrl.u32 %v5533, 7
  %v5535 = vsub.s32 %v5532, %v5534
  %v5536 = vrot.slane %v5522, %v5535
  %v5537 = vcombine.high %v5529, %v5529
  %v5538 = vcombine.high %v5536, %v5536
  %v5539 = vcombine.high %v4675, %v4675
  %v5541 = vunpack.c.l.s4 1983009808
  %v5542 = vunpack.c.0.s8 %v5541
  %v5543 = vlaneseq
  %v5544 = vshrl.u32 %v5543, 7
  %v5545 = vsub.s32 %v5542, %v5544
  %v5546 = vrot.slane %v4675, %v5545
  %v5548 = vunpack.c.l.s4 1983009808
  %v5549 = vunpack.c.0.s8 %v5548
  %v5550 = vlaneseq
  %v5551 = vshrl.u32 %v5550, 7
  %v5552 = vsub.s32 %v5549, %v5551
  %v5553 = vrot.slane %v5539, %v5552
  %v5554 = vcombine.high %v5546, %v5546
  %v5555 = vcombine.high %v5553, %v5553
  %v5556 = vcombine.high %v4676, %v4676
  %v5558 = vunpack.c.l.s4 1983009808
  %v5559 = vunpack.c.0.s8 %v5558
  %v5560 = vlaneseq
  %v5561 = vshrl.u32 %v5560, 7
  %v5562 = vsub.s32 %v5559, %v5561
  %v5563 = vrot.slane %v4676, %v5562
  %v5565 = vunpack.c.l.s4 1983009808
  %v5566 = vunpack.c.0.s8 %v5565
  %v5567 = vlaneseq
  %v5568 = vshrl.u32 %v5567, 7
  %v5569 = vsub.s32 %v5566, %v5568
  %v5570 = vrot.slane %v5556, %v5569
  %v5571 = vcombine.high %v5563, %v5563
  %v5572 = vcombine.high %v5570, %v5570
  %v5573 = vcombine.high %v4677, %v4677
  %v5575 = vunpack.c.l.s4 1983009808
  %v5576 = vunpack.c.0.s8 %v5575
  %v5577 = vlaneseq
  %v5578 = vshrl.u32 %v5577, 7
  %v5579 = vsub.s32 %v5576, %v5578
  %v5580 = vrot.slane %v4677, %v5579
  %v5582 = vunpack.c.l.s4 1983009808
  %v5583 = vunpack.c.0.s8 %v5582
  %v5584 = vlaneseq
  %v5585 = vshrl.u32 %v5584, 7
  %v5586 = vsub.s32 %v5583, %v5585
  %v5587 = vrot.slane %v5573, %v5586
  %v5588 = vcombine.high %v5580, %v5580
  %v5589 = vcombine.high %v5587, %v5587
  %v5590 = vcombine.high %v4678, %v4678
  %v5592 = vunpack.c.l.s4 1983009808
  %v5593 = vunpack.c.0.s8 %v5592
  %v5594 = vlaneseq
  %v5595 = vshrl.u32 %v5594, 7
  %v5596 = vsub.s32 %v5593, %v5595
  %v5597 = vrot.slane %v4678, %v5596
  %v5599 = vunpack.c.l.s4 1983009808
  %v5600 = vunpack.c.0.s8 %v5599
  %v5601 = vlaneseq
  %v5602 = vshrl.u32 %v5601, 7
  %v5603 = vsub.s32 %v5600, %v5602
  %v5604 = vrot.slane %v5590, %v5603
  %v5605 = vcombine.high %v5597, %v5597
  %v5606 = vcombine.high %v5604, %v5604
  %v5607 = vcombine.high %v4679, %v4679
  %v5609 = vunpack.c.l.s4 1983009808
  %v5610 = vunpack.c.0.s8 %v5609
  %v5611 = vlaneseq
  %v5612 = vshrl.u32 %v5611, 7
  %v5613 = vsub.s32 %v5610, %v5612
  %v5614 = vrot.slane %v4679, %v5613
  %v5616 = vunpack.c.l.s4 1983009808
  %v5617 = vunpack.c.0.s8 %v5616
  %v5618 = vlaneseq
  %v5619 = vshrl.u32 %v5618, 7
  %v5620 = vsub.s32 %v5617, %v5619
  %v5621 = vrot.slane %v5607, %v5620
  %v5622 = vcombine.high %v5614, %v5614
  %v5623 = vcombine.high %v5621, %v5621
  %v5624 = vcombine.high %v4680, %v4680
  %v5626 = vunpack.c.l.s4 1983009808
  %v5627 = vunpack.c.0.s8 %v5626
  %v5628 = vlaneseq
  %v5629 = vshrl.u32 %v5628, 7
  %v5630 = vsub.s32 %v5627, %v5629
  %v5631 = vrot.slane %v4680, %v5630
  %v5633 = vunpack.c.l.s4 1983009808
  %v5634 = vunpack.c.0.s8 %v5633
  %v5635 = vlaneseq
  %v5636 = vshrl.u32 %v5635, 7
  %v5637 = vsub.s32 %v5634, %v5636
  %v5638 = vrot.slane %v5624, %v5637
  %v5639 = vcombine.high %v5631, %v5631
  %v5640 = vcombine.high %v5638, %v5638
  %v5641 = vcombine.high %v4681, %v4681
  %v5643 = vunpack.c.l.s4 1983009808
  %v5644 = vunpack.c.0.s8 %v5643
  %v5645 = vlaneseq
  %v5646 = vshrl.u32 %v5645, 7
  %v5647 = vsub.s32 %v5644, %v5646
  %v5648 = vrot.slane %v4681, %v5647
  %v5650 = vunpack.c.l.s4 1983009808
  %v5651 = vunpack.c.0.s8 %v5650
  %v5652 = vlaneseq
  %v5653 = vshrl.u32 %v5652, 7
  %v5654 = vsub.s32 %v5651, %v5653
  %v5655 = vrot.slane %v5641, %v5654
  %v5656 = vcombine.high %v5648, %v5648
  %v5657 = vcombine.high %v5655, %v5655
  %v5658 = vcombine.high %v4682, %v4682
  %v5660 = vunpack.c.l.s4 1983009808
  %v5661 = vunpack.c.0.s8 %v5660
  %v5662 = vlaneseq
  %v5663 = vshrl.u32 %v5662, 7
  %v5664 = vsub.s32 %v5661, %v5663
  %v5665 = vrot.slane %v4682, %v5664
  %v5667 = vunpack.c.l.s4 1983009808
  %v5668 = vunpack.c.0.s8 %v5667
  %v5669 = vlaneseq
  %v5670 = vshrl.u32 %v5669, 7
  %v5671 = vsub.s32 %v5668, %v5670
  %v5672 = vrot.slane %v5658, %v5671
  %v5673 = vcombine.high %v5665, %v5665
  %v5674 = vcombine.high %v5672, %v5672
  %v5675 = vcombine.high %v4683, %v4683
  %v5677 = vunpack.c.l.s4 1983009808
  %v5678 = vunpack.c.0.s8 %v5677
  %v5679 = vlaneseq
  %v5680 = vshrl.u32 %v5679, 7
  %v5681 = vsub.s32 %v5678, %v5680
  %v5682 = vrot.slane %v4683, %v5681
  %v5684 = vunpack.c.l.s4 1983009808
  %v5685 = vunpack.c.0.s8 %v5684
  %v5686 = vlaneseq
  %v5687 = vshrl.u32 %v5686, 7
  %v5688 = vsub.s32 %v5685, %v5687
  %v5689 = vrot.slane %v5675, %v5688
  %v5690 = vcombine.high %v5682, %v5682
  %v5691 = vcombine.high %v5689, %v5689
  %v5692 = vcombine.high %v4684, %v4684
  %v5694 = vunpack.c.l.s4 1983009808
  %v5695 = vunpack.c.0.s8 %v5694
  %v5696 = vlaneseq
  %v5697 = vshrl.u32 %v5696, 7
  %v5698 = vsub.s32 %v5695, %v5697
  %v5699 = vrot.slane %v4684, %v5698
  %v5701 = vunpack.c.l.s4 1983009808
  %v5702 = vunpack.c.0.s8 %v5701
  %v5703 = vlaneseq
  %v5704 = vshrl.u32 %v5703, 7
  %v5705 = vsub.s32 %v5702, %v5704
  %v5706 = vrot.slane %v5692, %v5705
  %v5707 = vcombine.high %v5699, %v5699
  %v5708 = vcombine.high %v5706, %v5706
  %v5709 = vcombine.high %v4685, %v4685
  %v5711 = vunpack.c.l.s4 1983009808
  %v5712 = vunpack.c.0.s8 %v5711
  %v5713 = vlaneseq
  %v5714 = vshrl.u32 %v5713, 7
  %v5715 = vsub.s32 %v5712, %v5714
  %v5716 = vrot.slane %v4685, %v5715
  %v5718 = vunpack.c.l.s4 1983009808
  %v5719 = vunpack.c.0.s8 %v5718
  %v5720 = vlaneseq
  %v5721 = vshrl.u32 %v5720, 7
  %v5722 = vsub.s32 %v5719, %v5721
  %v5723 = vrot.slane %v5709, %v5722
  %v5724 = vcombine.high %v5716, %v5716
  %v5725 = vcombine.high %v5723, %v5723
  %v5726 = vcombine.high %v4686, %v4686
  %v5728 = vunpack.c.l.s4 1983009808
  %v5729 = vunpack.c.0.s8 %v5728
  %v5730 = vlaneseq
  %v5731 = vshrl.u32 %v5730, 7
  %v5732 = vsub.s32 %v5729, %v5731
  %v5733 = vrot.slane %v4686, %v5732
  %v5735 = vunpack.c.l.s4 1983009808
  %v5736 = vunpack.c.0.s8 %v5735
  %v5737 = vlaneseq
  %v5738 = vshrl.u32 %v5737, 7
  %v5739 = vsub.s32 %v5736, %v5738
  %v5740 = vrot.slane %v5726, %v5739
  %v5741 = vcombine.high %v5733, %v5733
  %v5742 = vcombine.high %v5740, %v5740
  %v5743 = vcombine.high %v4687, %v4687
  %v5745 = vunpack.c.l.s4 1983009808
  %v5746 = vunpack.c.0.s8 %v5745
  %v5747 = vlaneseq
  %v5748 = vshrl.u32 %v5747, 7
  %v5749 = vsub.s32 %v5746, %v5748
  %v5750 = vrot.slane %v4687, %v5749
  %v5752 = vunpack.c.l.s4 1983009808
  %v5753 = vunpack.c.0.s8 %v5752
  %v5754 = vlaneseq
  %v5755 = vshrl.u32 %v5754, 7
  %v5756 = vsub.s32 %v5753, %v5755
  %v5757 = vrot.slane %v5743, %v5756
  %v5758 = vcombine.high %v5750, %v5750
  %v5759 = vcombine.high %v5757, %v5757
  %v5760 = vcombine.high %v4688, %v4688
  %v5762 = vunpack.c.l.s4 1983009808
  %v5763 = vunpack.c.0.s8 %v5762
  %v5764 = vlaneseq
  %v5765 = vshrl.u32 %v5764, 7
  %v5766 = vsub.s32 %v5763, %v5765
  %v5767 = vrot.slane %v4688, %v5766
  %v5769 = vunpack.c.l.s4 1983009808
  %v5770 = vunpack.c.0.s8 %v5769
  %v5771 = vlaneseq
  %v5772 = vshrl.u32 %v5771, 7
  %v5773 = vsub.s32 %v5770, %v5772
  %v5774 = vrot.slane %v5760, %v5773
  %v5775 = vcombine.high %v5767, %v5767
  %v5776 = vcombine.high %v5774, %v5774
  %v5777 = vcombine.high %v4689, %v4689
  %v5779 = vunpack.c.l.s4 1983009808
  %v5780 = vunpack.c.0.s8 %v5779
  %v5781 = vlaneseq
  %v5782 = vshrl.u32 %v5781, 7
  %v5783 = vsub.s32 %v5780, %v5782
  %v5784 = vrot.slane %v4689, %v5783
  %v5786 = vunpack.c.l.s4 1983009808
  %v5787 = vunpack.c.0.s8 %v5786
  %v5788 = vlaneseq
  %v5789 = vshrl.u32 %v5788, 7
  %v5790 = vsub.s32 %v5787, %v5789
  %v5791 = vrot.slane %v5777, %v5790
  %v5792 = vcombine.high %v5784, %v5784
  %v5793 = vcombine.high %v5791, %v5791
  %v5794 = vcombine.high %v4690, %v4690
  %v5796 = vunpack.c.l.s4 1983009808
  %v5797 = vunpack.c.0.s8 %v5796
  %v5798 = vlaneseq
  %v5799 = vshrl.u32 %v5798, 7
  %v5800 = vsub.s32 %v5797, %v5799
  %v5801 = vrot.slane %v4690, %v5800
  %v5803 = vunpack.c.l.s4 1983009808
  %v5804 = vunpack.c.0.s8 %v5803
  %v5805 = vlaneseq
  %v5806 = vshrl.u32 %v5805, 7
  %v5807 = vsub.s32 %v5804, %v5806
  %v5808 = vrot.slane %v5794, %v5807
  %v5809 = vcombine.high %v5801, %v5801
  %v5810 = vcombine.high %v5808, %v5808
  %v5811 = vcombine.high %v4691, %v4691
  %v5813 = vunpack.c.l.s4 1983009808
  %v5814 = vunpack.c.0.s8 %v5813
  %v5815 = vlaneseq
  %v5816 = vshrl.u32 %v5815, 7
  %v5817 = vsub.s32 %v5814, %v5816
  %v5818 = vrot.slane %v4691, %v5817
  %v5820 = vunpack.c.l.s4 1983009808
  %v5821 = vunpack.c.0.s8 %v5820
  %v5822 = vlaneseq
  %v5823 = vshrl.u32 %v5822, 7
  %v5824 = vsub.s32 %v5821, %v5823
  %v5825 = vrot.slane %v5811, %v5824
  %v5826 = vcombine.high %v5818, %v5818
  %v5827 = vcombine.high %v5825, %v5825
  %v5828 = vcombine.high %v4692, %v4692
  %v5830 = vunpack.c.l.s4 1983009808
  %v5831 = vunpack.c.0.s8 %v5830
  %v5832 = vlaneseq
  %v5833 = vshrl.u32 %v5832, 7
  %v5834 = vsub.s32 %v5831, %v5833
  %v5835 = vrot.slane %v4692, %v5834
  %v5837 = vunpack.c.l.s4 1983009808
  %v5838 = vunpack.c.0.s8 %v5837
  %v5839 = vlaneseq
  %v5840 = vshrl.u32 %v5839, 7
  %v5841 = vsub.s32 %v5838, %v5840
  %v5842 = vrot.slane %v5828, %v5841
  %v5843 = vcombine.high %v5835, %v5835
  %v5844 = vcombine.high %v5842, %v5842
  %vm6101 = vcmask 254976
  %v6102 = vsel %vm6101, %v4764, -inf
  %v6103 = vrot.slane %v6102, 4
  %v6104 = vmax.f32 %v6102, %v6103
  %v6105 = vrot.slane %v6104, 2
  %v6106 = vmax.f32 %v6104, %v6105
  %v6107 = vrot.slane %v6106, 1
  %v6108 = vmax.f32 %v6106, %v6107
  %v6109 = vsel %vm6101, %v4772, -inf
  %v6110 = vrot.slane %v6109, 4
  %v6111 = vmax.f32 %v6109, %v6110
  %v6112 = vrot.slane %v6111, 2
  %v6113 = vmax.f32 %v6111, %v6112
  %v6114 = vrot.slane %v6113, 1
  %v6115 = vmax.f32 %v6113, %v6114
  %v6116 = vsel %vm6101, %v4771, -inf
  %v6117 = vrot.slane %v6116, 4
  %v6118 = vmax.f32 %v6116, %v6117
  %v6119 = vrot.slane %v6118, 2
  %v6120 = vmax.f32 %v6118, %v6119
  %v6121 = vrot.slane %v6120, 1
  %v6122 = vmax.f32 %v6120, %v6121
  %v6123 = vsel %vm6101, %v4773, -inf
  %v6124 = vrot.slane %v6123, 4
  %v6125 = vmax.f32 %v6123, %v6124
  %v6126 = vrot.slane %v6125, 2
  %v6127 = vmax.f32 %v6125, %v6126
  %v6128 = vrot.slane %v6127, 1
  %v6129 = vmax.f32 %v6127, %v6128
  %v6130 = vsel %vm6101, %v4781, -inf
  %v6131 = vrot.slane %v6130, 4
  %v6132 = vmax.f32 %v6130, %v6131
  %v6133 = vrot.slane %v6132, 2
  %v6134 = vmax.f32 %v6132, %v6133
  %v6135 = vrot.slane %v6134, 1
  %v6136 = vmax.f32 %v6134, %v6135
  %v6137 = vsel %vm6101, %v4789, -inf
  %v6138 = vrot.slane %v6137, 4
  %v6139 = vmax.f32 %v6137, %v6138
  %v6140 = vrot.slane %v6139, 2
  %v6141 = vmax.f32 %v6139, %v6140
  %v6142 = vrot.slane %v6141, 1
  %v6143 = vmax.f32 %v6141, %v6142
  %v6144 = vsel %vm6101, %v4788, -inf
  %v6145 = vrot.slane %v6144, 4
  %v6146 = vmax.f32 %v6144, %v6145
  %v6147 = vrot.slane %v6146, 2
  %v6148 = vmax.f32 %v6146, %v6147
  %v6149 = vrot.slane %v6148, 1
  %v6150 = vmax.f32 %v6148, %v6149
  %v6151 = vsel %vm6101, %v4790, -inf
  %v6152 = vrot.slane %v6151, 4
  %v6153 = vmax.f32 %v6151, %v6152
  %v6154 = vrot.slane %v6153, 2
  %v6155 = vmax.f32 %v6153, %v6154
  %v6156 = vrot.slane %v6155, 1
  %v6157 = vmax.f32 %v6155, %v6156
  %v6158 = vsel %vm6101, %v4798, -inf
  %v6159 = vrot.slane %v6158, 4
  %v6160 = vmax.f32 %v6158, %v6159
  %v6161 = vrot.slane %v6160, 2
  %v6162 = vmax.f32 %v6160, %v6161
  %v6163 = vrot.slane %v6162, 1
  %v6164 = vmax.f32 %v6162, %v6163
  %v6165 = vsel %vm6101, %v4806, -inf
  %v6166 = vrot.slane %v6165, 4
  %v6167 = vmax.f32 %v6165, %v6166
  %v6168 = vrot.slane %v6167, 2
  %v6169 = vmax.f32 %v6167, %v6168
  %v6170 = vrot.slane %v6169, 1
  %v6171 = vmax.f32 %v6169, %v6170
  %v6172 = vsel %vm6101, %v4805, -inf
  %v6173 = vrot.slane %v6172, 4
  %v6174 = vmax.f32 %v6172, %v6173
  %v6175 = vrot.slane %v6174, 2
  %v6176 = vmax.f32 %v6174, %v6175
  %v6177 = vrot.slane %v6176, 1
  %v6178 = vmax.f32 %v6176, %v6177
  %v6179 = vsel %vm6101, %v4807, -inf
  %v6180 = vrot.slane %v6179, 4
  %v6181 = vmax.f32 %v6179, %v6180
  %v6182 = vrot.slane %v6181, 2
  %v6183 = vmax.f32 %v6181, %v6182
  %v6184 = vrot.slane %v6183, 1
  %v6185 = vmax.f32 %v6183, %v6184
  %v6186 = vsel %vm6101, %v4815, -inf
  %v6187 = vrot.slane %v6186, 4
  %v6188 = vmax.f32 %v6186, %v6187
  %v6189 = vrot.slane %v6188, 2
  %v6190 = vmax.f32 %v6188, %v6189
  %v6191 = vrot.slane %v6190, 1
  %v6192 = vmax.f32 %v6190, %v6191
  %v6193 = vsel %vm6101, %v4823, -inf
  %v6194 = vrot.slane %v6193, 4
  %v6195 = vmax.f32 %v6193, %v6194
  %v6196 = vrot.slane %v6195, 2
  %v6197 = vmax.f32 %v6195, %v6196
  %v6198 = vrot.slane %v6197, 1
  %v6199 = vmax.f32 %v6197, %v6198
  %v6200 = vsel %vm6101, %v4822, -inf
  %v6201 = vrot.slane %v6200, 4
  %v6202 = vmax.f32 %v6200, %v6201
  %v6203 = vrot.slane %v6202, 2
  %v6204 = vmax.f32 %v6202, %v6203
  %v6205 = vrot.slane %v6204, 1
  %v6206 = vmax.f32 %v6204, %v6205
  %v6207 = vsel %vm6101, %v4824, -inf
  %v6208 = vrot.slane %v6207, 4
  %v6209 = vmax.f32 %v6207, %v6208
  %v6210 = vrot.slane %v6209, 2
  %v6211 = vmax.f32 %v6209, %v6210
  %v6212 = vrot.slane %v6211, 1
  %v6213 = vmax.f32 %v6211, %v6212
  %v6214 = vsel %vm6101, %v4832, -inf
  %v6215 = vrot.slane %v6214, 4
  %v6216 = vmax.f32 %v6214, %v6215
  %v6217 = vrot.slane %v6216, 2
  %v6218 = vmax.f32 %v6216, %v6217
  %v6219 = vrot.slane %v6218, 1
  %v6220 = vmax.f32 %v6218, %v6219
  %v6221 = vsel %vm6101, %v4840, -inf
  %v6222 = vrot.slane %v6221, 4
  %v6223 = vmax.f32 %v6221, %v6222
  %v6224 = vrot.slane %v6223, 2
  %v6225 = vmax.f32 %v6223, %v6224
  %v6226 = vrot.slane %v6225, 1
  %v6227 = vmax.f32 %v6225, %v6226
  %v6228 = vsel %vm6101, %v4839, -inf
  %v6229 = vrot.slane %v6228, 4
  %v6230 = vmax.f32 %v6228, %v6229
  %v6231 = vrot.slane %v6230, 2
  %v6232 = vmax.f32 %v6230, %v6231
  %v6233 = vrot.slane %v6232, 1
  %v6234 = vmax.f32 %v6232, %v6233
  %v6235 = vsel %vm6101, %v4841, -inf
  %v6236 = vrot.slane %v6235, 4
  %v6237 = vmax.f32 %v6235, %v6236
  %v6238 = vrot.slane %v6237, 2
  %v6239 = vmax.f32 %v6237, %v6238
  %v6240 = vrot.slane %v6239, 1
  %v6241 = vmax.f32 %v6239, %v6240
  %v6242 = vsel %vm6101, %v4849, -inf
  %v6243 = vrot.slane %v6242, 4
  %v6244 = vmax.f32 %v6242, %v6243
  %v6245 = vrot.slane %v6244, 2
  %v6246 = vmax.f32 %v6244, %v6245
  %v6247 = vrot.slane %v6246, 1
  %v6248 = vmax.f32 %v6246, %v6247
  %v6249 = vsel %vm6101, %v4857, -inf
  %v6250 = vrot.slane %v6249, 4
  %v6251 = vmax.f32 %v6249, %v6250
  %v6252 = vrot.slane %v6251, 2
  %v6253 = vmax.f32 %v6251, %v6252
  %v6254 = vrot.slane %v6253, 1
  %v6255 = vmax.f32 %v6253, %v6254
  %v6256 = vsel %vm6101, %v4856, -inf
  %v6257 = vrot.slane %v6256, 4
  %v6258 = vmax.f32 %v6256, %v6257
  %v6259 = vrot.slane %v6258, 2
  %v6260 = vmax.f32 %v6258, %v6259
  %v6261 = vrot.slane %v6260, 1
  %v6262 = vmax.f32 %v6260, %v6261
  %v6263 = vsel %vm6101, %v4858, -inf
  %v6264 = vrot.slane %v6263, 4
  %v6265 = vmax.f32 %v6263, %v6264
  %v6266 = vrot.slane %v6265, 2
  %v6267 = vmax.f32 %v6265, %v6266
  %v6268 = vrot.slane %v6267, 1
  %v6269 = vmax.f32 %v6267, %v6268
  %v6270 = vsel %vm6101, %v4866, -inf
  %v6271 = vrot.slane %v6270, 4
  %v6272 = vmax.f32 %v6270, %v6271
  %v6273 = vrot.slane %v6272, 2
  %v6274 = vmax.f32 %v6272, %v6273
  %v6275 = vrot.slane %v6274, 1
  %v6276 = vmax.f32 %v6274, %v6275
  %v6277 = vsel %vm6101, %v4874, -inf
  %v6278 = vrot.slane %v6277, 4
  %v6279 = vmax.f32 %v6277, %v6278
  %v6280 = vrot.slane %v6279, 2
  %v6281 = vmax.f32 %v6279, %v6280
  %v6282 = vrot.slane %v6281, 1
  %v6283 = vmax.f32 %v6281, %v6282
  %v6284 = vsel %vm6101, %v4873, -inf
  %v6285 = vrot.slane %v6284, 4
  %v6286 = vmax.f32 %v6284, %v6285
  %v6287 = vrot.slane %v6286, 2
  %v6288 = vmax.f32 %v6286, %v6287
  %v6289 = vrot.slane %v6288, 1
  %v6290 = vmax.f32 %v6288, %v6289
  %v6291 = vsel %vm6101, %v4875, -inf
  %v6292 = vrot.slane %v6291, 4
  %v6293 = vmax.f32 %v6291, %v6292
  %v6294 = vrot.slane %v6293, 2
  %v6295 = vmax.f32 %v6293, %v6294
  %v6296 = vrot.slane %v6295, 1
  %v6297 = vmax.f32 %v6295, %v6296
  %v6298 = vsel %vm6101, %v4883, -inf
  %v6299 = vrot.slane %v6298, 4
  %v6300 = vmax.f32 %v6298, %v6299
  %v6301 = vrot.slane %v6300, 2
  %v6302 = vmax.f32 %v6300, %v6301
  %v6303 = vrot.slane %v6302, 1
  %v6304 = vmax.f32 %v6302, %v6303
  %v6305 = vsel %vm6101, %v4891, -inf
  %v6306 = vrot.slane %v6305, 4
  %v6307 = vmax.f32 %v6305, %v6306
  %v6308 = vrot.slane %v6307, 2
  %v6309 = vmax.f32 %v6307, %v6308
  %v6310 = vrot.slane %v6309, 1
  %v6311 = vmax.f32 %v6309, %v6310
  %v6312 = vsel %vm6101, %v4890, -inf
  %v6313 = vrot.slane %v6312, 4
  %v6314 = vmax.f32 %v6312, %v6313
  %v6315 = vrot.slane %v6314, 2
  %v6316 = vmax.f32 %v6314, %v6315
  %v6317 = vrot.slane %v6316, 1
  %v6318 = vmax.f32 %v6316, %v6317
  %v6319 = vsel %vm6101, %v4892, -inf
  %v6320 = vrot.slane %v6319, 4
  %v6321 = vmax.f32 %v6319, %v6320
  %v6322 = vrot.slane %v6321, 2
  %v6323 = vmax.f32 %v6321, %v6322
  %v6324 = vrot.slane %v6323, 1
  %v6325 = vmax.f32 %v6323, %v6324
  %v6326 = vsel %vm6101, %v4900, -inf
  %v6327 = vrot.slane %v6326, 4
  %v6328 = vmax.f32 %v6326, %v6327
  %v6329 = vrot.slane %v6328, 2
  %v6330 = vmax.f32 %v6328, %v6329
  %v6331 = vrot.slane %v6330, 1
  %v6332 = vmax.f32 %v6330, %v6331
  %v6333 = vsel %vm6101, %v4908, -inf
  %v6334 = vrot.slane %v6333, 4
  %v6335 = vmax.f32 %v6333, %v6334
  %v6336 = vrot.slane %v6335, 2
  %v6337 = vmax.f32 %v6335, %v6336
  %v6338 = vrot.slane %v6337, 1
  %v6339 = vmax.f32 %v6337, %v6338
  %v6340 = vsel %vm6101, %v4907, -inf
  %v6341 = vrot.slane %v6340, 4
  %v6342 = vmax.f32 %v6340, %v6341
  %v6343 = vrot.slane %v6342, 2
  %v6344 = vmax.f32 %v6342, %v6343
  %v6345 = vrot.slane %v6344, 1
  %v6346 = vmax.f32 %v6344, %v6345
  %v6347 = vsel %vm6101, %v4909, -inf
  %v6348 = vrot.slane %v6347, 4
  %v6349 = vmax.f32 %v6347, %v6348
  %v6350 = vrot.slane %v6349, 2
  %v6351 = vmax.f32 %v6349, %v6350
  %v6352 = vrot.slane %v6351, 1
  %v6353 = vmax.f32 %v6351, %v6352
  %v6354 = vsel %vm6101, %v4917, -inf
  %v6355 = vrot.slane %v6354, 4
  %v6356 = vmax.f32 %v6354, %v6355
  %v6357 = vrot.slane %v6356, 2
  %v6358 = vmax.f32 %v6356, %v6357
  %v6359 = vrot.slane %v6358, 1
  %v6360 = vmax.f32 %v6358, %v6359
  %v6361 = vsel %vm6101, %v4925, -inf
  %v6362 = vrot.slane %v6361, 4
  %v6363 = vmax.f32 %v6361, %v6362
  %v6364 = vrot.slane %v6363, 2
  %v6365 = vmax.f32 %v6363, %v6364
  %v6366 = vrot.slane %v6365, 1
  %v6367 = vmax.f32 %v6365, %v6366
  %v6368 = vsel %vm6101, %v4924, -inf
  %v6369 = vrot.slane %v6368, 4
  %v6370 = vmax.f32 %v6368, %v6369
  %v6371 = vrot.slane %v6370, 2
  %v6372 = vmax.f32 %v6370, %v6371
  %v6373 = vrot.slane %v6372, 1
  %v6374 = vmax.f32 %v6372, %v6373
  %v6375 = vsel %vm6101, %v4926, -inf
  %v6376 = vrot.slane %v6375, 4
  %v6377 = vmax.f32 %v6375, %v6376
  %v6378 = vrot.slane %v6377, 2
  %v6379 = vmax.f32 %v6377, %v6378
  %v6380 = vrot.slane %v6379, 1
  %v6381 = vmax.f32 %v6379, %v6380
  %v6382 = vsel %vm6101, %v4934, -inf
  %v6383 = vrot.slane %v6382, 4
  %v6384 = vmax.f32 %v6382, %v6383
  %v6385 = vrot.slane %v6384, 2
  %v6386 = vmax.f32 %v6384, %v6385
  %v6387 = vrot.slane %v6386, 1
  %v6388 = vmax.f32 %v6386, %v6387
  %v6389 = vsel %vm6101, %v4942, -inf
  %v6390 = vrot.slane %v6389, 4
  %v6391 = vmax.f32 %v6389, %v6390
  %v6392 = vrot.slane %v6391, 2
  %v6393 = vmax.f32 %v6391, %v6392
  %v6394 = vrot.slane %v6393, 1
  %v6395 = vmax.f32 %v6393, %v6394
  %v6396 = vsel %vm6101, %v4941, -inf
  %v6397 = vrot.slane %v6396, 4
  %v6398 = vmax.f32 %v6396, %v6397
  %v6399 = vrot.slane %v6398, 2
  %v6400 = vmax.f32 %v6398, %v6399
  %v6401 = vrot.slane %v6400, 1
  %v6402 = vmax.f32 %v6400, %v6401
  %v6403 = vsel %vm6101, %v4943, -inf
  %v6404 = vrot.slane %v6403, 4
  %v6405 = vmax.f32 %v6403, %v6404
  %v6406 = vrot.slane %v6405, 2
  %v6407 = vmax.f32 %v6405, %v6406
  %v6408 = vrot.slane %v6407, 1
  %v6409 = vmax.f32 %v6407, %v6408
  %v6410 = vsel %vm6101, %v4951, -inf
  %v6411 = vrot.slane %v6410, 4
  %v6412 = vmax.f32 %v6410, %v6411
  %v6413 = vrot.slane %v6412, 2
  %v6414 = vmax.f32 %v6412, %v6413
  %v6415 = vrot.slane %v6414, 1
  %v6416 = vmax.f32 %v6414, %v6415
  %v6417 = vsel %vm6101, %v4959, -inf
  %v6418 = vrot.slane %v6417, 4
  %v6419 = vmax.f32 %v6417, %v6418
  %v6420 = vrot.slane %v6419, 2
  %v6421 = vmax.f32 %v6419, %v6420
  %v6422 = vrot.slane %v6421, 1
  %v6423 = vmax.f32 %v6421, %v6422
  %v6424 = vsel %vm6101, %v4958, -inf
  %v6425 = vrot.slane %v6424, 4
  %v6426 = vmax.f32 %v6424, %v6425
  %v6427 = vrot.slane %v6426, 2
  %v6428 = vmax.f32 %v6426, %v6427
  %v6429 = vrot.slane %v6428, 1
  %v6430 = vmax.f32 %v6428, %v6429
  %v6431 = vsel %vm6101, %v4960, -inf
  %v6432 = vrot.slane %v6431, 4
  %v6433 = vmax.f32 %v6431, %v6432
  %v6434 = vrot.slane %v6433, 2
  %v6435 = vmax.f32 %v6433, %v6434
  %v6436 = vrot.slane %v6435, 1
  %v6437 = vmax.f32 %v6435, %v6436
  %v6438 = vsel %vm6101, %v4968, -inf
  %v6439 = vrot.slane %v6438, 4
  %v6440 = vmax.f32 %v6438, %v6439
  %v6441 = vrot.slane %v6440, 2
  %v6442 = vmax.f32 %v6440, %v6441
  %v6443 = vrot.slane %v6442, 1
  %v6444 = vmax.f32 %v6442, %v6443
  %v6445 = vsel %vm6101, %v4976, -inf
  %v6446 = vrot.slane %v6445, 4
  %v6447 = vmax.f32 %v6445, %v6446
  %v6448 = vrot.slane %v6447, 2
  %v6449 = vmax.f32 %v6447, %v6448
  %v6450 = vrot.slane %v6449, 1
  %v6451 = vmax.f32 %v6449, %v6450
  %v6452 = vsel %vm6101, %v4975, -inf
  %v6453 = vrot.slane %v6452, 4
  %v6454 = vmax.f32 %v6452, %v6453
  %v6455 = vrot.slane %v6454, 2
  %v6456 = vmax.f32 %v6454, %v6455
  %v6457 = vrot.slane %v6456, 1
  %v6458 = vmax.f32 %v6456, %v6457
  %v6459 = vsel %vm6101, %v4977, -inf
  %v6460 = vrot.slane %v6459, 4
  %v6461 = vmax.f32 %v6459, %v6460
  %v6462 = vrot.slane %v6461, 2
  %v6463 = vmax.f32 %v6461, %v6462
  %v6464 = vrot.slane %v6463, 1
  %v6465 = vmax.f32 %v6463, %v6464
  %v6466 = vsel %vm6101, %v4985, -inf
  %v6467 = vrot.slane %v6466, 4
  %v6468 = vmax.f32 %v6466, %v6467
  %v6469 = vrot.slane %v6468, 2
  %v6470 = vmax.f32 %v6468, %v6469
  %v6471 = vrot.slane %v6470, 1
  %v6472 = vmax.f32 %v6470, %v6471
  %v6473 = vsel %vm6101, %v4993, -inf
  %v6474 = vrot.slane %v6473, 4
  %v6475 = vmax.f32 %v6473, %v6474
  %v6476 = vrot.slane %v6475, 2
  %v6477 = vmax.f32 %v6475, %v6476
  %v6478 = vrot.slane %v6477, 1
  %v6479 = vmax.f32 %v6477, %v6478
  %v6480 = vsel %vm6101, %v4992, -inf
  %v6481 = vrot.slane %v6480, 4
  %v6482 = vmax.f32 %v6480, %v6481
  %v6483 = vrot.slane %v6482, 2
  %v6484 = vmax.f32 %v6482, %v6483
  %v6485 = vrot.slane %v6484, 1
  %v6486 = vmax.f32 %v6484, %v6485
  %v6487 = vsel %vm6101, %v4994, -inf
  %v6488 = vrot.slane %v6487, 4
  %v6489 = vmax.f32 %v6487, %v6488
  %v6490 = vrot.slane %v6489, 2
  %v6491 = vmax.f32 %v6489, %v6490
  %v6492 = vrot.slane %v6491, 1
  %v6493 = vmax.f32 %v6491, %v6492
  %v6494 = vsel %vm6101, %v5002, -inf
  %v6495 = vrot.slane %v6494, 4
  %v6496 = vmax.f32 %v6494, %v6495
  %v6497 = vrot.slane %v6496, 2
  %v6498 = vmax.f32 %v6496, %v6497
  %v6499 = vrot.slane %v6498, 1
  %v6500 = vmax.f32 %v6498, %v6499
  %v6501 = vsel %vm6101, %v5010, -inf
  %v6502 = vrot.slane %v6501, 4
  %v6503 = vmax.f32 %v6501, %v6502
  %v6504 = vrot.slane %v6503, 2
  %v6505 = vmax.f32 %v6503, %v6504
  %v6506 = vrot.slane %v6505, 1
  %v6507 = vmax.f32 %v6505, %v6506
  %v6508 = vsel %vm6101, %v5009, -inf
  %v6509 = vrot.slane %v6508, 4
  %v6510 = vmax.f32 %v6508, %v6509
  %v6511 = vrot.slane %v6510, 2
  %v6512 = vmax.f32 %v6510, %v6511
  %v6513 = vrot.slane %v6512, 1
  %v6514 = vmax.f32 %v6512, %v6513
  %v6515 = vsel %vm6101, %v5011, -inf
  %v6516 = vrot.slane %v6515, 4
  %v6517 = vmax.f32 %v6515, %v6516
  %v6518 = vrot.slane %v6517, 2
  %v6519 = vmax.f32 %v6517, %v6518
  %v6520 = vrot.slane %v6519, 1
  %v6521 = vmax.f32 %v6519, %v6520
  %v6522 = vsel %vm6101, %v5019, -inf
  %v6523 = vrot.slane %v6522, 4
  %v6524 = vmax.f32 %v6522, %v6523
  %v6525 = vrot.slane %v6524, 2
  %v6526 = vmax.f32 %v6524, %v6525
  %v6527 = vrot.slane %v6526, 1
  %v6528 = vmax.f32 %v6526, %v6527
  %v6529 = vsel %vm6101, %v5027, -inf
  %v6530 = vrot.slane %v6529, 4
  %v6531 = vmax.f32 %v6529, %v6530
  %v6532 = vrot.slane %v6531, 2
  %v6533 = vmax.f32 %v6531, %v6532
  %v6534 = vrot.slane %v6533, 1
  %v6535 = vmax.f32 %v6533, %v6534
  %v6536 = vsel %vm6101, %v5026, -inf
  %v6537 = vrot.slane %v6536, 4
  %v6538 = vmax.f32 %v6536, %v6537
  %v6539 = vrot.slane %v6538, 2
  %v6540 = vmax.f32 %v6538, %v6539
  %v6541 = vrot.slane %v6540, 1
  %v6542 = vmax.f32 %v6540, %v6541
  %v6543 = vsel %vm6101, %v5028, -inf
  %v6544 = vrot.slane %v6543, 4
  %v6545 = vmax.f32 %v6543, %v6544
  %v6546 = vrot.slane %v6545, 2
  %v6547 = vmax.f32 %v6545, %v6546
  %v6548 = vrot.slane %v6547, 1
  %v6549 = vmax.f32 %v6547, %v6548
  %v6550 = vsel %vm6101, %v5036, -inf
  %v6551 = vrot.slane %v6550, 4
  %v6552 = vmax.f32 %v6550, %v6551
  %v6553 = vrot.slane %v6552, 2
  %v6554 = vmax.f32 %v6552, %v6553
  %v6555 = vrot.slane %v6554, 1
  %v6556 = vmax.f32 %v6554, %v6555
  %v6557 = vsel %vm6101, %v5044, -inf
  %v6558 = vrot.slane %v6557, 4
  %v6559 = vmax.f32 %v6557, %v6558
  %v6560 = vrot.slane %v6559, 2
  %v6561 = vmax.f32 %v6559, %v6560
  %v6562 = vrot.slane %v6561, 1
  %v6563 = vmax.f32 %v6561, %v6562
  %v6564 = vsel %vm6101, %v5043, -inf
  %v6565 = vrot.slane %v6564, 4
  %v6566 = vmax.f32 %v6564, %v6565
  %v6567 = vrot.slane %v6566, 2
  %v6568 = vmax.f32 %v6566, %v6567
  %v6569 = vrot.slane %v6568, 1
  %v6570 = vmax.f32 %v6568, %v6569
  %v6571 = vsel %vm6101, %v5045, -inf
  %v6572 = vrot.slane %v6571, 4
  %v6573 = vmax.f32 %v6571, %v6572
  %v6574 = vrot.slane %v6573, 2
  %v6575 = vmax.f32 %v6573, %v6574
  %v6576 = vrot.slane %v6575, 1
  %v6577 = vmax.f32 %v6575, %v6576
  %v6578 = vsel %vm6101, %v5053, -inf
  %v6579 = vrot.slane %v6578, 4
  %v6580 = vmax.f32 %v6578, %v6579
  %v6581 = vrot.slane %v6580, 2
  %v6582 = vmax.f32 %v6580, %v6581
  %v6583 = vrot.slane %v6582, 1
  %v6584 = vmax.f32 %v6582, %v6583
  %v6585 = vsel %vm6101, %v5061, -inf
  %v6586 = vrot.slane %v6585, 4
  %v6587 = vmax.f32 %v6585, %v6586
  %v6588 = vrot.slane %v6587, 2
  %v6589 = vmax.f32 %v6587, %v6588
  %v6590 = vrot.slane %v6589, 1
  %v6591 = vmax.f32 %v6589, %v6590
  %v6592 = vsel %vm6101, %v5060, -inf
  %v6593 = vrot.slane %v6592, 4
  %v6594 = vmax.f32 %v6592, %v6593
  %v6595 = vrot.slane %v6594, 2
  %v6596 = vmax.f32 %v6594, %v6595
  %v6597 = vrot.slane %v6596, 1
  %v6598 = vmax.f32 %v6596, %v6597
  %v6599 = vsel %vm6101, %v5062, -inf
  %v6600 = vrot.slane %v6599, 4
  %v6601 = vmax.f32 %v6599, %v6600
  %v6602 = vrot.slane %v6601, 2
  %v6603 = vmax.f32 %v6601, %v6602
  %v6604 = vrot.slane %v6603, 1
  %v6605 = vmax.f32 %v6603, %v6604
  %v6606 = vsel %vm6101, %v5070, -inf
  %v6607 = vrot.slane %v6606, 4
  %v6608 = vmax.f32 %v6606, %v6607
  %v6609 = vrot.slane %v6608, 2
  %v6610 = vmax.f32 %v6608, %v6609
  %v6611 = vrot.slane %v6610, 1
  %v6612 = vmax.f32 %v6610, %v6611
  %v6613 = vsel %vm6101, %v5078, -inf
  %v6614 = vrot.slane %v6613, 4
  %v6615 = vmax.f32 %v6613, %v6614
  %v6616 = vrot.slane %v6615, 2
  %v6617 = vmax.f32 %v6615, %v6616
  %v6618 = vrot.slane %v6617, 1
  %v6619 = vmax.f32 %v6617, %v6618
  %v6620 = vsel %vm6101, %v5077, -inf
  %v6621 = vrot.slane %v6620, 4
  %v6622 = vmax.f32 %v6620, %v6621
  %v6623 = vrot.slane %v6622, 2
  %v6624 = vmax.f32 %v6622, %v6623
  %v6625 = vrot.slane %v6624, 1
  %v6626 = vmax.f32 %v6624, %v6625
  %v6627 = vsel %vm6101, %v5079, -inf
  %v6628 = vrot.slane %v6627, 4
  %v6629 = vmax.f32 %v6627, %v6628
  %v6630 = vrot.slane %v6629, 2
  %v6631 = vmax.f32 %v6629, %v6630
  %v6632 = vrot.slane %v6631, 1
  %v6633 = vmax.f32 %v6631, %v6632
  %v6634 = vsel %vm6101, %v5087, -inf
  %v6635 = vrot.slane %v6634, 4
  %v6636 = vmax.f32 %v6634, %v6635
  %v6637 = vrot.slane %v6636, 2
  %v6638 = vmax.f32 %v6636, %v6637
  %v6639 = vrot.slane %v6638, 1
  %v6640 = vmax.f32 %v6638, %v6639
  %v6641 = vsel %vm6101, %v5095, -inf
  %v6642 = vrot.slane %v6641, 4
  %v6643 = vmax.f32 %v6641, %v6642
  %v6644 = vrot.slane %v6643, 2
  %v6645 = vmax.f32 %v6643, %v6644
  %v6646 = vrot.slane %v6645, 1
  %v6647 = vmax.f32 %v6645, %v6646
  %v6648 = vsel %vm6101, %v5094, -inf
  %v6649 = vrot.slane %v6648, 4
  %v6650 = vmax.f32 %v6648, %v6649
  %v6651 = vrot.slane %v6650, 2
  %v6652 = vmax.f32 %v6650, %v6651
  %v6653 = vrot.slane %v6652, 1
  %v6654 = vmax.f32 %v6652, %v6653
  %v6655 = vsel %vm6101, %v5096, -inf
  %v6656 = vrot.slane %v6655, 4
  %v6657 = vmax.f32 %v6655, %v6656
  %v6658 = vrot.slane %v6657, 2
  %v6659 = vmax.f32 %v6657, %v6658
  %v6660 = vrot.slane %v6659, 1
  %v6661 = vmax.f32 %v6659, %v6660
  %v6662 = vsel %vm6101, %v5104, -inf
  %v6663 = vrot.slane %v6662, 4
  %v6664 = vmax.f32 %v6662, %v6663
  %v6665 = vrot.slane %v6664, 2
  %v6666 = vmax.f32 %v6664, %v6665
  %v6667 = vrot.slane %v6666, 1
  %v6668 = vmax.f32 %v6666, %v6667
  %v6669 = vsel %vm6101, %v5112, -inf
  %v6670 = vrot.slane %v6669, 4
  %v6671 = vmax.f32 %v6669, %v6670
  %v6672 = vrot.slane %v6671, 2
  %v6673 = vmax.f32 %v6671, %v6672
  %v6674 = vrot.slane %v6673, 1
  %v6675 = vmax.f32 %v6673, %v6674
  %v6676 = vsel %vm6101, %v5111, -inf
  %v6677 = vrot.slane %v6676, 4
  %v6678 = vmax.f32 %v6676, %v6677
  %v6679 = vrot.slane %v6678, 2
  %v6680 = vmax.f32 %v6678, %v6679
  %v6681 = vrot.slane %v6680, 1
  %v6682 = vmax.f32 %v6680, %v6681
  %v6683 = vsel %vm6101, %v5113, -inf
  %v6684 = vrot.slane %v6683, 4
  %v6685 = vmax.f32 %v6683, %v6684
  %v6686 = vrot.slane %v6685, 2
  %v6687 = vmax.f32 %v6685, %v6686
  %v6688 = vrot.slane %v6687, 1
  %v6689 = vmax.f32 %v6687, %v6688
  %v6690 = vsel %vm6101, %v5121, -inf
  %v6691 = vrot.slane %v6690, 4
  %v6692 = vmax.f32 %v6690, %v6691
  %v6693 = vrot.slane %v6692, 2
  %v6694 = vmax.f32 %v6692, %v6693
  %v6695 = vrot.slane %v6694, 1
  %v6696 = vmax.f32 %v6694, %v6695
  %v6697 = vsel %vm6101, %v5129, -inf
  %v6698 = vrot.slane %v6697, 4
  %v6699 = vmax.f32 %v6697, %v6698
  %v6700 = vrot.slane %v6699, 2
  %v6701 = vmax.f32 %v6699, %v6700
  %v6702 = vrot.slane %v6701, 1
  %v6703 = vmax.f32 %v6701, %v6702
  %v6704 = vsel %vm6101, %v5128, -inf
  %v6705 = vrot.slane %v6704, 4
  %v6706 = vmax.f32 %v6704, %v6705
  %v6707 = vrot.slane %v6706, 2
  %v6708 = vmax.f32 %v6706, %v6707
  %v6709 = vrot.slane %v6708, 1
  %v6710 = vmax.f32 %v6708, %v6709
  %v6711 = vsel %vm6101, %v5130, -inf
  %v6712 = vrot.slane %v6711, 4
  %v6713 = vmax.f32 %v6711, %v6712
  %v6714 = vrot.slane %v6713, 2
  %v6715 = vmax.f32 %v6713, %v6714
  %v6716 = vrot.slane %v6715, 1
  %v6717 = vmax.f32 %v6715, %v6716
  %v6718 = vsel %vm6101, %v5138, -inf
  %v6719 = vrot.slane %v6718, 4
  %v6720 = vmax.f32 %v6718, %v6719
  %v6721 = vrot.slane %v6720, 2
  %v6722 = vmax.f32 %v6720, %v6721
  %v6723 = vrot.slane %v6722, 1
  %v6724 = vmax.f32 %v6722, %v6723
  %v6725 = vsel %vm6101, %v5146, -inf
  %v6726 = vrot.slane %v6725, 4
  %v6727 = vmax.f32 %v6725, %v6726
  %v6728 = vrot.slane %v6727, 2
  %v6729 = vmax.f32 %v6727, %v6728
  %v6730 = vrot.slane %v6729, 1
  %v6731 = vmax.f32 %v6729, %v6730
  %v6732 = vsel %vm6101, %v5145, -inf
  %v6733 = vrot.slane %v6732, 4
  %v6734 = vmax.f32 %v6732, %v6733
  %v6735 = vrot.slane %v6734, 2
  %v6736 = vmax.f32 %v6734, %v6735
  %v6737 = vrot.slane %v6736, 1
  %v6738 = vmax.f32 %v6736, %v6737
  %v6739 = vsel %vm6101, %v5147, -inf
  %v6740 = vrot.slane %v6739, 4
  %v6741 = vmax.f32 %v6739, %v6740
  %v6742 = vrot.slane %v6741, 2
  %v6743 = vmax.f32 %v6741, %v6742
  %v6744 = vrot.slane %v6743, 1
  %v6745 = vmax.f32 %v6743, %v6744
  %v6746 = vsel %vm6101, %v5155, -inf
  %v6747 = vrot.slane %v6746, 4
  %v6748 = vmax.f32 %v6746, %v6747
  %v6749 = vrot.slane %v6748, 2
  %v6750 = vmax.f32 %v6748, %v6749
  %v6751 = vrot.slane %v6750, 1
  %v6752 = vmax.f32 %v6750, %v6751
  %v6753 = vsel %vm6101, %v5163, -inf
  %v6754 = vrot.slane %v6753, 4
  %v6755 = vmax.f32 %v6753, %v6754
  %v6756 = vrot.slane %v6755, 2
  %v6757 = vmax.f32 %v6755, %v6756
  %v6758 = vrot.slane %v6757, 1
  %v6759 = vmax.f32 %v6757, %v6758
  %v6760 = vsel %vm6101, %v5162, -inf
  %v6761 = vrot.slane %v6760, 4
  %v6762 = vmax.f32 %v6760, %v6761
  %v6763 = vrot.slane %v6762, 2
  %v6764 = vmax.f32 %v6762, %v6763
  %v6765 = vrot.slane %v6764, 1
  %v6766 = vmax.f32 %v6764, %v6765
  %v6767 = vsel %vm6101, %v5164, -inf
  %v6768 = vrot.slane %v6767, 4
  %v6769 = vmax.f32 %v6767, %v6768
  %v6770 = vrot.slane %v6769, 2
  %v6771 = vmax.f32 %v6769, %v6770
  %v6772 = vrot.slane %v6771, 1
  %v6773 = vmax.f32 %v6771, %v6772
  %v6774 = vsel %vm6101, %v5172, -inf
  %v6775 = vrot.slane %v6774, 4
  %v6776 = vmax.f32 %v6774, %v6775
  %v6777 = vrot.slane %v6776, 2
  %v6778 = vmax.f32 %v6776, %v6777
  %v6779 = vrot.slane %v6778, 1
  %v6780 = vmax.f32 %v6778, %v6779
  %v6781 = vsel %vm6101, %v5180, -inf
  %v6782 = vrot.slane %v6781, 4
  %v6783 = vmax.f32 %v6781, %v6782
  %v6784 = vrot.slane %v6783, 2
  %v6785 = vmax.f32 %v6783, %v6784
  %v6786 = vrot.slane %v6785, 1
  %v6787 = vmax.f32 %v6785, %v6786
  %v6788 = vsel %vm6101, %v5179, -inf
  %v6789 = vrot.slane %v6788, 4
  %v6790 = vmax.f32 %v6788, %v6789
  %v6791 = vrot.slane %v6790, 2
  %v6792 = vmax.f32 %v6790, %v6791
  %v6793 = vrot.slane %v6792, 1
  %v6794 = vmax.f32 %v6792, %v6793
  %v6795 = vsel %vm6101, %v5181, -inf
  %v6796 = vrot.slane %v6795, 4
  %v6797 = vmax.f32 %v6795, %v6796
  %v6798 = vrot.slane %v6797, 2
  %v6799 = vmax.f32 %v6797, %v6798
  %v6800 = vrot.slane %v6799, 1
  %v6801 = vmax.f32 %v6799, %v6800
  %v6802 = vsel %vm6101, %v5189, -inf
  %v6803 = vrot.slane %v6802, 4
  %v6804 = vmax.f32 %v6802, %v6803
  %v6805 = vrot.slane %v6804, 2
  %v6806 = vmax.f32 %v6804, %v6805
  %v6807 = vrot.slane %v6806, 1
  %v6808 = vmax.f32 %v6806, %v6807
  %v6809 = vsel %vm6101, %v5197, -inf
  %v6810 = vrot.slane %v6809, 4
  %v6811 = vmax.f32 %v6809, %v6810
  %v6812 = vrot.slane %v6811, 2
  %v6813 = vmax.f32 %v6811, %v6812
  %v6814 = vrot.slane %v6813, 1
  %v6815 = vmax.f32 %v6813, %v6814
  %v6816 = vsel %vm6101, %v5196, -inf
  %v6817 = vrot.slane %v6816, 4
  %v6818 = vmax.f32 %v6816, %v6817
  %v6819 = vrot.slane %v6818, 2
  %v6820 = vmax.f32 %v6818, %v6819
  %v6821 = vrot.slane %v6820, 1
  %v6822 = vmax.f32 %v6820, %v6821
  %v6823 = vsel %vm6101, %v5198, -inf
  %v6824 = vrot.slane %v6823, 4
  %v6825 = vmax.f32 %v6823, %v6824
  %v6826 = vrot.slane %v6825, 2
  %v6827 = vmax.f32 %v6825, %v6826
  %v6828 = vrot.slane %v6827, 1
  %v6829 = vmax.f32 %v6827, %v6828
  %v6830 = vsel %vm6101, %v5206, -inf
  %v6831 = vrot.slane %v6830, 4
  %v6832 = vmax.f32 %v6830, %v6831
  %v6833 = vrot.slane %v6832, 2
  %v6834 = vmax.f32 %v6832, %v6833
  %v6835 = vrot.slane %v6834, 1
  %v6836 = vmax.f32 %v6834, %v6835
  %v6837 = vsel %vm6101, %v5214, -inf
  %v6838 = vrot.slane %v6837, 4
  %v6839 = vmax.f32 %v6837, %v6838
  %v6840 = vrot.slane %v6839, 2
  %v6841 = vmax.f32 %v6839, %v6840
  %v6842 = vrot.slane %v6841, 1
  %v6843 = vmax.f32 %v6841, %v6842
  %v6844 = vsel %vm6101, %v5213, -inf
  %v6845 = vrot.slane %v6844, 4
  %v6846 = vmax.f32 %v6844, %v6845
  %v6847 = vrot.slane %v6846, 2
  %v6848 = vmax.f32 %v6846, %v6847
  %v6849 = vrot.slane %v6848, 1
  %v6850 = vmax.f32 %v6848, %v6849
  %v6851 = vsel %vm6101, %v5215, -inf
  %v6852 = vrot.slane %v6851, 4
  %v6853 = vmax.f32 %v6851, %v6852
  %v6854 = vrot.slane %v6853, 2
  %v6855 = vmax.f32 %v6853, %v6854
  %v6856 = vrot.slane %v6855, 1
  %v6857 = vmax.f32 %v6855, %v6856
  %v6858 = vsel %vm6101, %v5223, -inf
  %v6859 = vrot.slane %v6858, 4
  %v6860 = vmax.f32 %v6858, %v6859
  %v6861 = vrot.slane %v6860, 2
  %v6862 = vmax.f32 %v6860, %v6861
  %v6863 = vrot.slane %v6862, 1
  %v6864 = vmax.f32 %v6862, %v6863
  %v6865 = vsel %vm6101, %v5231, -inf
  %v6866 = vrot.slane %v6865, 4
  %v6867 = vmax.f32 %v6865, %v6866
  %v6868 = vrot.slane %v6867, 2
  %v6869 = vmax.f32 %v6867, %v6868
  %v6870 = vrot.slane %v6869, 1
  %v6871 = vmax.f32 %v6869, %v6870
  %v6872 = vsel %vm6101, %v5230, -inf
  %v6873 = vrot.slane %v6872, 4
  %v6874 = vmax.f32 %v6872, %v6873
  %v6875 = vrot.slane %v6874, 2
  %v6876 = vmax.f32 %v6874, %v6875
  %v6877 = vrot.slane %v6876, 1
  %v6878 = vmax.f32 %v6876, %v6877
  %v6879 = vsel %vm6101, %v5232, -inf
  %v6880 = vrot.slane %v6879, 4
  %v6881 = vmax.f32 %v6879, %v6880
  %v6882 = vrot.slane %v6881, 2
  %v6883 = vmax.f32 %v6881, %v6882
  %v6884 = vrot.slane %v6883, 1
  %v6885 = vmax.f32 %v6883, %v6884
  %v6886 = vsel %vm6101, %v5240, -inf
  %v6887 = vrot.slane %v6886, 4
  %v6888 = vmax.f32 %v6886, %v6887
  %v6889 = vrot.slane %v6888, 2
  %v6890 = vmax.f32 %v6888, %v6889
  %v6891 = vrot.slane %v6890, 1
  %v6892 = vmax.f32 %v6890, %v6891
  %v6893 = vsel %vm6101, %v5248, -inf
  %v6894 = vrot.slane %v6893, 4
  %v6895 = vmax.f32 %v6893, %v6894
  %v6896 = vrot.slane %v6895, 2
  %v6897 = vmax.f32 %v6895, %v6896
  %v6898 = vrot.slane %v6897, 1
  %v6899 = vmax.f32 %v6897, %v6898
  %v6900 = vsel %vm6101, %v5247, -inf
  %v6901 = vrot.slane %v6900, 4
  %v6902 = vmax.f32 %v6900, %v6901
  %v6903 = vrot.slane %v6902, 2
  %v6904 = vmax.f32 %v6902, %v6903
  %v6905 = vrot.slane %v6904, 1
  %v6906 = vmax.f32 %v6904, %v6905
  %v6907 = vsel %vm6101, %v5249, -inf
  %v6908 = vrot.slane %v6907, 4
  %v6909 = vmax.f32 %v6907, %v6908
  %v6910 = vrot.slane %v6909, 2
  %v6911 = vmax.f32 %v6909, %v6910
  %v6912 = vrot.slane %v6911, 1
  %v6913 = vmax.f32 %v6911, %v6912
  %v6914 = vsel %vm6101, %v5257, -inf
  %v6915 = vrot.slane %v6914, 4
  %v6916 = vmax.f32 %v6914, %v6915
  %v6917 = vrot.slane %v6916, 2
  %v6918 = vmax.f32 %v6916, %v6917
  %v6919 = vrot.slane %v6918, 1
  %v6920 = vmax.f32 %v6918, %v6919
  %v6921 = vsel %vm6101, %v5265, -inf
  %v6922 = vrot.slane %v6921, 4
  %v6923 = vmax.f32 %v6921, %v6922
  %v6924 = vrot.slane %v6923, 2
  %v6925 = vmax.f32 %v6923, %v6924
  %v6926 = vrot.slane %v6925, 1
  %v6927 = vmax.f32 %v6925, %v6926
  %v6928 = vsel %vm6101, %v5264, -inf
  %v6929 = vrot.slane %v6928, 4
  %v6930 = vmax.f32 %v6928, %v6929
  %v6931 = vrot.slane %v6930, 2
  %v6932 = vmax.f32 %v6930, %v6931
  %v6933 = vrot.slane %v6932, 1
  %v6934 = vmax.f32 %v6932, %v6933
  %v6935 = vsel %vm6101, %v5266, -inf
  %v6936 = vrot.slane %v6935, 4
  %v6937 = vmax.f32 %v6935, %v6936
  %v6938 = vrot.slane %v6937, 2
  %v6939 = vmax.f32 %v6937, %v6938
  %v6940 = vrot.slane %v6939, 1
  %v6941 = vmax.f32 %v6939, %v6940
  %v6942 = vsel %vm6101, %v5274, -inf
  %v6943 = vrot.slane %v6942, 4
  %v6944 = vmax.f32 %v6942, %v6943
  %v6945 = vrot.slane %v6944, 2
  %v6946 = vmax.f32 %v6944, %v6945
  %v6947 = vrot.slane %v6946, 1
  %v6948 = vmax.f32 %v6946, %v6947
  %v6949 = vsel %vm6101, %v5282, -inf
  %v6950 = vrot.slane %v6949, 4
  %v6951 = vmax.f32 %v6949, %v6950
  %v6952 = vrot.slane %v6951, 2
  %v6953 = vmax.f32 %v6951, %v6952
  %v6954 = vrot.slane %v6953, 1
  %v6955 = vmax.f32 %v6953, %v6954
  %v6956 = vsel %vm6101, %v5281, -inf
  %v6957 = vrot.slane %v6956, 4
  %v6958 = vmax.f32 %v6956, %v6957
  %v6959 = vrot.slane %v6958, 2
  %v6960 = vmax.f32 %v6958, %v6959
  %v6961 = vrot.slane %v6960, 1
  %v6962 = vmax.f32 %v6960, %v6961
  %v6963 = vsel %vm6101, %v5283, -inf
  %v6964 = vrot.slane %v6963, 4
  %v6965 = vmax.f32 %v6963, %v6964
  %v6966 = vrot.slane %v6965, 2
  %v6967 = vmax.f32 %v6965, %v6966
  %v6968 = vrot.slane %v6967, 1
  %v6969 = vmax.f32 %v6967, %v6968
  %v6970 = vsel %vm6101, %v5291, -inf
  %v6971 = vrot.slane %v6970, 4
  %v6972 = vmax.f32 %v6970, %v6971
  %v6973 = vrot.slane %v6972, 2
  %v6974 = vmax.f32 %v6972, %v6973
  %v6975 = vrot.slane %v6974, 1
  %v6976 = vmax.f32 %v6974, %v6975
  %v6977 = vsel %vm6101, %v5299, -inf
  %v6978 = vrot.slane %v6977, 4
  %v6979 = vmax.f32 %v6977, %v6978
  %v6980 = vrot.slane %v6979, 2
  %v6981 = vmax.f32 %v6979, %v6980
  %v6982 = vrot.slane %v6981, 1
  %v6983 = vmax.f32 %v6981, %v6982
  %v6984 = vsel %vm6101, %v5298, -inf
  %v6985 = vrot.slane %v6984, 4
  %v6986 = vmax.f32 %v6984, %v6985
  %v6987 = vrot.slane %v6986, 2
  %v6988 = vmax.f32 %v6986, %v6987
  %v6989 = vrot.slane %v6988, 1
  %v6990 = vmax.f32 %v6988, %v6989
  %v6991 = vsel %vm6101, %v5300, -inf
  %v6992 = vrot.slane %v6991, 4
  %v6993 = vmax.f32 %v6991, %v6992
  %v6994 = vrot.slane %v6993, 2
  %v6995 = vmax.f32 %v6993, %v6994
  %v6996 = vrot.slane %v6995, 1
  %v6997 = vmax.f32 %v6995, %v6996
  %v6998 = vsel %vm6101, %v5308, -inf
  %v6999 = vrot.slane %v6998, 4
  %v7000 = vmax.f32 %v6998, %v6999
  %v7001 = vrot.slane %v7000, 2
  %v7002 = vmax.f32 %v7000, %v7001
  %v7003 = vrot.slane %v7002, 1
  %v7004 = vmax.f32 %v7002, %v7003
  %v7005 = vsel %vm6101, %v5316, -inf
  %v7006 = vrot.slane %v7005, 4
  %v7007 = vmax.f32 %v7005, %v7006
  %v7008 = vrot.slane %v7007, 2
  %v7009 = vmax.f32 %v7007, %v7008
  %v7010 = vrot.slane %v7009, 1
  %v7011 = vmax.f32 %v7009, %v7010
  %v7012 = vsel %vm6101, %v5315, -inf
  %v7013 = vrot.slane %v7012, 4
  %v7014 = vmax.f32 %v7012, %v7013
  %v7015 = vrot.slane %v7014, 2
  %v7016 = vmax.f32 %v7014, %v7015
  %v7017 = vrot.slane %v7016, 1
  %v7018 = vmax.f32 %v7016, %v7017
  %v7019 = vsel %vm6101, %v5317, -inf
  %v7020 = vrot.slane %v7019, 4
  %v7021 = vmax.f32 %v7019, %v7020
  %v7022 = vrot.slane %v7021, 2
  %v7023 = vmax.f32 %v7021, %v7022
  %v7024 = vrot.slane %v7023, 1
  %v7025 = vmax.f32 %v7023, %v7024
  %v7026 = vsel %vm6101, %v5325, -inf
  %v7027 = vrot.slane %v7026, 4
  %v7028 = vmax.f32 %v7026, %v7027
  %v7029 = vrot.slane %v7028, 2
  %v7030 = vmax.f32 %v7028, %v7029
  %v7031 = vrot.slane %v7030, 1
  %v7032 = vmax.f32 %v7030, %v7031
  %v7033 = vsel %vm6101, %v5333, -inf
  %v7034 = vrot.slane %v7033, 4
  %v7035 = vmax.f32 %v7033, %v7034
  %v7036 = vrot.slane %v7035, 2
  %v7037 = vmax.f32 %v7035, %v7036
  %v7038 = vrot.slane %v7037, 1
  %v7039 = vmax.f32 %v7037, %v7038
  %v7040 = vsel %vm6101, %v5332, -inf
  %v7041 = vrot.slane %v7040, 4
  %v7042 = vmax.f32 %v7040, %v7041
  %v7043 = vrot.slane %v7042, 2
  %v7044 = vmax.f32 %v7042, %v7043
  %v7045 = vrot.slane %v7044, 1
  %v7046 = vmax.f32 %v7044, %v7045
  %v7047 = vsel %vm6101, %v5334, -inf
  %v7048 = vrot.slane %v7047, 4
  %v7049 = vmax.f32 %v7047, %v7048
  %v7050 = vrot.slane %v7049, 2
  %v7051 = vmax.f32 %v7049, %v7050
  %v7052 = vrot.slane %v7051, 1
  %v7053 = vmax.f32 %v7051, %v7052
  %v7054 = vsel %vm6101, %v5342, -inf
  %v7055 = vrot.slane %v7054, 4
  %v7056 = vmax.f32 %v7054, %v7055
  %v7057 = vrot.slane %v7056, 2
  %v7058 = vmax.f32 %v7056, %v7057
  %v7059 = vrot.slane %v7058, 1
  %v7060 = vmax.f32 %v7058, %v7059
  %v7061 = vsel %vm6101, %v5350, -inf
  %v7062 = vrot.slane %v7061, 4
  %v7063 = vmax.f32 %v7061, %v7062
  %v7064 = vrot.slane %v7063, 2
  %v7065 = vmax.f32 %v7063, %v7064
  %v7066 = vrot.slane %v7065, 1
  %v7067 = vmax.f32 %v7065, %v7066
  %v7068 = vsel %vm6101, %v5349, -inf
  %v7069 = vrot.slane %v7068, 4
  %v7070 = vmax.f32 %v7068, %v7069
  %v7071 = vrot.slane %v7070, 2
  %v7072 = vmax.f32 %v7070, %v7071
  %v7073 = vrot.slane %v7072, 1
  %v7074 = vmax.f32 %v7072, %v7073
  %v7075 = vsel %vm6101, %v5351, -inf
  %v7076 = vrot.slane %v7075, 4
  %v7077 = vmax.f32 %v7075, %v7076
  %v7078 = vrot.slane %v7077, 2
  %v7079 = vmax.f32 %v7077, %v7078
  %v7080 = vrot.slane %v7079, 1
  %v7081 = vmax.f32 %v7079, %v7080
  %v7082 = vsel %vm6101, %v5359, -inf
  %v7083 = vrot.slane %v7082, 4
  %v7084 = vmax.f32 %v7082, %v7083
  %v7085 = vrot.slane %v7084, 2
  %v7086 = vmax.f32 %v7084, %v7085
  %v7087 = vrot.slane %v7086, 1
  %v7088 = vmax.f32 %v7086, %v7087
  %v7089 = vsel %vm6101, %v5367, -inf
  %v7090 = vrot.slane %v7089, 4
  %v7091 = vmax.f32 %v7089, %v7090
  %v7092 = vrot.slane %v7091, 2
  %v7093 = vmax.f32 %v7091, %v7092
  %v7094 = vrot.slane %v7093, 1
  %v7095 = vmax.f32 %v7093, %v7094
  %v7096 = vsel %vm6101, %v5366, -inf
  %v7097 = vrot.slane %v7096, 4
  %v7098 = vmax.f32 %v7096, %v7097
  %v7099 = vrot.slane %v7098, 2
  %v7100 = vmax.f32 %v7098, %v7099
  %v7101 = vrot.slane %v7100, 1
  %v7102 = vmax.f32 %v7100, %v7101
  %v7103 = vsel %vm6101, %v5368, -inf
  %v7104 = vrot.slane %v7103, 4
  %v7105 = vmax.f32 %v7103, %v7104
  %v7106 = vrot.slane %v7105, 2
  %v7107 = vmax.f32 %v7105, %v7106
  %v7108 = vrot.slane %v7107, 1
  %v7109 = vmax.f32 %v7107, %v7108
  %v7110 = vsel %vm6101, %v5376, -inf
  %v7111 = vrot.slane %v7110, 4
  %v7112 = vmax.f32 %v7110, %v7111
  %v7113 = vrot.slane %v7112, 2
  %v7114 = vmax.f32 %v7112, %v7113
  %v7115 = vrot.slane %v7114, 1
  %v7116 = vmax.f32 %v7114, %v7115
  %v7117 = vsel %vm6101, %v5384, -inf
  %v7118 = vrot.slane %v7117, 4
  %v7119 = vmax.f32 %v7117, %v7118
  %v7120 = vrot.slane %v7119, 2
  %v7121 = vmax.f32 %v7119, %v7120
  %v7122 = vrot.slane %v7121, 1
  %v7123 = vmax.f32 %v7121, %v7122
  %v7124 = vsel %vm6101, %v5383, -inf
  %v7125 = vrot.slane %v7124, 4
  %v7126 = vmax.f32 %v7124, %v7125
  %v7127 = vrot.slane %v7126, 2
  %v7128 = vmax.f32 %v7126, %v7127
  %v7129 = vrot.slane %v7128, 1
  %v7130 = vmax.f32 %v7128, %v7129
  %v7131 = vsel %vm6101, %v5385, -inf
  %v7132 = vrot.slane %v7131, 4
  %v7133 = vmax.f32 %v7131, %v7132
  %v7134 = vrot.slane %v7133, 2
  %v7135 = vmax.f32 %v7133, %v7134
  %v7136 = vrot.slane %v7135, 1
  %v7137 = vmax.f32 %v7135, %v7136
  %v7138 = vsel %vm6101, %v5393, -inf
  %v7139 = vrot.slane %v7138, 4
  %v7140 = vmax.f32 %v7138, %v7139
  %v7141 = vrot.slane %v7140, 2
  %v7142 = vmax.f32 %v7140, %v7141
  %v7143 = vrot.slane %v7142, 1
  %v7144 = vmax.f32 %v7142, %v7143
  %v7145 = vsel %vm6101, %v5401, -inf
  %v7146 = vrot.slane %v7145, 4
  %v7147 = vmax.f32 %v7145, %v7146
  %v7148 = vrot.slane %v7147, 2
  %v7149 = vmax.f32 %v7147, %v7148
  %v7150 = vrot.slane %v7149, 1
  %v7151 = vmax.f32 %v7149, %v7150
  %v7152 = vsel %vm6101, %v5400, -inf
  %v7153 = vrot.slane %v7152, 4
  %v7154 = vmax.f32 %v7152, %v7153
  %v7155 = vrot.slane %v7154, 2
  %v7156 = vmax.f32 %v7154, %v7155
  %v7157 = vrot.slane %v7156, 1
  %v7158 = vmax.f32 %v7156, %v7157
  %v7159 = vsel %vm6101, %v5402, -inf
  %v7160 = vrot.slane %v7159, 4
  %v7161 = vmax.f32 %v7159, %v7160
  %v7162 = vrot.slane %v7161, 2
  %v7163 = vmax.f32 %v7161, %v7162
  %v7164 = vrot.slane %v7163, 1
  %v7165 = vmax.f32 %v7163, %v7164
  %v7166 = vsel %vm6101, %v5410, -inf
  %v7167 = vrot.slane %v7166, 4
  %v7168 = vmax.f32 %v7166, %v7167
  %v7169 = vrot.slane %v7168, 2
  %v7170 = vmax.f32 %v7168, %v7169
  %v7171 = vrot.slane %v7170, 1
  %v7172 = vmax.f32 %v7170, %v7171
  %v7173 = vsel %vm6101, %v5418, -inf
  %v7174 = vrot.slane %v7173, 4
  %v7175 = vmax.f32 %v7173, %v7174
  %v7176 = vrot.slane %v7175, 2
  %v7177 = vmax.f32 %v7175, %v7176
  %v7178 = vrot.slane %v7177, 1
  %v7179 = vmax.f32 %v7177, %v7178
  %v7180 = vsel %vm6101, %v5417, -inf
  %v7181 = vrot.slane %v7180, 4
  %v7182 = vmax.f32 %v7180, %v7181
  %v7183 = vrot.slane %v7182, 2
  %v7184 = vmax.f32 %v7182, %v7183
  %v7185 = vrot.slane %v7184, 1
  %v7186 = vmax.f32 %v7184, %v7185
  %v7187 = vsel %vm6101, %v5419, -inf
  %v7188 = vrot.slane %v7187, 4
  %v7189 = vmax.f32 %v7187, %v7188
  %v7190 = vrot.slane %v7189, 2
  %v7191 = vmax.f32 %v7189, %v7190
  %v7192 = vrot.slane %v7191, 1
  %v7193 = vmax.f32 %v7191, %v7192
  %v7194 = vsel %vm6101, %v5427, -inf
  %v7195 = vrot.slane %v7194, 4
  %v7196 = vmax.f32 %v7194, %v7195
  %v7197 = vrot.slane %v7196, 2
  %v7198 = vmax.f32 %v7196, %v7197
  %v7199 = vrot.slane %v7198, 1
  %v7200 = vmax.f32 %v7198, %v7199
  %v7201 = vsel %vm6101, %v5435, -inf
  %v7202 = vrot.slane %v7201, 4
  %v7203 = vmax.f32 %v7201, %v7202
  %v7204 = vrot.slane %v7203, 2
  %v7205 = vmax.f32 %v7203, %v7204
  %v7206 = vrot.slane %v7205, 1
  %v7207 = vmax.f32 %v7205, %v7206
  %v7208 = vsel %vm6101, %v5434, -inf
  %v7209 = vrot.slane %v7208, 4
  %v7210 = vmax.f32 %v7208, %v7209
  %v7211 = vrot.slane %v7210, 2
  %v7212 = vmax.f32 %v7210, %v7211
  %v7213 = vrot.slane %v7212, 1
  %v7214 = vmax.f32 %v7212, %v7213
  %v7215 = vsel %vm6101, %v5436, -inf
  %v7216 = vrot.slane %v7215, 4
  %v7217 = vmax.f32 %v7215, %v7216
  %v7218 = vrot.slane %v7217, 2
  %v7219 = vmax.f32 %v7217, %v7218
  %v7220 = vrot.slane %v7219, 1
  %v7221 = vmax.f32 %v7219, %v7220
  %v7222 = vsel %vm6101, %v5444, -inf
  %v7223 = vrot.slane %v7222, 4
  %v7224 = vmax.f32 %v7222, %v7223
  %v7225 = vrot.slane %v7224, 2
  %v7226 = vmax.f32 %v7224, %v7225
  %v7227 = vrot.slane %v7226, 1
  %v7228 = vmax.f32 %v7226, %v7227
  %v7229 = vsel %vm6101, %v5452, -inf
  %v7230 = vrot.slane %v7229, 4
  %v7231 = vmax.f32 %v7229, %v7230
  %v7232 = vrot.slane %v7231, 2
  %v7233 = vmax.f32 %v7231, %v7232
  %v7234 = vrot.slane %v7233, 1
  %v7235 = vmax.f32 %v7233, %v7234
  %v7236 = vsel %vm6101, %v5451, -inf
  %v7237 = vrot.slane %v7236, 4
  %v7238 = vmax.f32 %v7236, %v7237
  %v7239 = vrot.slane %v7238, 2
  %v7240 = vmax.f32 %v7238, %v7239
  %v7241 = vrot.slane %v7240, 1
  %v7242 = vmax.f32 %v7240, %v7241
  %v7243 = vsel %vm6101, %v5453, -inf
  %v7244 = vrot.slane %v7243, 4
  %v7245 = vmax.f32 %v7243, %v7244
  %v7246 = vrot.slane %v7245, 2
  %v7247 = vmax.f32 %v7245, %v7246
  %v7248 = vrot.slane %v7247, 1
  %v7249 = vmax.f32 %v7247, %v7248
  %v7250 = vsel %vm6101, %v5461, -inf
  %v7251 = vrot.slane %v7250, 4
  %v7252 = vmax.f32 %v7250, %v7251
  %v7253 = vrot.slane %v7252, 2
  %v7254 = vmax.f32 %v7252, %v7253
  %v7255 = vrot.slane %v7254, 1
  %v7256 = vmax.f32 %v7254, %v7255
  %v7257 = vsel %vm6101, %v5469, -inf
  %v7258 = vrot.slane %v7257, 4
  %v7259 = vmax.f32 %v7257, %v7258
  %v7260 = vrot.slane %v7259, 2
  %v7261 = vmax.f32 %v7259, %v7260
  %v7262 = vrot.slane %v7261, 1
  %v7263 = vmax.f32 %v7261, %v7262
  %v7264 = vsel %vm6101, %v5468, -inf
  %v7265 = vrot.slane %v7264, 4
  %v7266 = vmax.f32 %v7264, %v7265
  %v7267 = vrot.slane %v7266, 2
  %v7268 = vmax.f32 %v7266, %v7267
  %v7269 = vrot.slane %v7268, 1
  %v7270 = vmax.f32 %v7268, %v7269
  %v7271 = vsel %vm6101, %v5470, -inf
  %v7272 = vrot.slane %v7271, 4
  %v7273 = vmax.f32 %v7271, %v7272
  %v7274 = vrot.slane %v7273, 2
  %v7275 = vmax.f32 %v7273, %v7274
  %v7276 = vrot.slane %v7275, 1
  %v7277 = vmax.f32 %v7275, %v7276
  %v7278 = vsel %vm6101, %v5478, -inf
  %v7279 = vrot.slane %v7278, 4
  %v7280 = vmax.f32 %v7278, %v7279
  %v7281 = vrot.slane %v7280, 2
  %v7282 = vmax.f32 %v7280, %v7281
  %v7283 = vrot.slane %v7282, 1
  %v7284 = vmax.f32 %v7282, %v7283
  %v7285 = vsel %vm6101, %v5486, -inf
  %v7286 = vrot.slane %v7285, 4
  %v7287 = vmax.f32 %v7285, %v7286
  %v7288 = vrot.slane %v7287, 2
  %v7289 = vmax.f32 %v7287, %v7288
  %v7290 = vrot.slane %v7289, 1
  %v7291 = vmax.f32 %v7289, %v7290
  %v7292 = vsel %vm6101, %v5485, -inf
  %v7293 = vrot.slane %v7292, 4
  %v7294 = vmax.f32 %v7292, %v7293
  %v7295 = vrot.slane %v7294, 2
  %v7296 = vmax.f32 %v7294, %v7295
  %v7297 = vrot.slane %v7296, 1
  %v7298 = vmax.f32 %v7296, %v7297
  %v7299 = vsel %vm6101, %v5487, -inf
  %v7300 = vrot.slane %v7299, 4
  %v7301 = vmax.f32 %v7299, %v7300
  %v7302 = vrot.slane %v7301, 2
  %v7303 = vmax.f32 %v7301, %v7302
  %v7304 = vrot.slane %v7303, 1
  %v7305 = vmax.f32 %v7303, %v7304
  %v7306 = vsel %vm6101, %v5495, -inf
  %v7307 = vrot.slane %v7306, 4
  %v7308 = vmax.f32 %v7306, %v7307
  %v7309 = vrot.slane %v7308, 2
  %v7310 = vmax.f32 %v7308, %v7309
  %v7311 = vrot.slane %v7310, 1
  %v7312 = vmax.f32 %v7310, %v7311
  %v7313 = vsel %vm6101, %v5503, -inf
  %v7314 = vrot.slane %v7313, 4
  %v7315 = vmax.f32 %v7313, %v7314
  %v7316 = vrot.slane %v7315, 2
  %v7317 = vmax.f32 %v7315, %v7316
  %v7318 = vrot.slane %v7317, 1
  %v7319 = vmax.f32 %v7317, %v7318
  %v7320 = vsel %vm6101, %v5502, -inf
  %v7321 = vrot.slane %v7320, 4
  %v7322 = vmax.f32 %v7320, %v7321
  %v7323 = vrot.slane %v7322, 2
  %v7324 = vmax.f32 %v7322, %v7323
  %v7325 = vrot.slane %v7324, 1
  %v7326 = vmax.f32 %v7324, %v7325
  %v7327 = vsel %vm6101, %v5504, -inf
  %v7328 = vrot.slane %v7327, 4
  %v7329 = vmax.f32 %v7327, %v7328
  %v7330 = vrot.slane %v7329, 2
  %v7331 = vmax.f32 %v7329, %v7330
  %v7332 = vrot.slane %v7331, 1
  %v7333 = vmax.f32 %v7331, %v7332
  %v7334 = vsel %vm6101, %v5512, -inf
  %v7335 = vrot.slane %v7334, 4
  %v7336 = vmax.f32 %v7334, %v7335
  %v7337 = vrot.slane %v7336, 2
  %v7338 = vmax.f32 %v7336, %v7337
  %v7339 = vrot.slane %v7338, 1
  %v7340 = vmax.f32 %v7338, %v7339
  %v7341 = vsel %vm6101, %v5520, -inf
  %v7342 = vrot.slane %v7341, 4
  %v7343 = vmax.f32 %v7341, %v7342
  %v7344 = vrot.slane %v7343, 2
  %v7345 = vmax.f32 %v7343, %v7344
  %v7346 = vrot.slane %v7345, 1
  %v7347 = vmax.f32 %v7345, %v7346
  %v7348 = vsel %vm6101, %v5519, -inf
  %v7349 = vrot.slane %v7348, 4
  %v7350 = vmax.f32 %v7348, %v7349
  %v7351 = vrot.slane %v7350, 2
  %v7352 = vmax.f32 %v7350, %v7351
  %v7353 = vrot.slane %v7352, 1
  %v7354 = vmax.f32 %v7352, %v7353
  %v7355 = vsel %vm6101, %v5521, -inf
  %v7356 = vrot.slane %v7355, 4
  %v7357 = vmax.f32 %v7355, %v7356
  %v7358 = vrot.slane %v7357, 2
  %v7359 = vmax.f32 %v7357, %v7358
  %v7360 = vrot.slane %v7359, 1
  %v7361 = vmax.f32 %v7359, %v7360
  %v7362 = vsel %vm6101, %v5529, -inf
  %v7363 = vrot.slane %v7362, 4
  %v7364 = vmax.f32 %v7362, %v7363
  %v7365 = vrot.slane %v7364, 2
  %v7366 = vmax.f32 %v7364, %v7365
  %v7367 = vrot.slane %v7366, 1
  %v7368 = vmax.f32 %v7366, %v7367
  %v7369 = vsel %vm6101, %v5537, -inf
  %v7370 = vrot.slane %v7369, 4
  %v7371 = vmax.f32 %v7369, %v7370
  %v7372 = vrot.slane %v7371, 2
  %v7373 = vmax.f32 %v7371, %v7372
  %v7374 = vrot.slane %v7373, 1
  %v7375 = vmax.f32 %v7373, %v7374
  %v7376 = vsel %vm6101, %v5536, -inf
  %v7377 = vrot.slane %v7376, 4
  %v7378 = vmax.f32 %v7376, %v7377
  %v7379 = vrot.slane %v7378, 2
  %v7380 = vmax.f32 %v7378, %v7379
  %v7381 = vrot.slane %v7380, 1
  %v7382 = vmax.f32 %v7380, %v7381
  %v7383 = vsel %vm6101, %v5538, -inf
  %v7384 = vrot.slane %v7383, 4
  %v7385 = vmax.f32 %v7383, %v7384
  %v7386 = vrot.slane %v7385, 2
  %v7387 = vmax.f32 %v7385, %v7386
  %v7388 = vrot.slane %v7387, 1
  %v7389 = vmax.f32 %v7387, %v7388
  %v7390 = vsel %vm6101, %v5546, -inf
  %v7391 = vrot.slane %v7390, 4
  %v7392 = vmax.f32 %v7390, %v7391
  %v7393 = vrot.slane %v7392, 2
  %v7394 = vmax.f32 %v7392, %v7393
  %v7395 = vrot.slane %v7394, 1
  %v7396 = vmax.f32 %v7394, %v7395
  %v7397 = vsel %vm6101, %v5554, -inf
  %v7398 = vrot.slane %v7397, 4
  %v7399 = vmax.f32 %v7397, %v7398
  %v7400 = vrot.slane %v7399, 2
  %v7401 = vmax.f32 %v7399, %v7400
  %v7402 = vrot.slane %v7401, 1
  %v7403 = vmax.f32 %v7401, %v7402
  %v7404 = vsel %vm6101, %v5553, -inf
  %v7405 = vrot.slane %v7404, 4
  %v7406 = vmax.f32 %v7404, %v7405
  %v7407 = vrot.slane %v7406, 2
  %v7408 = vmax.f32 %v7406, %v7407
  %v7409 = vrot.slane %v7408, 1
  %v7410 = vmax.f32 %v7408, %v7409
  %v7411 = vsel %vm6101, %v5555, -inf
  %v7412 = vrot.slane %v7411, 4
  %v7413 = vmax.f32 %v7411, %v7412
  %v7414 = vrot.slane %v7413, 2
  %v7415 = vmax.f32 %v7413, %v7414
  %v7416 = vrot.slane %v7415, 1
  %v7417 = vmax.f32 %v7415, %v7416
  %v7418 = vsel %vm6101, %v5563, -inf
  %v7419 = vrot.slane %v7418, 4
  %v7420 = vmax.f32 %v7418, %v7419
  %v7421 = vrot.slane %v7420, 2
  %v7422 = vmax.f32 %v7420, %v7421
  %v7423 = vrot.slane %v7422, 1
  %v7424 = vmax.f32 %v7422, %v7423
  %v7425 = vsel %vm6101, %v5571, -inf
  %v7426 = vrot.slane %v7425, 4
  %v7427 = vmax.f32 %v7425, %v7426
  %v7428 = vrot.slane %v7427, 2
  %v7429 = vmax.f32 %v7427, %v7428
  %v7430 = vrot.slane %v7429, 1
  %v7431 = vmax.f32 %v7429, %v7430
  %v7432 = vsel %vm6101, %v5570, -inf
  %v7433 = vrot.slane %v7432, 4
  %v7434 = vmax.f32 %v7432, %v7433
  %v7435 = vrot.slane %v7434, 2
  %v7436 = vmax.f32 %v7434, %v7435
  %v7437 = vrot.slane %v7436, 1
  %v7438 = vmax.f32 %v7436, %v7437
  %v7439 = vsel %vm6101, %v5572, -inf
  %v7440 = vrot.slane %v7439, 4
  %v7441 = vmax.f32 %v7439, %v7440
  %v7442 = vrot.slane %v7441, 2
  %v7443 = vmax.f32 %v7441, %v7442
  %v7444 = vrot.slane %v7443, 1
  %v7445 = vmax.f32 %v7443, %v7444
  %v7446 = vsel %vm6101, %v5580, -inf
  %v7447 = vrot.slane %v7446, 4
  %v7448 = vmax.f32 %v7446, %v7447
  %v7449 = vrot.slane %v7448, 2
  %v7450 = vmax.f32 %v7448, %v7449
  %v7451 = vrot.slane %v7450, 1
  %v7452 = vmax.f32 %v7450, %v7451
  %v7453 = vsel %vm6101, %v5588, -inf
  %v7454 = vrot.slane %v7453, 4
  %v7455 = vmax.f32 %v7453, %v7454
  %v7456 = vrot.slane %v7455, 2
  %v7457 = vmax.f32 %v7455, %v7456
  %v7458 = vrot.slane %v7457, 1
  %v7459 = vmax.f32 %v7457, %v7458
  %v7460 = vsel %vm6101, %v5587, -inf
  %v7461 = vrot.slane %v7460, 4
  %v7462 = vmax.f32 %v7460, %v7461
  %v7463 = vrot.slane %v7462, 2
  %v7464 = vmax.f32 %v7462, %v7463
  %v7465 = vrot.slane %v7464, 1
  %v7466 = vmax.f32 %v7464, %v7465
  %v7467 = vsel %vm6101, %v5589, -inf
  %v7468 = vrot.slane %v7467, 4
  %v7469 = vmax.f32 %v7467, %v7468
  %v7470 = vrot.slane %v7469, 2
  %v7471 = vmax.f32 %v7469, %v7470
  %v7472 = vrot.slane %v7471, 1
  %v7473 = vmax.f32 %v7471, %v7472
  %v7474 = vsel %vm6101, %v5597, -inf
  %v7475 = vrot.slane %v7474, 4
  %v7476 = vmax.f32 %v7474, %v7475
  %v7477 = vrot.slane %v7476, 2
  %v7478 = vmax.f32 %v7476, %v7477
  %v7479 = vrot.slane %v7478, 1
  %v7480 = vmax.f32 %v7478, %v7479
  %v7481 = vsel %vm6101, %v5605, -inf
  %v7482 = vrot.slane %v7481, 4
  %v7483 = vmax.f32 %v7481, %v7482
  %v7484 = vrot.slane %v7483, 2
  %v7485 = vmax.f32 %v7483, %v7484
  %v7486 = vrot.slane %v7485, 1
  %v7487 = vmax.f32 %v7485, %v7486
  %v7488 = vsel %vm6101, %v5604, -inf
  %v7489 = vrot.slane %v7488, 4
  %v7490 = vmax.f32 %v7488, %v7489
  %v7491 = vrot.slane %v7490, 2
  %v7492 = vmax.f32 %v7490, %v7491
  %v7493 = vrot.slane %v7492, 1
  %v7494 = vmax.f32 %v7492, %v7493
  %v7495 = vsel %vm6101, %v5606, -inf
  %v7496 = vrot.slane %v7495, 4
  %v7497 = vmax.f32 %v7495, %v7496
  %v7498 = vrot.slane %v7497, 2
  %v7499 = vmax.f32 %v7497, %v7498
  %v7500 = vrot.slane %v7499, 1
  %v7501 = vmax.f32 %v7499, %v7500
  %v7502 = vsel %vm6101, %v5614, -inf
  %v7503 = vrot.slane %v7502, 4
  %v7504 = vmax.f32 %v7502, %v7503
  %v7505 = vrot.slane %v7504, 2
  %v7506 = vmax.f32 %v7504, %v7505
  %v7507 = vrot.slane %v7506, 1
  %v7508 = vmax.f32 %v7506, %v7507
  %v7509 = vsel %vm6101, %v5622, -inf
  %v7510 = vrot.slane %v7509, 4
  %v7511 = vmax.f32 %v7509, %v7510
  %v7512 = vrot.slane %v7511, 2
  %v7513 = vmax.f32 %v7511, %v7512
  %v7514 = vrot.slane %v7513, 1
  %v7515 = vmax.f32 %v7513, %v7514
  %v7516 = vsel %vm6101, %v5621, -inf
  %v7517 = vrot.slane %v7516, 4
  %v7518 = vmax.f32 %v7516, %v7517
  %v7519 = vrot.slane %v7518, 2
  %v7520 = vmax.f32 %v7518, %v7519
  %v7521 = vrot.slane %v7520, 1
  %v7522 = vmax.f32 %v7520, %v7521
  %v7523 = vsel %vm6101, %v5623, -inf
  %v7524 = vrot.slane %v7523, 4
  %v7525 = vmax.f32 %v7523, %v7524
  %v7526 = vrot.slane %v7525, 2
  %v7527 = vmax.f32 %v7525, %v7526
  %v7528 = vrot.slane %v7527, 1
  %v7529 = vmax.f32 %v7527, %v7528
  %v7530 = vsel %vm6101, %v5631, -inf
  %v7531 = vrot.slane %v7530, 4
  %v7532 = vmax.f32 %v7530, %v7531
  %v7533 = vrot.slane %v7532, 2
  %v7534 = vmax.f32 %v7532, %v7533
  %v7535 = vrot.slane %v7534, 1
  %v7536 = vmax.f32 %v7534, %v7535
  %v7537 = vsel %vm6101, %v5639, -inf
  %v7538 = vrot.slane %v7537, 4
  %v7539 = vmax.f32 %v7537, %v7538
  %v7540 = vrot.slane %v7539, 2
  %v7541 = vmax.f32 %v7539, %v7540
  %v7542 = vrot.slane %v7541, 1
  %v7543 = vmax.f32 %v7541, %v7542
  %v7544 = vsel %vm6101, %v5638, -inf
  %v7545 = vrot.slane %v7544, 4
  %v7546 = vmax.f32 %v7544, %v7545
  %v7547 = vrot.slane %v7546, 2
  %v7548 = vmax.f32 %v7546, %v7547
  %v7549 = vrot.slane %v7548, 1
  %v7550 = vmax.f32 %v7548, %v7549
  %v7551 = vsel %vm6101, %v5640, -inf
  %v7552 = vrot.slane %v7551, 4
  %v7553 = vmax.f32 %v7551, %v7552
  %v7554 = vrot.slane %v7553, 2
  %v7555 = vmax.f32 %v7553, %v7554
  %v7556 = vrot.slane %v7555, 1
  %v7557 = vmax.f32 %v7555, %v7556
  %v7558 = vsel %vm6101, %v5648, -inf
  %v7559 = vrot.slane %v7558, 4
  %v7560 = vmax.f32 %v7558, %v7559
  %v7561 = vrot.slane %v7560, 2
  %v7562 = vmax.f32 %v7560, %v7561
  %v7563 = vrot.slane %v7562, 1
  %v7564 = vmax.f32 %v7562, %v7563
  %v7565 = vsel %vm6101, %v5656, -inf
  %v7566 = vrot.slane %v7565, 4
  %v7567 = vmax.f32 %v7565, %v7566
  %v7568 = vrot.slane %v7567, 2
  %v7569 = vmax.f32 %v7567, %v7568
  %v7570 = vrot.slane %v7569, 1
  %v7571 = vmax.f32 %v7569, %v7570
  %v7572 = vsel %vm6101, %v5655, -inf
  %v7573 = vrot.slane %v7572, 4
  %v7574 = vmax.f32 %v7572, %v7573
  %v7575 = vrot.slane %v7574, 2
  %v7576 = vmax.f32 %v7574, %v7575
  %v7577 = vrot.slane %v7576, 1
  %v7578 = vmax.f32 %v7576, %v7577
  %v7579 = vsel %vm6101, %v5657, -inf
  %v7580 = vrot.slane %v7579, 4
  %v7581 = vmax.f32 %v7579, %v7580
  %v7582 = vrot.slane %v7581, 2
  %v7583 = vmax.f32 %v7581, %v7582
  %v7584 = vrot.slane %v7583, 1
  %v7585 = vmax.f32 %v7583, %v7584
  %v7586 = vsel %vm6101, %v5665, -inf
  %v7587 = vrot.slane %v7586, 4
  %v7588 = vmax.f32 %v7586, %v7587
  %v7589 = vrot.slane %v7588, 2
  %v7590 = vmax.f32 %v7588, %v7589
  %v7591 = vrot.slane %v7590, 1
  %v7592 = vmax.f32 %v7590, %v7591
  %v7593 = vsel %vm6101, %v5673, -inf
  %v7594 = vrot.slane %v7593, 4
  %v7595 = vmax.f32 %v7593, %v7594
  %v7596 = vrot.slane %v7595, 2
  %v7597 = vmax.f32 %v7595, %v7596
  %v7598 = vrot.slane %v7597, 1
  %v7599 = vmax.f32 %v7597, %v7598
  %v7600 = vsel %vm6101, %v5672, -inf
  %v7601 = vrot.slane %v7600, 4
  %v7602 = vmax.f32 %v7600, %v7601
  %v7603 = vrot.slane %v7602, 2
  %v7604 = vmax.f32 %v7602, %v7603
  %v7605 = vrot.slane %v7604, 1
  %v7606 = vmax.f32 %v7604, %v7605
  %v7607 = vsel %vm6101, %v5674, -inf
  %v7608 = vrot.slane %v7607, 4
  %v7609 = vmax.f32 %v7607, %v7608
  %v7610 = vrot.slane %v7609, 2
  %v7611 = vmax.f32 %v7609, %v7610
  %v7612 = vrot.slane %v7611, 1
  %v7613 = vmax.f32 %v7611, %v7612
  %v7614 = vsel %vm6101, %v5682, -inf
  %v7615 = vrot.slane %v7614, 4
  %v7616 = vmax.f32 %v7614, %v7615
  %v7617 = vrot.slane %v7616, 2
  %v7618 = vmax.f32 %v7616, %v7617
  %v7619 = vrot.slane %v7618, 1
  %v7620 = vmax.f32 %v7618, %v7619
  %v7621 = vsel %vm6101, %v5690, -inf
  %v7622 = vrot.slane %v7621, 4
  %v7623 = vmax.f32 %v7621, %v7622
  %v7624 = vrot.slane %v7623, 2
  %v7625 = vmax.f32 %v7623, %v7624
  %v7626 = vrot.slane %v7625, 1
  %v7627 = vmax.f32 %v7625, %v7626
  %v7628 = vsel %vm6101, %v5689, -inf
  %v7629 = vrot.slane %v7628, 4
  %v7630 = vmax.f32 %v7628, %v7629
  %v7631 = vrot.slane %v7630, 2
  %v7632 = vmax.f32 %v7630, %v7631
  %v7633 = vrot.slane %v7632, 1
  %v7634 = vmax.f32 %v7632, %v7633
  %v7635 = vsel %vm6101, %v5691, -inf
  %v7636 = vrot.slane %v7635, 4
  %v7637 = vmax.f32 %v7635, %v7636
  %v7638 = vrot.slane %v7637, 2
  %v7639 = vmax.f32 %v7637, %v7638
  %v7640 = vrot.slane %v7639, 1
  %v7641 = vmax.f32 %v7639, %v7640
  %v7642 = vsel %vm6101, %v5699, -inf
  %v7643 = vrot.slane %v7642, 4
  %v7644 = vmax.f32 %v7642, %v7643
  %v7645 = vrot.slane %v7644, 2
  %v7646 = vmax.f32 %v7644, %v7645
  %v7647 = vrot.slane %v7646, 1
  %v7648 = vmax.f32 %v7646, %v7647
  %v7649 = vsel %vm6101, %v5707, -inf
  %v7650 = vrot.slane %v7649, 4
  %v7651 = vmax.f32 %v7649, %v7650
  %v7652 = vrot.slane %v7651, 2
  %v7653 = vmax.f32 %v7651, %v7652
  %v7654 = vrot.slane %v7653, 1
  %v7655 = vmax.f32 %v7653, %v7654
  %v7656 = vsel %vm6101, %v5706, -inf
  %v7657 = vrot.slane %v7656, 4
  %v7658 = vmax.f32 %v7656, %v7657
  %v7659 = vrot.slane %v7658, 2
  %v7660 = vmax.f32 %v7658, %v7659
  %v7661 = vrot.slane %v7660, 1
  %v7662 = vmax.f32 %v7660, %v7661
  %v7663 = vsel %vm6101, %v5708, -inf
  %v7664 = vrot.slane %v7663, 4
  %v7665 = vmax.f32 %v7663, %v7664
  %v7666 = vrot.slane %v7665, 2
  %v7667 = vmax.f32 %v7665, %v7666
  %v7668 = vrot.slane %v7667, 1
  %v7669 = vmax.f32 %v7667, %v7668
  %v7670 = vsel %vm6101, %v5716, -inf
  %v7671 = vrot.slane %v7670, 4
  %v7672 = vmax.f32 %v7670, %v7671
  %v7673 = vrot.slane %v7672, 2
  %v7674 = vmax.f32 %v7672, %v7673
  %v7675 = vrot.slane %v7674, 1
  %v7676 = vmax.f32 %v7674, %v7675
  %v7677 = vsel %vm6101, %v5724, -inf
  %v7678 = vrot.slane %v7677, 4
  %v7679 = vmax.f32 %v7677, %v7678
  %v7680 = vrot.slane %v7679, 2
  %v7681 = vmax.f32 %v7679, %v7680
  %v7682 = vrot.slane %v7681, 1
  %v7683 = vmax.f32 %v7681, %v7682
  %v7684 = vsel %vm6101, %v5723, -inf
  %v7685 = vrot.slane %v7684, 4
  %v7686 = vmax.f32 %v7684, %v7685
  %v7687 = vrot.slane %v7686, 2
  %v7688 = vmax.f32 %v7686, %v7687
  %v7689 = vrot.slane %v7688, 1
  %v7690 = vmax.f32 %v7688, %v7689
  %v7691 = vsel %vm6101, %v5725, -inf
  %v7692 = vrot.slane %v7691, 4
  %v7693 = vmax.f32 %v7691, %v7692
  %v7694 = vrot.slane %v7693, 2
  %v7695 = vmax.f32 %v7693, %v7694
  %v7696 = vrot.slane %v7695, 1
  %v7697 = vmax.f32 %v7695, %v7696
  %v7698 = vsel %vm6101, %v5733, -inf
  %v7699 = vrot.slane %v7698, 4
  %v7700 = vmax.f32 %v7698, %v7699
  %v7701 = vrot.slane %v7700, 2
  %v7702 = vmax.f32 %v7700, %v7701
  %v7703 = vrot.slane %v7702, 1
  %v7704 = vmax.f32 %v7702, %v7703
  %v7705 = vsel %vm6101, %v5741, -inf
  %v7706 = vrot.slane %v7705, 4
  %v7707 = vmax.f32 %v7705, %v7706
  %v7708 = vrot.slane %v7707, 2
  %v7709 = vmax.f32 %v7707, %v7708
  %v7710 = vrot.slane %v7709, 1
  %v7711 = vmax.f32 %v7709, %v7710
  %v7712 = vsel %vm6101, %v5740, -inf
  %v7713 = vrot.slane %v7712, 4
  %v7714 = vmax.f32 %v7712, %v7713
  %v7715 = vrot.slane %v7714, 2
  %v7716 = vmax.f32 %v7714, %v7715
  %v7717 = vrot.slane %v7716, 1
  %v7718 = vmax.f32 %v7716, %v7717
  %v7719 = vsel %vm6101, %v5742, -inf
  %v7720 = vrot.slane %v7719, 4
  %v7721 = vmax.f32 %v7719, %v7720
  %v7722 = vrot.slane %v7721, 2
  %v7723 = vmax.f32 %v7721, %v7722
  %v7724 = vrot.slane %v7723, 1
  %v7725 = vmax.f32 %v7723, %v7724
  %v7726 = vsel %vm6101, %v5750, -inf
  %v7727 = vrot.slane %v7726, 4
  %v7728 = vmax.f32 %v7726, %v7727
  %v7729 = vrot.slane %v7728, 2
  %v7730 = vmax.f32 %v7728, %v7729
  %v7731 = vrot.slane %v7730, 1
  %v7732 = vmax.f32 %v7730, %v7731
  %v7733 = vsel %vm6101, %v5758, -inf
  %v7734 = vrot.slane %v7733, 4
  %v7735 = vmax.f32 %v7733, %v7734
  %v7736 = vrot.slane %v7735, 2
  %v7737 = vmax.f32 %v7735, %v7736
  %v7738 = vrot.slane %v7737, 1
  %v7739 = vmax.f32 %v7737, %v7738
  %v7740 = vsel %vm6101, %v5757, -inf
  %v7741 = vrot.slane %v7740, 4
  %v7742 = vmax.f32 %v7740, %v7741
  %v7743 = vrot.slane %v7742, 2
  %v7744 = vmax.f32 %v7742, %v7743
  %v7745 = vrot.slane %v7744, 1
  %v7746 = vmax.f32 %v7744, %v7745
  %v7747 = vsel %vm6101, %v5759, -inf
  %v7748 = vrot.slane %v7747, 4
  %v7749 = vmax.f32 %v7747, %v7748
  %v7750 = vrot.slane %v7749, 2
  %v7751 = vmax.f32 %v7749, %v7750
  %v7752 = vrot.slane %v7751, 1
  %v7753 = vmax.f32 %v7751, %v7752
  %v7754 = vsel %vm6101, %v5767, -inf
  %v7755 = vrot.slane %v7754, 4
  %v7756 = vmax.f32 %v7754, %v7755
  %v7757 = vrot.slane %v7756, 2
  %v7758 = vmax.f32 %v7756, %v7757
  %v7759 = vrot.slane %v7758, 1
  %v7760 = vmax.f32 %v7758, %v7759
  %v7761 = vsel %vm6101, %v5775, -inf
  %v7762 = vrot.slane %v7761, 4
  %v7763 = vmax.f32 %v7761, %v7762
  %v7764 = vrot.slane %v7763, 2
  %v7765 = vmax.f32 %v7763, %v7764
  %v7766 = vrot.slane %v7765, 1
  %v7767 = vmax.f32 %v7765, %v7766
  %v7768 = vsel %vm6101, %v5774, -inf
  %v7769 = vrot.slane %v7768, 4
  %v7770 = vmax.f32 %v7768, %v7769
  %v7771 = vrot.slane %v7770, 2
  %v7772 = vmax.f32 %v7770, %v7771
  %v7773 = vrot.slane %v7772, 1
  %v7774 = vmax.f32 %v7772, %v7773
  %v7775 = vsel %vm6101, %v5776, -inf
  %v7776 = vrot.slane %v7775, 4
  %v7777 = vmax.f32 %v7775, %v7776
  %v7778 = vrot.slane %v7777, 2
  %v7779 = vmax.f32 %v7777, %v7778
  %v7780 = vrot.slane %v7779, 1
  %v7781 = vmax.f32 %v7779, %v7780
  %v7782 = vsel %vm6101, %v5784, -inf
  %v7783 = vrot.slane %v7782, 4
  %v7784 = vmax.f32 %v7782, %v7783
  %v7785 = vrot.slane %v7784, 2
  %v7786 = vmax.f32 %v7784, %v7785
  %v7787 = vrot.slane %v7786, 1
  %v7788 = vmax.f32 %v7786, %v7787
  %v7789 = vsel %vm6101, %v5792, -inf
  %v7790 = vrot.slane %v7789, 4
  %v7791 = vmax.f32 %v7789, %v7790
  %v7792 = vrot.slane %v7791, 2
  %v7793 = vmax.f32 %v7791, %v7792
  %v7794 = vrot.slane %v7793, 1
  %v7795 = vmax.f32 %v7793, %v7794
  %v7796 = vsel %vm6101, %v5791, -inf
  %v7797 = vrot.slane %v7796, 4
  %v7798 = vmax.f32 %v7796, %v7797
  %v7799 = vrot.slane %v7798, 2
  %v7800 = vmax.f32 %v7798, %v7799
  %v7801 = vrot.slane %v7800, 1
  %v7802 = vmax.f32 %v7800, %v7801
  %v7803 = vsel %vm6101, %v5793, -inf
  %v7804 = vrot.slane %v7803, 4
  %v7805 = vmax.f32 %v7803, %v7804
  %v7806 = vrot.slane %v7805, 2
  %v7807 = vmax.f32 %v7805, %v7806
  %v7808 = vrot.slane %v7807, 1
  %v7809 = vmax.f32 %v7807, %v7808
  %v7810 = vsel %vm6101, %v5801, -inf
  %v7811 = vrot.slane %v7810, 4
  %v7812 = vmax.f32 %v7810, %v7811
  %v7813 = vrot.slane %v7812, 2
  %v7814 = vmax.f32 %v7812, %v7813
  %v7815 = vrot.slane %v7814, 1
  %v7816 = vmax.f32 %v7814, %v7815
  %v7817 = vsel %vm6101, %v5809, -inf
  %v7818 = vrot.slane %v7817, 4
  %v7819 = vmax.f32 %v7817, %v7818
  %v7820 = vrot.slane %v7819, 2
  %v7821 = vmax.f32 %v7819, %v7820
  %v7822 = vrot.slane %v7821, 1
  %v7823 = vmax.f32 %v7821, %v7822
  %v7824 = vsel %vm6101, %v5808, -inf
  %v7825 = vrot.slane %v7824, 4
  %v7826 = vmax.f32 %v7824, %v7825
  %v7827 = vrot.slane %v7826, 2
  %v7828 = vmax.f32 %v7826, %v7827
  %v7829 = vrot.slane %v7828, 1
  %v7830 = vmax.f32 %v7828, %v7829
  %v7831 = vsel %vm6101, %v5810, -inf
  %v7832 = vrot.slane %v7831, 4
  %v7833 = vmax.f32 %v7831, %v7832
  %v7834 = vrot.slane %v7833, 2
  %v7835 = vmax.f32 %v7833, %v7834
  %v7836 = vrot.slane %v7835, 1
  %v7837 = vmax.f32 %v7835, %v7836
  %v7838 = vsel %vm6101, %v5818, -inf
  %v7839 = vrot.slane %v7838, 4
  %v7840 = vmax.f32 %v7838, %v7839
  %v7841 = vrot.slane %v7840, 2
  %v7842 = vmax.f32 %v7840, %v7841
  %v7843 = vrot.slane %v7842, 1
  %v7844 = vmax.f32 %v7842, %v7843
  %v7845 = vsel %vm6101, %v5826, -inf
  %v7846 = vrot.slane %v7845, 4
  %v7847 = vmax.f32 %v7845, %v7846
  %v7848 = vrot.slane %v7847, 2
  %v7849 = vmax.f32 %v7847, %v7848
  %v7850 = vrot.slane %v7849, 1
  %v7851 = vmax.f32 %v7849, %v7850
  %v7852 = vsel %vm6101, %v5825, -inf
  %v7853 = vrot.slane %v7852, 4
  %v7854 = vmax.f32 %v7852, %v7853
  %v7855 = vrot.slane %v7854, 2
  %v7856 = vmax.f32 %v7854, %v7855
  %v7857 = vrot.slane %v7856, 1
  %v7858 = vmax.f32 %v7856, %v7857
  %v7859 = vsel %vm6101, %v5827, -inf
  %v7860 = vrot.slane %v7859, 4
  %v7861 = vmax.f32 %v7859, %v7860
  %v7862 = vrot.slane %v7861, 2
  %v7863 = vmax.f32 %v7861, %v7862
  %v7864 = vrot.slane %v7863, 1
  %v7865 = vmax.f32 %v7863, %v7864
  %v7866 = vsel %vm6101, %v5835, -inf
  %v7867 = vrot.slane %v7866, 4
  %v7868 = vmax.f32 %v7866, %v7867
  %v7869 = vrot.slane %v7868, 2
  %v7870 = vmax.f32 %v7868, %v7869
  %v7871 = vrot.slane %v7870, 1
  %v7872 = vmax.f32 %v7870, %v7871
  %v7873 = vsel %vm6101, %v5843, -inf
  %v7874 = vrot.slane %v7873, 4
  %v7875 = vmax.f32 %v7873, %v7874
  %v7876 = vrot.slane %v7875, 2
  %v7877 = vmax.f32 %v7875, %v7876
  %v7878 = vrot.slane %v7877, 1
  %v7879 = vmax.f32 %v7877, %v7878
  %v7880 = vsel %vm6101, %v5842, -inf
  %v7881 = vrot.slane %v7880, 4
  %v7882 = vmax.f32 %v7880, %v7881
  %v7883 = vrot.slane %v7882, 2
  %v7884 = vmax.f32 %v7882, %v7883
  %v7885 = vrot.slane %v7884, 1
  %v7886 = vmax.f32 %v7884, %v7885
  %v7887 = vsel %vm6101, %v5844, -inf
  %v7888 = vrot.slane %v7887, 4
  %v7889 = vmax.f32 %v7887, %v7888
  %v7890 = vrot.slane %v7889, 2
  %v7891 = vmax.f32 %v7889, %v7890
  %v7892 = vrot.slane %v7891, 1
  %v7893 = vmax.f32 %v7891, %v7892
  %vm7894 = vcmask 261120
  %v7895 = vsel %vm7894, %v6108, -inf
  %v7896 = vsel %vm7894, %v6136, -inf
  %v7897 = vmax.f32 %v7895, %v7896
  %v7898 = vsel %vm7894, %v6115, -inf
  %v7899 = vsel %vm7894, %v6143, -inf
  %v7900 = vmax.f32 %v7898, %v7899
  %v7901 = vsel %vm7894, %v6122, -inf
  %v7902 = vsel %vm7894, %v6150, -inf
  %v7903 = vmax.f32 %v7901, %v7902
  %v7904 = vsel %vm7894, %v6129, -inf
  %v7905 = vsel %vm7894, %v6157, -inf
  %v7906 = vmax.f32 %v7904, %v7905
  %v7907 = vsel %vm7894, %v6164, -inf
  %v7908 = vsel %vm7894, %v6192, -inf
  %v7909 = vmax.f32 %v7907, %v7908
  %v7910 = vsel %vm7894, %v6171, -inf
  %v7911 = vsel %vm7894, %v6199, -inf
  %v7912 = vmax.f32 %v7910, %v7911
  %v7913 = vsel %vm7894, %v6178, -inf
  %v7914 = vsel %vm7894, %v6206, -inf
  %v7915 = vmax.f32 %v7913, %v7914
  %v7916 = vsel %vm7894, %v6185, -inf
  %v7917 = vsel %vm7894, %v6213, -inf
  %v7918 = vmax.f32 %v7916, %v7917
  %v7919 = vsel %vm7894, %v6220, -inf
  %v7920 = vsel %vm7894, %v6248, -inf
  %v7921 = vmax.f32 %v7919, %v7920
  %v7922 = vsel %vm7894, %v6227, -inf
  %v7923 = vsel %vm7894, %v6255, -inf
  %v7924 = vmax.f32 %v7922, %v7923
  %v7925 = vsel %vm7894, %v6234, -inf
  %v7926 = vsel %vm7894, %v6262, -inf
  %v7927 = vmax.f32 %v7925, %v7926
  %v7928 = vsel %vm7894, %v6241, -inf
  %v7929 = vsel %vm7894, %v6269, -inf
  %v7930 = vmax.f32 %v7928, %v7929
  %v7931 = vsel %vm7894, %v6276, -inf
  %v7932 = vsel %vm7894, %v6304, -inf
  %v7933 = vmax.f32 %v7931, %v7932
  %v7934 = vsel %vm7894, %v6283, -inf
  %v7935 = vsel %vm7894, %v6311, -inf
  %v7936 = vmax.f32 %v7934, %v7935
  %v7937 = vsel %vm7894, %v6290, -inf
  %v7938 = vsel %vm7894, %v6318, -inf
  %v7939 = vmax.f32 %v7937, %v7938
  %v7940 = vsel %vm7894, %v6297, -inf
  %v7941 = vsel %vm7894, %v6325, -inf
  %v7942 = vmax.f32 %v7940, %v7941
  %v7943 = vsel %vm7894, %v6332, -inf
  %v7944 = vsel %vm7894, %v6360, -inf
  %v7945 = vmax.f32 %v7943, %v7944
  %v7946 = vsel %vm7894, %v6339, -inf
  %v7947 = vsel %vm7894, %v6367, -inf
  %v7948 = vmax.f32 %v7946, %v7947
  %v7949 = vsel %vm7894, %v6346, -inf
  %v7950 = vsel %vm7894, %v6374, -inf
  %v7951 = vmax.f32 %v7949, %v7950
  %v7952 = vsel %vm7894, %v6353, -inf
  %v7953 = vsel %vm7894, %v6381, -inf
  %v7954 = vmax.f32 %v7952, %v7953
  %v7955 = vsel %vm7894, %v6388, -inf
  %v7956 = vsel %vm7894, %v6416, -inf
  %v7957 = vmax.f32 %v7955, %v7956
  %v7958 = vsel %vm7894, %v6395, -inf
  %v7959 = vsel %vm7894, %v6423, -inf
  %v7960 = vmax.f32 %v7958, %v7959
  %v7961 = vsel %vm7894, %v6402, -inf
  %v7962 = vsel %vm7894, %v6430, -inf
  %v7963 = vmax.f32 %v7961, %v7962
  %v7964 = vsel %vm7894, %v6409, -inf
  %v7965 = vsel %vm7894, %v6437, -inf
  %v7966 = vmax.f32 %v7964, %v7965
  %v7967 = vsel %vm7894, %v6444, -inf
  %v7968 = vsel %vm7894, %v6472, -inf
  %v7969 = vmax.f32 %v7967, %v7968
  %v7970 = vsel %vm7894, %v6451, -inf
  %v7971 = vsel %vm7894, %v6479, -inf
  %v7972 = vmax.f32 %v7970, %v7971
  %v7973 = vsel %vm7894, %v6458, -inf
  %v7974 = vsel %vm7894, %v6486, -inf
  %v7975 = vmax.f32 %v7973, %v7974
  %v7976 = vsel %vm7894, %v6465, -inf
  %v7977 = vsel %vm7894, %v6493, -inf
  %v7978 = vmax.f32 %v7976, %v7977
  %v7979 = vsel %vm7894, %v6500, -inf
  %v7980 = vsel %vm7894, %v6528, -inf
  %v7981 = vmax.f32 %v7979, %v7980
  %v7982 = vsel %vm7894, %v6507, -inf
  %v7983 = vsel %vm7894, %v6535, -inf
  %v7984 = vmax.f32 %v7982, %v7983
  %v7985 = vsel %vm7894, %v6514, -inf
  %v7986 = vsel %vm7894, %v6542, -inf
  %v7987 = vmax.f32 %v7985, %v7986
  %v7988 = vsel %vm7894, %v6521, -inf
  %v7989 = vsel %vm7894, %v6549, -inf
  %v7990 = vmax.f32 %v7988, %v7989
  %v7991 = vsel %vm7894, %v6556, -inf
  %v7992 = vsel %vm7894, %v6584, -inf
  %v7993 = vmax.f32 %v7991, %v7992
  %v7994 = vsel %vm7894, %v6563, -inf
  %v7995 = vsel %vm7894, %v6591, -inf
  %v7996 = vmax.f32 %v7994, %v7995
  %v7997 = vsel %vm7894, %v6570, -inf
  %v7998 = vsel %vm7894, %v6598, -inf
  %v7999 = vmax.f32 %v7997, %v7998
  %v8000 = vsel %vm7894, %v6577, -inf
  %v8001 = vsel %vm7894, %v6605, -inf
  %v8002 = vmax.f32 %v8000, %v8001
  %v8003 = vsel %vm7894, %v6612, -inf
  %v8004 = vsel %vm7894, %v6640, -inf
  %v8005 = vmax.f32 %v8003, %v8004
  %v8006 = vsel %vm7894, %v6619, -inf
  %v8007 = vsel %vm7894, %v6647, -inf
  %v8008 = vmax.f32 %v8006, %v8007
  %v8009 = vsel %vm7894, %v6626, -inf
  %v8010 = vsel %vm7894, %v6654, -inf
  %v8011 = vmax.f32 %v8009, %v8010
  %v8012 = vsel %vm7894, %v6633, -inf
  %v8013 = vsel %vm7894, %v6661, -inf
  %v8014 = vmax.f32 %v8012, %v8013
  %v8015 = vsel %vm7894, %v6668, -inf
  %v8016 = vsel %vm7894, %v6696, -inf
  %v8017 = vmax.f32 %v8015, %v8016
  %v8018 = vsel %vm7894, %v6675, -inf
  %v8019 = vsel %vm7894, %v6703, -inf
  %v8020 = vmax.f32 %v8018, %v8019
  %v8021 = vsel %vm7894, %v6682, -inf
  %v8022 = vsel %vm7894, %v6710, -inf
  %v8023 = vmax.f32 %v8021, %v8022
  %v8024 = vsel %vm7894, %v6689, -inf
  %v8025 = vsel %vm7894, %v6717, -inf
  %v8026 = vmax.f32 %v8024, %v8025
  %v8027 = vsel %vm7894, %v6724, -inf
  %v8028 = vsel %vm7894, %v6752, -inf
  %v8029 = vmax.f32 %v8027, %v8028
  %v8030 = vsel %vm7894, %v6731, -inf
  %v8031 = vsel %vm7894, %v6759, -inf
  %v8032 = vmax.f32 %v8030, %v8031
  %v8033 = vsel %vm7894, %v6738, -inf
  %v8034 = vsel %vm7894, %v6766, -inf
  %v8035 = vmax.f32 %v8033, %v8034
  %v8036 = vsel %vm7894, %v6745, -inf
  %v8037 = vsel %vm7894, %v6773, -inf
  %v8038 = vmax.f32 %v8036, %v8037
  %v8039 = vsel %vm7894, %v6780, -inf
  %v8040 = vsel %vm7894, %v6808, -inf
  %v8041 = vmax.f32 %v8039, %v8040
  %v8042 = vsel %vm7894, %v6787, -inf
  %v8043 = vsel %vm7894, %v6815, -inf
  %v8044 = vmax.f32 %v8042, %v8043
  %v8045 = vsel %vm7894, %v6794, -inf
  %v8046 = vsel %vm7894, %v6822, -inf
  %v8047 = vmax.f32 %v8045, %v8046
  %v8048 = vsel %vm7894, %v6801, -inf
  %v8049 = vsel %vm7894, %v6829, -inf
  %v8050 = vmax.f32 %v8048, %v8049
  %v8051 = vsel %vm7894, %v6836, -inf
  %v8052 = vsel %vm7894, %v6864, -inf
  %v8053 = vmax.f32 %v8051, %v8052
  %v8054 = vsel %vm7894, %v6843, -inf
  %v8055 = vsel %vm7894, %v6871, -inf
  %v8056 = vmax.f32 %v8054, %v8055
  %v8057 = vsel %vm7894, %v6850, -inf
  %v8058 = vsel %vm7894, %v6878, -inf
  %v8059 = vmax.f32 %v8057, %v8058
  %v8060 = vsel %vm7894, %v6857, -inf
  %v8061 = vsel %vm7894, %v6885, -inf
  %v8062 = vmax.f32 %v8060, %v8061
  %v8063 = vsel %vm7894, %v6892, -inf
  %v8064 = vsel %vm7894, %v6920, -inf
  %v8065 = vmax.f32 %v8063, %v8064
  %v8066 = vsel %vm7894, %v6899, -inf
  %v8067 = vsel %vm7894, %v6927, -inf
  %v8068 = vmax.f32 %v8066, %v8067
  %v8069 = vsel %vm7894, %v6906, -inf
  %v8070 = vsel %vm7894, %v6934, -inf
  %v8071 = vmax.f32 %v8069, %v8070
  %v8072 = vsel %vm7894, %v6913, -inf
  %v8073 = vsel %vm7894, %v6941, -inf
  %v8074 = vmax.f32 %v8072, %v8073
  %v8075 = vsel %vm7894, %v6948, -inf
  %v8076 = vsel %vm7894, %v6976, -inf
  %v8077 = vmax.f32 %v8075, %v8076
  %v8078 = vsel %vm7894, %v6955, -inf
  %v8079 = vsel %vm7894, %v6983, -inf
  %v8080 = vmax.f32 %v8078, %v8079
  %v8081 = vsel %vm7894, %v6962, -inf
  %v8082 = vsel %vm7894, %v6990, -inf
  %v8083 = vmax.f32 %v8081, %v8082
  %v8084 = vsel %vm7894, %v6969, -inf
  %v8085 = vsel %vm7894, %v6997, -inf
  %v8086 = vmax.f32 %v8084, %v8085
  %v8087 = vsel %vm7894, %v7004, -inf
  %v8088 = vsel %vm7894, %v7032, -inf
  %v8089 = vmax.f32 %v8087, %v8088
  %v8090 = vsel %vm7894, %v7011, -inf
  %v8091 = vsel %vm7894, %v7039, -inf
  %v8092 = vmax.f32 %v8090, %v8091
  %v8093 = vsel %vm7894, %v7018, -inf
  %v8094 = vsel %vm7894, %v7046, -inf
  %v8095 = vmax.f32 %v8093, %v8094
  %v8096 = vsel %vm7894, %v7025, -inf
  %v8097 = vsel %vm7894, %v7053, -inf
  %v8098 = vmax.f32 %v8096, %v8097
  %v8099 = vsel %vm7894, %v7060, -inf
  %v8100 = vsel %vm7894, %v7088, -inf
  %v8101 = vmax.f32 %v8099, %v8100
  %v8102 = vsel %vm7894, %v7067, -inf
  %v8103 = vsel %vm7894, %v7095, -inf
  %v8104 = vmax.f32 %v8102, %v8103
  %v8105 = vsel %vm7894, %v7074, -inf
  %v8106 = vsel %vm7894, %v7102, -inf
  %v8107 = vmax.f32 %v8105, %v8106
  %v8108 = vsel %vm7894, %v7081, -inf
  %v8109 = vsel %vm7894, %v7109, -inf
  %v8110 = vmax.f32 %v8108, %v8109
  %v8111 = vsel %vm7894, %v7116, -inf
  %v8112 = vsel %vm7894, %v7144, -inf
  %v8113 = vmax.f32 %v8111, %v8112
  %v8114 = vsel %vm7894, %v7123, -inf
  %v8115 = vsel %vm7894, %v7151, -inf
  %v8116 = vmax.f32 %v8114, %v8115
  %v8117 = vsel %vm7894, %v7130, -inf
  %v8118 = vsel %vm7894, %v7158, -inf
  %v8119 = vmax.f32 %v8117, %v8118
  %v8120 = vsel %vm7894, %v7137, -inf
  %v8121 = vsel %vm7894, %v7165, -inf
  %v8122 = vmax.f32 %v8120, %v8121
  %v8123 = vsel %vm7894, %v7172, -inf
  %v8124 = vsel %vm7894, %v7200, -inf
  %v8125 = vmax.f32 %v8123, %v8124
  %v8126 = vsel %vm7894, %v7179, -inf
  %v8127 = vsel %vm7894, %v7207, -inf
  %v8128 = vmax.f32 %v8126, %v8127
  %v8129 = vsel %vm7894, %v7186, -inf
  %v8130 = vsel %vm7894, %v7214, -inf
  %v8131 = vmax.f32 %v8129, %v8130
  %v8132 = vsel %vm7894, %v7193, -inf
  %v8133 = vsel %vm7894, %v7221, -inf
  %v8134 = vmax.f32 %v8132, %v8133
  %v8135 = vsel %vm7894, %v7228, -inf
  %v8136 = vsel %vm7894, %v7256, -inf
  %v8137 = vmax.f32 %v8135, %v8136
  %v8138 = vsel %vm7894, %v7235, -inf
  %v8139 = vsel %vm7894, %v7263, -inf
  %v8140 = vmax.f32 %v8138, %v8139
  %v8141 = vsel %vm7894, %v7242, -inf
  %v8142 = vsel %vm7894, %v7270, -inf
  %v8143 = vmax.f32 %v8141, %v8142
  %v8144 = vsel %vm7894, %v7249, -inf
  %v8145 = vsel %vm7894, %v7277, -inf
  %v8146 = vmax.f32 %v8144, %v8145
  %v8147 = vsel %vm7894, %v7284, -inf
  %v8148 = vsel %vm7894, %v7312, -inf
  %v8149 = vmax.f32 %v8147, %v8148
  %v8150 = vsel %vm7894, %v7291, -inf
  %v8151 = vsel %vm7894, %v7319, -inf
  %v8152 = vmax.f32 %v8150, %v8151
  %v8153 = vsel %vm7894, %v7298, -inf
  %v8154 = vsel %vm7894, %v7326, -inf
  %v8155 = vmax.f32 %v8153, %v8154
  %v8156 = vsel %vm7894, %v7305, -inf
  %v8157 = vsel %vm7894, %v7333, -inf
  %v8158 = vmax.f32 %v8156, %v8157
  %v8159 = vsel %vm7894, %v7340, -inf
  %v8160 = vsel %vm7894, %v7368, -inf
  %v8161 = vmax.f32 %v8159, %v8160
  %v8162 = vsel %vm7894, %v7347, -inf
  %v8163 = vsel %vm7894, %v7375, -inf
  %v8164 = vmax.f32 %v8162, %v8163
  %v8165 = vsel %vm7894, %v7354, -inf
  %v8166 = vsel %vm7894, %v7382, -inf
  %v8167 = vmax.f32 %v8165, %v8166
  %v8168 = vsel %vm7894, %v7361, -inf
  %v8169 = vsel %vm7894, %v7389, -inf
  %v8170 = vmax.f32 %v8168, %v8169
  %v8171 = vsel %vm7894, %v7396, -inf
  %v8172 = vsel %vm7894, %v7424, -inf
  %v8173 = vmax.f32 %v8171, %v8172
  %v8174 = vsel %vm7894, %v7403, -inf
  %v8175 = vsel %vm7894, %v7431, -inf
  %v8176 = vmax.f32 %v8174, %v8175
  %v8177 = vsel %vm7894, %v7410, -inf
  %v8178 = vsel %vm7894, %v7438, -inf
  %v8179 = vmax.f32 %v8177, %v8178
  %v8180 = vsel %vm7894, %v7417, -inf
  %v8181 = vsel %vm7894, %v7445, -inf
  %v8182 = vmax.f32 %v8180, %v8181
  %v8183 = vsel %vm7894, %v7452, -inf
  %v8184 = vsel %vm7894, %v7480, -inf
  %v8185 = vmax.f32 %v8183, %v8184
  %v8186 = vsel %vm7894, %v7459, -inf
  %v8187 = vsel %vm7894, %v7487, -inf
  %v8188 = vmax.f32 %v8186, %v8187
  %v8189 = vsel %vm7894, %v7466, -inf
  %v8190 = vsel %vm7894, %v7494, -inf
  %v8191 = vmax.f32 %v8189, %v8190
  %v8192 = vsel %vm7894, %v7473, -inf
  %v8193 = vsel %vm7894, %v7501, -inf
  %v8194 = vmax.f32 %v8192, %v8193
  %v8195 = vsel %vm7894, %v7508, -inf
  %v8196 = vsel %vm7894, %v7536, -inf
  %v8197 = vmax.f32 %v8195, %v8196
  %v8198 = vsel %vm7894, %v7515, -inf
  %v8199 = vsel %vm7894, %v7543, -inf
  %v8200 = vmax.f32 %v8198, %v8199
  %v8201 = vsel %vm7894, %v7522, -inf
  %v8202 = vsel %vm7894, %v7550, -inf
  %v8203 = vmax.f32 %v8201, %v8202
  %v8204 = vsel %vm7894, %v7529, -inf
  %v8205 = vsel %vm7894, %v7557, -inf
  %v8206 = vmax.f32 %v8204, %v8205
  %v8207 = vsel %vm7894, %v7564, -inf
  %v8208 = vsel %vm7894, %v7592, -inf
  %v8209 = vmax.f32 %v8207, %v8208
  %v8210 = vsel %vm7894, %v7571, -inf
  %v8211 = vsel %vm7894, %v7599, -inf
  %v8212 = vmax.f32 %v8210, %v8211
  %v8213 = vsel %vm7894, %v7578, -inf
  %v8214 = vsel %vm7894, %v7606, -inf
  %v8215 = vmax.f32 %v8213, %v8214
  %v8216 = vsel %vm7894, %v7585, -inf
  %v8217 = vsel %vm7894, %v7613, -inf
  %v8218 = vmax.f32 %v8216, %v8217
  %v8219 = vsel %vm7894, %v7620, -inf
  %v8220 = vsel %vm7894, %v7648, -inf
  %v8221 = vmax.f32 %v8219, %v8220
  %v8222 = vsel %vm7894, %v7627, -inf
  %v8223 = vsel %vm7894, %v7655, -inf
  %v8224 = vmax.f32 %v8222, %v8223
  %v8225 = vsel %vm7894, %v7634, -inf
  %v8226 = vsel %vm7894, %v7662, -inf
  %v8227 = vmax.f32 %v8225, %v8226
  %v8228 = vsel %vm7894, %v7641, -inf
  %v8229 = vsel %vm7894, %v7669, -inf
  %v8230 = vmax.f32 %v8228, %v8229
  %v8231 = vsel %vm7894, %v7676, -inf
  %v8232 = vsel %vm7894, %v7704, -inf
  %v8233 = vmax.f32 %v8231, %v8232
  %v8234 = vsel %vm7894, %v7683, -inf
  %v8235 = vsel %vm7894, %v7711, -inf
  %v8236 = vmax.f32 %v8234, %v8235
  %v8237 = vsel %vm7894, %v7690, -inf
  %v8238 = vsel %vm7894, %v7718, -inf
  %v8239 = vmax.f32 %v8237, %v8238
  %v8240 = vsel %vm7894, %v7697, -inf
  %v8241 = vsel %vm7894, %v7725, -inf
  %v8242 = vmax.f32 %v8240, %v8241
  %v8243 = vsel %vm7894, %v7732, -inf
  %v8244 = vsel %vm7894, %v7760, -inf
  %v8245 = vmax.f32 %v8243, %v8244
  %v8246 = vsel %vm7894, %v7739, -inf
  %v8247 = vsel %vm7894, %v7767, -inf
  %v8248 = vmax.f32 %v8246, %v8247
  %v8249 = vsel %vm7894, %v7746, -inf
  %v8250 = vsel %vm7894, %v7774, -inf
  %v8251 = vmax.f32 %v8249, %v8250
  %v8252 = vsel %vm7894, %v7753, -inf
  %v8253 = vsel %vm7894, %v7781, -inf
  %v8254 = vmax.f32 %v8252, %v8253
  %v8255 = vsel %vm7894, %v7788, -inf
  %v8256 = vsel %vm7894, %v7816, -inf
  %v8257 = vmax.f32 %v8255, %v8256
  %v8258 = vsel %vm7894, %v7795, -inf
  %v8259 = vsel %vm7894, %v7823, -inf
  %v8260 = vmax.f32 %v8258, %v8259
  %v8261 = vsel %vm7894, %v7802, -inf
  %v8262 = vsel %vm7894, %v7830, -inf
  %v8263 = vmax.f32 %v8261, %v8262
  %v8264 = vsel %vm7894, %v7809, -inf
  %v8265 = vsel %vm7894, %v7837, -inf
  %v8266 = vmax.f32 %v8264, %v8265
  %v8267 = vsel %vm7894, %v7844, -inf
  %v8268 = vsel %vm7894, %v7872, -inf
  %v8269 = vmax.f32 %v8267, %v8268
  %v8270 = vsel %vm7894, %v7851, -inf
  %v8271 = vsel %vm7894, %v7879, -inf
  %v8272 = vmax.f32 %v8270, %v8271
  %v8273 = vsel %vm7894, %v7858, -inf
  %v8274 = vsel %vm7894, %v7886, -inf
  %v8275 = vmax.f32 %v8273, %v8274
  %v8276 = vsel %vm7894, %v7865, -inf
  %v8277 = vsel %vm7894, %v7893, -inf
  %v8278 = vmax.f32 %v8276, %v8277
  %v8279 = vld [vmem:[%s2] sm:$0x1]
  %v8281 = vlaneseq
  %v8282 = vshrl.u32 %v8281, 7
  %v8283 = vsub.s32 0, %v8282
  %v8284 = vrot.slane %v8279, %v8283
  %v8286 = vadd.f32 %v7897, %v8284
  %v8287 = vadd.f32 %v7900, %v8284
  %v8288 = vadd.f32 %v7903, %v8284
  %v8289 = vadd.f32 %v7906, %v8284
  %v8290 = vadd.f32 %v7909, %v8284
  %v8291 = vadd.f32 %v7912, %v8284
  %v8292 = vadd.f32 %v7915, %v8284
  %v8293 = vadd.f32 %v7918, %v8284
  %v8294 = vadd.f32 %v7921, %v8284
  %v8295 = vadd.f32 %v7924, %v8284
  %v8296 = vadd.f32 %v7927, %v8284
  %v8297 = vadd.f32 %v7930, %v8284
  %v8298 = vadd.f32 %v7933, %v8284
  %v8299 = vadd.f32 %v7936, %v8284
  %v8300 = vadd.f32 %v7939, %v8284
  %v8301 = vadd.f32 %v7942, %v8284
  %v8302 = vadd.f32 %v7945, %v8284
  %v8303 = vadd.f32 %v7948, %v8284
  %v8304 = vadd.f32 %v7951, %v8284
  %v8305 = vadd.f32 %v7954, %v8284
  %v8306 = vadd.f32 %v7957, %v8284
  %v8307 = vadd.f32 %v7960, %v8284
  %v8308 = vadd.f32 %v7963, %v8284
  %v8309 = vadd.f32 %v7966, %v8284
  %v8310 = vadd.f32 %v7969, %v8284
  %v8311 = vadd.f32 %v7972, %v8284
  %v8312 = vadd.f32 %v7975, %v8284
  %v8313 = vadd.f32 %v7978, %v8284
  %v8314 = vadd.f32 %v7981, %v8284
  %v8315 = vadd.f32 %v7984, %v8284
  %v8316 = vadd.f32 %v7987, %v8284
  %v8317 = vadd.f32 %v7990, %v8284
  %v8318 = vadd.f32 %v7993, %v8284
  %v8319 = vadd.f32 %v7996, %v8284
  %v8320 = vadd.f32 %v7999, %v8284
  %v8321 = vadd.f32 %v8002, %v8284
  %v8322 = vadd.f32 %v8005, %v8284
  %v8323 = vadd.f32 %v8008, %v8284
  %v8324 = vadd.f32 %v8011, %v8284
  %v8325 = vadd.f32 %v8014, %v8284
  %v8326 = vadd.f32 %v8017, %v8284
  %v8327 = vadd.f32 %v8020, %v8284
  %v8328 = vadd.f32 %v8023, %v8284
  %v8329 = vadd.f32 %v8026, %v8284
  %v8330 = vadd.f32 %v8029, %v8284
  %v8331 = vadd.f32 %v8032, %v8284
  %v8332 = vadd.f32 %v8035, %v8284
  %v8333 = vadd.f32 %v8038, %v8284
  %v8334 = vadd.f32 %v8041, %v8284
  %v8335 = vadd.f32 %v8044, %v8284
  %v8336 = vadd.f32 %v8047, %v8284
  %v8337 = vadd.f32 %v8050, %v8284
  %v8338 = vadd.f32 %v8053, %v8284
  %v8339 = vadd.f32 %v8056, %v8284
  %v8340 = vadd.f32 %v8059, %v8284
  %v8341 = vadd.f32 %v8062, %v8284
  %v8342 = vadd.f32 %v8065, %v8284
  %v8343 = vadd.f32 %v8068, %v8284
  %v8344 = vadd.f32 %v8071, %v8284
  %v8345 = vadd.f32 %v8074, %v8284
  %v8346 = vadd.f32 %v8077, %v8284
  %v8347 = vadd.f32 %v8080, %v8284
  %v8348 = vadd.f32 %v8083, %v8284
  %v8349 = vadd.f32 %v8086, %v8284
  %v8350 = vadd.f32 %v8089, %v8284
  %v8351 = vadd.f32 %v8092, %v8284
  %v8352 = vadd.f32 %v8095, %v8284
  %v8353 = vadd.f32 %v8098, %v8284
  %v8354 = vadd.f32 %v8101, %v8284
  %v8355 = vadd.f32 %v8104, %v8284
  %v8356 = vadd.f32 %v8107, %v8284
  %v8357 = vadd.f32 %v8110, %v8284
  %v8358 = vadd.f32 %v8113, %v8284
  %v8359 = vadd.f32 %v8116, %v8284
  %v8360 = vadd.f32 %v8119, %v8284
  %v8361 = vadd.f32 %v8122, %v8284
  %v8362 = vadd.f32 %v8125, %v8284
  %v8363 = vadd.f32 %v8128, %v8284
  %v8364 = vadd.f32 %v8131, %v8284
  %v8365 = vadd.f32 %v8134, %v8284
  %v8366 = vadd.f32 %v8137, %v8284
  %v8367 = vadd.f32 %v8140, %v8284
  %v8368 = vadd.f32 %v8143, %v8284
  %v8369 = vadd.f32 %v8146, %v8284
  %v8370 = vadd.f32 %v8149, %v8284
  %v8371 = vadd.f32 %v8152, %v8284
  %v8372 = vadd.f32 %v8155, %v8284
  %v8373 = vadd.f32 %v8158, %v8284
  %v8374 = vadd.f32 %v8161, %v8284
  %v8375 = vadd.f32 %v8164, %v8284
  %v8376 = vadd.f32 %v8167, %v8284
  %v8377 = vadd.f32 %v8170, %v8284
  %v8378 = vadd.f32 %v8173, %v8284
  %v8379 = vadd.f32 %v8176, %v8284
  %v8380 = vadd.f32 %v8179, %v8284
  %v8381 = vadd.f32 %v8182, %v8284
  %v8382 = vadd.f32 %v8185, %v8284
  %v8383 = vadd.f32 %v8188, %v8284
  %v8384 = vadd.f32 %v8191, %v8284
  %v8385 = vadd.f32 %v8194, %v8284
  %v8386 = vadd.f32 %v8197, %v8284
  %v8387 = vadd.f32 %v8200, %v8284
  %v8388 = vadd.f32 %v8203, %v8284
  %v8389 = vadd.f32 %v8206, %v8284
  %v8390 = vadd.f32 %v8209, %v8284
  %v8391 = vadd.f32 %v8212, %v8284
  %v8392 = vadd.f32 %v8215, %v8284
  %v8393 = vadd.f32 %v8218, %v8284
  %v8394 = vadd.f32 %v8221, %v8284
  %v8395 = vadd.f32 %v8224, %v8284
  %v8396 = vadd.f32 %v8227, %v8284
  %v8397 = vadd.f32 %v8230, %v8284
  %v8398 = vadd.f32 %v8233, %v8284
  %v8399 = vadd.f32 %v8236, %v8284
  %v8400 = vadd.f32 %v8239, %v8284
  %v8401 = vadd.f32 %v8242, %v8284
  %v8402 = vadd.f32 %v8245, %v8284
  %v8403 = vadd.f32 %v8248, %v8284
  %v8404 = vadd.f32 %v8251, %v8284
  %v8405 = vadd.f32 %v8254, %v8284
  %v8406 = vadd.f32 %v8257, %v8284
  %v8407 = vadd.f32 %v8260, %v8284
  %v8408 = vadd.f32 %v8263, %v8284
  %v8409 = vadd.f32 %v8266, %v8284
  %v8410 = vadd.f32 %v8269, %v8284
  %v8411 = vadd.f32 %v8272, %v8284
  %v8412 = vadd.f32 %v8275, %v8284
  %v8413 = vadd.f32 %v8278, %v8284
  %v8414 = vmax.f32 %v8286, 0.0
  %v8415 = vmax.f32 %v8287, 0.0
  %v8416 = vmax.f32 %v8288, 0.0
  %v8417 = vmax.f32 %v8289, 0.0
  %v8418 = vmax.f32 %v8290, 0.0
  %v8419 = vmax.f32 %v8291, 0.0
  %v8420 = vmax.f32 %v8292, 0.0
  %v8421 = vmax.f32 %v8293, 0.0
  %v8422 = vmax.f32 %v8294, 0.0
  %v8423 = vmax.f32 %v8295, 0.0
  %v8424 = vmax.f32 %v8296, 0.0
  %v8425 = vmax.f32 %v8297, 0.0
  %v8426 = vmax.f32 %v8298, 0.0
  %v8427 = vmax.f32 %v8299, 0.0
  %v8428 = vmax.f32 %v8300, 0.0
  %v8429 = vmax.f32 %v8301, 0.0
  %v8430 = vmax.f32 %v8302, 0.0
  %v8431 = vmax.f32 %v8303, 0.0
  %v8432 = vmax.f32 %v8304, 0.0
  %v8433 = vmax.f32 %v8305, 0.0
  %v8434 = vmax.f32 %v8306, 0.0
  %v8435 = vmax.f32 %v8307, 0.0
  %v8436 = vmax.f32 %v8308, 0.0
  %v8437 = vmax.f32 %v8309, 0.0
  %v8438 = vmax.f32 %v8310, 0.0
  %v8439 = vmax.f32 %v8311, 0.0
  %v8440 = vmax.f32 %v8312, 0.0
  %v8441 = vmax.f32 %v8313, 0.0
  %v8442 = vmax.f32 %v8314, 0.0
  %v8443 = vmax.f32 %v8315, 0.0
  %v8444 = vmax.f32 %v8316, 0.0
  %v8445 = vmax.f32 %v8317, 0.0
  %v8446 = vmax.f32 %v8318, 0.0
  %v8447 = vmax.f32 %v8319, 0.0
  %v8448 = vmax.f32 %v8320, 0.0
  %v8449 = vmax.f32 %v8321, 0.0
  %v8450 = vmax.f32 %v8322, 0.0
  %v8451 = vmax.f32 %v8323, 0.0
  %v8452 = vmax.f32 %v8324, 0.0
  %v8453 = vmax.f32 %v8325, 0.0
  %v8454 = vmax.f32 %v8326, 0.0
  %v8455 = vmax.f32 %v8327, 0.0
  %v8456 = vmax.f32 %v8328, 0.0
  %v8457 = vmax.f32 %v8329, 0.0
  %v8458 = vmax.f32 %v8330, 0.0
  %v8459 = vmax.f32 %v8331, 0.0
  %v8460 = vmax.f32 %v8332, 0.0
  %v8461 = vmax.f32 %v8333, 0.0
  %v8462 = vmax.f32 %v8334, 0.0
  %v8463 = vmax.f32 %v8335, 0.0
  %v8464 = vmax.f32 %v8336, 0.0
  %v8465 = vmax.f32 %v8337, 0.0
  %v8466 = vmax.f32 %v8338, 0.0
  %v8467 = vmax.f32 %v8339, 0.0
  %v8468 = vmax.f32 %v8340, 0.0
  %v8469 = vmax.f32 %v8341, 0.0
  %v8470 = vmax.f32 %v8342, 0.0
  %v8471 = vmax.f32 %v8343, 0.0
  %v8472 = vmax.f32 %v8344, 0.0
  %v8473 = vmax.f32 %v8345, 0.0
  %v8474 = vmax.f32 %v8346, 0.0
  %v8475 = vmax.f32 %v8347, 0.0
  %v8476 = vmax.f32 %v8348, 0.0
  %v8477 = vmax.f32 %v8349, 0.0
  %v8478 = vmax.f32 %v8350, 0.0
  %v8479 = vmax.f32 %v8351, 0.0
  %v8480 = vmax.f32 %v8352, 0.0
  %v8481 = vmax.f32 %v8353, 0.0
  %v8482 = vmax.f32 %v8354, 0.0
  %v8483 = vmax.f32 %v8355, 0.0
  %v8484 = vmax.f32 %v8356, 0.0
  %v8485 = vmax.f32 %v8357, 0.0
  %v8486 = vmax.f32 %v8358, 0.0
  %v8487 = vmax.f32 %v8359, 0.0
  %v8488 = vmax.f32 %v8360, 0.0
  %v8489 = vmax.f32 %v8361, 0.0
  %v8490 = vmax.f32 %v8362, 0.0
  %v8491 = vmax.f32 %v8363, 0.0
  %v8492 = vmax.f32 %v8364, 0.0
  %v8493 = vmax.f32 %v8365, 0.0
  %v8494 = vmax.f32 %v8366, 0.0
  %v8495 = vmax.f32 %v8367, 0.0
  %v8496 = vmax.f32 %v8368, 0.0
  %v8497 = vmax.f32 %v8369, 0.0
  %v8498 = vmax.f32 %v8370, 0.0
  %v8499 = vmax.f32 %v8371, 0.0
  %v8500 = vmax.f32 %v8372, 0.0
  %v8501 = vmax.f32 %v8373, 0.0
  %v8502 = vmax.f32 %v8374, 0.0
  %v8503 = vmax.f32 %v8375, 0.0
  %v8504 = vmax.f32 %v8376, 0.0
  %v8505 = vmax.f32 %v8377, 0.0
  %v8506 = vmax.f32 %v8378, 0.0
  %v8507 = vmax.f32 %v8379, 0.0
  %v8508 = vmax.f32 %v8380, 0.0
  %v8509 = vmax.f32 %v8381, 0.0
  %v8510 = vmax.f32 %v8382, 0.0
  %v8511 = vmax.f32 %v8383, 0.0
  %v8512 = vmax.f32 %v8384, 0.0
  %v8513 = vmax.f32 %v8385, 0.0
  %v8514 = vmax.f32 %v8386, 0.0
  %v8515 = vmax.f32 %v8387, 0.0
  %v8516 = vmax.f32 %v8388, 0.0
  %v8517 = vmax.f32 %v8389, 0.0
  %v8518 = vmax.f32 %v8390, 0.0
  %v8519 = vmax.f32 %v8391, 0.0
  %v8520 = vmax.f32 %v8392, 0.0
  %v8521 = vmax.f32 %v8393, 0.0
  %v8522 = vmax.f32 %v8394, 0.0
  %v8523 = vmax.f32 %v8395, 0.0
  %v8524 = vmax.f32 %v8396, 0.0
  %v8525 = vmax.f32 %v8397, 0.0
  %v8526 = vmax.f32 %v8398, 0.0
  %v8527 = vmax.f32 %v8399, 0.0
  %v8528 = vmax.f32 %v8400, 0.0
  %v8529 = vmax.f32 %v8401, 0.0
  %v8530 = vmax.f32 %v8402, 0.0
  %v8531 = vmax.f32 %v8403, 0.0
  %v8532 = vmax.f32 %v8404, 0.0
  %v8533 = vmax.f32 %v8405, 0.0
  %v8534 = vmax.f32 %v8406, 0.0
  %v8535 = vmax.f32 %v8407, 0.0
  %v8536 = vmax.f32 %v8408, 0.0
  %v8537 = vmax.f32 %v8409, 0.0
  %v8538 = vmax.f32 %v8410, 0.0
  %v8539 = vmax.f32 %v8411, 0.0
  %v8540 = vmax.f32 %v8412, 0.0
  %v8541 = vmax.f32 %v8413, 0.0
  %vm8542 = vcmask 259072
  %8543 = vst.msk [vmem:[#allocation2] sm:$0x3f] %vm8542, 0.0
  %8544 = vst.msk [vmem:[#allocation2 + $0x8] sm:$0x3f] %vm8542, 0.0
  %8545 = vst.msk [vmem:[#allocation2 + $0x10] sm:$0x3f] %vm8542, 0.0
  %8546 = vst.msk [vmem:[#allocation2 + $0x18] sm:$0x3f] %vm8542, 0.0
  %8547 = vst.msk [vmem:[#allocation2 + $0x20] sm:$0x3f] %vm8542, 0.0
  %8548 = vst.msk [vmem:[#allocation2 + $0x28] sm:$0x3f] %vm8542, 0.0
  %8549 = vst.msk [vmem:[#allocation2 + $0x30] sm:$0x3f] %vm8542, 0.0
  %8550 = vst.msk [vmem:[#allocation2 + $0x38] sm:$0x3f] %vm8542, 0.0
  %8551 = vst.msk [vmem:[#allocation2 + $0x40] sm:$0x3f] %vm8542, 0.0
  %8552 = vst.msk [vmem:[#allocation2 + $0x48] sm:$0x3f] %vm8542, 0.0
  %8553 = vst.msk [vmem:[#allocation2 + $0x50] sm:$0x3f] %vm8542, 0.0
  %8554 = vst.msk [vmem:[#allocation2 + $0x58] sm:$0x3f] %vm8542, 0.0
  %8555 = vst.msk [vmem:[#allocation2 + $0x60] sm:$0x3f] %vm8542, 0.0
  %8556 = vst.msk [vmem:[#allocation2 + $0x68] sm:$0x3f] %vm8542, 0.0
  %8557 = vst.msk [vmem:[#allocation2 + $0x70] sm:$0x3f] %vm8542, 0.0
  %8558 = vst.msk [vmem:[#allocation2 + $0x78] sm:$0x3f] %vm8542, 0.0
  %8559 = vst.msk [vmem:[#allocation2 + $0x80] sm:$0x3f] %vm8542, 0.0
  %8560 = vst.msk [vmem:[#allocation2 + $0x88] sm:$0x3f] %vm8542, 0.0
  %8561 = vst.msk [vmem:[#allocation2 + $0x90] sm:$0x3f] %vm8542, 0.0
  %8562 = vst.msk [vmem:[#allocation2 + $0x98] sm:$0x3f] %vm8542, 0.0
  %8563 = vst.msk [vmem:[#allocation2 + $0xa0] sm:$0x3f] %vm8542, 0.0
  %8564 = vst.msk [vmem:[#allocation2 + $0xa8] sm:$0x3f] %vm8542, 0.0
  %8565 = vst.msk [vmem:[#allocation2 + $0xb0] sm:$0x3f] %vm8542, 0.0
  %8566 = vst.msk [vmem:[#allocation2 + $0xb8] sm:$0x3f] %vm8542, 0.0
  %8567 = vst.msk [vmem:[#allocation2 + $0xc0] sm:$0x3f] %vm8542, 0.0
  %8568 = vst.msk [vmem:[#allocation2 + $0xc8] sm:$0x3f] %vm8542, 0.0
  %8569 = vst.msk [vmem:[#allocation2 + $0xd0] sm:$0x3f] %vm8542, 0.0
  %8570 = vst.msk [vmem:[#allocation2 + $0xd8] sm:$0x3f] %vm8542, 0.0
  %8571 = vst.msk [vmem:[#allocation2 + $0xe0] sm:$0x3f] %vm8542, 0.0
  %8572 = vst.msk [vmem:[#allocation2 + $0xe8] sm:$0x3f] %vm8542, 0.0
  %8573 = vst.msk [vmem:[#allocation2 + $0xf0] sm:$0x3f] %vm8542, 0.0
  %8574 = vst.msk [vmem:[#allocation2 + $0xf8] sm:$0x3f] %vm8542, 0.0
  %8575 = vst.msk [vmem:[#allocation2 + $0x100] sm:$0x3f] %vm8542, 0.0
  %8576 = vst.msk [vmem:[#allocation2 + $0x108] sm:$0x3f] %vm8542, 0.0
  %8577 = vst.msk [vmem:[#allocation2 + $0x110] sm:$0x3f] %vm8542, 0.0
  %8578 = vst.msk [vmem:[#allocation2 + $0x118] sm:$0x3f] %vm8542, 0.0
  %8579 = vst.msk [vmem:[#allocation2 + $0x120] sm:$0x3f] %vm8542, 0.0
  %8580 = vst.msk [vmem:[#allocation2 + $0x128] sm:$0x3f] %vm8542, 0.0
  %8581 = vst.msk [vmem:[#allocation2 + $0x130] sm:$0x3f] %vm8542, 0.0
  %8582 = vst.msk [vmem:[#allocation2 + $0x138] sm:$0x3f] %vm8542, 0.0
  %8583 = vst.msk [vmem:[#allocation2 + $0x140] sm:$0x3f] %vm8542, 0.0
  %8584 = vst.msk [vmem:[#allocation2 + $0x148] sm:$0x3f] %vm8542, 0.0
  %8585 = vst.msk [vmem:[#allocation2 + $0x150] sm:$0x3f] %vm8542, 0.0
  %8586 = vst.msk [vmem:[#allocation2 + $0x158] sm:$0x3f] %vm8542, 0.0
  %8587 = vst.msk [vmem:[#allocation2 + $0x160] sm:$0x3f] %vm8542, 0.0
  %8588 = vst.msk [vmem:[#allocation2 + $0x168] sm:$0x3f] %vm8542, 0.0
  %8589 = vst.msk [vmem:[#allocation2 + $0x170] sm:$0x3f] %vm8542, 0.0
  %8590 = vst.msk [vmem:[#allocation2 + $0x178] sm:$0x3f] %vm8542, 0.0
  %v8719 = vrot.slane %v8415, 7
  %vm8720 = vcmask 1041409
  %v8721 = vsel %vm8720, %v8719, %v8414
  %v8722 = vrot.slane %v8416, 6
  %vm8723 = vcmask 1042434
  %v8724 = vsel %vm8723, %v8722, %v8721
  %v8725 = vrot.slane %v8417, 5
  %vm8726 = vcmask 1043459
  %v8727 = vsel %vm8726, %v8725, %v8724
  %v8728 = vrot.slane %v8419, 7
  %v8729 = vsel %vm8720, %v8728, %v8418
  %v8730 = vrot.slane %v8420, 6
  %v8731 = vsel %vm8723, %v8730, %v8729
  %v8732 = vrot.slane %v8421, 5
  %v8733 = vsel %vm8726, %v8732, %v8731
  %v8734 = vrot.slane %v8423, 7
  %v8735 = vsel %vm8720, %v8734, %v8422
  %v8736 = vrot.slane %v8424, 6
  %v8737 = vsel %vm8723, %v8736, %v8735
  %v8738 = vrot.slane %v8425, 5
  %v8739 = vsel %vm8726, %v8738, %v8737
  %v8740 = vrot.slane %v8427, 7
  %v8741 = vsel %vm8720, %v8740, %v8426
  %v8742 = vrot.slane %v8428, 6
  %v8743 = vsel %vm8723, %v8742, %v8741
  %v8744 = vrot.slane %v8429, 5
  %v8745 = vsel %vm8726, %v8744, %v8743
  %v8746 = vrot.slane %v8431, 7
  %v8747 = vsel %vm8720, %v8746, %v8430
  %v8748 = vrot.slane %v8432, 6
  %v8749 = vsel %vm8723, %v8748, %v8747
  %v8750 = vrot.slane %v8433, 5
  %v8751 = vsel %vm8726, %v8750, %v8749
  %v8752 = vrot.slane %v8435, 7
  %v8753 = vsel %vm8720, %v8752, %v8434
  %v8754 = vrot.slane %v8436, 6
  %v8755 = vsel %vm8723, %v8754, %v8753
  %v8756 = vrot.slane %v8437, 5
  %v8757 = vsel %vm8726, %v8756, %v8755
  %v8758 = vrot.slane %v8439, 7
  %v8759 = vsel %vm8720, %v8758, %v8438
  %v8760 = vrot.slane %v8440, 6
  %v8761 = vsel %vm8723, %v8760, %v8759
  %v8762 = vrot.slane %v8441, 5
  %v8763 = vsel %vm8726, %v8762, %v8761
  %v8764 = vrot.slane %v8443, 7
  %v8765 = vsel %vm8720, %v8764, %v8442
  %v8766 = vrot.slane %v8444, 6
  %v8767 = vsel %vm8723, %v8766, %v8765
  %v8768 = vrot.slane %v8445, 5
  %v8769 = vsel %vm8726, %v8768, %v8767
  %v8770 = vrot.slane %v8447, 7
  %v8771 = vsel %vm8720, %v8770, %v8446
  %v8772 = vrot.slane %v8448, 6
  %v8773 = vsel %vm8723, %v8772, %v8771
  %v8774 = vrot.slane %v8449, 5
  %v8775 = vsel %vm8726, %v8774, %v8773
  %v8776 = vrot.slane %v8451, 7
  %v8777 = vsel %vm8720, %v8776, %v8450
  %v8778 = vrot.slane %v8452, 6
  %v8779 = vsel %vm8723, %v8778, %v8777
  %v8780 = vrot.slane %v8453, 5
  %v8781 = vsel %vm8726, %v8780, %v8779
  %v8782 = vrot.slane %v8455, 7
  %v8783 = vsel %vm8720, %v8782, %v8454
  %v8784 = vrot.slane %v8456, 6
  %v8785 = vsel %vm8723, %v8784, %v8783
  %v8786 = vrot.slane %v8457, 5
  %v8787 = vsel %vm8726, %v8786, %v8785
  %v8788 = vrot.slane %v8459, 7
  %v8789 = vsel %vm8720, %v8788, %v8458
  %v8790 = vrot.slane %v8460, 6
  %v8791 = vsel %vm8723, %v8790, %v8789
  %v8792 = vrot.slane %v8461, 5
  %v8793 = vsel %vm8726, %v8792, %v8791
  %v8794 = vrot.slane %v8463, 7
  %v8795 = vsel %vm8720, %v8794, %v8462
  %v8796 = vrot.slane %v8464, 6
  %v8797 = vsel %vm8723, %v8796, %v8795
  %v8798 = vrot.slane %v8465, 5
  %v8799 = vsel %vm8726, %v8798, %v8797
  %v8800 = vrot.slane %v8467, 7
  %v8801 = vsel %vm8720, %v8800, %v8466
  %v8802 = vrot.slane %v8468, 6
  %v8803 = vsel %vm8723, %v8802, %v8801
  %v8804 = vrot.slane %v8469, 5
  %v8805 = vsel %vm8726, %v8804, %v8803
  %v8806 = vrot.slane %v8471, 7
  %v8807 = vsel %vm8720, %v8806, %v8470
  %v8808 = vrot.slane %v8472, 6
  %v8809 = vsel %vm8723, %v8808, %v8807
  %v8810 = vrot.slane %v8473, 5
  %v8811 = vsel %vm8726, %v8810, %v8809
  %v8812 = vrot.slane %v8475, 7
  %v8813 = vsel %vm8720, %v8812, %v8474
  %v8814 = vrot.slane %v8476, 6
  %v8815 = vsel %vm8723, %v8814, %v8813
  %v8816 = vrot.slane %v8477, 5
  %v8817 = vsel %vm8726, %v8816, %v8815
  %v8818 = vrot.slane %v8479, 7
  %v8819 = vsel %vm8720, %v8818, %v8478
  %v8820 = vrot.slane %v8480, 6
  %v8821 = vsel %vm8723, %v8820, %v8819
  %v8822 = vrot.slane %v8481, 5
  %v8823 = vsel %vm8726, %v8822, %v8821
  %v8824 = vrot.slane %v8483, 7
  %v8825 = vsel %vm8720, %v8824, %v8482
  %v8826 = vrot.slane %v8484, 6
  %v8827 = vsel %vm8723, %v8826, %v8825
  %v8828 = vrot.slane %v8485, 5
  %v8829 = vsel %vm8726, %v8828, %v8827
  %v8830 = vrot.slane %v8487, 7
  %v8831 = vsel %vm8720, %v8830, %v8486
  %v8832 = vrot.slane %v8488, 6
  %v8833 = vsel %vm8723, %v8832, %v8831
  %v8834 = vrot.slane %v8489, 5
  %v8835 = vsel %vm8726, %v8834, %v8833
  %v8836 = vrot.slane %v8491, 7
  %v8837 = vsel %vm8720, %v8836, %v8490
  %v8838 = vrot.slane %v8492, 6
  %v8839 = vsel %vm8723, %v8838, %v8837
  %v8840 = vrot.slane %v8493, 5
  %v8841 = vsel %vm8726, %v8840, %v8839
  %v8842 = vrot.slane %v8495, 7
  %v8843 = vsel %vm8720, %v8842, %v8494
  %v8844 = vrot.slane %v8496, 6
  %v8845 = vsel %vm8723, %v8844, %v8843
  %v8846 = vrot.slane %v8497, 5
  %v8847 = vsel %vm8726, %v8846, %v8845
  %v8848 = vrot.slane %v8499, 7
  %v8849 = vsel %vm8720, %v8848, %v8498
  %v8850 = vrot.slane %v8500, 6
  %v8851 = vsel %vm8723, %v8850, %v8849
  %v8852 = vrot.slane %v8501, 5
  %v8853 = vsel %vm8726, %v8852, %v8851
  %v8854 = vrot.slane %v8503, 7
  %v8855 = vsel %vm8720, %v8854, %v8502
  %v8856 = vrot.slane %v8504, 6
  %v8857 = vsel %vm8723, %v8856, %v8855
  %v8858 = vrot.slane %v8505, 5
  %v8859 = vsel %vm8726, %v8858, %v8857
  %v8860 = vrot.slane %v8507, 7
  %v8861 = vsel %vm8720, %v8860, %v8506
  %v8862 = vrot.slane %v8508, 6
  %v8863 = vsel %vm8723, %v8862, %v8861
  %v8864 = vrot.slane %v8509, 5
  %v8865 = vsel %vm8726, %v8864, %v8863
  %v8866 = vrot.slane %v8511, 7
  %v8867 = vsel %vm8720, %v8866, %v8510
  %v8868 = vrot.slane %v8512, 6
  %v8869 = vsel %vm8723, %v8868, %v8867
  %v8870 = vrot.slane %v8513, 5
  %v8871 = vsel %vm8726, %v8870, %v8869
  %v8872 = vrot.slane %v8515, 7
  %v8873 = vsel %vm8720, %v8872, %v8514
  %v8874 = vrot.slane %v8516, 6
  %v8875 = vsel %vm8723, %v8874, %v8873
  %v8876 = vrot.slane %v8517, 5
  %v8877 = vsel %vm8726, %v8876, %v8875
  %v8878 = vrot.slane %v8519, 7
  %v8879 = vsel %vm8720, %v8878, %v8518
  %v8880 = vrot.slane %v8520, 6
  %v8881 = vsel %vm8723, %v8880, %v8879
  %v8882 = vrot.slane %v8521, 5
  %v8883 = vsel %vm8726, %v8882, %v8881
  %v8884 = vrot.slane %v8523, 7
  %v8885 = vsel %vm8720, %v8884, %v8522
  %v8886 = vrot.slane %v8524, 6
  %v8887 = vsel %vm8723, %v8886, %v8885
  %v8888 = vrot.slane %v8525, 5
  %v8889 = vsel %vm8726, %v8888, %v8887
  %v8890 = vrot.slane %v8527, 7
  %v8891 = vsel %vm8720, %v8890, %v8526
  %v8892 = vrot.slane %v8528, 6
  %v8893 = vsel %vm8723, %v8892, %v8891
  %v8894 = vrot.slane %v8529, 5
  %v8895 = vsel %vm8726, %v8894, %v8893
  %v8896 = vrot.slane %v8531, 7
  %v8897 = vsel %vm8720, %v8896, %v8530
  %v8898 = vrot.slane %v8532, 6
  %v8899 = vsel %vm8723, %v8898, %v8897
  %v8900 = vrot.slane %v8533, 5
  %v8901 = vsel %vm8726, %v8900, %v8899
  %v8902 = vrot.slane %v8535, 7
  %v8903 = vsel %vm8720, %v8902, %v8534
  %v8904 = vrot.slane %v8536, 6
  %v8905 = vsel %vm8723, %v8904, %v8903
  %v8906 = vrot.slane %v8537, 5
  %v8907 = vsel %vm8726, %v8906, %v8905
  %v8908 = vrot.slane %v8539, 7
  %v8909 = vsel %vm8720, %v8908, %v8538
  %v8910 = vrot.slane %v8540, 6
  %v8911 = vsel %vm8723, %v8910, %v8909
  %v8912 = vrot.slane %v8541, 5
  %v8913 = vsel %vm8726, %v8912, %v8911
  %s8946 = scalar_lea.vmem [#allocation2], 8
  %vm8947 = vcmask 257024
  %8948 = vst.msk [vmem:[%s8946 + $0x1] sm:$0xf] %vm8947, %v8727
  %8949 = vst.msk [vmem:[%s8946 + $0x9] sm:$0xf] %vm8947, %v8733
  %8950 = vst.msk [vmem:[%s8946 + $0x11] sm:$0xf] %vm8947, %v8739
  %8951 = vst.msk [vmem:[%s8946 + $0x19] sm:$0xf] %vm8947, %v8745
  %8952 = vst.msk [vmem:[%s8946 + $0x31] sm:$0xf] %vm8947, %v8751
  %8953 = vst.msk [vmem:[%s8946 + $0x39] sm:$0xf] %vm8947, %v8757
  %8954 = vst.msk [vmem:[%s8946 + $0x41] sm:$0xf] %vm8947, %v8763
  %8955 = vst.msk [vmem:[%s8946 + $0x49] sm:$0xf] %vm8947, %v8769
  %8956 = vst.msk [vmem:[%s8946 + $0x61] sm:$0xf] %vm8947, %v8775
  %8957 = vst.msk [vmem:[%s8946 + $0x69] sm:$0xf] %vm8947, %v8781
  %8958 = vst.msk [vmem:[%s8946 + $0x71] sm:$0xf] %vm8947, %v8787
  %8959 = vst.msk [vmem:[%s8946 + $0x79] sm:$0xf] %vm8947, %v8793
  %8960 = vst.msk [vmem:[%s8946 + $0x91] sm:$0xf] %vm8947, %v8799
  %8961 = vst.msk [vmem:[%s8946 + $0x99] sm:$0xf] %vm8947, %v8805
  %8962 = vst.msk [vmem:[%s8946 + $0xa1] sm:$0xf] %vm8947, %v8811
  %8963 = vst.msk [vmem:[%s8946 + $0xa9] sm:$0xf] %vm8947, %v8817
  %8964 = vst.msk [vmem:[%s8946 + $0xc1] sm:$0xf] %vm8947, %v8823
  %8965 = vst.msk [vmem:[%s8946 + $0xc9] sm:$0xf] %vm8947, %v8829
  %8966 = vst.msk [vmem:[%s8946 + $0xd1] sm:$0xf] %vm8947, %v8835
  %8967 = vst.msk [vmem:[%s8946 + $0xd9] sm:$0xf] %vm8947, %v8841
  %8968 = vst.msk [vmem:[%s8946 + $0xf1] sm:$0xf] %vm8947, %v8847
  %8969 = vst.msk [vmem:[%s8946 + $0xf9] sm:$0xf] %vm8947, %v8853
  %8970 = vst.msk [vmem:[%s8946 + $0x101] sm:$0xf] %vm8947, %v8859
  %8971 = vst.msk [vmem:[%s8946 + $0x109] sm:$0xf] %vm8947, %v8865
  %8972 = vst.msk [vmem:[%s8946 + $0x121] sm:$0xf] %vm8947, %v8871
  %8973 = vst.msk [vmem:[%s8946 + $0x129] sm:$0xf] %vm8947, %v8877
  %8974 = vst.msk [vmem:[%s8946 + $0x131] sm:$0xf] %vm8947, %v8883
  %8975 = vst.msk [vmem:[%s8946 + $0x139] sm:$0xf] %vm8947, %v8889
  %8976 = vst.msk [vmem:[%s8946 + $0x151] sm:$0xf] %vm8947, %v8895
  %8977 = vst.msk [vmem:[%s8946 + $0x159] sm:$0xf] %vm8947, %v8901
  %8978 = vst.msk [vmem:[%s8946 + $0x161] sm:$0xf] %vm8947, %v8907
  %8979 = vst.msk [vmem:[%s8946 + $0x169] sm:$0xf] %vm8947, %v8913
  %v8980 = vld [vmem:[#allocation2] sm:$0xf]
  %v8981 = vld [vmem:[#allocation2 + $0x8] sm:$0xf]
  %v8982 = vld [vmem:[#allocation2 + $0x10] sm:$0xf]
  %v8983 = vld [vmem:[#allocation2 + $0x18] sm:$0xf]
  %v8984 = vld [vmem:[#allocation2 + $0x30] sm:$0xf]
  %v8985 = vld [vmem:[#allocation2 + $0x38] sm:$0xf]
  %v8986 = vld [vmem:[#allocation2 + $0x40] sm:$0xf]
  %v8987 = vld [vmem:[#allocation2 + $0x48] sm:$0xf]
  %v8988 = vld [vmem:[#allocation2 + $0x60] sm:$0xf]
  %v8989 = vld [vmem:[#allocation2 + $0x68] sm:$0xf]
  %v8990 = vld [vmem:[#allocation2 + $0x70] sm:$0xf]
  %v8991 = vld [vmem:[#allocation2 + $0x78] sm:$0xf]
  %v8992 = vld [vmem:[#allocation2 + $0x90] sm:$0xf]
  %v8993 = vld [vmem:[#allocation2 + $0x98] sm:$0xf]
  %v8994 = vld [vmem:[#allocation2 + $0xa0] sm:$0xf]
  %v8995 = vld [vmem:[#allocation2 + $0xa8] sm:$0xf]
  %v8996 = vld [vmem:[#allocation2 + $0xc0] sm:$0xf]
  %v8997 = vld [vmem:[#allocation2 + $0xc8] sm:$0xf]
  %v8998 = vld [vmem:[#allocation2 + $0xd0] sm:$0xf]
  %v8999 = vld [vmem:[#allocation2 + $0xd8] sm:$0xf]
  %v9000 = vld [vmem:[#allocation2 + $0xf0] sm:$0xf]
  %v9001 = vld [vmem:[#allocation2 + $0xf8] sm:$0xf]
  %v9002 = vld [vmem:[#allocation2 + $0x100] sm:$0xf]
  %v9003 = vld [vmem:[#allocation2 + $0x108] sm:$0xf]
  %v9004 = vld [vmem:[#allocation2 + $0x120] sm:$0xf]
  %v9005 = vld [vmem:[#allocation2 + $0x128] sm:$0xf]
  %v9006 = vld [vmem:[#allocation2 + $0x130] sm:$0xf]
  %v9007 = vld [vmem:[#allocation2 + $0x138] sm:$0xf]
  %v9008 = vld [vmem:[#allocation2 + $0x150] sm:$0xf]
  %v9009 = vld [vmem:[#allocation2 + $0x158] sm:$0xf]
  %v9010 = vld [vmem:[#allocation2 + $0x160] sm:$0xf]
  %v9011 = vld [vmem:[#allocation2 + $0x168] sm:$0xf]
  %v9012 = vld [vmem:[%s3] sm:$0xff]
  %v9013 = vld [vmem:[%s3 + $0x8] sm:$0xff]
  %v9014 = vld [vmem:[%s3 + $0x10] sm:$0xff]
  %v9015 = vld [vmem:[%s3 + $0x18] sm:$0xff]
  %v9016 = vld [vmem:[#allocation2 + $0x1] sm:$0xf]
  %v9017 = vld [vmem:[#allocation2 + $0x9] sm:$0xf]
  %v9018 = vld [vmem:[#allocation2 + $0x11] sm:$0xf]
  %v9019 = vld [vmem:[#allocation2 + $0x19] sm:$0xf]
  %v9020 = vld [vmem:[#allocation2 + $0x31] sm:$0xf]
  %v9021 = vld [vmem:[#allocation2 + $0x39] sm:$0xf]
  %v9022 = vld [vmem:[#allocation2 + $0x41] sm:$0xf]
  %v9023 = vld [vmem:[#allocation2 + $0x49] sm:$0xf]
  %v9024 = vld [vmem:[#allocation2 + $0x61] sm:$0xf]
  %v9025 = vld [vmem:[#allocation2 + $0x69] sm:$0xf]
  %v9026 = vld [vmem:[#allocation2 + $0x71] sm:$0xf]
  %v9027 = vld [vmem:[#allocation2 + $0x79] sm:$0xf]
  %v9028 = vld [vmem:[#allocation2 + $0x91] sm:$0xf]
  %v9029 = vld [vmem:[#allocation2 + $0x99] sm:$0xf]
  %v9030 = vld [vmem:[#allocation2 + $0xa1] sm:$0xf]
  %v9031 = vld [vmem:[#allocation2 + $0xa9] sm:$0xf]
  %v9032 = vld [vmem:[#allocation2 + $0xc1] sm:$0xf]
  %v9033 = vld [vmem:[#allocation2 + $0xc9] sm:$0xf]
  %v9034 = vld [vmem:[#allocation2 + $0xd1] sm:$0xf]
  %v9035 = vld [vmem:[#allocation2 + $0xd9] sm:$0xf]
  %v9036 = vld [vmem:[#allocation2 + $0xf1] sm:$0xf]
  %v9037 = vld [vmem:[#allocation2 + $0xf9] sm:$0xf]
  %v9038 = vld [vmem:[#allocation2 + $0x101] sm:$0xf]
  %v9039 = vld [vmem:[#allocation2 + $0x109] sm:$0xf]
  %v9040 = vld [vmem:[#allocation2 + $0x121] sm:$0xf]
  %v9041 = vld [vmem:[#allocation2 + $0x129] sm:$0xf]
  %v9042 = vld [vmem:[#allocation2 + $0x131] sm:$0xf]
  %v9043 = vld [vmem:[#allocation2 + $0x139] sm:$0xf]
  %v9044 = vld [vmem:[#allocation2 + $0x151] sm:$0xf]
  %v9045 = vld [vmem:[#allocation2 + $0x159] sm:$0xf]
  %v9046 = vld [vmem:[#allocation2 + $0x161] sm:$0xf]
  %v9047 = vld [vmem:[#allocation2 + $0x169] sm:$0xf]
  %v9048 = vld [vmem:[%s3 + $0x20] sm:$0xff]
  %v9049 = vld [vmem:[%s3 + $0x28] sm:$0xff]
  %v9050 = vld [vmem:[%s3 + $0x30] sm:$0xff]
  %v9051 = vld [vmem:[%s3 + $0x38] sm:$0xff]
  %v9084 = vcombine.low %v9016, %v9017
  %v9085 = vcombine.low %v9018, %v9019
  %v9086 = vcombine.low %v9020, %v9021
  %v9087 = vcombine.low %v9022, %v9023
  %v9088 = vcombine.low %v9024, %v9025
  %v9089 = vcombine.low %v9026, %v9027
  %v9090 = vcombine.low %v9028, %v9029
  %v9091 = vcombine.low %v9030, %v9031
  %v9092 = vcombine.low %v9032, %v9033
  %v9093 = vcombine.low %v9034, %v9035
  %v9094 = vcombine.low %v9036, %v9037
  %v9095 = vcombine.low %v9038, %v9039
  %v9096 = vcombine.low %v9040, %v9041
  %v9097 = vcombine.low %v9042, %v9043
  %v9098 = vcombine.low %v9044, %v9045
  %v9099 = vcombine.low %v9046, %v9047
  %v9100 = vsel %vm7894, %v9084, 0
  %v9102 = vsel %vm7894, %v9085, 0
  %v9104 = vsel %vm7894, %v9086, 0
  %v9106 = vsel %vm7894, %v9087, 0
  %v9108 = vsel %vm7894, %v9088, 0
  %v9110 = vsel %vm7894, %v9089, 0
  %v9112 = vsel %vm7894, %v9090, 0
  %v9114 = vsel %vm7894, %v9091, 0
  %v9116 = vsel %vm7894, %v9092, 0
  %v9118 = vsel %vm7894, %v9093, 0
  %v9120 = vsel %vm7894, %v9094, 0
  %v9122 = vsel %vm7894, %v9095, 0
  %v9124 = vsel %vm7894, %v9096, 0
  %v9126 = vsel %vm7894, %v9097, 0
  %v9128 = vsel %vm7894, %v9098, 0
  %v9130 = vsel %vm7894, %v9099, 0
  %9132 = vmatprep.subr.mxu0 0.0
  %9133 = vmatpush1.msra.mxu0 %v9048
  %9134 = vmatprep.subr.mxu0 0.0
  %9135 = vmatpush1.msra.mxu0 %v9049
  %9136 = vmatprep.subr.mxu0 0.0
  %9137 = vmatpush1.msra.mxu0 %v9050
  %9138 = vmatprep.subr.mxu0 0.0
  %9139 = vmatpush1.msra.mxu0 %v9051
  %9140 = vmatprep.subr.mxu0 0.0
  %9141 = vmatpush1.msra.mxu0 0.0
  %9142 = vmatprep.subr.mxu0 0.0
  %9143 = vmatpush1.msra.mxu0 0.0
  %9144 = vmatprep.subr.mxu0 0.0
  %9145 = vmatpush1.msra.mxu0 0.0
  %9146 = vmatprep.subr.mxu0 0.0
  %9147 = vmatpush1.msra.mxu0 0.0
  %9148 = vmatprep.subr.mxu0 0.0
  %9149 = vmatpush1.msra.mxu0 0.0
  %9150 = vmatprep.subr.mxu0 0.0
  %9151 = vmatpush1.msra.mxu0 0.0
  %9152 = vmatprep.subr.mxu0 0.0
  %9153 = vmatpush1.msra.mxu0 0.0
  %9154 = vmatprep.subr.mxu0 0.0
  %9155 = vmatpush1.msra.mxu0 0.0
  %9156 = vmatprep.subr.mxu0 0.0
  %9157 = vmatpush1.msra.mxu0 0.0
  %9158 = vmatprep.subr.mxu0 0.0
  %9159 = vmatpush1.msra.mxu0 0.0
  %9160 = vmatprep.subr.mxu0 0.0
  %9161 = vmatpush1.msra.mxu0 0.0
  %9162 = vmatprep.subr.mxu0 0.0
  %9163 = vmatpush1.msra.mxu0 0.0
  %9164 = vmatprep.subr.mxu0 0.0
  %9165 = vmatpush1.msra.mxu0 0.0
  %9166 = vmatprep.subr.mxu0 0.0
  %9167 = vmatpush1.msra.mxu0 0.0
  %9168 = vmatprep.subr.mxu0 0.0
  %9169 = vmatpush1.msra.mxu0 0.0
  %9170 = vmatprep.subr.mxu0 0.0
  %9171 = vmatpush1.msra.mxu0 0.0
  %9172 = vmatprep.subr.mxu0 0.0
  %9173 = vmatpush1.msra.mxu0 0.0
  %9174 = vmatprep.subr.mxu0 0.0
  %9175 = vmatpush1.msra.mxu0 0.0
  %9176 = vmatprep.subr.mxu0 0.0
  %9177 = vmatpush1.msra.mxu0 0.0
  %9178 = vmatprep.subr.mxu0 0.0
  %9179 = vmatpush1.msra.mxu0 0.0
  %9180 = vmatprep.subr.mxu0 0.0
  %9181 = vmatpush1.msra.mxu0 0.0
  %9182 = vmatprep.subr.mxu0 0.0
  %9183 = vmatpush1.msra.mxu0 0.0
  %9184 = vmatprep.subr.mxu0 0.0
  %9185 = vmatpush1.msra.mxu0 0.0
  %9186 = vmatprep.subr.mxu0 0.0
  %9187 = vmatpush1.msra.mxu0 0.0
  %9188 = vmatprep.subr.mxu0 0.0
  %9189 = vmatpush1.msra.mxu0 0.0
  %9190 = vmatprep.subr.mxu0 0.0
  %9191 = vmatpush1.msra.mxu0 0.0
  %9192 = vmatprep.subr.mxu0 0.0
  %9193 = vmatpush1.msra.mxu0 0.0
  %9194 = vmatprep.subr.mxu0 0.0
  %9195 = vmatpush1.msra.mxu0 0.0
  %9196 = vmatprep.mubr.f32.mxu0 0.0
  %9197 = vmatmul.mubr.f32.gmra.mrb[0].mxu0 %v9100
  %v9198 = vpop.f32.mrb[0].mxu0
  %v9199 = vadd.f32 0.0, %v9198
  %v9200 = vpop.f32.mrb[0].mxu0
  %9201 = vmatprep.mubr.f32.mxu0 0.0
  %9202 = vmatmul.mubr.f32.gmra.mrb[0].mxu0 %v9102
  %v9203 = vpop.f32.mrb[0].mxu0
  %v9204 = vadd.f32 0.0, %v9203
  %v9205 = vpop.f32.mrb[0].mxu0
  %9206 = vmatprep.mubr.f32.mxu0 0.0
  %9207 = vmatmul.mubr.f32.gmra.mrb[0].mxu0 %v9104
  %v9208 = vpop.f32.mrb[0].mxu0
  %v9209 = vadd.f32 0.0, %v9208
  %v9210 = vpop.f32.mrb[0].mxu0
  %9211 = vmatprep.mubr.f32.mxu0 0.0
  %9212 = vmatmul.mubr.f32.gmra.mrb[0].mxu0 %v9106
  %v9213 = vpop.f32.mrb[0].mxu0
  %v9214 = vadd.f32 0.0, %v9213
  %v9215 = vpop.f32.mrb[0].mxu0
  %9216 = vmatprep.mubr.f32.mxu0 0.0
  %9217 = vmatmul.mubr.f32.gmra.mrb[0].mxu0 %v9108
  %v9218 = vpop.f32.mrb[0].mxu0
  %v9219 = vadd.f32 0.0, %v9218
  %v9220 = vpop.f32.mrb[0].mxu0
  %9221 = vmatprep.mubr.f32.mxu0 0.0
  %9222 = vmatmul.mubr.f32.gmra.mrb[0].mxu0 %v9110
  %v9223 = vpop.f32.mrb[0].mxu0
  %v9224 = vadd.f32 0.0, %v9223
  %v9225 = vpop.f32.mrb[0].mxu0
  %9226 = vmatprep.mubr.f32.mxu0 0.0
  %9227 = vmatmul.mubr.f32.gmra.mrb[0].mxu0 %v9112
  %v9228 = vpop.f32.mrb[0].mxu0
  %v9229 = vadd.f32 0.0, %v9228
  %v9230 = vpop.f32.mrb[0].mxu0
  %9231 = vmatprep.mubr.f32.mxu0 0.0
  %9232 = vmatmul.mubr.f32.gmra.mrb[0].mxu0 %v9114
  %v9233 = vpop.f32.mrb[0].mxu0
  %v9234 = vadd.f32 0.0, %v9233
  %v9235 = vpop.f32.mrb[0].mxu0
  %9236 = vmatprep.mubr.f32.mxu0 0.0
  %9237 = vmatmul.mubr.f32.gmra.mrb[0].mxu0 %v9116
  %v9238 = vpop.f32.mrb[0].mxu0
  %v9239 = vadd.f32 0.0, %v9238
  %v9240 = vpop.f32.mrb[0].mxu0
  %9241 = vmatprep.mubr.f32.mxu0 0.0
  %9242 = vmatmul.mubr.f32.gmra.mrb[0].mxu0 %v9118
  %v9243 = vpop.f32.mrb[0].mxu0
  %v9244 = vadd.f32 0.0, %v9243
  %v9245 = vpop.f32.mrb[0].mxu0
  %9246 = vmatprep.mubr.f32.mxu0 0.0
  %9247 = vmatmul.mubr.f32.gmra.mrb[0].mxu0 %v9120
  %v9248 = vpop.f32.mrb[0].mxu0
  %v9249 = vadd.f32 0.0, %v9248
  %v9250 = vpop.f32.mrb[0].mxu0
  %9251 = vmatprep.mubr.f32.mxu0 0.0
  %9252 = vmatmul.mubr.f32.gmra.mrb[0].mxu0 %v9122
  %v9253 = vpop.f32.mrb[0].mxu0
  %v9254 = vadd.f32 0.0, %v9253
  %v9255 = vpop.f32.mrb[0].mxu0
  %9256 = vmatprep.mubr.f32.mxu0 0.0
  %9257 = vmatmul.mubr.f32.gmra.mrb[0].mxu0 %v9124
  %v9258 = vpop.f32.mrb[0].mxu0
  %v9259 = vadd.f32 0.0, %v9258
  %v9260 = vpop.f32.mrb[0].mxu0
  %9261 = vmatprep.mubr.f32.mxu0 0.0
  %9262 = vmatmul.mubr.f32.gmra.mrb[0].mxu0 %v9126
  %v9263 = vpop.f32.mrb[0].mxu0
  %v9264 = vadd.f32 0.0, %v9263
  %v9265 = vpop.f32.mrb[0].mxu0
  %9266 = vmatprep.mubr.f32.mxu0 0.0
  %9267 = vmatmul.mubr.f32.gmra.mrb[0].mxu0 %v9128
  %v9268 = vpop.f32.mrb[0].mxu0
  %v9269 = vadd.f32 0.0, %v9268
  %v9270 = vpop.f32.mrb[0].mxu0
  %9271 = vmatprep.mubr.f32.mxu0 0.0
  %9272 = vmatmul.mubr.f32.gmra.mrb[0].mxu0 %v9130
  %v9273 = vpop.f32.mrb[0].mxu0
  %v9274 = vadd.f32 0.0, %v9273
  %v9275 = vpop.f32.mrb[0].mxu0
  %9276 = vdwg.mxu0
  %v9309 = vcombine.low %v8980, %v8981
  %v9310 = vcombine.low %v8982, %v8983
  %v9311 = vcombine.low %v8984, %v8985
  %v9312 = vcombine.low %v8986, %v8987
  %v9313 = vcombine.low %v8988, %v8989
  %v9314 = vcombine.low %v8990, %v8991
  %v9315 = vcombine.low %v8992, %v8993
  %v9316 = vcombine.low %v8994, %v8995
  %v9317 = vcombine.low %v8996, %v8997
  %v9318 = vcombine.low %v8998, %v8999
  %v9319 = vcombine.low %v9000, %v9001
  %v9320 = vcombine.low %v9002, %v9003
  %v9321 = vcombine.low %v9004, %v9005
  %v9322 = vcombine.low %v9006, %v9007
  %v9323 = vcombine.low %v9008, %v9009
  %v9324 = vcombine.low %v9010, %v9011
  %v9325 = vsel %vm7894, %v9309, 0
  %v9327 = vsel %vm7894, %v9310, 0
  %v9329 = vsel %vm7894, %v9311, 0
  %v9331 = vsel %vm7894, %v9312, 0
  %v9333 = vsel %vm7894, %v9313, 0
  %v9335 = vsel %vm7894, %v9314, 0
  %v9337 = vsel %vm7894, %v9315, 0
  %v9339 = vsel %vm7894, %v9316, 0
  %v9341 = vsel %vm7894, %v9317, 0
  %v9343 = vsel %vm7894, %v9318, 0
  %v9345 = vsel %vm7894, %v9319, 0
  %v9347 = vsel %vm7894, %v9320, 0
  %v9349 = vsel %vm7894, %v9321, 0
  %v9351 = vsel %vm7894, %v9322, 0
  %v9353 = vsel %vm7894, %v9323, 0
  %v9355 = vsel %vm7894, %v9324, 0
  %9357 = vmatprep.subr.mxu0 0.0
  %9358 = vmatpush1.msra.mxu0 %v9012
  %9359 = vmatprep.subr.mxu0 0.0
  %9360 = vmatpush1.msra.mxu0 %v9013
  %9361 = vmatprep.subr.mxu0 0.0
  %9362 = vmatpush1.msra.mxu0 %v9014
  %9363 = vmatprep.subr.mxu0 0.0
  %9364 = vmatpush1.msra.mxu0 %v9015
  %9365 = vmatprep.subr.mxu0 0.0
  %9366 = vmatpush1.msra.mxu0 0.0
  %9367 = vmatprep.subr.mxu0 0.0
  %9368 = vmatpush1.msra.mxu0 0.0
  %9369 = vmatprep.subr.mxu0 0.0
  %9370 = vmatpush1.msra.mxu0 0.0
  %9371 = vmatprep.subr.mxu0 0.0
  %9372 = vmatpush1.msra.mxu0 0.0
  %9373 = vmatprep.subr.mxu0 0.0
  %9374 = vmatpush1.msra.mxu0 0.0
  %9375 = vmatprep.subr.mxu0 0.0
  %9376 = vmatpush1.msra.mxu0 0.0
  %9377 = vmatprep.subr.mxu0 0.0
  %9378 = vmatpush1.msra.mxu0 0.0
  %9379 = vmatprep.subr.mxu0 0.0
  %9380 = vmatpush1.msra.mxu0 0.0
  %9381 = vmatprep.subr.mxu0 0.0
  %9382 = vmatpush1.msra.mxu0 0.0
  %9383 = vmatprep.subr.mxu0 0.0
  %9384 = vmatpush1.msra.mxu0 0.0
  %9385 = vmatprep.subr.mxu0 0.0
  %9386 = vmatpush1.msra.mxu0 0.0
  %9387 = vmatprep.subr.mxu0 0.0
  %9388 = vmatpush1.msra.mxu0 0.0
  %9389 = vmatprep.subr.mxu0 0.0
  %9390 = vmatpush1.msra.mxu0 0.0
  %9391 = vmatprep.subr.mxu0 0.0
  %9392 = vmatpush1.msra.mxu0 0.0
  %9393 = vmatprep.subr.mxu0 0.0
  %9394 = vmatpush1.msra.mxu0 0.0
  %9395 = vmatprep.subr.mxu0 0.0
  %9396 = vmatpush1.msra.mxu0 0.0
  %9397 = vmatprep.subr.mxu0 0.0
  %9398 = vmatpush1.msra.mxu0 0.0
  %9399 = vmatprep.subr.mxu0 0.0
  %9400 = vmatpush1.msra.mxu0 0.0
  %9401 = vmatprep.subr.mxu0 0.0
  %9402 = vmatpush1.msra.mxu0 0.0
  %9403 = vmatprep.subr.mxu0 0.0
  %9404 = vmatpush1.msra.mxu0 0.0
  %9405 = vmatprep.subr.mxu0 0.0
  %9406 = vmatpush1.msra.mxu0 0.0
  %9407 = vmatprep.subr.mxu0 0.0
  %9408 = vmatpush1.msra.mxu0 0.0
  %9409 = vmatprep.subr.mxu0 0.0
  %9410 = vmatpush1.msra.mxu0 0.0
  %9411 = vmatprep.subr.mxu0 0.0
  %9412 = vmatpush1.msra.mxu0 0.0
  %9413 = vmatprep.subr.mxu0 0.0
  %9414 = vmatpush1.msra.mxu0 0.0
  %9415 = vmatprep.subr.mxu0 0.0
  %9416 = vmatpush1.msra.mxu0 0.0
  %9417 = vmatprep.subr.mxu0 0.0
  %9418 = vmatpush1.msra.mxu0 0.0
  %9419 = vmatprep.subr.mxu0 0.0
  %9420 = vmatpush1.msra.mxu0 0.0
  %9421 = vmatprep.mubr.f32.mxu0 0.0
  %9422 = vmatmul.mubr.f32.gmra.mrb[0].mxu0 %v9325
  %v9423 = vpop.f32.mrb[0].mxu0
  %v9424 = vadd.f32 %v9199, %v9423
  %v9425 = vpop.f32.mrb[0].mxu0
  %9426 = vmatprep.mubr.f32.mxu0 0.0
  %9427 = vmatmul.mubr.f32.gmra.mrb[0].mxu0 %v9327
  %v9428 = vpop.f32.mrb[0].mxu0
  %v9429 = vadd.f32 %v9204, %v9428
  %v9430 = vpop.f32.mrb[0].mxu0
  %9431 = vmatprep.mubr.f32.mxu0 0.0
  %9432 = vmatmul.mubr.f32.gmra.mrb[0].mxu0 %v9329
  %v9433 = vpop.f32.mrb[0].mxu0
  %v9434 = vadd.f32 %v9209, %v9433
  %v9435 = vpop.f32.mrb[0].mxu0
  %9436 = vmatprep.mubr.f32.mxu0 0.0
  %9437 = vmatmul.mubr.f32.gmra.mrb[0].mxu0 %v9331
  %v9438 = vpop.f32.mrb[0].mxu0
  %v9439 = vadd.f32 %v9214, %v9438
  %v9440 = vpop.f32.mrb[0].mxu0
  %9441 = vmatprep.mubr.f32.mxu0 0.0
  %9442 = vmatmul.mubr.f32.gmra.mrb[0].mxu0 %v9333
  %v9443 = vpop.f32.mrb[0].mxu0
  %v9444 = vadd.f32 %v9219, %v9443
  %v9445 = vpop.f32.mrb[0].mxu0
  %9446 = vmatprep.mubr.f32.mxu0 0.0
  %9447 = vmatmul.mubr.f32.gmra.mrb[0].mxu0 %v9335
  %v9448 = vpop.f32.mrb[0].mxu0
  %v9449 = vadd.f32 %v9224, %v9448
  %v9450 = vpop.f32.mrb[0].mxu0
  %9451 = vmatprep.mubr.f32.mxu0 0.0
  %9452 = vmatmul.mubr.f32.gmra.mrb[0].mxu0 %v9337
  %v9453 = vpop.f32.mrb[0].mxu0
  %v9454 = vadd.f32 %v9229, %v9453
  %v9455 = vpop.f32.mrb[0].mxu0
  %9456 = vmatprep.mubr.f32.mxu0 0.0
  %9457 = vmatmul.mubr.f32.gmra.mrb[0].mxu0 %v9339
  %v9458 = vpop.f32.mrb[0].mxu0
  %v9459 = vadd.f32 %v9234, %v9458
  %v9460 = vpop.f32.mrb[0].mxu0
  %9461 = vmatprep.mubr.f32.mxu0 0.0
  %9462 = vmatmul.mubr.f32.gmra.mrb[0].mxu0 %v9341
  %v9463 = vpop.f32.mrb[0].mxu0
  %v9464 = vadd.f32 %v9239, %v9463
  %v9465 = vpop.f32.mrb[0].mxu0
  %9466 = vmatprep.mubr.f32.mxu0 0.0
  %9467 = vmatmul.mubr.f32.gmra.mrb[0].mxu0 %v9343
  %v9468 = vpop.f32.mrb[0].mxu0
  %v9469 = vadd.f32 %v9244, %v9468
  %v9470 = vpop.f32.mrb[0].mxu0
  %9471 = vmatprep.mubr.f32.mxu0 0.0
  %9472 = vmatmul.mubr.f32.gmra.mrb[0].mxu0 %v9345
  %v9473 = vpop.f32.mrb[0].mxu0
  %v9474 = vadd.f32 %v9249, %v9473
  %v9475 = vpop.f32.mrb[0].mxu0
  %9476 = vmatprep.mubr.f32.mxu0 0.0
  %9477 = vmatmul.mubr.f32.gmra.mrb[0].mxu0 %v9347
  %v9478 = vpop.f32.mrb[0].mxu0
  %v9479 = vadd.f32 %v9254, %v9478
  %v9480 = vpop.f32.mrb[0].mxu0
  %9481 = vmatprep.mubr.f32.mxu0 0.0
  %9482 = vmatmul.mubr.f32.gmra.mrb[0].mxu0 %v9349
  %v9483 = vpop.f32.mrb[0].mxu0
  %v9484 = vadd.f32 %v9259, %v9483
  %v9485 = vpop.f32.mrb[0].mxu0
  %9486 = vmatprep.mubr.f32.mxu0 0.0
  %9487 = vmatmul.mubr.f32.gmra.mrb[0].mxu0 %v9351
  %v9488 = vpop.f32.mrb[0].mxu0
  %v9489 = vadd.f32 %v9264, %v9488
  %v9490 = vpop.f32.mrb[0].mxu0
  %9491 = vmatprep.mubr.f32.mxu0 0.0
  %9492 = vmatmul.mubr.f32.gmra.mrb[0].mxu0 %v9353
  %v9493 = vpop.f32.mrb[0].mxu0
  %v9494 = vadd.f32 %v9269, %v9493
  %v9495 = vpop.f32.mrb[0].mxu0
  %9496 = vmatprep.mubr.f32.mxu0 0.0
  %9497 = vmatmul.mubr.f32.gmra.mrb[0].mxu0 %v9355
  %v9498 = vpop.f32.mrb[0].mxu0
  %v9499 = vadd.f32 %v9274, %v9498
  %v9500 = vpop.f32.mrb[0].mxu0
  %9501 = vdwg.mxu0
  %v9502 = vld [vmem:[#allocation2 + $0x2] sm:$0xf]
  %v9503 = vld [vmem:[#allocation2 + $0xa] sm:$0xf]
  %v9504 = vld [vmem:[#allocation2 + $0x12] sm:$0xf]
  %v9505 = vld [vmem:[#allocation2 + $0x1a] sm:$0xf]
  %v9506 = vld [vmem:[#allocation2 + $0x32] sm:$0xf]
  %v9507 = vld [vmem:[#allocation2 + $0x3a] sm:$0xf]
  %v9508 = vld [vmem:[#allocation2 + $0x42] sm:$0xf]
  %v9509 = vld [vmem:[#allocation2 + $0x4a] sm:$0xf]
  %v9510 = vld [vmem:[#allocation2 + $0x62] sm:$0xf]
  %v9511 = vld [vmem:[#allocation2 + $0x6a] sm:$0xf]
  %v9512 = vld [vmem:[#allocation2 + $0x72] sm:$0xf]
  %v9513 = vld [vmem:[#allocation2 + $0x7a] sm:$0xf]
  %v9514 = vld [vmem:[#allocation2 + $0x92] sm:$0xf]
  %v9515 = vld [vmem:[#allocation2 + $0x9a] sm:$0xf]
  %v9516 = vld [vmem:[#allocation2 + $0xa2] sm:$0xf]
  %v9517 = vld [vmem:[#allocation2 + $0xaa] sm:$0xf]
  %v9518 = vld [vmem:[#allocation2 + $0xc2] sm:$0xf]
  %v9519 = vld [vmem:[#allocation2 + $0xca] sm:$0xf]
  %v9520 = vld [vmem:[#allocation2 + $0xd2] sm:$0xf]
  %v9521 = vld [vmem:[#allocation2 + $0xda] sm:$0xf]
  %v9522 = vld [vmem:[#allocation2 + $0xf2] sm:$0xf]
  %v9523 = vld [vmem:[#allocation2 + $0xfa] sm:$0xf]
  %v9524 = vld [vmem:[#allocation2 + $0x102] sm:$0xf]
  %v9525 = vld [vmem:[#allocation2 + $0x10a] sm:$0xf]
  %v9526 = vld [vmem:[#allocation2 + $0x122] sm:$0xf]
  %v9527 = vld [vmem:[#allocation2 + $0x12a] sm:$0xf]
  %v9528 = vld [vmem:[#allocation2 + $0x132] sm:$0xf]
  %v9529 = vld [vmem:[#allocation2 + $0x13a] sm:$0xf]
  %v9530 = vld [vmem:[#allocation2 + $0x152] sm:$0xf]
  %v9531 = vld [vmem:[#allocation2 + $0x15a] sm:$0xf]
  %v9532 = vld [vmem:[#allocation2 + $0x162] sm:$0xf]
  %v9533 = vld [vmem:[#allocation2 + $0x16a] sm:$0xf]
  %v9534 = vld [vmem:[%s3 + $0x40] sm:$0xff]
  %v9535 = vld [vmem:[%s3 + $0x48] sm:$0xff]
  %v9536 = vld [vmem:[%s3 + $0x50] sm:$0xff]
  %v9537 = vld [vmem:[%s3 + $0x58] sm:$0xff]
  %v9570 = vcombine.low %v9502, %v9503
  %v9571 = vcombine.low %v9504, %v9505
  %v9572 = vcombine.low %v9506, %v9507
  %v9573 = vcombine.low %v9508, %v9509
  %v9574 = vcombine.low %v9510, %v9511
  %v9575 = vcombine.low %v9512, %v9513
  %v9576 = vcombine.low %v9514, %v9515
  %v9577 = vcombine.low %v9516, %v9517
  %v9578 = vcombine.low %v9518, %v9519
  %v9579 = vcombine.low %v9520, %v9521
  %v9580 = vcombine.low %v9522, %v9523
  %v9581 = vcombine.low %v9524, %v9525
  %v9582 = vcombine.low %v9526, %v9527
  %v9583 = vcombine.low %v9528, %v9529
  %v9584 = vcombine.low %v9530, %v9531
  %v9585 = vcombine.low %v9532, %v9533
  %v9586 = vsel %vm7894, %v9570, 0
  %v9588 = vsel %vm7894, %v9571, 0
  %v9590 = vsel %vm7894, %v9572, 0
  %v9592 = vsel %vm7894, %v9573, 0
  %v9594 = vsel %vm7894, %v9574, 0
  %v9596 = vsel %vm7894, %v9575, 0
  %v9598 = vsel %vm7894, %v9576, 0
  %v9600 = vsel %vm7894, %v9577, 0
  %v9602 = vsel %vm7894, %v9578, 0
  %v9604 = vsel %vm7894, %v9579, 0
  %v9606 = vsel %vm7894, %v9580, 0
  %v9608 = vsel %vm7894, %v9581, 0
  %v9610 = vsel %vm7894, %v9582, 0
  %v9612 = vsel %vm7894, %v9583, 0
  %v9614 = vsel %vm7894, %v9584, 0
  %v9616 = vsel %vm7894, %v9585, 0
  %9618 = vmatprep.subr.mxu0 0.0
  %9619 = vmatpush1.msra.mxu0 %v9534
  %9620 = vmatprep.subr.mxu0 0.0
  %9621 = vmatpush1.msra.mxu0 %v9535
  %9622 = vmatprep.subr.mxu0 0.0
  %9623 = vmatpush1.msra.mxu0 %v9536
  %9624 = vmatprep.subr.mxu0 0.0
  %9625 = vmatpush1.msra.mxu0 %v9537
  %9626 = vmatprep.subr.mxu0 0.0
  %9627 = vmatpush1.msra.mxu0 0.0
  %9628 = vmatprep.subr.mxu0 0.0
  %9629 = vmatpush1.msra.mxu0 0.0
  %9630 = vmatprep.subr.mxu0 0.0
  %9631 = vmatpush1.msra.mxu0 0.0
  %9632 = vmatprep.subr.mxu0 0.0
  %9633 = vmatpush1.msra.mxu0 0.0
  %9634 = vmatprep.subr.mxu0 0.0
  %9635 = vmatpush1.msra.mxu0 0.0
  %9636 = vmatprep.subr.mxu0 0.0
  %9637 = vmatpush1.msra.mxu0 0.0
  %9638 = vmatprep.subr.mxu0 0.0
  %9639 = vmatpush1.msra.mxu0 0.0
  %9640 = vmatprep.subr.mxu0 0.0
  %9641 = vmatpush1.msra.mxu0 0.0
  %9642 = vmatprep.subr.mxu0 0.0
  %9643 = vmatpush1.msra.mxu0 0.0
  %9644 = vmatprep.subr.mxu0 0.0
  %9645 = vmatpush1.msra.mxu0 0.0
  %9646 = vmatprep.subr.mxu0 0.0
  %9647 = vmatpush1.msra.mxu0 0.0
  %9648 = vmatprep.subr.mxu0 0.0
  %9649 = vmatpush1.msra.mxu0 0.0
  %9650 = vmatprep.subr.mxu0 0.0
  %9651 = vmatpush1.msra.mxu0 0.0
  %9652 = vmatprep.subr.mxu0 0.0
  %9653 = vmatpush1.msra.mxu0 0.0
  %9654 = vmatprep.subr.mxu0 0.0
  %9655 = vmatpush1.msra.mxu0 0.0
  %9656 = vmatprep.subr.mxu0 0.0
  %9657 = vmatpush1.msra.mxu0 0.0
  %9658 = vmatprep.subr.mxu0 0.0
  %9659 = vmatpush1.msra.mxu0 0.0
  %9660 = vmatprep.subr.mxu0 0.0
  %9661 = vmatpush1.msra.mxu0 0.0
  %9662 = vmatprep.subr.mxu0 0.0
  %9663 = vmatpush1.msra.mxu0 0.0
  %9664 = vmatprep.subr.mxu0 0.0
  %9665 = vmatpush1.msra.mxu0 0.0
  %9666 = vmatprep.subr.mxu0 0.0
  %9667 = vmatpush1.msra.mxu0 0.0
  %9668 = vmatprep.subr.mxu0 0.0
  %9669 = vmatpush1.msra.mxu0 0.0
  %9670 = vmatprep.subr.mxu0 0.0
  %9671 = vmatpush1.msra.mxu0 0.0
  %9672 = vmatprep.subr.mxu0 0.0
  %9673 = vmatpush1.msra.mxu0 0.0
  %9674 = vmatprep.subr.mxu0 0.0
  %9675 = vmatpush1.msra.mxu0 0.0
  %9676 = vmatprep.subr.mxu0 0.0
  %9677 = vmatpush1.msra.mxu0 0.0
  %9678 = vmatprep.subr.mxu0 0.0
  %9679 = vmatpush1.msra.mxu0 0.0
  %9680 = vmatprep.subr.mxu0 0.0
  %9681 = vmatpush1.msra.mxu0 0.0
  %9682 = vmatprep.mubr.f32.mxu0 0.0
  %9683 = vmatmul.mubr.f32.gmra.mrb[0].mxu0 %v9586
  %v9684 = vpop.f32.mrb[0].mxu0
  %v9685 = vadd.f32 0.0, %v9684
  %v9686 = vpop.f32.mrb[0].mxu0
  %9687 = vmatprep.mubr.f32.mxu0 0.0
  %9688 = vmatmul.mubr.f32.gmra.mrb[0].mxu0 %v9588
  %v9689 = vpop.f32.mrb[0].mxu0
  %v9690 = vadd.f32 0.0, %v9689
  %v9691 = vpop.f32.mrb[0].mxu0
  %9692 = vmatprep.mubr.f32.mxu0 0.0
  %9693 = vmatmul.mubr.f32.gmra.mrb[0].mxu0 %v9590
  %v9694 = vpop.f32.mrb[0].mxu0
  %v9695 = vadd.f32 0.0, %v9694
  %v9696 = vpop.f32.mrb[0].mxu0
  %9697 = vmatprep.mubr.f32.mxu0 0.0
  %9698 = vmatmul.mubr.f32.gmra.mrb[0].mxu0 %v9592
  %v9699 = vpop.f32.mrb[0].mxu0
  %v9700 = vadd.f32 0.0, %v9699
  %v9701 = vpop.f32.mrb[0].mxu0
  %9702 = vmatprep.mubr.f32.mxu0 0.0
  %9703 = vmatmul.mubr.f32.gmra.mrb[0].mxu0 %v9594
  %v9704 = vpop.f32.mrb[0].mxu0
  %v9705 = vadd.f32 0.0, %v9704
  %v9706 = vpop.f32.mrb[0].mxu0
  %9707 = vmatprep.mubr.f32.mxu0 0.0
  %9708 = vmatmul.mubr.f32.gmra.mrb[0].mxu0 %v9596
  %v9709 = vpop.f32.mrb[0].mxu0
  %v9710 = vadd.f32 0.0, %v9709
  %v9711 = vpop.f32.mrb[0].mxu0
  %9712 = vmatprep.mubr.f32.mxu0 0.0
  %9713 = vmatmul.mubr.f32.gmra.mrb[0].mxu0 %v9598
  %v9714 = vpop.f32.mrb[0].mxu0
  %v9715 = vadd.f32 0.0, %v9714
  %v9716 = vpop.f32.mrb[0].mxu0
  %9717 = vmatprep.mubr.f32.mxu0 0.0
  %9718 = vmatmul.mubr.f32.gmra.mrb[0].mxu0 %v9600
  %v9719 = vpop.f32.mrb[0].mxu0
  %v9720 = vadd.f32 0.0, %v9719
  %v9721 = vpop.f32.mrb[0].mxu0
  %9722 = vmatprep.mubr.f32.mxu0 0.0
  %9723 = vmatmul.mubr.f32.gmra.mrb[0].mxu0 %v9602
  %v9724 = vpop.f32.mrb[0].mxu0
  %v9725 = vadd.f32 0.0, %v9724
  %v9726 = vpop.f32.mrb[0].mxu0
  %9727 = vmatprep.mubr.f32.mxu0 0.0
  %9728 = vmatmul.mubr.f32.gmra.mrb[0].mxu0 %v9604
  %v9729 = vpop.f32.mrb[0].mxu0
  %v9730 = vadd.f32 0.0, %v9729
  %v9731 = vpop.f32.mrb[0].mxu0
  %9732 = vmatprep.mubr.f32.mxu0 0.0
  %9733 = vmatmul.mubr.f32.gmra.mrb[0].mxu0 %v9606
  %v9734 = vpop.f32.mrb[0].mxu0
  %v9735 = vadd.f32 0.0, %v9734
  %v9736 = vpop.f32.mrb[0].mxu0
  %9737 = vmatprep.mubr.f32.mxu0 0.0
  %9738 = vmatmul.mubr.f32.gmra.mrb[0].mxu0 %v9608
  %v9739 = vpop.f32.mrb[0].mxu0
  %v9740 = vadd.f32 0.0, %v9739
  %v9741 = vpop.f32.mrb[0].mxu0
  %9742 = vmatprep.mubr.f32.mxu0 0.0
  %9743 = vmatmul.mubr.f32.gmra.mrb[0].mxu0 %v9610
  %v9744 = vpop.f32.mrb[0].mxu0
  %v9745 = vadd.f32 0.0, %v9744
  %v9746 = vpop.f32.mrb[0].mxu0
  %9747 = vmatprep.mubr.f32.mxu0 0.0
  %9748 = vmatmul.mubr.f32.gmra.mrb[0].mxu0 %v9612
  %v9749 = vpop.f32.mrb[0].mxu0
  %v9750 = vadd.f32 0.0, %v9749
  %v9751 = vpop.f32.mrb[0].mxu0
  %9752 = vmatprep.mubr.f32.mxu0 0.0
  %9753 = vmatmul.mubr.f32.gmra.mrb[0].mxu0 %v9614
  %v9754 = vpop.f32.mrb[0].mxu0
  %v9755 = vadd.f32 0.0, %v9754
  %v9756 = vpop.f32.mrb[0].mxu0
  %9757 = vmatprep.mubr.f32.mxu0 0.0
  %9758 = vmatmul.mubr.f32.gmra.mrb[0].mxu0 %v9616
  %v9759 = vpop.f32.mrb[0].mxu0
  %v9760 = vadd.f32 0.0, %v9759
  %v9761 = vpop.f32.mrb[0].mxu0
  %9762 = vdwg.mxu0
  %v9763 = vadd.f32 %v9424, %v9685
  %v9764 = vadd.f32 %v9429, %v9690
  %v9765 = vadd.f32 %v9434, %v9695
  %v9766 = vadd.f32 %v9439, %v9700
  %v9767 = vadd.f32 %v9444, %v9705
  %v9768 = vadd.f32 %v9449, %v9710
  %v9769 = vadd.f32 %v9454, %v9715
  %v9770 = vadd.f32 %v9459, %v9720
  %v9771 = vadd.f32 %v9464, %v9725
  %v9772 = vadd.f32 %v9469, %v9730
  %v9773 = vadd.f32 %v9474, %v9735
  %v9774 = vadd.f32 %v9479, %v9740
  %v9775 = vadd.f32 %v9484, %v9745
  %v9776 = vadd.f32 %v9489, %v9750
  %v9777 = vadd.f32 %v9494, %v9755
  %v9778 = vadd.f32 %v9499, %v9760
  %v9779 = vld [vmem:[%s8946] sm:$0xf]
  %v9780 = vld [vmem:[%s8946 + $0x8] sm:$0xf]
  %v9781 = vld [vmem:[%s8946 + $0x10] sm:$0xf]
  %v9782 = vld [vmem:[%s8946 + $0x18] sm:$0xf]
  %v9783 = vld [vmem:[%s8946 + $0x30] sm:$0xf]
  %v9784 = vld [vmem:[%s8946 + $0x38] sm:$0xf]
  %v9785 = vld [vmem:[%s8946 + $0x40] sm:$0xf]
  %v9786 = vld [vmem:[%s8946 + $0x48] sm:$0xf]
  %v9787 = vld [vmem:[%s8946 + $0x60] sm:$0xf]
  %v9788 = vld [vmem:[%s8946 + $0x68] sm:$0xf]
  %v9789 = vld [vmem:[%s8946 + $0x70] sm:$0xf]
  %v9790 = vld [vmem:[%s8946 + $0x78] sm:$0xf]
  %v9791 = vld [vmem:[%s8946 + $0x90] sm:$0xf]
  %v9792 = vld [vmem:[%s8946 + $0x98] sm:$0xf]
  %v9793 = vld [vmem:[%s8946 + $0xa0] sm:$0xf]
  %v9794 = vld [vmem:[%s8946 + $0xa8] sm:$0xf]
  %v9795 = vld [vmem:[%s8946 + $0xc0] sm:$0xf]
  %v9796 = vld [vmem:[%s8946 + $0xc8] sm:$0xf]
  %v9797 = vld [vmem:[%s8946 + $0xd0] sm:$0xf]
  %v9798 = vld [vmem:[%s8946 + $0xd8] sm:$0xf]
  %v9799 = vld [vmem:[%s8946 + $0xf0] sm:$0xf]
  %v9800 = vld [vmem:[%s8946 + $0xf8] sm:$0xf]
  %v9801 = vld [vmem:[%s8946 + $0x100] sm:$0xf]
  %v9802 = vld [vmem:[%s8946 + $0x108] sm:$0xf]
  %v9803 = vld [vmem:[%s8946 + $0x120] sm:$0xf]
  %v9804 = vld [vmem:[%s8946 + $0x128] sm:$0xf]
  %v9805 = vld [vmem:[%s8946 + $0x130] sm:$0xf]
  %v9806 = vld [vmem:[%s8946 + $0x138] sm:$0xf]
  %v9807 = vld [vmem:[%s8946 + $0x150] sm:$0xf]
  %v9808 = vld [vmem:[%s8946 + $0x158] sm:$0xf]
  %v9809 = vld [vmem:[%s8946 + $0x160] sm:$0xf]
  %v9810 = vld [vmem:[%s8946 + $0x168] sm:$0xf]
  %v9811 = vld [vmem:[%s3 + $0x60] sm:$0xff]
  %v9812 = vld [vmem:[%s3 + $0x68] sm:$0xff]
  %v9813 = vld [vmem:[%s3 + $0x70] sm:$0xff]
  %v9814 = vld [vmem:[%s3 + $0x78] sm:$0xff]
  %v9847 = vcombine.low %v9779, %v9780
  %v9848 = vcombine.low %v9781, %v9782
  %v9849 = vcombine.low %v9783, %v9784
  %v9850 = vcombine.low %v9785, %v9786
  %v9851 = vcombine.low %v9787, %v9788
  %v9852 = vcombine.low %v9789, %v9790
  %v9853 = vcombine.low %v9791, %v9792
  %v9854 = vcombine.low %v9793, %v9794
  %v9855 = vcombine.low %v9795, %v9796
  %v9856 = vcombine.low %v9797, %v9798
  %v9857 = vcombine.low %v9799, %v9800
  %v9858 = vcombine.low %v9801, %v9802
  %v9859 = vcombine.low %v9803, %v9804
  %v9860 = vcombine.low %v9805, %v9806
  %v9861 = vcombine.low %v9807, %v9808
  %v9862 = vcombine.low %v9809, %v9810
  %v9863 = vsel %vm7894, %v9847, 0
  %v9865 = vsel %vm7894, %v9848, 0
  %v9867 = vsel %vm7894, %v9849, 0
  %v9869 = vsel %vm7894, %v9850, 0
  %v9871 = vsel %vm7894, %v9851, 0
  %v9873 = vsel %vm7894, %v9852, 0
  %v9875 = vsel %vm7894, %v9853, 0
  %v9877 = vsel %vm7894, %v9854, 0
  %v9879 = vsel %vm7894, %v9855, 0
  %v9881 = vsel %vm7894, %v9856, 0
  %v9883 = vsel %vm7894, %v9857, 0
  %v9885 = vsel %vm7894, %v9858, 0
  %v9887 = vsel %vm7894, %v9859, 0
  %v9889 = vsel %vm7894, %v9860, 0
  %v9891 = vsel %vm7894, %v9861, 0
  %v9893 = vsel %vm7894, %v9862, 0
  %9895 = vmatprep.subr.mxu0 0.0
  %9896 = vmatpush1.msra.mxu0 %v9811
  %9897 = vmatprep.subr.mxu0 0.0
  %9898 = vmatpush1.msra.mxu0 %v9812
  %9899 = vmatprep.subr.mxu0 0.0
  %9900 = vmatpush1.msra.mxu0 %v9813
  %9901 = vmatprep.subr.mxu0 0.0
  %9902 = vmatpush1.msra.mxu0 %v9814
  %9903 = vmatprep.subr.mxu0 0.0
  %9904 = vmatpush1.msra.mxu0 0.0
  %9905 = vmatprep.subr.mxu0 0.0
  %9906 = vmatpush1.msra.mxu0 0.0
  %9907 = vmatprep.subr.mxu0 0.0
  %9908 = vmatpush1.msra.mxu0 0.0
  %9909 = vmatprep.subr.mxu0 0.0
  %9910 = vmatpush1.msra.mxu0 0.0
  %9911 = vmatprep.subr.mxu0 0.0
  %9912 = vmatpush1.msra.mxu0 0.0
  %9913 = vmatprep.subr.mxu0 0.0
  %9914 = vmatpush1.msra.mxu0 0.0
  %9915 = vmatprep.subr.mxu0 0.0
  %9916 = vmatpush1.msra.mxu0 0.0
  %9917 = vmatprep.subr.mxu0 0.0
  %9918 = vmatpush1.msra.mxu0 0.0
  %9919 = vmatprep.subr.mxu0 0.0
  %9920 = vmatpush1.msra.mxu0 0.0
  %9921 = vmatprep.subr.mxu0 0.0
  %9922 = vmatpush1.msra.mxu0 0.0
  %9923 = vmatprep.subr.mxu0 0.0
  %9924 = vmatpush1.msra.mxu0 0.0
  %9925 = vmatprep.subr.mxu0 0.0
  %9926 = vmatpush1.msra.mxu0 0.0
  %9927 = vmatprep.subr.mxu0 0.0
  %9928 = vmatpush1.msra.mxu0 0.0
  %9929 = vmatprep.subr.mxu0 0.0
  %9930 = vmatpush1.msra.mxu0 0.0
  %9931 = vmatprep.subr.mxu0 0.0
  %9932 = vmatpush1.msra.mxu0 0.0
  %9933 = vmatprep.subr.mxu0 0.0
  %9934 = vmatpush1.msra.mxu0 0.0
  %9935 = vmatprep.subr.mxu0 0.0
  %9936 = vmatpush1.msra.mxu0 0.0
  %9937 = vmatprep.subr.mxu0 0.0
  %9938 = vmatpush1.msra.mxu0 0.0
  %9939 = vmatprep.subr.mxu0 0.0
  %9940 = vmatpush1.msra.mxu0 0.0
  %9941 = vmatprep.subr.mxu0 0.0
  %9942 = vmatpush1.msra.mxu0 0.0
  %9943 = vmatprep.subr.mxu0 0.0
  %9944 = vmatpush1.msra.mxu0 0.0
  %9945 = vmatprep.subr.mxu0 0.0
  %9946 = vmatpush1.msra.mxu0 0.0
  %9947 = vmatprep.subr.mxu0 0.0
  %9948 = vmatpush1.msra.mxu0 0.0
  %9949 = vmatprep.subr.mxu0 0.0
  %9950 = vmatpush1.msra.mxu0 0.0
  %9951 = vmatprep.subr.mxu0 0.0
  %9952 = vmatpush1.msra.mxu0 0.0
  %9953 = vmatprep.subr.mxu0 0.0
  %9954 = vmatpush1.msra.mxu0 0.0
  %9955 = vmatprep.subr.mxu0 0.0
  %9956 = vmatpush1.msra.mxu0 0.0
  %9957 = vmatprep.subr.mxu0 0.0
  %9958 = vmatpush1.msra.mxu0 0.0
  %9959 = vmatprep.mubr.f32.mxu0 0.0
  %9960 = vmatmul.mubr.f32.gmra.mrb[0].mxu0 %v9863
  %v9961 = vpop.f32.mrb[0].mxu0
  %v9962 = vadd.f32 0.0, %v9961
  %v9963 = vpop.f32.mrb[0].mxu0
  %9964 = vmatprep.mubr.f32.mxu0 0.0
  %9965 = vmatmul.mubr.f32.gmra.mrb[0].mxu0 %v9865
  %v9966 = vpop.f32.mrb[0].mxu0
  %v9967 = vadd.f32 0.0, %v9966
  %v9968 = vpop.f32.mrb[0].mxu0
  %9969 = vmatprep.mubr.f32.mxu0 0.0
  %9970 = vmatmul.mubr.f32.gmra.mrb[0].mxu0 %v9867
  %v9971 = vpop.f32.mrb[0].mxu0
  %v9972 = vadd.f32 0.0, %v9971
  %v9973 = vpop.f32.mrb[0].mxu0
  %9974 = vmatprep.mubr.f32.mxu0 0.0
  %9975 = vmatmul.mubr.f32.gmra.mrb[0].mxu0 %v9869
  %v9976 = vpop.f32.mrb[0].mxu0
  %v9977 = vadd.f32 0.0, %v9976
  %v9978 = vpop.f32.mrb[0].mxu0
  %9979 = vmatprep.mubr.f32.mxu0 0.0
  %9980 = vmatmul.mubr.f32.gmra.mrb[0].mxu0 %v9871
  %v9981 = vpop.f32.mrb[0].mxu0
  %v9982 = vadd.f32 0.0, %v9981
  %v9983 = vpop.f32.mrb[0].mxu0
  %9984 = vmatprep.mubr.f32.mxu0 0.0
  %9985 = vmatmul.mubr.f32.gmra.mrb[0].mxu0 %v9873
  %v9986 = vpop.f32.mrb[0].mxu0
  %v9987 = vadd.f32 0.0, %v9986
  %v9988 = vpop.f32.mrb[0].mxu0
  %9989 = vmatprep.mubr.f32.mxu0 0.0
  %9990 = vmatmul.mubr.f32.gmra.mrb[0].mxu0 %v9875
  %v9991 = vpop.f32.mrb[0].mxu0
  %v9992 = vadd.f32 0.0, %v9991
  %v9993 = vpop.f32.mrb[0].mxu0
  %9994 = vmatprep.mubr.f32.mxu0 0.0
  %9995 = vmatmul.mubr.f32.gmra.mrb[0].mxu0 %v9877
  %v9996 = vpop.f32.mrb[0].mxu0
  %v9997 = vadd.f32 0.0, %v9996
  %v9998 = vpop.f32.mrb[0].mxu0
  %9999 = vmatprep.mubr.f32.mxu0 0.0
  %10000 = vmatmul.mubr.f32.gmra.mrb[0].mxu0 %v9879
  %v10001 = vpop.f32.mrb[0].mxu0
  %v10002 = vadd.f32 0.0, %v10001
  %v10003 = vpop.f32.mrb[0].mxu0
  %10004 = vmatprep.mubr.f32.mxu0 0.0
  %10005 = vmatmul.mubr.f32.gmra.mrb[0].mxu0 %v9881
  %v10006 = vpop.f32.mrb[0].mxu0
  %v10007 = vadd.f32 0.0, %v10006
  %v10008 = vpop.f32.mrb[0].mxu0
  %10009 = vmatprep.mubr.f32.mxu0 0.0
  %10010 = vmatmul.mubr.f32.gmra.mrb[0].mxu0 %v9883
  %v10011 = vpop.f32.mrb[0].mxu0
  %v10012 = vadd.f32 0.0, %v10011
  %v10013 = vpop.f32.mrb[0].mxu0
  %10014 = vmatprep.mubr.f32.mxu0 0.0
  %10015 = vmatmul.mubr.f32.gmra.mrb[0].mxu0 %v9885
  %v10016 = vpop.f32.mrb[0].mxu0
  %v10017 = vadd.f32 0.0, %v10016
  %v10018 = vpop.f32.mrb[0].mxu0
  %10019 = vmatprep.mubr.f32.mxu0 0.0
  %10020 = vmatmul.mubr.f32.gmra.mrb[0].mxu0 %v9887
  %v10021 = vpop.f32.mrb[0].mxu0
  %v10022 = vadd.f32 0.0, %v10021
  %v10023 = vpop.f32.mrb[0].mxu0
  %10024 = vmatprep.mubr.f32.mxu0 0.0
  %10025 = vmatmul.mubr.f32.gmra.mrb[0].mxu0 %v9889
  %v10026 = vpop.f32.mrb[0].mxu0
  %v10027 = vadd.f32 0.0, %v10026
  %v10028 = vpop.f32.mrb[0].mxu0
  %10029 = vmatprep.mubr.f32.mxu0 0.0
  %10030 = vmatmul.mubr.f32.gmra.mrb[0].mxu0 %v9891
  %v10031 = vpop.f32.mrb[0].mxu0
  %v10032 = vadd.f32 0.0, %v10031
  %v10033 = vpop.f32.mrb[0].mxu0
  %10034 = vmatprep.mubr.f32.mxu0 0.0
  %10035 = vmatmul.mubr.f32.gmra.mrb[0].mxu0 %v9893
  %v10036 = vpop.f32.mrb[0].mxu0
  %v10037 = vadd.f32 0.0, %v10036
  %v10038 = vpop.f32.mrb[0].mxu0
  %10039 = vdwg.mxu0
  %v10040 = vadd.f32 %v9763, %v9962
  %v10041 = vadd.f32 %v9764, %v9967
  %v10042 = vadd.f32 %v9765, %v9972
  %v10043 = vadd.f32 %v9766, %v9977
  %v10044 = vadd.f32 %v9767, %v9982
  %v10045 = vadd.f32 %v9768, %v9987
  %v10046 = vadd.f32 %v9769, %v9992
  %v10047 = vadd.f32 %v9770, %v9997
  %v10048 = vadd.f32 %v9771, %v10002
  %v10049 = vadd.f32 %v9772, %v10007
  %v10050 = vadd.f32 %v9773, %v10012
  %v10051 = vadd.f32 %v9774, %v10017
  %v10052 = vadd.f32 %v9775, %v10022
  %v10053 = vadd.f32 %v9776, %v10027
  %v10054 = vadd.f32 %v9777, %v10032
  %v10055 = vadd.f32 %v9778, %v10037
  %v10056 = vld [vmem:[%s8946 + $0x1] sm:$0xf]
  %v10057 = vld [vmem:[%s8946 + $0x9] sm:$0xf]
  %v10058 = vld [vmem:[%s8946 + $0x11] sm:$0xf]
  %v10059 = vld [vmem:[%s8946 + $0x19] sm:$0xf]
  %v10060 = vld [vmem:[%s8946 + $0x31] sm:$0xf]
  %v10061 = vld [vmem:[%s8946 + $0x39] sm:$0xf]
  %v10062 = vld [vmem:[%s8946 + $0x41] sm:$0xf]
  %v10063 = vld [vmem:[%s8946 + $0x49] sm:$0xf]
  %v10064 = vld [vmem:[%s8946 + $0x61] sm:$0xf]
  %v10065 = vld [vmem:[%s8946 + $0x69] sm:$0xf]
  %v10066 = vld [vmem:[%s8946 + $0x71] sm:$0xf]
  %v10067 = vld [vmem:[%s8946 + $0x79] sm:$0xf]
  %v10068 = vld [vmem:[%s8946 + $0x91] sm:$0xf]
  %v10069 = vld [vmem:[%s8946 + $0x99] sm:$0xf]
  %v10070 = vld [vmem:[%s8946 + $0xa1] sm:$0xf]
  %v10071 = vld [vmem:[%s8946 + $0xa9] sm:$0xf]
  %v10072 = vld [vmem:[%s8946 + $0xc1] sm:$0xf]
  %v10073 = vld [vmem:[%s8946 + $0xc9] sm:$0xf]
  %v10074 = vld [vmem:[%s8946 + $0xd1] sm:$0xf]
  %v10075 = vld [vmem:[%s8946 + $0xd9] sm:$0xf]
  %v10076 = vld [vmem:[%s8946 + $0xf1] sm:$0xf]
  %v10077 = vld [vmem:[%s8946 + $0xf9] sm:$0xf]
  %v10078 = vld [vmem:[%s8946 + $0x101] sm:$0xf]
  %v10079 = vld [vmem:[%s8946 + $0x109] sm:$0xf]
  %v10080 = vld [vmem:[%s8946 + $0x121] sm:$0xf]
  %v10081 = vld [vmem:[%s8946 + $0x129] sm:$0xf]
  %v10082 = vld [vmem:[%s8946 + $0x131] sm:$0xf]
  %v10083 = vld [vmem:[%s8946 + $0x139] sm:$0xf]
  %v10084 = vld [vmem:[%s8946 + $0x151] sm:$0xf]
  %v10085 = vld [vmem:[%s8946 + $0x159] sm:$0xf]
  %v10086 = vld [vmem:[%s8946 + $0x161] sm:$0xf]
  %v10087 = vld [vmem:[%s8946 + $0x169] sm:$0xf]
  %v10088 = vld [vmem:[%s3 + $0x80] sm:$0xff]
  %v10089 = vld [vmem:[%s3 + $0x88] sm:$0xff]
  %v10090 = vld [vmem:[%s3 + $0x90] sm:$0xff]
  %v10091 = vld [vmem:[%s3 + $0x98] sm:$0xff]
  %v10124 = vcombine.low %v10056, %v10057
  %v10125 = vcombine.low %v10058, %v10059
  %v10126 = vcombine.low %v10060, %v10061
  %v10127 = vcombine.low %v10062, %v10063
  %v10128 = vcombine.low %v10064, %v10065
  %v10129 = vcombine.low %v10066, %v10067
  %v10130 = vcombine.low %v10068, %v10069
  %v10131 = vcombine.low %v10070, %v10071
  %v10132 = vcombine.low %v10072, %v10073
  %v10133 = vcombine.low %v10074, %v10075
  %v10134 = vcombine.low %v10076, %v10077
  %v10135 = vcombine.low %v10078, %v10079
  %v10136 = vcombine.low %v10080, %v10081
  %v10137 = vcombine.low %v10082, %v10083
  %v10138 = vcombine.low %v10084, %v10085
  %v10139 = vcombine.low %v10086, %v10087
  %v10140 = vsel %vm7894, %v10124, 0
  %v10142 = vsel %vm7894, %v10125, 0
  %v10144 = vsel %vm7894, %v10126, 0
  %v10146 = vsel %vm7894, %v10127, 0
  %v10148 = vsel %vm7894, %v10128, 0
  %v10150 = vsel %vm7894, %v10129, 0
  %v10152 = vsel %vm7894, %v10130, 0
  %v10154 = vsel %vm7894, %v10131, 0
  %v10156 = vsel %vm7894, %v10132, 0
  %v10158 = vsel %vm7894, %v10133, 0
  %v10160 = vsel %vm7894, %v10134, 0
  %v10162 = vsel %vm7894, %v10135, 0
  %v10164 = vsel %vm7894, %v10136, 0
  %v10166 = vsel %vm7894, %v10137, 0
  %v10168 = vsel %vm7894, %v10138, 0
  %v10170 = vsel %vm7894, %v10139, 0
  %10172 = vmatprep.subr.mxu0 0.0
  %10173 = vmatpush1.msra.mxu0 %v10088
  %10174 = vmatprep.subr.mxu0 0.0
  %10175 = vmatpush1.msra.mxu0 %v10089
  %10176 = vmatprep.subr.mxu0 0.0
  %10177 = vmatpush1.msra.mxu0 %v10090
  %10178 = vmatprep.subr.mxu0 0.0
  %10179 = vmatpush1.msra.mxu0 %v10091
  %10180 = vmatprep.subr.mxu0 0.0
  %10181 = vmatpush1.msra.mxu0 0.0
  %10182 = vmatprep.subr.mxu0 0.0
  %10183 = vmatpush1.msra.mxu0 0.0
  %10184 = vmatprep.subr.mxu0 0.0
  %10185 = vmatpush1.msra.mxu0 0.0
  %10186 = vmatprep.subr.mxu0 0.0
  %10187 = vmatpush1.msra.mxu0 0.0
  %10188 = vmatprep.subr.mxu0 0.0
  %10189 = vmatpush1.msra.mxu0 0.0
  %10190 = vmatprep.subr.mxu0 0.0
  %10191 = vmatpush1.msra.mxu0 0.0
  %10192 = vmatprep.subr.mxu0 0.0
  %10193 = vmatpush1.msra.mxu0 0.0
  %10194 = vmatprep.subr.mxu0 0.0
  %10195 = vmatpush1.msra.mxu0 0.0
  %10196 = vmatprep.subr.mxu0 0.0
  %10197 = vmatpush1.msra.mxu0 0.0
  %10198 = vmatprep.subr.mxu0 0.0
  %10199 = vmatpush1.msra.mxu0 0.0
  %10200 = vmatprep.subr.mxu0 0.0
  %10201 = vmatpush1.msra.mxu0 0.0
  %10202 = vmatprep.subr.mxu0 0.0
  %10203 = vmatpush1.msra.mxu0 0.0
  %10204 = vmatprep.subr.mxu0 0.0
  %10205 = vmatpush1.msra.mxu0 0.0
  %10206 = vmatprep.subr.mxu0 0.0
  %10207 = vmatpush1.msra.mxu0 0.0
  %10208 = vmatprep.subr.mxu0 0.0
  %10209 = vmatpush1.msra.mxu0 0.0
  %10210 = vmatprep.subr.mxu0 0.0
  %10211 = vmatpush1.msra.mxu0 0.0
  %10212 = vmatprep.subr.mxu0 0.0
  %10213 = vmatpush1.msra.mxu0 0.0
  %10214 = vmatprep.subr.mxu0 0.0
  %10215 = vmatpush1.msra.mxu0 0.0
  %10216 = vmatprep.subr.mxu0 0.0
  %10217 = vmatpush1.msra.mxu0 0.0
  %10218 = vmatprep.subr.mxu0 0.0
  %10219 = vmatpush1.msra.mxu0 0.0
  %10220 = vmatprep.subr.mxu0 0.0
  %10221 = vmatpush1.msra.mxu0 0.0
  %10222 = vmatprep.subr.mxu0 0.0
  %10223 = vmatpush1.msra.mxu0 0.0
  %10224 = vmatprep.subr.mxu0 0.0
  %10225 = vmatpush1.msra.mxu0 0.0
  %10226 = vmatprep.subr.mxu0 0.0
  %10227 = vmatpush1.msra.mxu0 0.0
  %10228 = vmatprep.subr.mxu0 0.0
  %10229 = vmatpush1.msra.mxu0 0.0
  %10230 = vmatprep.subr.mxu0 0.0
  %10231 = vmatpush1.msra.mxu0 0.0
  %10232 = vmatprep.subr.mxu0 0.0
  %10233 = vmatpush1.msra.mxu0 0.0
  %10234 = vmatprep.subr.mxu0 0.0
  %10235 = vmatpush1.msra.mxu0 0.0
  %10236 = vmatprep.mubr.f32.mxu0 0.0
  %10237 = vmatmul.mubr.f32.gmra.mrb[0].mxu0 %v10140
  %v10238 = vpop.f32.mrb[0].mxu0
  %v10239 = vadd.f32 0.0, %v10238
  %v10240 = vpop.f32.mrb[0].mxu0
  %10241 = vmatprep.mubr.f32.mxu0 0.0
  %10242 = vmatmul.mubr.f32.gmra.mrb[0].mxu0 %v10142
  %v10243 = vpop.f32.mrb[0].mxu0
  %v10244 = vadd.f32 0.0, %v10243
  %v10245 = vpop.f32.mrb[0].mxu0
  %10246 = vmatprep.mubr.f32.mxu0 0.0
  %10247 = vmatmul.mubr.f32.gmra.mrb[0].mxu0 %v10144
  %v10248 = vpop.f32.mrb[0].mxu0
  %v10249 = vadd.f32 0.0, %v10248
  %v10250 = vpop.f32.mrb[0].mxu0
  %10251 = vmatprep.mubr.f32.mxu0 0.0
  %10252 = vmatmul.mubr.f32.gmra.mrb[0].mxu0 %v10146
  %v10253 = vpop.f32.mrb[0].mxu0
  %v10254 = vadd.f32 0.0, %v10253
  %v10255 = vpop.f32.mrb[0].mxu0
  %10256 = vmatprep.mubr.f32.mxu0 0.0
  %10257 = vmatmul.mubr.f32.gmra.mrb[0].mxu0 %v10148
  %v10258 = vpop.f32.mrb[0].mxu0
  %v10259 = vadd.f32 0.0, %v10258
  %v10260 = vpop.f32.mrb[0].mxu0
  %10261 = vmatprep.mubr.f32.mxu0 0.0
  %10262 = vmatmul.mubr.f32.gmra.mrb[0].mxu0 %v10150
  %v10263 = vpop.f32.mrb[0].mxu0
  %v10264 = vadd.f32 0.0, %v10263
  %v10265 = vpop.f32.mrb[0].mxu0
  %10266 = vmatprep.mubr.f32.mxu0 0.0
  %10267 = vmatmul.mubr.f32.gmra.mrb[0].mxu0 %v10152
  %v10268 = vpop.f32.mrb[0].mxu0
  %v10269 = vadd.f32 0.0, %v10268
  %v10270 = vpop.f32.mrb[0].mxu0
  %10271 = vmatprep.mubr.f32.mxu0 0.0
  %10272 = vmatmul.mubr.f32.gmra.mrb[0].mxu0 %v10154
  %v10273 = vpop.f32.mrb[0].mxu0
  %v10274 = vadd.f32 0.0, %v10273
  %v10275 = vpop.f32.mrb[0].mxu0
  %10276 = vmatprep.mubr.f32.mxu0 0.0
  %10277 = vmatmul.mubr.f32.gmra.mrb[0].mxu0 %v10156
  %v10278 = vpop.f32.mrb[0].mxu0
  %v10279 = vadd.f32 0.0, %v10278
  %v10280 = vpop.f32.mrb[0].mxu0
  %10281 = vmatprep.mubr.f32.mxu0 0.0
  %10282 = vmatmul.mubr.f32.gmra.mrb[0].mxu0 %v10158
  %v10283 = vpop.f32.mrb[0].mxu0
  %v10284 = vadd.f32 0.0, %v10283
  %v10285 = vpop.f32.mrb[0].mxu0
  %10286 = vmatprep.mubr.f32.mxu0 0.0
  %10287 = vmatmul.mubr.f32.gmra.mrb[0].mxu0 %v10160
  %v10288 = vpop.f32.mrb[0].mxu0
  %v10289 = vadd.f32 0.0, %v10288
  %v10290 = vpop.f32.mrb[0].mxu0
  %10291 = vmatprep.mubr.f32.mxu0 0.0
  %10292 = vmatmul.mubr.f32.gmra.mrb[0].mxu0 %v10162
  %v10293 = vpop.f32.mrb[0].mxu0
  %v10294 = vadd.f32 0.0, %v10293
  %v10295 = vpop.f32.mrb[0].mxu0
  %10296 = vmatprep.mubr.f32.mxu0 0.0
  %10297 = vmatmul.mubr.f32.gmra.mrb[0].mxu0 %v10164
  %v10298 = vpop.f32.mrb[0].mxu0
  %v10299 = vadd.f32 0.0, %v10298
  %v10300 = vpop.f32.mrb[0].mxu0
  %10301 = vmatprep.mubr.f32.mxu0 0.0
  %10302 = vmatmul.mubr.f32.gmra.mrb[0].mxu0 %v10166
  %v10303 = vpop.f32.mrb[0].mxu0
  %v10304 = vadd.f32 0.0, %v10303
  %v10305 = vpop.f32.mrb[0].mxu0
  %10306 = vmatprep.mubr.f32.mxu0 0.0
  %10307 = vmatmul.mubr.f32.gmra.mrb[0].mxu0 %v10168
  %v10308 = vpop.f32.mrb[0].mxu0
  %v10309 = vadd.f32 0.0, %v10308
  %v10310 = vpop.f32.mrb[0].mxu0
  %10311 = vmatprep.mubr.f32.mxu0 0.0
  %10312 = vmatmul.mubr.f32.gmra.mrb[0].mxu0 %v10170
  %v10313 = vpop.f32.mrb[0].mxu0
  %v10314 = vadd.f32 0.0, %v10313
  %v10315 = vpop.f32.mrb[0].mxu0
  %10316 = vdwg.mxu0
  %v10317 = vadd.f32 %v10040, %v10239
  %v10318 = vadd.f32 %v10041, %v10244
  %v10319 = vadd.f32 %v10042, %v10249
  %v10320 = vadd.f32 %v10043, %v10254
  %v10321 = vadd.f32 %v10044, %v10259
  %v10322 = vadd.f32 %v10045, %v10264
  %v10323 = vadd.f32 %v10046, %v10269
  %v10324 = vadd.f32 %v10047, %v10274
  %v10325 = vadd.f32 %v10048, %v10279
  %v10326 = vadd.f32 %v10049, %v10284
  %v10327 = vadd.f32 %v10050, %v10289
  %v10328 = vadd.f32 %v10051, %v10294
  %v10329 = vadd.f32 %v10052, %v10299
  %v10330 = vadd.f32 %v10053, %v10304
  %v10331 = vadd.f32 %v10054, %v10309
  %v10332 = vadd.f32 %v10055, %v10314
  %v10333 = vld [vmem:[%s8946 + $0x2] sm:$0xf]
  %v10334 = vld [vmem:[%s8946 + $0xa] sm:$0xf]
  %v10335 = vld [vmem:[%s8946 + $0x12] sm:$0xf]
  %v10336 = vld [vmem:[%s8946 + $0x1a] sm:$0xf]
  %v10337 = vld [vmem:[%s8946 + $0x32] sm:$0xf]
  %v10338 = vld [vmem:[%s8946 + $0x3a] sm:$0xf]
  %v10339 = vld [vmem:[%s8946 + $0x42] sm:$0xf]
  %v10340 = vld [vmem:[%s8946 + $0x4a] sm:$0xf]
  %v10341 = vld [vmem:[%s8946 + $0x62] sm:$0xf]
  %v10342 = vld [vmem:[%s8946 + $0x6a] sm:$0xf]
  %v10343 = vld [vmem:[%s8946 + $0x72] sm:$0xf]
  %v10344 = vld [vmem:[%s8946 + $0x7a] sm:$0xf]
  %v10345 = vld [vmem:[%s8946 + $0x92] sm:$0xf]
  %v10346 = vld [vmem:[%s8946 + $0x9a] sm:$0xf]
  %v10347 = vld [vmem:[%s8946 + $0xa2] sm:$0xf]
  %v10348 = vld [vmem:[%s8946 + $0xaa] sm:$0xf]
  %v10349 = vld [vmem:[%s8946 + $0xc2] sm:$0xf]
  %v10350 = vld [vmem:[%s8946 + $0xca] sm:$0xf]
  %v10351 = vld [vmem:[%s8946 + $0xd2] sm:$0xf]
  %v10352 = vld [vmem:[%s8946 + $0xda] sm:$0xf]
  %v10353 = vld [vmem:[%s8946 + $0xf2] sm:$0xf]
  %v10354 = vld [vmem:[%s8946 + $0xfa] sm:$0xf]
  %v10355 = vld [vmem:[%s8946 + $0x102] sm:$0xf]
  %v10356 = vld [vmem:[%s8946 + $0x10a] sm:$0xf]
  %v10357 = vld [vmem:[%s8946 + $0x122] sm:$0xf]
  %v10358 = vld [vmem:[%s8946 + $0x12a] sm:$0xf]
  %v10359 = vld [vmem:[%s8946 + $0x132] sm:$0xf]
  %v10360 = vld [vmem:[%s8946 + $0x13a] sm:$0xf]
  %v10361 = vld [vmem:[%s8946 + $0x152] sm:$0xf]
  %v10362 = vld [vmem:[%s8946 + $0x15a] sm:$0xf]
  %v10363 = vld [vmem:[%s8946 + $0x162] sm:$0xf]
  %v10364 = vld [vmem:[%s8946 + $0x16a] sm:$0xf]
  %v10365 = vld [vmem:[%s3 + $0xa0] sm:$0xff]
  %v10366 = vld [vmem:[%s3 + $0xa8] sm:$0xff]
  %v10367 = vld [vmem:[%s3 + $0xb0] sm:$0xff]
  %v10368 = vld [vmem:[%s3 + $0xb8] sm:$0xff]
  %v10401 = vcombine.low %v10333, %v10334
  %v10402 = vcombine.low %v10335, %v10336
  %v10403 = vcombine.low %v10337, %v10338
  %v10404 = vcombine.low %v10339, %v10340
  %v10405 = vcombine.low %v10341, %v10342
  %v10406 = vcombine.low %v10343, %v10344
  %v10407 = vcombine.low %v10345, %v10346
  %v10408 = vcombine.low %v10347, %v10348
  %v10409 = vcombine.low %v10349, %v10350
  %v10410 = vcombine.low %v10351, %v10352
  %v10411 = vcombine.low %v10353, %v10354
  %v10412 = vcombine.low %v10355, %v10356
  %v10413 = vcombine.low %v10357, %v10358
  %v10414 = vcombine.low %v10359, %v10360
  %v10415 = vcombine.low %v10361, %v10362
  %v10416 = vcombine.low %v10363, %v10364
  %v10417 = vsel %vm7894, %v10401, 0
  %v10419 = vsel %vm7894, %v10402, 0
  %v10421 = vsel %vm7894, %v10403, 0
  %v10423 = vsel %vm7894, %v10404, 0
  %v10425 = vsel %vm7894, %v10405, 0
  %v10427 = vsel %vm7894, %v10406, 0
  %v10429 = vsel %vm7894, %v10407, 0
  %v10431 = vsel %vm7894, %v10408, 0
  %v10433 = vsel %vm7894, %v10409, 0
  %v10435 = vsel %vm7894, %v10410, 0
  %v10437 = vsel %vm7894, %v10411, 0
  %v10439 = vsel %vm7894, %v10412, 0
  %v10441 = vsel %vm7894, %v10413, 0
  %v10443 = vsel %vm7894, %v10414, 0
  %v10445 = vsel %vm7894, %v10415, 0
  %v10447 = vsel %vm7894, %v10416, 0
  %10449 = vmatprep.subr.mxu0 0.0
  %10450 = vmatpush1.msra.mxu0 %v10365
  %10451 = vmatprep.subr.mxu0 0.0
  %10452 = vmatpush1.msra.mxu0 %v10366
  %10453 = vmatprep.subr.mxu0 0.0
  %10454 = vmatpush1.msra.mxu0 %v10367
  %10455 = vmatprep.subr.mxu0 0.0
  %10456 = vmatpush1.msra.mxu0 %v10368
  %10457 = vmatprep.subr.mxu0 0.0
  %10458 = vmatpush1.msra.mxu0 0.0
  %10459 = vmatprep.subr.mxu0 0.0
  %10460 = vmatpush1.msra.mxu0 0.0
  %10461 = vmatprep.subr.mxu0 0.0
  %10462 = vmatpush1.msra.mxu0 0.0
  %10463 = vmatprep.subr.mxu0 0.0
  %10464 = vmatpush1.msra.mxu0 0.0
  %10465 = vmatprep.subr.mxu0 0.0
  %10466 = vmatpush1.msra.mxu0 0.0
  %10467 = vmatprep.subr.mxu0 0.0
  %10468 = vmatpush1.msra.mxu0 0.0
  %10469 = vmatprep.subr.mxu0 0.0
  %10470 = vmatpush1.msra.mxu0 0.0
  %10471 = vmatprep.subr.mxu0 0.0
  %10472 = vmatpush1.msra.mxu0 0.0
  %10473 = vmatprep.subr.mxu0 0.0
  %10474 = vmatpush1.msra.mxu0 0.0
  %10475 = vmatprep.subr.mxu0 0.0
  %10476 = vmatpush1.msra.mxu0 0.0
  %10477 = vmatprep.subr.mxu0 0.0
  %10478 = vmatpush1.msra.mxu0 0.0
  %10479 = vmatprep.subr.mxu0 0.0
  %10480 = vmatpush1.msra.mxu0 0.0
  %10481 = vmatprep.subr.mxu0 0.0
  %10482 = vmatpush1.msra.mxu0 0.0
  %10483 = vmatprep.subr.mxu0 0.0
  %10484 = vmatpush1.msra.mxu0 0.0
  %10485 = vmatprep.subr.mxu0 0.0
  %10486 = vmatpush1.msra.mxu0 0.0
  %10487 = vmatprep.subr.mxu0 0.0
  %10488 = vmatpush1.msra.mxu0 0.0
  %10489 = vmatprep.subr.mxu0 0.0
  %10490 = vmatpush1.msra.mxu0 0.0
  %10491 = vmatprep.subr.mxu0 0.0
  %10492 = vmatpush1.msra.mxu0 0.0
  %10493 = vmatprep.subr.mxu0 0.0
  %10494 = vmatpush1.msra.mxu0 0.0
  %10495 = vmatprep.subr.mxu0 0.0
  %10496 = vmatpush1.msra.mxu0 0.0
  %10497 = vmatprep.subr.mxu0 0.0
  %10498 = vmatpush1.msra.mxu0 0.0
  %10499 = vmatprep.subr.mxu0 0.0
  %10500 = vmatpush1.msra.mxu0 0.0
  %10501 = vmatprep.subr.mxu0 0.0
  %10502 = vmatpush1.msra.mxu0 0.0
  %10503 = vmatprep.subr.mxu0 0.0
  %10504 = vmatpush1.msra.mxu0 0.0
  %10505 = vmatprep.subr.mxu0 0.0
  %10506 = vmatpush1.msra.mxu0 0.0
  %10507 = vmatprep.subr.mxu0 0.0
  %10508 = vmatpush1.msra.mxu0 0.0
  %10509 = vmatprep.subr.mxu0 0.0
  %10510 = vmatpush1.msra.mxu0 0.0
  %10511 = vmatprep.subr.mxu0 0.0
  %10512 = vmatpush1.msra.mxu0 0.0
  %10513 = vmatprep.mubr.f32.mxu0 0.0
  %10514 = vmatmul.mubr.f32.gmra.mrb[0].mxu0 %v10417
  %v10515 = vpop.f32.mrb[0].mxu0
  %v10516 = vadd.f32 0.0, %v10515
  %v10517 = vpop.f32.mrb[0].mxu0
  %10518 = vmatprep.mubr.f32.mxu0 0.0
  %10519 = vmatmul.mubr.f32.gmra.mrb[0].mxu0 %v10419
  %v10520 = vpop.f32.mrb[0].mxu0
  %v10521 = vadd.f32 0.0, %v10520
  %v10522 = vpop.f32.mrb[0].mxu0
  %10523 = vmatprep.mubr.f32.mxu0 0.0
  %10524 = vmatmul.mubr.f32.gmra.mrb[0].mxu0 %v10421
  %v10525 = vpop.f32.mrb[0].mxu0
  %v10526 = vadd.f32 0.0, %v10525
  %v10527 = vpop.f32.mrb[0].mxu0
  %10528 = vmatprep.mubr.f32.mxu0 0.0
  %10529 = vmatmul.mubr.f32.gmra.mrb[0].mxu0 %v10423
  %v10530 = vpop.f32.mrb[0].mxu0
  %v10531 = vadd.f32 0.0, %v10530
  %v10532 = vpop.f32.mrb[0].mxu0
  %10533 = vmatprep.mubr.f32.mxu0 0.0
  %10534 = vmatmul.mubr.f32.gmra.mrb[0].mxu0 %v10425
  %v10535 = vpop.f32.mrb[0].mxu0
  %v10536 = vadd.f32 0.0, %v10535
  %v10537 = vpop.f32.mrb[0].mxu0
  %10538 = vmatprep.mubr.f32.mxu0 0.0
  %10539 = vmatmul.mubr.f32.gmra.mrb[0].mxu0 %v10427
  %v10540 = vpop.f32.mrb[0].mxu0
  %v10541 = vadd.f32 0.0, %v10540
  %v10542 = vpop.f32.mrb[0].mxu0
  %10543 = vmatprep.mubr.f32.mxu0 0.0
  %10544 = vmatmul.mubr.f32.gmra.mrb[0].mxu0 %v10429
  %v10545 = vpop.f32.mrb[0].mxu0
  %v10546 = vadd.f32 0.0, %v10545
  %v10547 = vpop.f32.mrb[0].mxu0
  %10548 = vmatprep.mubr.f32.mxu0 0.0
  %10549 = vmatmul.mubr.f32.gmra.mrb[0].mxu0 %v10431
  %v10550 = vpop.f32.mrb[0].mxu0
  %v10551 = vadd.f32 0.0, %v10550
  %v10552 = vpop.f32.mrb[0].mxu0
  %10553 = vmatprep.mubr.f32.mxu0 0.0
  %10554 = vmatmul.mubr.f32.gmra.mrb[0].mxu0 %v10433
  %v10555 = vpop.f32.mrb[0].mxu0
  %v10556 = vadd.f32 0.0, %v10555
  %v10557 = vpop.f32.mrb[0].mxu0
  %10558 = vmatprep.mubr.f32.mxu0 0.0
  %10559 = vmatmul.mubr.f32.gmra.mrb[0].mxu0 %v10435
  %v10560 = vpop.f32.mrb[0].mxu0
  %v10561 = vadd.f32 0.0, %v10560
  %v10562 = vpop.f32.mrb[0].mxu0
  %10563 = vmatprep.mubr.f32.mxu0 0.0
  %10564 = vmatmul.mubr.f32.gmra.mrb[0].mxu0 %v10437
  %v10565 = vpop.f32.mrb[0].mxu0
  %v10566 = vadd.f32 0.0, %v10565
  %v10567 = vpop.f32.mrb[0].mxu0
  %10568 = vmatprep.mubr.f32.mxu0 0.0
  %10569 = vmatmul.mubr.f32.gmra.mrb[0].mxu0 %v10439
  %v10570 = vpop.f32.mrb[0].mxu0
  %v10571 = vadd.f32 0.0, %v10570
  %v10572 = vpop.f32.mrb[0].mxu0
  %10573 = vmatprep.mubr.f32.mxu0 0.0
  %10574 = vmatmul.mubr.f32.gmra.mrb[0].mxu0 %v10441
  %v10575 = vpop.f32.mrb[0].mxu0
  %v10576 = vadd.f32 0.0, %v10575
  %v10577 = vpop.f32.mrb[0].mxu0
  %10578 = vmatprep.mubr.f32.mxu0 0.0
  %10579 = vmatmul.mubr.f32.gmra.mrb[0].mxu0 %v10443
  %v10580 = vpop.f32.mrb[0].mxu0
  %v10581 = vadd.f32 0.0, %v10580
  %v10582 = vpop.f32.mrb[0].mxu0
  %10583 = vmatprep.mubr.f32.mxu0 0.0
  %10584 = vmatmul.mubr.f32.gmra.mrb[0].mxu0 %v10445
  %v10585 = vpop.f32.mrb[0].mxu0
  %v10586 = vadd.f32 0.0, %v10585
  %v10587 = vpop.f32.mrb[0].mxu0
  %10588 = vmatprep.mubr.f32.mxu0 0.0
  %10589 = vmatmul.mubr.f32.gmra.mrb[0].mxu0 %v10447
  %v10590 = vpop.f32.mrb[0].mxu0
  %v10591 = vadd.f32 0.0, %v10590
  %v10592 = vpop.f32.mrb[0].mxu0
  %10593 = vdwg.mxu0
  %v10594 = vadd.f32 %v10317, %v10516
  %v10595 = vadd.f32 %v10318, %v10521
  %v10596 = vadd.f32 %v10319, %v10526
  %v10597 = vadd.f32 %v10320, %v10531
  %v10598 = vadd.f32 %v10321, %v10536
  %v10599 = vadd.f32 %v10322, %v10541
  %v10600 = vadd.f32 %v10323, %v10546
  %v10601 = vadd.f32 %v10324, %v10551
  %v10602 = vadd.f32 %v10325, %v10556
  %v10603 = vadd.f32 %v10326, %v10561
  %v10604 = vadd.f32 %v10327, %v10566
  %v10605 = vadd.f32 %v10328, %v10571
  %v10606 = vadd.f32 %v10329, %v10576
  %v10607 = vadd.f32 %v10330, %v10581
  %v10608 = vadd.f32 %v10331, %v10586
  %v10609 = vadd.f32 %v10332, %v10591
  %s10610 = scalar_lea.vmem [#allocation2], 16
  %v10611 = vld [vmem:[%s10610] sm:$0xf]
  %v10612 = vld [vmem:[%s10610 + $0x8] sm:$0xf]
  %v10613 = vld [vmem:[%s10610 + $0x10] sm:$0xf]
  %v10614 = vld [vmem:[%s10610 + $0x18] sm:$0xf]
  %v10615 = vld [vmem:[%s10610 + $0x30] sm:$0xf]
  %v10616 = vld [vmem:[%s10610 + $0x38] sm:$0xf]
  %v10617 = vld [vmem:[%s10610 + $0x40] sm:$0xf]
  %v10618 = vld [vmem:[%s10610 + $0x48] sm:$0xf]
  %v10619 = vld [vmem:[%s10610 + $0x60] sm:$0xf]
  %v10620 = vld [vmem:[%s10610 + $0x68] sm:$0xf]
  %v10621 = vld [vmem:[%s10610 + $0x70] sm:$0xf]
  %v10622 = vld [vmem:[%s10610 + $0x78] sm:$0xf]
  %v10623 = vld [vmem:[%s10610 + $0x90] sm:$0xf]
  %v10624 = vld [vmem:[%s10610 + $0x98] sm:$0xf]
  %v10625 = vld [vmem:[%s10610 + $0xa0] sm:$0xf]
  %v10626 = vld [vmem:[%s10610 + $0xa8] sm:$0xf]
  %v10627 = vld [vmem:[%s10610 + $0xc0] sm:$0xf]
  %v10628 = vld [vmem:[%s10610 + $0xc8] sm:$0xf]
  %v10629 = vld [vmem:[%s10610 + $0xd0] sm:$0xf]
  %v10630 = vld [vmem:[%s10610 + $0xd8] sm:$0xf]
  %v10631 = vld [vmem:[%s10610 + $0xf0] sm:$0xf]
  %v10632 = vld [vmem:[%s10610 + $0xf8] sm:$0xf]
  %v10633 = vld [vmem:[%s10610 + $0x100] sm:$0xf]
  %v10634 = vld [vmem:[%s10610 + $0x108] sm:$0xf]
  %v10635 = vld [vmem:[%s10610 + $0x120] sm:$0xf]
  %v10636 = vld [vmem:[%s10610 + $0x128] sm:$0xf]
  %v10637 = vld [vmem:[%s10610 + $0x130] sm:$0xf]
  %v10638 = vld [vmem:[%s10610 + $0x138] sm:$0xf]
  %v10639 = vld [vmem:[%s10610 + $0x150] sm:$0xf]
  %v10640 = vld [vmem:[%s10610 + $0x158] sm:$0xf]
  %v10641 = vld [vmem:[%s10610 + $0x160] sm:$0xf]
  %v10642 = vld [vmem:[%s10610 + $0x168] sm:$0xf]
  %v10643 = vld [vmem:[%s3 + $0xc0] sm:$0xff]
  %v10644 = vld [vmem:[%s3 + $0xc8] sm:$0xff]
  %v10645 = vld [vmem:[%s3 + $0xd0] sm:$0xff]
  %v10646 = vld [vmem:[%s3 + $0xd8] sm:$0xff]
  %v10679 = vcombine.low %v10611, %v10612
  %v10680 = vcombine.low %v10613, %v10614
  %v10681 = vcombine.low %v10615, %v10616
  %v10682 = vcombine.low %v10617, %v10618
  %v10683 = vcombine.low %v10619, %v10620
  %v10684 = vcombine.low %v10621, %v10622
  %v10685 = vcombine.low %v10623, %v10624
  %v10686 = vcombine.low %v10625, %v10626
  %v10687 = vcombine.low %v10627, %v10628
  %v10688 = vcombine.low %v10629, %v10630
  %v10689 = vcombine.low %v10631, %v10632
  %v10690 = vcombine.low %v10633, %v10634
  %v10691 = vcombine.low %v10635, %v10636
  %v10692 = vcombine.low %v10637, %v10638
  %v10693 = vcombine.low %v10639, %v10640
  %v10694 = vcombine.low %v10641, %v10642
  %v10695 = vsel %vm7894, %v10679, 0
  %v10697 = vsel %vm7894, %v10680, 0
  %v10699 = vsel %vm7894, %v10681, 0
  %v10701 = vsel %vm7894, %v10682, 0
  %v10703 = vsel %vm7894, %v10683, 0
  %v10705 = vsel %vm7894, %v10684, 0
  %v10707 = vsel %vm7894, %v10685, 0
  %v10709 = vsel %vm7894, %v10686, 0
  %v10711 = vsel %vm7894, %v10687, 0
  %v10713 = vsel %vm7894, %v10688, 0
  %v10715 = vsel %vm7894, %v10689, 0
  %v10717 = vsel %vm7894, %v10690, 0
  %v10719 = vsel %vm7894, %v10691, 0
  %v10721 = vsel %vm7894, %v10692, 0
  %v10723 = vsel %vm7894, %v10693, 0
  %v10725 = vsel %vm7894, %v10694, 0
  %10727 = vmatprep.subr.mxu0 0.0
  %10728 = vmatpush1.msra.mxu0 %v10643
  %10729 = vmatprep.subr.mxu0 0.0
  %10730 = vmatpush1.msra.mxu0 %v10644
  %10731 = vmatprep.subr.mxu0 0.0
  %10732 = vmatpush1.msra.mxu0 %v10645
  %10733 = vmatprep.subr.mxu0 0.0
  %10734 = vmatpush1.msra.mxu0 %v10646
  %10735 = vmatprep.subr.mxu0 0.0
  %10736 = vmatpush1.msra.mxu0 0.0
  %10737 = vmatprep.subr.mxu0 0.0
  %10738 = vmatpush1.msra.mxu0 0.0
  %10739 = vmatprep.subr.mxu0 0.0
  %10740 = vmatpush1.msra.mxu0 0.0
  %10741 = vmatprep.subr.mxu0 0.0
  %10742 = vmatpush1.msra.mxu0 0.0
  %10743 = vmatprep.subr.mxu0 0.0
  %10744 = vmatpush1.msra.mxu0 0.0
  %10745 = vmatprep.subr.mxu0 0.0
  %10746 = vmatpush1.msra.mxu0 0.0
  %10747 = vmatprep.subr.mxu0 0.0
  %10748 = vmatpush1.msra.mxu0 0.0
  %10749 = vmatprep.subr.mxu0 0.0
  %10750 = vmatpush1.msra.mxu0 0.0
  %10751 = vmatprep.subr.mxu0 0.0
  %10752 = vmatpush1.msra.mxu0 0.0
  %10753 = vmatprep.subr.mxu0 0.0
  %10754 = vmatpush1.msra.mxu0 0.0
  %10755 = vmatprep.subr.mxu0 0.0
  %10756 = vmatpush1.msra.mxu0 0.0
  %10757 = vmatprep.subr.mxu0 0.0
  %10758 = vmatpush1.msra.mxu0 0.0
  %10759 = vmatprep.subr.mxu0 0.0
  %10760 = vmatpush1.msra.mxu0 0.0
  %10761 = vmatprep.subr.mxu0 0.0
  %10762 = vmatpush1.msra.mxu0 0.0
  %10763 = vmatprep.subr.mxu0 0.0
  %10764 = vmatpush1.msra.mxu0 0.0
  %10765 = vmatprep.subr.mxu0 0.0
  %10766 = vmatpush1.msra.mxu0 0.0
  %10767 = vmatprep.subr.mxu0 0.0
  %10768 = vmatpush1.msra.mxu0 0.0
  %10769 = vmatprep.subr.mxu0 0.0
  %10770 = vmatpush1.msra.mxu0 0.0
  %10771 = vmatprep.subr.mxu0 0.0
  %10772 = vmatpush1.msra.mxu0 0.0
  %10773 = vmatprep.subr.mxu0 0.0
  %10774 = vmatpush1.msra.mxu0 0.0
  %10775 = vmatprep.subr.mxu0 0.0
  %10776 = vmatpush1.msra.mxu0 0.0
  %10777 = vmatprep.subr.mxu0 0.0
  %10778 = vmatpush1.msra.mxu0 0.0
  %10779 = vmatprep.subr.mxu0 0.0
  %10780 = vmatpush1.msra.mxu0 0.0
  %10781 = vmatprep.subr.mxu0 0.0
  %10782 = vmatpush1.msra.mxu0 0.0
  %10783 = vmatprep.subr.mxu0 0.0
  %10784 = vmatpush1.msra.mxu0 0.0
  %10785 = vmatprep.subr.mxu0 0.0
  %10786 = vmatpush1.msra.mxu0 0.0
  %10787 = vmatprep.subr.mxu0 0.0
  %10788 = vmatpush1.msra.mxu0 0.0
  %10789 = vmatprep.subr.mxu0 0.0
  %10790 = vmatpush1.msra.mxu0 0.0
  %10791 = vmatprep.mubr.f32.mxu0 0.0
  %10792 = vmatmul.mubr.f32.gmra.mrb[0].mxu0 %v10695
  %v10793 = vpop.f32.mrb[0].mxu0
  %v10794 = vadd.f32 0.0, %v10793
  %v10795 = vpop.f32.mrb[0].mxu0
  %10796 = vmatprep.mubr.f32.mxu0 0.0
  %10797 = vmatmul.mubr.f32.gmra.mrb[0].mxu0 %v10697
  %v10798 = vpop.f32.mrb[0].mxu0
  %v10799 = vadd.f32 0.0, %v10798
  %v10800 = vpop.f32.mrb[0].mxu0
  %10801 = vmatprep.mubr.f32.mxu0 0.0
  %10802 = vmatmul.mubr.f32.gmra.mrb[0].mxu0 %v10699
  %v10803 = vpop.f32.mrb[0].mxu0
  %v10804 = vadd.f32 0.0, %v10803
  %v10805 = vpop.f32.mrb[0].mxu0
  %10806 = vmatprep.mubr.f32.mxu0 0.0
  %10807 = vmatmul.mubr.f32.gmra.mrb[0].mxu0 %v10701
  %v10808 = vpop.f32.mrb[0].mxu0
  %v10809 = vadd.f32 0.0, %v10808
  %v10810 = vpop.f32.mrb[0].mxu0
  %10811 = vmatprep.mubr.f32.mxu0 0.0
  %10812 = vmatmul.mubr.f32.gmra.mrb[0].mxu0 %v10703
  %v10813 = vpop.f32.mrb[0].mxu0
  %v10814 = vadd.f32 0.0, %v10813
  %v10815 = vpop.f32.mrb[0].mxu0
  %10816 = vmatprep.mubr.f32.mxu0 0.0
  %10817 = vmatmul.mubr.f32.gmra.mrb[0].mxu0 %v10705
  %v10818 = vpop.f32.mrb[0].mxu0
  %v10819 = vadd.f32 0.0, %v10818
  %v10820 = vpop.f32.mrb[0].mxu0
  %10821 = vmatprep.mubr.f32.mxu0 0.0
  %10822 = vmatmul.mubr.f32.gmra.mrb[0].mxu0 %v10707
  %v10823 = vpop.f32.mrb[0].mxu0
  %v10824 = vadd.f32 0.0, %v10823
  %v10825 = vpop.f32.mrb[0].mxu0
  %10826 = vmatprep.mubr.f32.mxu0 0.0
  %10827 = vmatmul.mubr.f32.gmra.mrb[0].mxu0 %v10709
  %v10828 = vpop.f32.mrb[0].mxu0
  %v10829 = vadd.f32 0.0, %v10828
  %v10830 = vpop.f32.mrb[0].mxu0
  %10831 = vmatprep.mubr.f32.mxu0 0.0
  %10832 = vmatmul.mubr.f32.gmra.mrb[0].mxu0 %v10711
  %v10833 = vpop.f32.mrb[0].mxu0
  %v10834 = vadd.f32 0.0, %v10833
  %v10835 = vpop.f32.mrb[0].mxu0
  %10836 = vmatprep.mubr.f32.mxu0 0.0
  %10837 = vmatmul.mubr.f32.gmra.mrb[0].mxu0 %v10713
  %v10838 = vpop.f32.mrb[0].mxu0
  %v10839 = vadd.f32 0.0, %v10838
  %v10840 = vpop.f32.mrb[0].mxu0
  %10841 = vmatprep.mubr.f32.mxu0 0.0
  %10842 = vmatmul.mubr.f32.gmra.mrb[0].mxu0 %v10715
  %v10843 = vpop.f32.mrb[0].mxu0
  %v10844 = vadd.f32 0.0, %v10843
  %v10845 = vpop.f32.mrb[0].mxu0
  %10846 = vmatprep.mubr.f32.mxu0 0.0
  %10847 = vmatmul.mubr.f32.gmra.mrb[0].mxu0 %v10717
  %v10848 = vpop.f32.mrb[0].mxu0
  %v10849 = vadd.f32 0.0, %v10848
  %v10850 = vpop.f32.mrb[0].mxu0
  %10851 = vmatprep.mubr.f32.mxu0 0.0
  %10852 = vmatmul.mubr.f32.gmra.mrb[0].mxu0 %v10719
  %v10853 = vpop.f32.mrb[0].mxu0
  %v10854 = vadd.f32 0.0, %v10853
  %v10855 = vpop.f32.mrb[0].mxu0
  %10856 = vmatprep.mubr.f32.mxu0 0.0
  %10857 = vmatmul.mubr.f32.gmra.mrb[0].mxu0 %v10721
  %v10858 = vpop.f32.mrb[0].mxu0
  %v10859 = vadd.f32 0.0, %v10858
  %v10860 = vpop.f32.mrb[0].mxu0
  %10861 = vmatprep.mubr.f32.mxu0 0.0
  %10862 = vmatmul.mubr.f32.gmra.mrb[0].mxu0 %v10723
  %v10863 = vpop.f32.mrb[0].mxu0
  %v10864 = vadd.f32 0.0, %v10863
  %v10865 = vpop.f32.mrb[0].mxu0
  %10866 = vmatprep.mubr.f32.mxu0 0.0
  %10867 = vmatmul.mubr.f32.gmra.mrb[0].mxu0 %v10725
  %v10868 = vpop.f32.mrb[0].mxu0
  %v10869 = vadd.f32 0.0, %v10868
  %v10870 = vpop.f32.mrb[0].mxu0
  %10871 = vdwg.mxu0
  %v10872 = vadd.f32 %v10594, %v10794
  %v10873 = vadd.f32 %v10595, %v10799
  %v10874 = vadd.f32 %v10596, %v10804
  %v10875 = vadd.f32 %v10597, %v10809
  %v10876 = vadd.f32 %v10598, %v10814
  %v10877 = vadd.f32 %v10599, %v10819
  %v10878 = vadd.f32 %v10600, %v10824
  %v10879 = vadd.f32 %v10601, %v10829
  %v10880 = vadd.f32 %v10602, %v10834
  %v10881 = vadd.f32 %v10603, %v10839
  %v10882 = vadd.f32 %v10604, %v10844
  %v10883 = vadd.f32 %v10605, %v10849
  %v10884 = vadd.f32 %v10606, %v10854
  %v10885 = vadd.f32 %v10607, %v10859
  %v10886 = vadd.f32 %v10608, %v10864
  %v10887 = vadd.f32 %v10609, %v10869
  %v10888 = vld [vmem:[%s10610 + $0x1] sm:$0xf]
  %v10889 = vld [vmem:[%s10610 + $0x9] sm:$0xf]
  %v10890 = vld [vmem:[%s10610 + $0x11] sm:$0xf]
  %v10891 = vld [vmem:[%s10610 + $0x19] sm:$0xf]
  %v10892 = vld [vmem:[%s10610 + $0x31] sm:$0xf]
  %v10893 = vld [vmem:[%s10610 + $0x39] sm:$0xf]
  %v10894 = vld [vmem:[%s10610 + $0x41] sm:$0xf]
  %v10895 = vld [vmem:[%s10610 + $0x49] sm:$0xf]
  %v10896 = vld [vmem:[%s10610 + $0x61] sm:$0xf]
  %v10897 = vld [vmem:[%s10610 + $0x69] sm:$0xf]
  %v10898 = vld [vmem:[%s10610 + $0x71] sm:$0xf]
  %v10899 = vld [vmem:[%s10610 + $0x79] sm:$0xf]
  %v10900 = vld [vmem:[%s10610 + $0x91] sm:$0xf]
  %v10901 = vld [vmem:[%s10610 + $0x99] sm:$0xf]
  %v10902 = vld [vmem:[%s10610 + $0xa1] sm:$0xf]
  %v10903 = vld [vmem:[%s10610 + $0xa9] sm:$0xf]
  %v10904 = vld [vmem:[%s10610 + $0xc1] sm:$0xf]
  %v10905 = vld [vmem:[%s10610 + $0xc9] sm:$0xf]
  %v10906 = vld [vmem:[%s10610 + $0xd1] sm:$0xf]
  %v10907 = vld [vmem:[%s10610 + $0xd9] sm:$0xf]
  %v10908 = vld [vmem:[%s10610 + $0xf1] sm:$0xf]
  %v10909 = vld [vmem:[%s10610 + $0xf9] sm:$0xf]
  %v10910 = vld [vmem:[%s10610 + $0x101] sm:$0xf]
  %v10911 = vld [vmem:[%s10610 + $0x109] sm:$0xf]
  %v10912 = vld [vmem:[%s10610 + $0x121] sm:$0xf]
  %v10913 = vld [vmem:[%s10610 + $0x129] sm:$0xf]
  %v10914 = vld [vmem:[%s10610 + $0x131] sm:$0xf]
  %v10915 = vld [vmem:[%s10610 + $0x139] sm:$0xf]
  %v10916 = vld [vmem:[%s10610 + $0x151] sm:$0xf]
  %v10917 = vld [vmem:[%s10610 + $0x159] sm:$0xf]
  %v10918 = vld [vmem:[%s10610 + $0x161] sm:$0xf]
  %v10919 = vld [vmem:[%s10610 + $0x169] sm:$0xf]
  %v10920 = vld [vmem:[%s3 + $0xe0] sm:$0xff]
  %v10921 = vld [vmem:[%s3 + $0xe8] sm:$0xff]
  %v10922 = vld [vmem:[%s3 + $0xf0] sm:$0xff]
  %v10923 = vld [vmem:[%s3 + $0xf8] sm:$0xff]
  %v10956 = vcombine.low %v10888, %v10889
  %v10957 = vcombine.low %v10890, %v10891
  %v10958 = vcombine.low %v10892, %v10893
  %v10959 = vcombine.low %v10894, %v10895
  %v10960 = vcombine.low %v10896, %v10897
  %v10961 = vcombine.low %v10898, %v10899
  %v10962 = vcombine.low %v10900, %v10901
  %v10963 = vcombine.low %v10902, %v10903
  %v10964 = vcombine.low %v10904, %v10905
  %v10965 = vcombine.low %v10906, %v10907
  %v10966 = vcombine.low %v10908, %v10909
  %v10967 = vcombine.low %v10910, %v10911
  %v10968 = vcombine.low %v10912, %v10913
  %v10969 = vcombine.low %v10914, %v10915
  %v10970 = vcombine.low %v10916, %v10917
  %v10971 = vcombine.low %v10918, %v10919
  %v10972 = vsel %vm7894, %v10956, 0
  %v10974 = vsel %vm7894, %v10957, 0
  %v10976 = vsel %vm7894, %v10958, 0
  %v10978 = vsel %vm7894, %v10959, 0
  %v10980 = vsel %vm7894, %v10960, 0
  %v10982 = vsel %vm7894, %v10961, 0
  %v10984 = vsel %vm7894, %v10962, 0
  %v10986 = vsel %vm7894, %v10963, 0
  %v10988 = vsel %vm7894, %v10964, 0
  %v10990 = vsel %vm7894, %v10965, 0
  %v10992 = vsel %vm7894, %v10966, 0
  %v10994 = vsel %vm7894, %v10967, 0
  %v10996 = vsel %vm7894, %v10968, 0
  %v10998 = vsel %vm7894, %v10969, 0
  %v11000 = vsel %vm7894, %v10970, 0
  %v11002 = vsel %vm7894, %v10971, 0
  %11004 = vmatprep.subr.mxu0 0.0
  %11005 = vmatpush1.msra.mxu0 %v10920
  %11006 = vmatprep.subr.mxu0 0.0
  %11007 = vmatpush1.msra.mxu0 %v10921
  %11008 = vmatprep.subr.mxu0 0.0
  %11009 = vmatpush1.msra.mxu0 %v10922
  %11010 = vmatprep.subr.mxu0 0.0
  %11011 = vmatpush1.msra.mxu0 %v10923
  %11012 = vmatprep.subr.mxu0 0.0
  %11013 = vmatpush1.msra.mxu0 0.0
  %11014 = vmatprep.subr.mxu0 0.0
  %11015 = vmatpush1.msra.mxu0 0.0
  %11016 = vmatprep.subr.mxu0 0.0
  %11017 = vmatpush1.msra.mxu0 0.0
  %11018 = vmatprep.subr.mxu0 0.0
  %11019 = vmatpush1.msra.mxu0 0.0
  %11020 = vmatprep.subr.mxu0 0.0
  %11021 = vmatpush1.msra.mxu0 0.0
  %11022 = vmatprep.subr.mxu0 0.0
  %11023 = vmatpush1.msra.mxu0 0.0
  %11024 = vmatprep.subr.mxu0 0.0
  %11025 = vmatpush1.msra.mxu0 0.0
  %11026 = vmatprep.subr.mxu0 0.0
  %11027 = vmatpush1.msra.mxu0 0.0
  %11028 = vmatprep.subr.mxu0 0.0
  %11029 = vmatpush1.msra.mxu0 0.0
  %11030 = vmatprep.subr.mxu0 0.0
  %11031 = vmatpush1.msra.mxu0 0.0
  %11032 = vmatprep.subr.mxu0 0.0
  %11033 = vmatpush1.msra.mxu0 0.0
  %11034 = vmatprep.subr.mxu0 0.0
  %11035 = vmatpush1.msra.mxu0 0.0
  %11036 = vmatprep.subr.mxu0 0.0
  %11037 = vmatpush1.msra.mxu0 0.0
  %11038 = vmatprep.subr.mxu0 0.0
  %11039 = vmatpush1.msra.mxu0 0.0
  %11040 = vmatprep.subr.mxu0 0.0
  %11041 = vmatpush1.msra.mxu0 0.0
  %11042 = vmatprep.subr.mxu0 0.0
  %11043 = vmatpush1.msra.mxu0 0.0
  %11044 = vmatprep.subr.mxu0 0.0
  %11045 = vmatpush1.msra.mxu0 0.0
  %11046 = vmatprep.subr.mxu0 0.0
  %11047 = vmatpush1.msra.mxu0 0.0
  %11048 = vmatprep.subr.mxu0 0.0
  %11049 = vmatpush1.msra.mxu0 0.0
  %11050 = vmatprep.subr.mxu0 0.0
  %11051 = vmatpush1.msra.mxu0 0.0
  %11052 = vmatprep.subr.mxu0 0.0
  %11053 = vmatpush1.msra.mxu0 0.0
  %11054 = vmatprep.subr.mxu0 0.0
  %11055 = vmatpush1.msra.mxu0 0.0
  %11056 = vmatprep.subr.mxu0 0.0
  %11057 = vmatpush1.msra.mxu0 0.0
  %11058 = vmatprep.subr.mxu0 0.0
  %11059 = vmatpush1.msra.mxu0 0.0
  %11060 = vmatprep.subr.mxu0 0.0
  %11061 = vmatpush1.msra.mxu0 0.0
  %11062 = vmatprep.subr.mxu0 0.0
  %11063 = vmatpush1.msra.mxu0 0.0
  %11064 = vmatprep.subr.mxu0 0.0
  %11065 = vmatpush1.msra.mxu0 0.0
  %11066 = vmatprep.subr.mxu0 0.0
  %11067 = vmatpush1.msra.mxu0 0.0
  %11068 = vmatprep.mubr.f32.mxu0 0.0
  %11069 = vmatmul.mubr.f32.gmra.mrb[0].mxu0 %v10972
  %v11070 = vpop.f32.mrb[0].mxu0
  %v11071 = vadd.f32 0.0, %v11070
  %v11072 = vpop.f32.mrb[0].mxu0
  %11073 = vmatprep.mubr.f32.mxu0 0.0
  %11074 = vmatmul.mubr.f32.gmra.mrb[0].mxu0 %v10974
  %v11075 = vpop.f32.mrb[0].mxu0
  %v11076 = vadd.f32 0.0, %v11075
  %v11077 = vpop.f32.mrb[0].mxu0
  %11078 = vmatprep.mubr.f32.mxu0 0.0
  %11079 = vmatmul.mubr.f32.gmra.mrb[0].mxu0 %v10976
  %v11080 = vpop.f32.mrb[0].mxu0
  %v11081 = vadd.f32 0.0, %v11080
  %v11082 = vpop.f32.mrb[0].mxu0
  %11083 = vmatprep.mubr.f32.mxu0 0.0
  %11084 = vmatmul.mubr.f32.gmra.mrb[0].mxu0 %v10978
  %v11085 = vpop.f32.mrb[0].mxu0
  %v11086 = vadd.f32 0.0, %v11085
  %v11087 = vpop.f32.mrb[0].mxu0
  %11088 = vmatprep.mubr.f32.mxu0 0.0
  %11089 = vmatmul.mubr.f32.gmra.mrb[0].mxu0 %v10980
  %v11090 = vpop.f32.mrb[0].mxu0
  %v11091 = vadd.f32 0.0, %v11090
  %v11092 = vpop.f32.mrb[0].mxu0
  %11093 = vmatprep.mubr.f32.mxu0 0.0
  %11094 = vmatmul.mubr.f32.gmra.mrb[0].mxu0 %v10982
  %v11095 = vpop.f32.mrb[0].mxu0
  %v11096 = vadd.f32 0.0, %v11095
  %v11097 = vpop.f32.mrb[0].mxu0
  %11098 = vmatprep.mubr.f32.mxu0 0.0
  %11099 = vmatmul.mubr.f32.gmra.mrb[0].mxu0 %v10984
  %v11100 = vpop.f32.mrb[0].mxu0
  %v11101 = vadd.f32 0.0, %v11100
  %v11102 = vpop.f32.mrb[0].mxu0
  %11103 = vmatprep.mubr.f32.mxu0 0.0
  %11104 = vmatmul.mubr.f32.gmra.mrb[0].mxu0 %v10986
  %v11105 = vpop.f32.mrb[0].mxu0
  %v11106 = vadd.f32 0.0, %v11105
  %v11107 = vpop.f32.mrb[0].mxu0
  %11108 = vmatprep.mubr.f32.mxu0 0.0
  %11109 = vmatmul.mubr.f32.gmra.mrb[0].mxu0 %v10988
  %v11110 = vpop.f32.mrb[0].mxu0
  %v11111 = vadd.f32 0.0, %v11110
  %v11112 = vpop.f32.mrb[0].mxu0
  %11113 = vmatprep.mubr.f32.mxu0 0.0
  %11114 = vmatmul.mubr.f32.gmra.mrb[0].mxu0 %v10990
  %v11115 = vpop.f32.mrb[0].mxu0
  %v11116 = vadd.f32 0.0, %v11115
  %v11117 = vpop.f32.mrb[0].mxu0
  %11118 = vmatprep.mubr.f32.mxu0 0.0
  %11119 = vmatmul.mubr.f32.gmra.mrb[0].mxu0 %v10992
  %v11120 = vpop.f32.mrb[0].mxu0
  %v11121 = vadd.f32 0.0, %v11120
  %v11122 = vpop.f32.mrb[0].mxu0
  %11123 = vmatprep.mubr.f32.mxu0 0.0
  %11124 = vmatmul.mubr.f32.gmra.mrb[0].mxu0 %v10994
  %v11125 = vpop.f32.mrb[0].mxu0
  %v11126 = vadd.f32 0.0, %v11125
  %v11127 = vpop.f32.mrb[0].mxu0
  %11128 = vmatprep.mubr.f32.mxu0 0.0
  %11129 = vmatmul.mubr.f32.gmra.mrb[0].mxu0 %v10996
  %v11130 = vpop.f32.mrb[0].mxu0
  %v11131 = vadd.f32 0.0, %v11130
  %v11132 = vpop.f32.mrb[0].mxu0
  %11133 = vmatprep.mubr.f32.mxu0 0.0
  %11134 = vmatmul.mubr.f32.gmra.mrb[0].mxu0 %v10998
  %v11135 = vpop.f32.mrb[0].mxu0
  %v11136 = vadd.f32 0.0, %v11135
  %v11137 = vpop.f32.mrb[0].mxu0
  %11138 = vmatprep.mubr.f32.mxu0 0.0
  %11139 = vmatmul.mubr.f32.gmra.mrb[0].mxu0 %v11000
  %v11140 = vpop.f32.mrb[0].mxu0
  %v11141 = vadd.f32 0.0, %v11140
  %v11142 = vpop.f32.mrb[0].mxu0
  %11143 = vmatprep.mubr.f32.mxu0 0.0
  %11144 = vmatmul.mubr.f32.gmra.mrb[0].mxu0 %v11002
  %v11145 = vpop.f32.mrb[0].mxu0
  %v11146 = vadd.f32 0.0, %v11145
  %v11147 = vpop.f32.mrb[0].mxu0
  %11148 = vdwg.mxu0
  %v11149 = vadd.f32 %v10872, %v11071
  %v11150 = vadd.f32 %v10873, %v11076
  %v11151 = vadd.f32 %v10874, %v11081
  %v11152 = vadd.f32 %v10875, %v11086
  %v11153 = vadd.f32 %v10876, %v11091
  %v11154 = vadd.f32 %v10877, %v11096
  %v11155 = vadd.f32 %v10878, %v11101
  %v11156 = vadd.f32 %v10879, %v11106
  %v11157 = vadd.f32 %v10880, %v11111
  %v11158 = vadd.f32 %v10881, %v11116
  %v11159 = vadd.f32 %v10882, %v11121
  %v11160 = vadd.f32 %v10883, %v11126
  %v11161 = vadd.f32 %v10884, %v11131
  %v11162 = vadd.f32 %v10885, %v11136
  %v11163 = vadd.f32 %v10886, %v11141
  %v11164 = vadd.f32 %v10887, %v11146
  %v11165 = vld [vmem:[%s10610 + $0x2] sm:$0xf]
  %v11166 = vld [vmem:[%s10610 + $0xa] sm:$0xf]
  %v11167 = vld [vmem:[%s10610 + $0x12] sm:$0xf]
  %v11168 = vld [vmem:[%s10610 + $0x1a] sm:$0xf]
  %v11169 = vld [vmem:[%s10610 + $0x32] sm:$0xf]
  %v11170 = vld [vmem:[%s10610 + $0x3a] sm:$0xf]
  %v11171 = vld [vmem:[%s10610 + $0x42] sm:$0xf]
  %v11172 = vld [vmem:[%s10610 + $0x4a] sm:$0xf]
  %v11173 = vld [vmem:[%s10610 + $0x62] sm:$0xf]
  %v11174 = vld [vmem:[%s10610 + $0x6a] sm:$0xf]
  %v11175 = vld [vmem:[%s10610 + $0x72] sm:$0xf]
  %v11176 = vld [vmem:[%s10610 + $0x7a] sm:$0xf]
  %v11177 = vld [vmem:[%s10610 + $0x92] sm:$0xf]
  %v11178 = vld [vmem:[%s10610 + $0x9a] sm:$0xf]
  %v11179 = vld [vmem:[%s10610 + $0xa2] sm:$0xf]
  %v11180 = vld [vmem:[%s10610 + $0xaa] sm:$0xf]
  %v11181 = vld [vmem:[%s10610 + $0xc2] sm:$0xf]
  %v11182 = vld [vmem:[%s10610 + $0xca] sm:$0xf]
  %v11183 = vld [vmem:[%s10610 + $0xd2] sm:$0xf]
  %v11184 = vld [vmem:[%s10610 + $0xda] sm:$0xf]
  %v11185 = vld [vmem:[%s10610 + $0xf2] sm:$0xf]
  %v11186 = vld [vmem:[%s10610 + $0xfa] sm:$0xf]
  %v11187 = vld [vmem:[%s10610 + $0x102] sm:$0xf]
  %v11188 = vld [vmem:[%s10610 + $0x10a] sm:$0xf]
  %v11189 = vld [vmem:[%s10610 + $0x122] sm:$0xf]
  %v11190 = vld [vmem:[%s10610 + $0x12a] sm:$0xf]
  %v11191 = vld [vmem:[%s10610 + $0x132] sm:$0xf]
  %v11192 = vld [vmem:[%s10610 + $0x13a] sm:$0xf]
  %v11193 = vld [vmem:[%s10610 + $0x152] sm:$0xf]
  %v11194 = vld [vmem:[%s10610 + $0x15a] sm:$0xf]
  %v11195 = vld [vmem:[%s10610 + $0x162] sm:$0xf]
  %v11196 = vld [vmem:[%s10610 + $0x16a] sm:$0xf]
  %v11197 = vld [vmem:[%s3 + $0x100] sm:$0xff]
  %v11198 = vld [vmem:[%s3 + $0x108] sm:$0xff]
  %v11199 = vld [vmem:[%s3 + $0x110] sm:$0xff]
  %v11200 = vld [vmem:[%s3 + $0x118] sm:$0xff]
  %v11233 = vcombine.low %v11165, %v11166
  %v11234 = vcombine.low %v11167, %v11168
  %v11235 = vcombine.low %v11169, %v11170
  %v11236 = vcombine.low %v11171, %v11172
  %v11237 = vcombine.low %v11173, %v11174
  %v11238 = vcombine.low %v11175, %v11176
  %v11239 = vcombine.low %v11177, %v11178
  %v11240 = vcombine.low %v11179, %v11180
  %v11241 = vcombine.low %v11181, %v11182
  %v11242 = vcombine.low %v11183, %v11184
  %v11243 = vcombine.low %v11185, %v11186
  %v11244 = vcombine.low %v11187, %v11188
  %v11245 = vcombine.low %v11189, %v11190
  %v11246 = vcombine.low %v11191, %v11192
  %v11247 = vcombine.low %v11193, %v11194
  %v11248 = vcombine.low %v11195, %v11196
  %v11249 = vsel %vm7894, %v11233, 0
  %v11251 = vsel %vm7894, %v11234, 0
  %v11253 = vsel %vm7894, %v11235, 0
  %v11255 = vsel %vm7894, %v11236, 0
  %v11257 = vsel %vm7894, %v11237, 0
  %v11259 = vsel %vm7894, %v11238, 0
  %v11261 = vsel %vm7894, %v11239, 0
  %v11263 = vsel %vm7894, %v11240, 0
  %v11265 = vsel %vm7894, %v11241, 0
  %v11267 = vsel %vm7894, %v11242, 0
  %v11269 = vsel %vm7894, %v11243, 0
  %v11271 = vsel %vm7894, %v11244, 0
  %v11273 = vsel %vm7894, %v11245, 0
  %v11275 = vsel %vm7894, %v11246, 0
  %v11277 = vsel %vm7894, %v11247, 0
  %v11279 = vsel %vm7894, %v11248, 0
  %11281 = vmatprep.subr.mxu0 0.0
  %11282 = vmatpush1.msra.mxu0 %v11197
  %11283 = vmatprep.subr.mxu0 0.0
  %11284 = vmatpush1.msra.mxu0 %v11198
  %11285 = vmatprep.subr.mxu0 0.0
  %11286 = vmatpush1.msra.mxu0 %v11199
  %11287 = vmatprep.subr.mxu0 0.0
  %11288 = vmatpush1.msra.mxu0 %v11200
  %11289 = vmatprep.subr.mxu0 0.0
  %11290 = vmatpush1.msra.mxu0 0.0
  %11291 = vmatprep.subr.mxu0 0.0
  %11292 = vmatpush1.msra.mxu0 0.0
  %11293 = vmatprep.subr.mxu0 0.0
  %11294 = vmatpush1.msra.mxu0 0.0
  %11295 = vmatprep.subr.mxu0 0.0
  %11296 = vmatpush1.msra.mxu0 0.0
  %11297 = vmatprep.subr.mxu0 0.0
  %11298 = vmatpush1.msra.mxu0 0.0
  %11299 = vmatprep.subr.mxu0 0.0
  %11300 = vmatpush1.msra.mxu0 0.0
  %11301 = vmatprep.subr.mxu0 0.0
  %11302 = vmatpush1.msra.mxu0 0.0
  %11303 = vmatprep.subr.mxu0 0.0
  %11304 = vmatpush1.msra.mxu0 0.0
  %11305 = vmatprep.subr.mxu0 0.0
  %11306 = vmatpush1.msra.mxu0 0.0
  %11307 = vmatprep.subr.mxu0 0.0
  %11308 = vmatpush1.msra.mxu0 0.0
  %11309 = vmatprep.subr.mxu0 0.0
  %11310 = vmatpush1.msra.mxu0 0.0
  %11311 = vmatprep.subr.mxu0 0.0
  %11312 = vmatpush1.msra.mxu0 0.0
  %11313 = vmatprep.subr.mxu0 0.0
  %11314 = vmatpush1.msra.mxu0 0.0
  %11315 = vmatprep.subr.mxu0 0.0
  %11316 = vmatpush1.msra.mxu0 0.0
  %11317 = vmatprep.subr.mxu0 0.0
  %11318 = vmatpush1.msra.mxu0 0.0
  %11319 = vmatprep.subr.mxu0 0.0
  %11320 = vmatpush1.msra.mxu0 0.0
  %11321 = vmatprep.subr.mxu0 0.0
  %11322 = vmatpush1.msra.mxu0 0.0
  %11323 = vmatprep.subr.mxu0 0.0
  %11324 = vmatpush1.msra.mxu0 0.0
  %11325 = vmatprep.subr.mxu0 0.0
  %11326 = vmatpush1.msra.mxu0 0.0
  %11327 = vmatprep.subr.mxu0 0.0
  %11328 = vmatpush1.msra.mxu0 0.0
  %11329 = vmatprep.subr.mxu0 0.0
  %11330 = vmatpush1.msra.mxu0 0.0
  %11331 = vmatprep.subr.mxu0 0.0
  %11332 = vmatpush1.msra.mxu0 0.0
  %11333 = vmatprep.subr.mxu0 0.0
  %11334 = vmatpush1.msra.mxu0 0.0
  %11335 = vmatprep.subr.mxu0 0.0
  %11336 = vmatpush1.msra.mxu0 0.0
  %11337 = vmatprep.subr.mxu0 0.0
  %11338 = vmatpush1.msra.mxu0 0.0
  %11339 = vmatprep.subr.mxu0 0.0
  %11340 = vmatpush1.msra.mxu0 0.0
  %11341 = vmatprep.subr.mxu0 0.0
  %11342 = vmatpush1.msra.mxu0 0.0
  %11343 = vmatprep.subr.mxu0 0.0
  %11344 = vmatpush1.msra.mxu0 0.0
  %11345 = vmatprep.mubr.f32.mxu0 0.0
  %11346 = vmatmul.mubr.f32.gmra.mrb[0].mxu0 %v11249
  %v11347 = vpop.f32.mrb[0].mxu0
  %v11348 = vadd.f32 0.0, %v11347
  %v11349 = vpop.f32.mrb[0].mxu0
  %11350 = vmatprep.mubr.f32.mxu0 0.0
  %11351 = vmatmul.mubr.f32.gmra.mrb[0].mxu0 %v11251
  %v11352 = vpop.f32.mrb[0].mxu0
  %v11353 = vadd.f32 0.0, %v11352
  %v11354 = vpop.f32.mrb[0].mxu0
  %11355 = vmatprep.mubr.f32.mxu0 0.0
  %11356 = vmatmul.mubr.f32.gmra.mrb[0].mxu0 %v11253
  %v11357 = vpop.f32.mrb[0].mxu0
  %v11358 = vadd.f32 0.0, %v11357
  %v11359 = vpop.f32.mrb[0].mxu0
  %11360 = vmatprep.mubr.f32.mxu0 0.0
  %11361 = vmatmul.mubr.f32.gmra.mrb[0].mxu0 %v11255
  %v11362 = vpop.f32.mrb[0].mxu0
  %v11363 = vadd.f32 0.0, %v11362
  %v11364 = vpop.f32.mrb[0].mxu0
  %11365 = vmatprep.mubr.f32.mxu0 0.0
  %11366 = vmatmul.mubr.f32.gmra.mrb[0].mxu0 %v11257
  %v11367 = vpop.f32.mrb[0].mxu0
  %v11368 = vadd.f32 0.0, %v11367
  %v11369 = vpop.f32.mrb[0].mxu0
  %11370 = vmatprep.mubr.f32.mxu0 0.0
  %11371 = vmatmul.mubr.f32.gmra.mrb[0].mxu0 %v11259
  %v11372 = vpop.f32.mrb[0].mxu0
  %v11373 = vadd.f32 0.0, %v11372
  %v11374 = vpop.f32.mrb[0].mxu0
  %11375 = vmatprep.mubr.f32.mxu0 0.0
  %11376 = vmatmul.mubr.f32.gmra.mrb[0].mxu0 %v11261
  %v11377 = vpop.f32.mrb[0].mxu0
  %v11378 = vadd.f32 0.0, %v11377
  %v11379 = vpop.f32.mrb[0].mxu0
  %11380 = vmatprep.mubr.f32.mxu0 0.0
  %11381 = vmatmul.mubr.f32.gmra.mrb[0].mxu0 %v11263
  %v11382 = vpop.f32.mrb[0].mxu0
  %v11383 = vadd.f32 0.0, %v11382
  %v11384 = vpop.f32.mrb[0].mxu0
  %11385 = vmatprep.mubr.f32.mxu0 0.0
  %11386 = vmatmul.mubr.f32.gmra.mrb[0].mxu0 %v11265
  %v11387 = vpop.f32.mrb[0].mxu0
  %v11388 = vadd.f32 0.0, %v11387
  %v11389 = vpop.f32.mrb[0].mxu0
  %11390 = vmatprep.mubr.f32.mxu0 0.0
  %11391 = vmatmul.mubr.f32.gmra.mrb[0].mxu0 %v11267
  %v11392 = vpop.f32.mrb[0].mxu0
  %v11393 = vadd.f32 0.0, %v11392
  %v11394 = vpop.f32.mrb[0].mxu0
  %11395 = vmatprep.mubr.f32.mxu0 0.0
  %11396 = vmatmul.mubr.f32.gmra.mrb[0].mxu0 %v11269
  %v11397 = vpop.f32.mrb[0].mxu0
  %v11398 = vadd.f32 0.0, %v11397
  %v11399 = vpop.f32.mrb[0].mxu0
  %11400 = vmatprep.mubr.f32.mxu0 0.0
  %11401 = vmatmul.mubr.f32.gmra.mrb[0].mxu0 %v11271
  %v11402 = vpop.f32.mrb[0].mxu0
  %v11403 = vadd.f32 0.0, %v11402
  %v11404 = vpop.f32.mrb[0].mxu0
  %11405 = vmatprep.mubr.f32.mxu0 0.0
  %11406 = vmatmul.mubr.f32.gmra.mrb[0].mxu0 %v11273
  %v11407 = vpop.f32.mrb[0].mxu0
  %v11408 = vadd.f32 0.0, %v11407
  %v11409 = vpop.f32.mrb[0].mxu0
  %11410 = vmatprep.mubr.f32.mxu0 0.0
  %11411 = vmatmul.mubr.f32.gmra.mrb[0].mxu0 %v11275
  %v11412 = vpop.f32.mrb[0].mxu0
  %v11413 = vadd.f32 0.0, %v11412
  %v11414 = vpop.f32.mrb[0].mxu0
  %11415 = vmatprep.mubr.f32.mxu0 0.0
  %11416 = vmatmul.mubr.f32.gmra.mrb[0].mxu0 %v11277
  %v11417 = vpop.f32.mrb[0].mxu0
  %v11418 = vadd.f32 0.0, %v11417
  %v11419 = vpop.f32.mrb[0].mxu0
  %11420 = vmatprep.mubr.f32.mxu0 0.0
  %11421 = vmatmul.mubr.f32.gmra.mrb[0].mxu0 %v11279
  %v11422 = vpop.f32.mrb[0].mxu0
  %v11423 = vadd.f32 0.0, %v11422
  %v11424 = vpop.f32.mrb[0].mxu0
  %11425 = vdwg.mxu0
  %v11426 = vadd.f32 %v11149, %v11348
  %v11427 = vadd.f32 %v11150, %v11353
  %v11428 = vadd.f32 %v11151, %v11358
  %v11429 = vadd.f32 %v11152, %v11363
  %v11430 = vadd.f32 %v11153, %v11368
  %v11431 = vadd.f32 %v11154, %v11373
  %v11432 = vadd.f32 %v11155, %v11378
  %v11433 = vadd.f32 %v11156, %v11383
  %v11434 = vadd.f32 %v11157, %v11388
  %v11435 = vadd.f32 %v11158, %v11393
  %v11436 = vadd.f32 %v11159, %v11398
  %v11437 = vadd.f32 %v11160, %v11403
  %v11438 = vadd.f32 %v11161, %v11408
  %v11439 = vadd.f32 %v11162, %v11413
  %v11440 = vadd.f32 %v11163, %v11418
  %v11441 = vadd.f32 %v11164, %v11423
  %v11458 = vcombine.high %v11426, %v11426
  %v11460 = vunpack.c.l.s4 1983009808
  %v11461 = vunpack.c.0.s8 %v11460
  %v11462 = vlaneseq
  %v11463 = vshrl.u32 %v11462, 7
  %v11464 = vsub.s32 %v11461, %v11463
  %v11465 = vrot.slane %v11426, %v11464
  %v11467 = vunpack.c.l.s4 1983009808
  %v11468 = vunpack.c.0.s8 %v11467
  %v11469 = vlaneseq
  %v11470 = vshrl.u32 %v11469, 7
  %v11471 = vsub.s32 %v11468, %v11470
  %v11472 = vrot.slane %v11458, %v11471
  %v11473 = vcombine.high %v11465, %v11465
  %v11474 = vcombine.high %v11472, %v11472
  %v11475 = vcombine.high %v11427, %v11427
  %v11477 = vunpack.c.l.s4 1983009808
  %v11478 = vunpack.c.0.s8 %v11477
  %v11479 = vlaneseq
  %v11480 = vshrl.u32 %v11479, 7
  %v11481 = vsub.s32 %v11478, %v11480
  %v11482 = vrot.slane %v11427, %v11481
  %v11484 = vunpack.c.l.s4 1983009808
  %v11485 = vunpack.c.0.s8 %v11484
  %v11486 = vlaneseq
  %v11487 = vshrl.u32 %v11486, 7
  %v11488 = vsub.s32 %v11485, %v11487
  %v11489 = vrot.slane %v11475, %v11488
  %v11490 = vcombine.high %v11482, %v11482
  %v11491 = vcombine.high %v11489, %v11489
  %v11492 = vcombine.high %v11428, %v11428
  %v11494 = vunpack.c.l.s4 1983009808
  %v11495 = vunpack.c.0.s8 %v11494
  %v11496 = vlaneseq
  %v11497 = vshrl.u32 %v11496, 7
  %v11498 = vsub.s32 %v11495, %v11497
  %v11499 = vrot.slane %v11428, %v11498
  %v11501 = vunpack.c.l.s4 1983009808
  %v11502 = vunpack.c.0.s8 %v11501
  %v11503 = vlaneseq
  %v11504 = vshrl.u32 %v11503, 7
  %v11505 = vsub.s32 %v11502, %v11504
  %v11506 = vrot.slane %v11492, %v11505
  %v11507 = vcombine.high %v11499, %v11499
  %v11508 = vcombine.high %v11506, %v11506
  %v11509 = vcombine.high %v11429, %v11429
  %v11511 = vunpack.c.l.s4 1983009808
  %v11512 = vunpack.c.0.s8 %v11511
  %v11513 = vlaneseq
  %v11514 = vshrl.u32 %v11513, 7
  %v11515 = vsub.s32 %v11512, %v11514
  %v11516 = vrot.slane %v11429, %v11515
  %v11518 = vunpack.c.l.s4 1983009808
  %v11519 = vunpack.c.0.s8 %v11518
  %v11520 = vlaneseq
  %v11521 = vshrl.u32 %v11520, 7
  %v11522 = vsub.s32 %v11519, %v11521
  %v11523 = vrot.slane %v11509, %v11522
  %v11524 = vcombine.high %v11516, %v11516
  %v11525 = vcombine.high %v11523, %v11523
  %v11526 = vcombine.high %v11430, %v11430
  %v11528 = vunpack.c.l.s4 1983009808
  %v11529 = vunpack.c.0.s8 %v11528
  %v11530 = vlaneseq
  %v11531 = vshrl.u32 %v11530, 7
  %v11532 = vsub.s32 %v11529, %v11531
  %v11533 = vrot.slane %v11430, %v11532
  %v11535 = vunpack.c.l.s4 1983009808
  %v11536 = vunpack.c.0.s8 %v11535
  %v11537 = vlaneseq
  %v11538 = vshrl.u32 %v11537, 7
  %v11539 = vsub.s32 %v11536, %v11538
  %v11540 = vrot.slane %v11526, %v11539
  %v11541 = vcombine.high %v11533, %v11533
  %v11542 = vcombine.high %v11540, %v11540
  %v11543 = vcombine.high %v11431, %v11431
  %v11545 = vunpack.c.l.s4 1983009808
  %v11546 = vunpack.c.0.s8 %v11545
  %v11547 = vlaneseq
  %v11548 = vshrl.u32 %v11547, 7
  %v11549 = vsub.s32 %v11546, %v11548
  %v11550 = vrot.slane %v11431, %v11549
  %v11552 = vunpack.c.l.s4 1983009808
  %v11553 = vunpack.c.0.s8 %v11552
  %v11554 = vlaneseq
  %v11555 = vshrl.u32 %v11554, 7
  %v11556 = vsub.s32 %v11553, %v11555
  %v11557 = vrot.slane %v11543, %v11556
  %v11558 = vcombine.high %v11550, %v11550
  %v11559 = vcombine.high %v11557, %v11557
  %v11560 = vcombine.high %v11432, %v11432
  %v11562 = vunpack.c.l.s4 1983009808
  %v11563 = vunpack.c.0.s8 %v11562
  %v11564 = vlaneseq
  %v11565 = vshrl.u32 %v11564, 7
  %v11566 = vsub.s32 %v11563, %v11565
  %v11567 = vrot.slane %v11432, %v11566
  %v11569 = vunpack.c.l.s4 1983009808
  %v11570 = vunpack.c.0.s8 %v11569
  %v11571 = vlaneseq
  %v11572 = vshrl.u32 %v11571, 7
  %v11573 = vsub.s32 %v11570, %v11572
  %v11574 = vrot.slane %v11560, %v11573
  %v11575 = vcombine.high %v11567, %v11567
  %v11576 = vcombine.high %v11574, %v11574
  %v11577 = vcombine.high %v11433, %v11433
  %v11579 = vunpack.c.l.s4 1983009808
  %v11580 = vunpack.c.0.s8 %v11579
  %v11581 = vlaneseq
  %v11582 = vshrl.u32 %v11581, 7
  %v11583 = vsub.s32 %v11580, %v11582
  %v11584 = vrot.slane %v11433, %v11583
  %v11586 = vunpack.c.l.s4 1983009808
  %v11587 = vunpack.c.0.s8 %v11586
  %v11588 = vlaneseq
  %v11589 = vshrl.u32 %v11588, 7
  %v11590 = vsub.s32 %v11587, %v11589
  %v11591 = vrot.slane %v11577, %v11590
  %v11592 = vcombine.high %v11584, %v11584
  %v11593 = vcombine.high %v11591, %v11591
  %v11594 = vcombine.high %v11434, %v11434
  %v11596 = vunpack.c.l.s4 1983009808
  %v11597 = vunpack.c.0.s8 %v11596
  %v11598 = vlaneseq
  %v11599 = vshrl.u32 %v11598, 7
  %v11600 = vsub.s32 %v11597, %v11599
  %v11601 = vrot.slane %v11434, %v11600
  %v11603 = vunpack.c.l.s4 1983009808
  %v11604 = vunpack.c.0.s8 %v11603
  %v11605 = vlaneseq
  %v11606 = vshrl.u32 %v11605, 7
  %v11607 = vsub.s32 %v11604, %v11606
  %v11608 = vrot.slane %v11594, %v11607
  %v11609 = vcombine.high %v11601, %v11601
  %v11610 = vcombine.high %v11608, %v11608
  %v11611 = vcombine.high %v11435, %v11435
  %v11613 = vunpack.c.l.s4 1983009808
  %v11614 = vunpack.c.0.s8 %v11613
  %v11615 = vlaneseq
  %v11616 = vshrl.u32 %v11615, 7
  %v11617 = vsub.s32 %v11614, %v11616
  %v11618 = vrot.slane %v11435, %v11617
  %v11620 = vunpack.c.l.s4 1983009808
  %v11621 = vunpack.c.0.s8 %v11620
  %v11622 = vlaneseq
  %v11623 = vshrl.u32 %v11622, 7
  %v11624 = vsub.s32 %v11621, %v11623
  %v11625 = vrot.slane %v11611, %v11624
  %v11626 = vcombine.high %v11618, %v11618
  %v11627 = vcombine.high %v11625, %v11625
  %v11628 = vcombine.high %v11436, %v11436
  %v11630 = vunpack.c.l.s4 1983009808
  %v11631 = vunpack.c.0.s8 %v11630
  %v11632 = vlaneseq
  %v11633 = vshrl.u32 %v11632, 7
  %v11634 = vsub.s32 %v11631, %v11633
  %v11635 = vrot.slane %v11436, %v11634
  %v11637 = vunpack.c.l.s4 1983009808
  %v11638 = vunpack.c.0.s8 %v11637
  %v11639 = vlaneseq
  %v11640 = vshrl.u32 %v11639, 7
  %v11641 = vsub.s32 %v11638, %v11640
  %v11642 = vrot.slane %v11628, %v11641
  %v11643 = vcombine.high %v11635, %v11635
  %v11644 = vcombine.high %v11642, %v11642
  %v11645 = vcombine.high %v11437, %v11437
  %v11647 = vunpack.c.l.s4 1983009808
  %v11648 = vunpack.c.0.s8 %v11647
  %v11649 = vlaneseq
  %v11650 = vshrl.u32 %v11649, 7
  %v11651 = vsub.s32 %v11648, %v11650
  %v11652 = vrot.slane %v11437, %v11651
  %v11654 = vunpack.c.l.s4 1983009808
  %v11655 = vunpack.c.0.s8 %v11654
  %v11656 = vlaneseq
  %v11657 = vshrl.u32 %v11656, 7
  %v11658 = vsub.s32 %v11655, %v11657
  %v11659 = vrot.slane %v11645, %v11658
  %v11660 = vcombine.high %v11652, %v11652
  %v11661 = vcombine.high %v11659, %v11659
  %v11662 = vcombine.high %v11438, %v11438
  %v11664 = vunpack.c.l.s4 1983009808
  %v11665 = vunpack.c.0.s8 %v11664
  %v11666 = vlaneseq
  %v11667 = vshrl.u32 %v11666, 7
  %v11668 = vsub.s32 %v11665, %v11667
  %v11669 = vrot.slane %v11438, %v11668
  %v11671 = vunpack.c.l.s4 1983009808
  %v11672 = vunpack.c.0.s8 %v11671
  %v11673 = vlaneseq
  %v11674 = vshrl.u32 %v11673, 7
  %v11675 = vsub.s32 %v11672, %v11674
  %v11676 = vrot.slane %v11662, %v11675
  %v11677 = vcombine.high %v11669, %v11669
  %v11678 = vcombine.high %v11676, %v11676
  %v11679 = vcombine.high %v11439, %v11439
  %v11681 = vunpack.c.l.s4 1983009808
  %v11682 = vunpack.c.0.s8 %v11681
  %v11683 = vlaneseq
  %v11684 = vshrl.u32 %v11683, 7
  %v11685 = vsub.s32 %v11682, %v11684
  %v11686 = vrot.slane %v11439, %v11685
  %v11688 = vunpack.c.l.s4 1983009808
  %v11689 = vunpack.c.0.s8 %v11688
  %v11690 = vlaneseq
  %v11691 = vshrl.u32 %v11690, 7
  %v11692 = vsub.s32 %v11689, %v11691
  %v11693 = vrot.slane %v11679, %v11692
  %v11694 = vcombine.high %v11686, %v11686
  %v11695 = vcombine.high %v11693, %v11693
  %v11696 = vcombine.high %v11440, %v11440
  %v11698 = vunpack.c.l.s4 1983009808
  %v11699 = vunpack.c.0.s8 %v11698
  %v11700 = vlaneseq
  %v11701 = vshrl.u32 %v11700, 7
  %v11702 = vsub.s32 %v11699, %v11701
  %v11703 = vrot.slane %v11440, %v11702
  %v11705 = vunpack.c.l.s4 1983009808
  %v11706 = vunpack.c.0.s8 %v11705
  %v11707 = vlaneseq
  %v11708 = vshrl.u32 %v11707, 7
  %v11709 = vsub.s32 %v11706, %v11708
  %v11710 = vrot.slane %v11696, %v11709
  %v11711 = vcombine.high %v11703, %v11703
  %v11712 = vcombine.high %v11710, %v11710
  %v11713 = vcombine.high %v11441, %v11441
  %v11715 = vunpack.c.l.s4 1983009808
  %v11716 = vunpack.c.0.s8 %v11715
  %v11717 = vlaneseq
  %v11718 = vshrl.u32 %v11717, 7
  %v11719 = vsub.s32 %v11716, %v11718
  %v11720 = vrot.slane %v11441, %v11719
  %v11722 = vunpack.c.l.s4 1983009808
  %v11723 = vunpack.c.0.s8 %v11722
  %v11724 = vlaneseq
  %v11725 = vshrl.u32 %v11724, 7
  %v11726 = vsub.s32 %v11723, %v11725
  %v11727 = vrot.slane %v11713, %v11726
  %v11728 = vcombine.high %v11720, %v11720
  %v11729 = vcombine.high %v11727, %v11727
  %vm11794 = vcmask 517120
  %v11795 = vsel %vm11794, %v11465, -inf
  %v11796 = vrot.slane %v11795, 4
  %v11797 = vmax.f32 %v11795, %v11796
  %v11798 = vrot.slane %v11797, 2
  %v11799 = vmax.f32 %v11797, %v11798
  %v11800 = vrot.slane %v11799, 1
  %v11801 = vmax.f32 %v11799, %v11800
  %v11802 = vsel %vm11794, %v11473, -inf
  %v11803 = vrot.slane %v11802, 4
  %v11804 = vmax.f32 %v11802, %v11803
  %v11805 = vrot.slane %v11804, 2
  %v11806 = vmax.f32 %v11804, %v11805
  %v11807 = vrot.slane %v11806, 1
  %v11808 = vmax.f32 %v11806, %v11807
  %v11809 = vsel %vm11794, %v11472, -inf
  %v11810 = vrot.slane %v11809, 4
  %v11811 = vmax.f32 %v11809, %v11810
  %v11812 = vrot.slane %v11811, 2
  %v11813 = vmax.f32 %v11811, %v11812
  %v11814 = vrot.slane %v11813, 1
  %v11815 = vmax.f32 %v11813, %v11814
  %v11816 = vsel %vm11794, %v11474, -inf
  %v11817 = vrot.slane %v11816, 4
  %v11818 = vmax.f32 %v11816, %v11817
  %v11819 = vrot.slane %v11818, 2
  %v11820 = vmax.f32 %v11818, %v11819
  %v11821 = vrot.slane %v11820, 1
  %v11822 = vmax.f32 %v11820, %v11821
  %v11823 = vsel %vm11794, %v11482, -inf
  %v11824 = vrot.slane %v11823, 4
  %v11825 = vmax.f32 %v11823, %v11824
  %v11826 = vrot.slane %v11825, 2
  %v11827 = vmax.f32 %v11825, %v11826
  %v11828 = vrot.slane %v11827, 1
  %v11829 = vmax.f32 %v11827, %v11828
  %v11830 = vsel %vm11794, %v11490, -inf
  %v11831 = vrot.slane %v11830, 4
  %v11832 = vmax.f32 %v11830, %v11831
  %v11833 = vrot.slane %v11832, 2
  %v11834 = vmax.f32 %v11832, %v11833
  %v11835 = vrot.slane %v11834, 1
  %v11836 = vmax.f32 %v11834, %v11835
  %v11837 = vsel %vm11794, %v11489, -inf
  %v11838 = vrot.slane %v11837, 4
  %v11839 = vmax.f32 %v11837, %v11838
  %v11840 = vrot.slane %v11839, 2
  %v11841 = vmax.f32 %v11839, %v11840
  %v11842 = vrot.slane %v11841, 1
  %v11843 = vmax.f32 %v11841, %v11842
  %v11844 = vsel %vm11794, %v11491, -inf
  %v11845 = vrot.slane %v11844, 4
  %v11846 = vmax.f32 %v11844, %v11845
  %v11847 = vrot.slane %v11846, 2
  %v11848 = vmax.f32 %v11846, %v11847
  %v11849 = vrot.slane %v11848, 1
  %v11850 = vmax.f32 %v11848, %v11849
  %v11851 = vsel %vm11794, %v11499, -inf
  %v11852 = vrot.slane %v11851, 4
  %v11853 = vmax.f32 %v11851, %v11852
  %v11854 = vrot.slane %v11853, 2
  %v11855 = vmax.f32 %v11853, %v11854
  %v11856 = vrot.slane %v11855, 1
  %v11857 = vmax.f32 %v11855, %v11856
  %v11858 = vsel %vm11794, %v11507, -inf
  %v11859 = vrot.slane %v11858, 4
  %v11860 = vmax.f32 %v11858, %v11859
  %v11861 = vrot.slane %v11860, 2
  %v11862 = vmax.f32 %v11860, %v11861
  %v11863 = vrot.slane %v11862, 1
  %v11864 = vmax.f32 %v11862, %v11863
  %v11865 = vsel %vm11794, %v11506, -inf
  %v11866 = vrot.slane %v11865, 4
  %v11867 = vmax.f32 %v11865, %v11866
  %v11868 = vrot.slane %v11867, 2
  %v11869 = vmax.f32 %v11867, %v11868
  %v11870 = vrot.slane %v11869, 1
  %v11871 = vmax.f32 %v11869, %v11870
  %v11872 = vsel %vm11794, %v11508, -inf
  %v11873 = vrot.slane %v11872, 4
  %v11874 = vmax.f32 %v11872, %v11873
  %v11875 = vrot.slane %v11874, 2
  %v11876 = vmax.f32 %v11874, %v11875
  %v11877 = vrot.slane %v11876, 1
  %v11878 = vmax.f32 %v11876, %v11877
  %v11879 = vsel %vm11794, %v11516, -inf
  %v11880 = vrot.slane %v11879, 4
  %v11881 = vmax.f32 %v11879, %v11880
  %v11882 = vrot.slane %v11881, 2
  %v11883 = vmax.f32 %v11881, %v11882
  %v11884 = vrot.slane %v11883, 1
  %v11885 = vmax.f32 %v11883, %v11884
  %v11886 = vsel %vm11794, %v11524, -inf
  %v11887 = vrot.slane %v11886, 4
  %v11888 = vmax.f32 %v11886, %v11887
  %v11889 = vrot.slane %v11888, 2
  %v11890 = vmax.f32 %v11888, %v11889
  %v11891 = vrot.slane %v11890, 1
  %v11892 = vmax.f32 %v11890, %v11891
  %v11893 = vsel %vm11794, %v11523, -inf
  %v11894 = vrot.slane %v11893, 4
  %v11895 = vmax.f32 %v11893, %v11894
  %v11896 = vrot.slane %v11895, 2
  %v11897 = vmax.f32 %v11895, %v11896
  %v11898 = vrot.slane %v11897, 1
  %v11899 = vmax.f32 %v11897, %v11898
  %v11900 = vsel %vm11794, %v11525, -inf
  %v11901 = vrot.slane %v11900, 4
  %v11902 = vmax.f32 %v11900, %v11901
  %v11903 = vrot.slane %v11902, 2
  %v11904 = vmax.f32 %v11902, %v11903
  %v11905 = vrot.slane %v11904, 1
  %v11906 = vmax.f32 %v11904, %v11905
  %v11907 = vsel %vm11794, %v11533, -inf
  %v11908 = vrot.slane %v11907, 4
  %v11909 = vmax.f32 %v11907, %v11908
  %v11910 = vrot.slane %v11909, 2
  %v11911 = vmax.f32 %v11909, %v11910
  %v11912 = vrot.slane %v11911, 1
  %v11913 = vmax.f32 %v11911, %v11912
  %v11914 = vsel %vm11794, %v11541, -inf
  %v11915 = vrot.slane %v11914, 4
  %v11916 = vmax.f32 %v11914, %v11915
  %v11917 = vrot.slane %v11916, 2
  %v11918 = vmax.f32 %v11916, %v11917
  %v11919 = vrot.slane %v11918, 1
  %v11920 = vmax.f32 %v11918, %v11919
  %v11921 = vsel %vm11794, %v11540, -inf
  %v11922 = vrot.slane %v11921, 4
  %v11923 = vmax.f32 %v11921, %v11922
  %v11924 = vrot.slane %v11923, 2
  %v11925 = vmax.f32 %v11923, %v11924
  %v11926 = vrot.slane %v11925, 1
  %v11927 = vmax.f32 %v11925, %v11926
  %v11928 = vsel %vm11794, %v11542, -inf
  %v11929 = vrot.slane %v11928, 4
  %v11930 = vmax.f32 %v11928, %v11929
  %v11931 = vrot.slane %v11930, 2
  %v11932 = vmax.f32 %v11930, %v11931
  %v11933 = vrot.slane %v11932, 1
  %v11934 = vmax.f32 %v11932, %v11933
  %v11935 = vsel %vm11794, %v11550, -inf
  %v11936 = vrot.slane %v11935, 4
  %v11937 = vmax.f32 %v11935, %v11936
  %v11938 = vrot.slane %v11937, 2
  %v11939 = vmax.f32 %v11937, %v11938
  %v11940 = vrot.slane %v11939, 1
  %v11941 = vmax.f32 %v11939, %v11940
  %v11942 = vsel %vm11794, %v11558, -inf
  %v11943 = vrot.slane %v11942, 4
  %v11944 = vmax.f32 %v11942, %v11943
  %v11945 = vrot.slane %v11944, 2
  %v11946 = vmax.f32 %v11944, %v11945
  %v11947 = vrot.slane %v11946, 1
  %v11948 = vmax.f32 %v11946, %v11947
  %v11949 = vsel %vm11794, %v11557, -inf
  %v11950 = vrot.slane %v11949, 4
  %v11951 = vmax.f32 %v11949, %v11950
  %v11952 = vrot.slane %v11951, 2
  %v11953 = vmax.f32 %v11951, %v11952
  %v11954 = vrot.slane %v11953, 1
  %v11955 = vmax.f32 %v11953, %v11954
  %v11956 = vsel %vm11794, %v11559, -inf
  %v11957 = vrot.slane %v11956, 4
  %v11958 = vmax.f32 %v11956, %v11957
  %v11959 = vrot.slane %v11958, 2
  %v11960 = vmax.f32 %v11958, %v11959
  %v11961 = vrot.slane %v11960, 1
  %v11962 = vmax.f32 %v11960, %v11961
  %v11963 = vsel %vm11794, %v11567, -inf
  %v11964 = vrot.slane %v11963, 4
  %v11965 = vmax.f32 %v11963, %v11964
  %v11966 = vrot.slane %v11965, 2
  %v11967 = vmax.f32 %v11965, %v11966
  %v11968 = vrot.slane %v11967, 1
  %v11969 = vmax.f32 %v11967, %v11968
  %v11970 = vsel %vm11794, %v11575, -inf
  %v11971 = vrot.slane %v11970, 4
  %v11972 = vmax.f32 %v11970, %v11971
  %v11973 = vrot.slane %v11972, 2
  %v11974 = vmax.f32 %v11972, %v11973
  %v11975 = vrot.slane %v11974, 1
  %v11976 = vmax.f32 %v11974, %v11975
  %v11977 = vsel %vm11794, %v11574, -inf
  %v11978 = vrot.slane %v11977, 4
  %v11979 = vmax.f32 %v11977, %v11978
  %v11980 = vrot.slane %v11979, 2
  %v11981 = vmax.f32 %v11979, %v11980
  %v11982 = vrot.slane %v11981, 1
  %v11983 = vmax.f32 %v11981, %v11982
  %v11984 = vsel %vm11794, %v11576, -inf
  %v11985 = vrot.slane %v11984, 4
  %v11986 = vmax.f32 %v11984, %v11985
  %v11987 = vrot.slane %v11986, 2
  %v11988 = vmax.f32 %v11986, %v11987
  %v11989 = vrot.slane %v11988, 1
  %v11990 = vmax.f32 %v11988, %v11989
  %v11991 = vsel %vm11794, %v11584, -inf
  %v11992 = vrot.slane %v11991, 4
  %v11993 = vmax.f32 %v11991, %v11992
  %v11994 = vrot.slane %v11993, 2
  %v11995 = vmax.f32 %v11993, %v11994
  %v11996 = vrot.slane %v11995, 1
  %v11997 = vmax.f32 %v11995, %v11996
  %v11998 = vsel %vm11794, %v11592, -inf
  %v11999 = vrot.slane %v11998, 4
  %v12000 = vmax.f32 %v11998, %v11999
  %v12001 = vrot.slane %v12000, 2
  %v12002 = vmax.f32 %v12000, %v12001
  %v12003 = vrot.slane %v12002, 1
  %v12004 = vmax.f32 %v12002, %v12003
  %v12005 = vsel %vm11794, %v11591, -inf
  %v12006 = vrot.slane %v12005, 4
  %v12007 = vmax.f32 %v12005, %v12006
  %v12008 = vrot.slane %v12007, 2
  %v12009 = vmax.f32 %v12007, %v12008
  %v12010 = vrot.slane %v12009, 1
  %v12011 = vmax.f32 %v12009, %v12010
  %v12012 = vsel %vm11794, %v11593, -inf
  %v12013 = vrot.slane %v12012, 4
  %v12014 = vmax.f32 %v12012, %v12013
  %v12015 = vrot.slane %v12014, 2
  %v12016 = vmax.f32 %v12014, %v12015
  %v12017 = vrot.slane %v12016, 1
  %v12018 = vmax.f32 %v12016, %v12017
  %v12019 = vsel %vm11794, %v11601, -inf
  %v12020 = vrot.slane %v12019, 4
  %v12021 = vmax.f32 %v12019, %v12020
  %v12022 = vrot.slane %v12021, 2
  %v12023 = vmax.f32 %v12021, %v12022
  %v12024 = vrot.slane %v12023, 1
  %v12025 = vmax.f32 %v12023, %v12024
  %v12026 = vsel %vm11794, %v11609, -inf
  %v12027 = vrot.slane %v12026, 4
  %v12028 = vmax.f32 %v12026, %v12027
  %v12029 = vrot.slane %v12028, 2
  %v12030 = vmax.f32 %v12028, %v12029
  %v12031 = vrot.slane %v12030, 1
  %v12032 = vmax.f32 %v12030, %v12031
  %v12033 = vsel %vm11794, %v11608, -inf
  %v12034 = vrot.slane %v12033, 4
  %v12035 = vmax.f32 %v12033, %v12034
  %v12036 = vrot.slane %v12035, 2
  %v12037 = vmax.f32 %v12035, %v12036
  %v12038 = vrot.slane %v12037, 1
  %v12039 = vmax.f32 %v12037, %v12038
  %v12040 = vsel %vm11794, %v11610, -inf
  %v12041 = vrot.slane %v12040, 4
  %v12042 = vmax.f32 %v12040, %v12041
  %v12043 = vrot.slane %v12042, 2
  %v12044 = vmax.f32 %v12042, %v12043
  %v12045 = vrot.slane %v12044, 1
  %v12046 = vmax.f32 %v12044, %v12045
  %v12047 = vsel %vm11794, %v11618, -inf
  %v12048 = vrot.slane %v12047, 4
  %v12049 = vmax.f32 %v12047, %v12048
  %v12050 = vrot.slane %v12049, 2
  %v12051 = vmax.f32 %v12049, %v12050
  %v12052 = vrot.slane %v12051, 1
  %v12053 = vmax.f32 %v12051, %v12052
  %v12054 = vsel %vm11794, %v11626, -inf
  %v12055 = vrot.slane %v12054, 4
  %v12056 = vmax.f32 %v12054, %v12055
  %v12057 = vrot.slane %v12056, 2
  %v12058 = vmax.f32 %v12056, %v12057
  %v12059 = vrot.slane %v12058, 1
  %v12060 = vmax.f32 %v12058, %v12059
  %v12061 = vsel %vm11794, %v11625, -inf
  %v12062 = vrot.slane %v12061, 4
  %v12063 = vmax.f32 %v12061, %v12062
  %v12064 = vrot.slane %v12063, 2
  %v12065 = vmax.f32 %v12063, %v12064
  %v12066 = vrot.slane %v12065, 1
  %v12067 = vmax.f32 %v12065, %v12066
  %v12068 = vsel %vm11794, %v11627, -inf
  %v12069 = vrot.slane %v12068, 4
  %v12070 = vmax.f32 %v12068, %v12069
  %v12071 = vrot.slane %v12070, 2
  %v12072 = vmax.f32 %v12070, %v12071
  %v12073 = vrot.slane %v12072, 1
  %v12074 = vmax.f32 %v12072, %v12073
  %v12075 = vsel %vm11794, %v11635, -inf
  %v12076 = vrot.slane %v12075, 4
  %v12077 = vmax.f32 %v12075, %v12076
  %v12078 = vrot.slane %v12077, 2
  %v12079 = vmax.f32 %v12077, %v12078
  %v12080 = vrot.slane %v12079, 1
  %v12081 = vmax.f32 %v12079, %v12080
  %v12082 = vsel %vm11794, %v11643, -inf
  %v12083 = vrot.slane %v12082, 4
  %v12084 = vmax.f32 %v12082, %v12083
  %v12085 = vrot.slane %v12084, 2
  %v12086 = vmax.f32 %v12084, %v12085
  %v12087 = vrot.slane %v12086, 1
  %v12088 = vmax.f32 %v12086, %v12087
  %v12089 = vsel %vm11794, %v11642, -inf
  %v12090 = vrot.slane %v12089, 4
  %v12091 = vmax.f32 %v12089, %v12090
  %v12092 = vrot.slane %v12091, 2
  %v12093 = vmax.f32 %v12091, %v12092
  %v12094 = vrot.slane %v12093, 1
  %v12095 = vmax.f32 %v12093, %v12094
  %v12096 = vsel %vm11794, %v11644, -inf
  %v12097 = vrot.slane %v12096, 4
  %v12098 = vmax.f32 %v12096, %v12097
  %v12099 = vrot.slane %v12098, 2
  %v12100 = vmax.f32 %v12098, %v12099
  %v12101 = vrot.slane %v12100, 1
  %v12102 = vmax.f32 %v12100, %v12101
  %v12103 = vsel %vm11794, %v11652, -inf
  %v12104 = vrot.slane %v12103, 4
  %v12105 = vmax.f32 %v12103, %v12104
  %v12106 = vrot.slane %v12105, 2
  %v12107 = vmax.f32 %v12105, %v12106
  %v12108 = vrot.slane %v12107, 1
  %v12109 = vmax.f32 %v12107, %v12108
  %v12110 = vsel %vm11794, %v11660, -inf
  %v12111 = vrot.slane %v12110, 4
  %v12112 = vmax.f32 %v12110, %v12111
  %v12113 = vrot.slane %v12112, 2
  %v12114 = vmax.f32 %v12112, %v12113
  %v12115 = vrot.slane %v12114, 1
  %v12116 = vmax.f32 %v12114, %v12115
  %v12117 = vsel %vm11794, %v11659, -inf
  %v12118 = vrot.slane %v12117, 4
  %v12119 = vmax.f32 %v12117, %v12118
  %v12120 = vrot.slane %v12119, 2
  %v12121 = vmax.f32 %v12119, %v12120
  %v12122 = vrot.slane %v12121, 1
  %v12123 = vmax.f32 %v12121, %v12122
  %v12124 = vsel %vm11794, %v11661, -inf
  %v12125 = vrot.slane %v12124, 4
  %v12126 = vmax.f32 %v12124, %v12125
  %v12127 = vrot.slane %v12126, 2
  %v12128 = vmax.f32 %v12126, %v12127
  %v12129 = vrot.slane %v12128, 1
  %v12130 = vmax.f32 %v12128, %v12129
  %v12131 = vsel %vm11794, %v11669, -inf
  %v12132 = vrot.slane %v12131, 4
  %v12133 = vmax.f32 %v12131, %v12132
  %v12134 = vrot.slane %v12133, 2
  %v12135 = vmax.f32 %v12133, %v12134
  %v12136 = vrot.slane %v12135, 1
  %v12137 = vmax.f32 %v12135, %v12136
  %v12138 = vsel %vm11794, %v11677, -inf
  %v12139 = vrot.slane %v12138, 4
  %v12140 = vmax.f32 %v12138, %v12139
  %v12141 = vrot.slane %v12140, 2
  %v12142 = vmax.f32 %v12140, %v12141
  %v12143 = vrot.slane %v12142, 1
  %v12144 = vmax.f32 %v12142, %v12143
  %v12145 = vsel %vm11794, %v11676, -inf
  %v12146 = vrot.slane %v12145, 4
  %v12147 = vmax.f32 %v12145, %v12146
  %v12148 = vrot.slane %v12147, 2
  %v12149 = vmax.f32 %v12147, %v12148
  %v12150 = vrot.slane %v12149, 1
  %v12151 = vmax.f32 %v12149, %v12150
  %v12152 = vsel %vm11794, %v11678, -inf
  %v12153 = vrot.slane %v12152, 4
  %v12154 = vmax.f32 %v12152, %v12153
  %v12155 = vrot.slane %v12154, 2
  %v12156 = vmax.f32 %v12154, %v12155
  %v12157 = vrot.slane %v12156, 1
  %v12158 = vmax.f32 %v12156, %v12157
  %v12159 = vsel %vm11794, %v11686, -inf
  %v12160 = vrot.slane %v12159, 4
  %v12161 = vmax.f32 %v12159, %v12160
  %v12162 = vrot.slane %v12161, 2
  %v12163 = vmax.f32 %v12161, %v12162
  %v12164 = vrot.slane %v12163, 1
  %v12165 = vmax.f32 %v12163, %v12164
  %v12166 = vsel %vm11794, %v11694, -inf
  %v12167 = vrot.slane %v12166, 4
  %v12168 = vmax.f32 %v12166, %v12167
  %v12169 = vrot.slane %v12168, 2
  %v12170 = vmax.f32 %v12168, %v12169
  %v12171 = vrot.slane %v12170, 1
  %v12172 = vmax.f32 %v12170, %v12171
  %v12173 = vsel %vm11794, %v11693, -inf
  %v12174 = vrot.slane %v12173, 4
  %v12175 = vmax.f32 %v12173, %v12174
  %v12176 = vrot.slane %v12175, 2
  %v12177 = vmax.f32 %v12175, %v12176
  %v12178 = vrot.slane %v12177, 1
  %v12179 = vmax.f32 %v12177, %v12178
  %v12180 = vsel %vm11794, %v11695, -inf
  %v12181 = vrot.slane %v12180, 4
  %v12182 = vmax.f32 %v12180, %v12181
  %v12183 = vrot.slane %v12182, 2
  %v12184 = vmax.f32 %v12182, %v12183
  %v12185 = vrot.slane %v12184, 1
  %v12186 = vmax.f32 %v12184, %v12185
  %v12187 = vsel %vm11794, %v11703, -inf
  %v12188 = vrot.slane %v12187, 4
  %v12189 = vmax.f32 %v12187, %v12188
  %v12190 = vrot.slane %v12189, 2
  %v12191 = vmax.f32 %v12189, %v12190
  %v12192 = vrot.slane %v12191, 1
  %v12193 = vmax.f32 %v12191, %v12192
  %v12194 = vsel %vm11794, %v11711, -inf
  %v12195 = vrot.slane %v12194, 4
  %v12196 = vmax.f32 %v12194, %v12195
  %v12197 = vrot.slane %v12196, 2
  %v12198 = vmax.f32 %v12196, %v12197
  %v12199 = vrot.slane %v12198, 1
  %v12200 = vmax.f32 %v12198, %v12199
  %v12201 = vsel %vm11794, %v11710, -inf
  %v12202 = vrot.slane %v12201, 4
  %v12203 = vmax.f32 %v12201, %v12202
  %v12204 = vrot.slane %v12203, 2
  %v12205 = vmax.f32 %v12203, %v12204
  %v12206 = vrot.slane %v12205, 1
  %v12207 = vmax.f32 %v12205, %v12206
  %v12208 = vsel %vm11794, %v11712, -inf
  %v12209 = vrot.slane %v12208, 4
  %v12210 = vmax.f32 %v12208, %v12209
  %v12211 = vrot.slane %v12210, 2
  %v12212 = vmax.f32 %v12210, %v12211
  %v12213 = vrot.slane %v12212, 1
  %v12214 = vmax.f32 %v12212, %v12213
  %v12215 = vsel %vm11794, %v11720, -inf
  %v12216 = vrot.slane %v12215, 4
  %v12217 = vmax.f32 %v12215, %v12216
  %v12218 = vrot.slane %v12217, 2
  %v12219 = vmax.f32 %v12217, %v12218
  %v12220 = vrot.slane %v12219, 1
  %v12221 = vmax.f32 %v12219, %v12220
  %v12222 = vsel %vm11794, %v11728, -inf
  %v12223 = vrot.slane %v12222, 4
  %v12224 = vmax.f32 %v12222, %v12223
  %v12225 = vrot.slane %v12224, 2
  %v12226 = vmax.f32 %v12224, %v12225
  %v12227 = vrot.slane %v12226, 1
  %v12228 = vmax.f32 %v12226, %v12227
  %v12229 = vsel %vm11794, %v11727, -inf
  %v12230 = vrot.slane %v12229, 4
  %v12231 = vmax.f32 %v12229, %v12230
  %v12232 = vrot.slane %v12231, 2
  %v12233 = vmax.f32 %v12231, %v12232
  %v12234 = vrot.slane %v12233, 1
  %v12235 = vmax.f32 %v12233, %v12234
  %v12236 = vsel %vm11794, %v11729, -inf
  %v12237 = vrot.slane %v12236, 4
  %v12238 = vmax.f32 %v12236, %v12237
  %v12239 = vrot.slane %v12238, 2
  %v12240 = vmax.f32 %v12238, %v12239
  %v12241 = vrot.slane %v12240, 1
  %v12242 = vmax.f32 %v12240, %v12241
  %vm12243 = vcmask 523264
  %v12244 = vsel %vm12243, %v11801, -inf
  %v12245 = vsel %vm12243, %v11815, -inf
  %v12246 = vmax.f32 %v12244, %v12245
  %v12247 = vsel %vm12243, %v11808, -inf
  %v12248 = vsel %vm12243, %v11822, -inf
  %v12249 = vmax.f32 %v12247, %v12248
  %v12250 = vsel %vm12243, %v11829, -inf
  %v12251 = vsel %vm12243, %v11843, -inf
  %v12252 = vmax.f32 %v12250, %v12251
  %v12253 = vsel %vm12243, %v11836, -inf
  %v12254 = vsel %vm12243, %v11850, -inf
  %v12255 = vmax.f32 %v12253, %v12254
  %v12256 = vsel %vm12243, %v11857, -inf
  %v12257 = vsel %vm12243, %v11871, -inf
  %v12258 = vmax.f32 %v12256, %v12257
  %v12259 = vsel %vm12243, %v11864, -inf
  %v12260 = vsel %vm12243, %v11878, -inf
  %v12261 = vmax.f32 %v12259, %v12260
  %v12262 = vsel %vm12243, %v11885, -inf
  %v12263 = vsel %vm12243, %v11899, -inf
  %v12264 = vmax.f32 %v12262, %v12263
  %v12265 = vsel %vm12243, %v11892, -inf
  %v12266 = vsel %vm12243, %v11906, -inf
  %v12267 = vmax.f32 %v12265, %v12266
  %v12268 = vsel %vm12243, %v11913, -inf
  %v12269 = vsel %vm12243, %v11927, -inf
  %v12270 = vmax.f32 %v12268, %v12269
  %v12271 = vsel %vm12243, %v11920, -inf
  %v12272 = vsel %vm12243, %v11934, -inf
  %v12273 = vmax.f32 %v12271, %v12272
  %v12274 = vsel %vm12243, %v11941, -inf
  %v12275 = vsel %vm12243, %v11955, -inf
  %v12276 = vmax.f32 %v12274, %v12275
  %v12277 = vsel %vm12243, %v11948, -inf
  %v12278 = vsel %vm12243, %v11962, -inf
  %v12279 = vmax.f32 %v12277, %v12278
  %v12280 = vsel %vm12243, %v11969, -inf
  %v12281 = vsel %vm12243, %v11983, -inf
  %v12282 = vmax.f32 %v12280, %v12281
  %v12283 = vsel %vm12243, %v11976, -inf
  %v12284 = vsel %vm12243, %v11990, -inf
  %v12285 = vmax.f32 %v12283, %v12284
  %v12286 = vsel %vm12243, %v11997, -inf
  %v12287 = vsel %vm12243, %v12011, -inf
  %v12288 = vmax.f32 %v12286, %v12287
  %v12289 = vsel %vm12243, %v12004, -inf
  %v12290 = vsel %vm12243, %v12018, -inf
  %v12291 = vmax.f32 %v12289, %v12290
  %v12292 = vsel %vm12243, %v12025, -inf
  %v12293 = vsel %vm12243, %v12039, -inf
  %v12294 = vmax.f32 %v12292, %v12293
  %v12295 = vsel %vm12243, %v12032, -inf
  %v12296 = vsel %vm12243, %v12046, -inf
  %v12297 = vmax.f32 %v12295, %v12296
  %v12298 = vsel %vm12243, %v12053, -inf
  %v12299 = vsel %vm12243, %v12067, -inf
  %v12300 = vmax.f32 %v12298, %v12299
  %v12301 = vsel %vm12243, %v12060, -inf
  %v12302 = vsel %vm12243, %v12074, -inf
  %v12303 = vmax.f32 %v12301, %v12302
  %v12304 = vsel %vm12243, %v12081, -inf
  %v12305 = vsel %vm12243, %v12095, -inf
  %v12306 = vmax.f32 %v12304, %v12305
  %v12307 = vsel %vm12243, %v12088, -inf
  %v12308 = vsel %vm12243, %v12102, -inf
  %v12309 = vmax.f32 %v12307, %v12308
  %v12310 = vsel %vm12243, %v12109, -inf
  %v12311 = vsel %vm12243, %v12123, -inf
  %v12312 = vmax.f32 %v12310, %v12311
  %v12313 = vsel %vm12243, %v12116, -inf
  %v12314 = vsel %vm12243, %v12130, -inf
  %v12315 = vmax.f32 %v12313, %v12314
  %v12316 = vsel %vm12243, %v12137, -inf
  %v12317 = vsel %vm12243, %v12151, -inf
  %v12318 = vmax.f32 %v12316, %v12317
  %v12319 = vsel %vm12243, %v12144, -inf
  %v12320 = vsel %vm12243, %v12158, -inf
  %v12321 = vmax.f32 %v12319, %v12320
  %v12322 = vsel %vm12243, %v12165, -inf
  %v12323 = vsel %vm12243, %v12179, -inf
  %v12324 = vmax.f32 %v12322, %v12323
  %v12325 = vsel %vm12243, %v12172, -inf
  %v12326 = vsel %vm12243, %v12186, -inf
  %v12327 = vmax.f32 %v12325, %v12326
  %v12328 = vsel %vm12243, %v12193, -inf
  %v12329 = vsel %vm12243, %v12207, -inf
  %v12330 = vmax.f32 %v12328, %v12329
  %v12331 = vsel %vm12243, %v12200, -inf
  %v12332 = vsel %vm12243, %v12214, -inf
  %v12333 = vmax.f32 %v12331, %v12332
  %v12334 = vsel %vm12243, %v12221, -inf
  %v12335 = vsel %vm12243, %v12235, -inf
  %v12336 = vmax.f32 %v12334, %v12335
  %v12337 = vsel %vm12243, %v12228, -inf
  %v12338 = vsel %vm12243, %v12242, -inf
  %v12339 = vmax.f32 %v12337, %v12338
  %v12340 = vld [vmem:[%s4] sm:$0x1]
  %v12342 = vlaneseq
  %v12343 = vshrl.u32 %v12342, 7
  %v12344 = vsub.s32 0, %v12343
  %v12345 = vrot.slane %v12340, %v12344
  %v12347 = vadd.f32 %v12246, %v12345
  %v12348 = vadd.f32 %v12249, %v12345
  %v12349 = vadd.f32 %v12252, %v12345
  %v12350 = vadd.f32 %v12255, %v12345
  %v12351 = vadd.f32 %v12258, %v12345
  %v12352 = vadd.f32 %v12261, %v12345
  %v12353 = vadd.f32 %v12264, %v12345
  %v12354 = vadd.f32 %v12267, %v12345
  %v12355 = vadd.f32 %v12270, %v12345
  %v12356 = vadd.f32 %v12273, %v12345
  %v12357 = vadd.f32 %v12276, %v12345
  %v12358 = vadd.f32 %v12279, %v12345
  %v12359 = vadd.f32 %v12282, %v12345
  %v12360 = vadd.f32 %v12285, %v12345
  %v12361 = vadd.f32 %v12288, %v12345
  %v12362 = vadd.f32 %v12291, %v12345
  %v12363 = vadd.f32 %v12294, %v12345
  %v12364 = vadd.f32 %v12297, %v12345
  %v12365 = vadd.f32 %v12300, %v12345
  %v12366 = vadd.f32 %v12303, %v12345
  %v12367 = vadd.f32 %v12306, %v12345
  %v12368 = vadd.f32 %v12309, %v12345
  %v12369 = vadd.f32 %v12312, %v12345
  %v12370 = vadd.f32 %v12315, %v12345
  %v12371 = vadd.f32 %v12318, %v12345
  %v12372 = vadd.f32 %v12321, %v12345
  %v12373 = vadd.f32 %v12324, %v12345
  %v12374 = vadd.f32 %v12327, %v12345
  %v12375 = vadd.f32 %v12330, %v12345
  %v12376 = vadd.f32 %v12333, %v12345
  %v12377 = vadd.f32 %v12336, %v12345
  %v12378 = vadd.f32 %v12339, %v12345
  %v12379 = vmax.f32 %v12347, 0.0
  %v12380 = vmax.f32 %v12348, 0.0
  %v12381 = vmax.f32 %v12349, 0.0
  %v12382 = vmax.f32 %v12350, 0.0
  %v12383 = vmax.f32 %v12351, 0.0
  %v12384 = vmax.f32 %v12352, 0.0
  %v12385 = vmax.f32 %v12353, 0.0
  %v12386 = vmax.f32 %v12354, 0.0
  %v12387 = vmax.f32 %v12355, 0.0
  %v12388 = vmax.f32 %v12356, 0.0
  %v12389 = vmax.f32 %v12357, 0.0
  %v12390 = vmax.f32 %v12358, 0.0
  %v12391 = vmax.f32 %v12359, 0.0
  %v12392 = vmax.f32 %v12360, 0.0
  %v12393 = vmax.f32 %v12361, 0.0
  %v12394 = vmax.f32 %v12362, 0.0
  %v12395 = vmax.f32 %v12363, 0.0
  %v12396 = vmax.f32 %v12364, 0.0
  %v12397 = vmax.f32 %v12365, 0.0
  %v12398 = vmax.f32 %v12366, 0.0
  %v12399 = vmax.f32 %v12367, 0.0
  %v12400 = vmax.f32 %v12368, 0.0
  %v12401 = vmax.f32 %v12369, 0.0
  %v12402 = vmax.f32 %v12370, 0.0
  %v12403 = vmax.f32 %v12371, 0.0
  %v12404 = vmax.f32 %v12372, 0.0
  %v12405 = vmax.f32 %v12373, 0.0
  %v12406 = vmax.f32 %v12374, 0.0
  %v12407 = vmax.f32 %v12375, 0.0
  %v12408 = vmax.f32 %v12376, 0.0
  %v12409 = vmax.f32 %v12377, 0.0
  %v12410 = vmax.f32 %v12378, 0.0
  %vm12411 = vcmask 519168
  %12412 = vst.msk [vmem:[#allocation3] sm:$0xf] %vm12411, 0.0
  %12413 = vst.msk [vmem:[#allocation3 + $0x4] sm:$0xf] %vm12411, 0.0
  %12414 = vst.msk [vmem:[#allocation3 + $0x8] sm:$0xf] %vm12411, 0.0
  %12415 = vst.msk [vmem:[#allocation3 + $0xc] sm:$0xf] %vm12411, 0.0
  %12416 = vst.msk [vmem:[#allocation3 + $0x10] sm:$0xf] %vm12411, 0.0
  %12417 = vst.msk [vmem:[#allocation3 + $0x14] sm:$0xf] %vm12411, 0.0
  %12418 = vst.msk [vmem:[#allocation3 + $0x18] sm:$0xf] %vm12411, 0.0
  %12419 = vst.msk [vmem:[#allocation3 + $0x1c] sm:$0xf] %vm12411, 0.0
  %12420 = vst.msk [vmem:[#allocation3 + $0x20] sm:$0xf] %vm12411, 0.0
  %12421 = vst.msk [vmem:[#allocation3 + $0x24] sm:$0xf] %vm12411, 0.0
  %12422 = vst.msk [vmem:[#allocation3 + $0x28] sm:$0xf] %vm12411, 0.0
  %12423 = vst.msk [vmem:[#allocation3 + $0x2c] sm:$0xf] %vm12411, 0.0
  %12424 = vst.msk [vmem:[#allocation3 + $0x30] sm:$0xf] %vm12411, 0.0
  %12425 = vst.msk [vmem:[#allocation3 + $0x34] sm:$0xf] %vm12411, 0.0
  %12426 = vst.msk [vmem:[#allocation3 + $0x38] sm:$0xf] %vm12411, 0.0
  %12427 = vst.msk [vmem:[#allocation3 + $0x3c] sm:$0xf] %vm12411, 0.0
  %12428 = vst.msk [vmem:[#allocation3 + $0x40] sm:$0xf] %vm12411, 0.0
  %12429 = vst.msk [vmem:[#allocation3 + $0x44] sm:$0xf] %vm12411, 0.0
  %12430 = vst.msk [vmem:[#allocation3 + $0x48] sm:$0xf] %vm12411, 0.0
  %12431 = vst.msk [vmem:[#allocation3 + $0x4c] sm:$0xf] %vm12411, 0.0
  %12432 = vst.msk [vmem:[#allocation3 + $0x50] sm:$0xf] %vm12411, 0.0
  %12433 = vst.msk [vmem:[#allocation3 + $0x54] sm:$0xf] %vm12411, 0.0
  %12434 = vst.msk [vmem:[#allocation3 + $0x58] sm:$0xf] %vm12411, 0.0
  %12435 = vst.msk [vmem:[#allocation3 + $0x5c] sm:$0xf] %vm12411, 0.0
  %12436 = vst.msk [vmem:[#allocation3 + $0x60] sm:$0xf] %vm12411, 0.0
  %12437 = vst.msk [vmem:[#allocation3 + $0x64] sm:$0xf] %vm12411, 0.0
  %12438 = vst.msk [vmem:[#allocation3 + $0x68] sm:$0xf] %vm12411, 0.0
  %12439 = vst.msk [vmem:[#allocation3 + $0x6c] sm:$0xf] %vm12411, 0.0
  %12440 = vst.msk [vmem:[#allocation3 + $0x70] sm:$0xf] %vm12411, 0.0
  %12441 = vst.msk [vmem:[#allocation3 + $0x74] sm:$0xf] %vm12411, 0.0
  %12442 = vst.msk [vmem:[#allocation3 + $0x78] sm:$0xf] %vm12411, 0.0
  %12443 = vst.msk [vmem:[#allocation3 + $0x7c] sm:$0xf] %vm12411, 0.0
  %v12476 = vrot.slane %v12380, 7
  %v12477 = vsel %vm8720, %v12476, %v12379
  %v12478 = vrot.slane %v12382, 7
  %v12479 = vsel %vm8720, %v12478, %v12381
  %v12480 = vrot.slane %v12384, 7
  %v12481 = vsel %vm8720, %v12480, %v12383
  %v12482 = vrot.slane %v12386, 7
  %v12483 = vsel %vm8720, %v12482, %v12385
  %v12484 = vrot.slane %v12388, 7
  %v12485 = vsel %vm8720, %v12484, %v12387
  %v12486 = vrot.slane %v12390, 7
  %v12487 = vsel %vm8720, %v12486, %v12389
  %v12488 = vrot.slane %v12392, 7
  %v12489 = vsel %vm8720, %v12488, %v12391
  %v12490 = vrot.slane %v12394, 7
  %v12491 = vsel %vm8720, %v12490, %v12393
  %v12492 = vrot.slane %v12396, 7
  %v12493 = vsel %vm8720, %v12492, %v12395
  %v12494 = vrot.slane %v12398, 7
  %v12495 = vsel %vm8720, %v12494, %v12397
  %v12496 = vrot.slane %v12400, 7
  %v12497 = vsel %vm8720, %v12496, %v12399
  %v12498 = vrot.slane %v12402, 7
  %v12499 = vsel %vm8720, %v12498, %v12401
  %v12500 = vrot.slane %v12404, 7
  %v12501 = vsel %vm8720, %v12500, %v12403
  %v12502 = vrot.slane %v12406, 7
  %v12503 = vsel %vm8720, %v12502, %v12405
  %v12504 = vrot.slane %v12408, 7
  %v12505 = vsel %vm8720, %v12504, %v12407
  %v12506 = vrot.slane %v12410, 7
  %v12507 = vsel %vm8720, %v12506, %v12409
  %s12524 = scalar_lea.vmem [#allocation3], 4
  %12525 = vst.msk [vmem:[%s12524 + $0x1] sm:$0x3] %vm11794, %v12477
  %12526 = vst.msk [vmem:[%s12524 + $0x5] sm:$0x3] %vm11794, %v12479
  %12527 = vst.msk [vmem:[%s12524 + $0x11] sm:$0x3] %vm11794, %v12481
  %12528 = vst.msk [vmem:[%s12524 + $0x15] sm:$0x3] %vm11794, %v12483
  %12529 = vst.msk [vmem:[%s12524 + $0x21] sm:$0x3] %vm11794, %v12485
  %12530 = vst.msk [vmem:[%s12524 + $0x25] sm:$0x3] %vm11794, %v12487
  %12531 = vst.msk [vmem:[%s12524 + $0x31] sm:$0x3] %vm11794, %v12489
  %12532 = vst.msk [vmem:[%s12524 + $0x35] sm:$0x3] %vm11794, %v12491
  %12533 = vst.msk [vmem:[%s12524 + $0x41] sm:$0x3] %vm11794, %v12493
  %12534 = vst.msk [vmem:[%s12524 + $0x45] sm:$0x3] %vm11794, %v12495
  %12535 = vst.msk [vmem:[%s12524 + $0x51] sm:$0x3] %vm11794, %v12497
  %12536 = vst.msk [vmem:[%s12524 + $0x55] sm:$0x3] %vm11794, %v12499
  %12537 = vst.msk [vmem:[%s12524 + $0x61] sm:$0x3] %vm11794, %v12501
  %12538 = vst.msk [vmem:[%s12524 + $0x65] sm:$0x3] %vm11794, %v12503
  %12539 = vst.msk [vmem:[%s12524 + $0x71] sm:$0x3] %vm11794, %v12505
  %12540 = vst.msk [vmem:[%s12524 + $0x75] sm:$0x3] %vm11794, %v12507
  %v12541 = vld [vmem:[#allocation3] sm:$0x3]
  %v12542 = vld [vmem:[#allocation3 + $0x4] sm:$0x3]
  %v12543 = vld [vmem:[#allocation3 + $0x10] sm:$0x3]
  %v12544 = vld [vmem:[#allocation3 + $0x14] sm:$0x3]
  %v12545 = vld [vmem:[#allocation3 + $0x20] sm:$0x3]
  %v12546 = vld [vmem:[#allocation3 + $0x24] sm:$0x3]
  %v12547 = vld [vmem:[#allocation3 + $0x30] sm:$0x3]
  %v12548 = vld [vmem:[#allocation3 + $0x34] sm:$0x3]
  %v12549 = vld [vmem:[#allocation3 + $0x40] sm:$0x3]
  %v12550 = vld [vmem:[#allocation3 + $0x44] sm:$0x3]
  %v12551 = vld [vmem:[#allocation3 + $0x50] sm:$0x3]
  %v12552 = vld [vmem:[#allocation3 + $0x54] sm:$0x3]
  %v12553 = vld [vmem:[#allocation3 + $0x60] sm:$0x3]
  %v12554 = vld [vmem:[#allocation3 + $0x64] sm:$0x3]
  %v12555 = vld [vmem:[#allocation3 + $0x70] sm:$0x3]
  %v12556 = vld [vmem:[#allocation3 + $0x74] sm:$0x3]
  %v12557 = vld [vmem:[%s5] sm:$0xff]
  %v12558 = vld [vmem:[%s5 + $0x8] sm:$0xff]
  %v12559 = vld [vmem:[%s5 + $0x10] sm:$0xff]
  %v12560 = vld [vmem:[%s5 + $0x18] sm:$0xff]
  %v12561 = vld [vmem:[%s5 + $0x20] sm:$0xff]
  %v12562 = vld [vmem:[%s5 + $0x28] sm:$0xff]
  %v12563 = vld [vmem:[%s5 + $0x30] sm:$0xff]
  %v12564 = vld [vmem:[%s5 + $0x38] sm:$0xff]
  %v12565 = vld [vmem:[#allocation3 + $0x1] sm:$0x3]
  %v12566 = vld [vmem:[#allocation3 + $0x5] sm:$0x3]
  %v12567 = vld [vmem:[#allocation3 + $0x11] sm:$0x3]
  %v12568 = vld [vmem:[#allocation3 + $0x15] sm:$0x3]
  %v12569 = vld [vmem:[#allocation3 + $0x21] sm:$0x3]
  %v12570 = vld [vmem:[#allocation3 + $0x25] sm:$0x3]
  %v12571 = vld [vmem:[#allocation3 + $0x31] sm:$0x3]
  %v12572 = vld [vmem:[#allocation3 + $0x35] sm:$0x3]
  %v12573 = vld [vmem:[#allocation3 + $0x41] sm:$0x3]
  %v12574 = vld [vmem:[#allocation3 + $0x45] sm:$0x3]
  %v12575 = vld [vmem:[#allocation3 + $0x51] sm:$0x3]
  %v12576 = vld [vmem:[#allocation3 + $0x55] sm:$0x3]
  %v12577 = vld [vmem:[#allocation3 + $0x61] sm:$0x3]
  %v12578 = vld [vmem:[#allocation3 + $0x65] sm:$0x3]
  %v12579 = vld [vmem:[#allocation3 + $0x71] sm:$0x3]
  %v12580 = vld [vmem:[#allocation3 + $0x75] sm:$0x3]
  %v12581 = vld [vmem:[%s5 + $0x40] sm:$0xff]
  %v12582 = vld [vmem:[%s5 + $0x48] sm:$0xff]
  %v12583 = vld [vmem:[%s5 + $0x50] sm:$0xff]
  %v12584 = vld [vmem:[%s5 + $0x58] sm:$0xff]
  %v12585 = vld [vmem:[%s5 + $0x60] sm:$0xff]
  %v12586 = vld [vmem:[%s5 + $0x68] sm:$0xff]
  %v12587 = vld [vmem:[%s5 + $0x70] sm:$0xff]
  %v12588 = vld [vmem:[%s5 + $0x78] sm:$0xff]
  %v12605 = vcombine.low %v12565, %v12566
  %v12606 = vcombine.low %v12567, %v12568
  %v12608 = vunpack.c.l.s4 1983009808
  %v12609 = vunpack.c.0.s8 %v12608
  %v12610 = vlaneseq
  %v12611 = vshrl.u32 %v12610, 7
  %v12612 = vsub.s32 %v12609, %v12611
  %v12613 = vrot.slane %v12605, %v12612
  %v12615 = vunpack.c.l.s4 1983009808
  %v12616 = vunpack.c.0.s8 %v12615
  %v12617 = vlaneseq
  %v12618 = vshrl.u32 %v12617, 7
  %v12619 = vsub.s32 %v12616, %v12618
  %v12620 = vrot.slane %v12606, %v12619
  %v12621 = vcombine.low %v12613, %v12620
  %v12622 = vcombine.low %v12569, %v12570
  %v12623 = vcombine.low %v12571, %v12572
  %v12625 = vunpack.c.l.s4 1983009808
  %v12626 = vunpack.c.0.s8 %v12625
  %v12627 = vlaneseq
  %v12628 = vshrl.u32 %v12627, 7
  %v12629 = vsub.s32 %v12626, %v12628
  %v12630 = vrot.slane %v12622, %v12629
  %v12632 = vunpack.c.l.s4 1983009808
  %v12633 = vunpack.c.0.s8 %v12632
  %v12634 = vlaneseq
  %v12635 = vshrl.u32 %v12634, 7
  %v12636 = vsub.s32 %v12633, %v12635
  %v12637 = vrot.slane %v12623, %v12636
  %v12638 = vcombine.low %v12630, %v12637
  %v12639 = vcombine.low %v12573, %v12574
  %v12640 = vcombine.low %v12575, %v12576
  %v12642 = vunpack.c.l.s4 1983009808
  %v12643 = vunpack.c.0.s8 %v12642
  %v12644 = vlaneseq
  %v12645 = vshrl.u32 %v12644, 7
  %v12646 = vsub.s32 %v12643, %v12645
  %v12647 = vrot.slane %v12639, %v12646
  %v12649 = vunpack.c.l.s4 1983009808
  %v12650 = vunpack.c.0.s8 %v12649
  %v12651 = vlaneseq
  %v12652 = vshrl.u32 %v12651, 7
  %v12653 = vsub.s32 %v12650, %v12652
  %v12654 = vrot.slane %v12640, %v12653
  %v12655 = vcombine.low %v12647, %v12654
  %v12656 = vcombine.low %v12577, %v12578
  %v12657 = vcombine.low %v12579, %v12580
  %v12659 = vunpack.c.l.s4 1983009808
  %v12660 = vunpack.c.0.s8 %v12659
  %v12661 = vlaneseq
  %v12662 = vshrl.u32 %v12661, 7
  %v12663 = vsub.s32 %v12660, %v12662
  %v12664 = vrot.slane %v12656, %v12663
  %v12666 = vunpack.c.l.s4 1983009808
  %v12667 = vunpack.c.0.s8 %v12666
  %v12668 = vlaneseq
  %v12669 = vshrl.u32 %v12668, 7
  %v12670 = vsub.s32 %v12667, %v12669
  %v12671 = vrot.slane %v12657, %v12670
  %v12672 = vcombine.low %v12664, %v12671
  %v12673 = vsel %vm12243, %v12621, 0
  %v12675 = vsel %vm12243, %v12638, 0
  %v12677 = vsel %vm12243, %v12655, 0
  %v12679 = vsel %vm12243, %v12672, 0
  %12681 = vmatprep.subr.mxu0 0.0
  %12682 = vmatpush1.msra.mxu0 %v12581
  %12683 = vmatprep.subr.mxu0 0.0
  %12684 = vmatpush1.msra.mxu0 %v12582
  %12685 = vmatprep.subr.mxu0 0.0
  %12686 = vmatpush1.msra.mxu0 %v12583
  %12687 = vmatprep.subr.mxu0 0.0
  %12688 = vmatpush1.msra.mxu0 %v12584
  %12689 = vmatprep.subr.mxu0 0.0
  %12690 = vmatpush1.msra.mxu0 %v12585
  %12691 = vmatprep.subr.mxu0 0.0
  %12692 = vmatpush1.msra.mxu0 %v12586
  %12693 = vmatprep.subr.mxu0 0.0
  %12694 = vmatpush1.msra.mxu0 %v12587
  %12695 = vmatprep.subr.mxu0 0.0
  %12696 = vmatpush1.msra.mxu0 %v12588
  %12697 = vmatprep.subr.mxu0 0.0
  %12698 = vmatpush1.msra.mxu0 0.0
  %12699 = vmatprep.subr.mxu0 0.0
  %12700 = vmatpush1.msra.mxu0 0.0
  %12701 = vmatprep.subr.mxu0 0.0
  %12702 = vmatpush1.msra.mxu0 0.0
  %12703 = vmatprep.subr.mxu0 0.0
  %12704 = vmatpush1.msra.mxu0 0.0
  %12705 = vmatprep.subr.mxu0 0.0
  %12706 = vmatpush1.msra.mxu0 0.0
  %12707 = vmatprep.subr.mxu0 0.0
  %12708 = vmatpush1.msra.mxu0 0.0
  %12709 = vmatprep.subr.mxu0 0.0
  %12710 = vmatpush1.msra.mxu0 0.0
  %12711 = vmatprep.subr.mxu0 0.0
  %12712 = vmatpush1.msra.mxu0 0.0
  %12713 = vmatprep.subr.mxu0 0.0
  %12714 = vmatpush1.msra.mxu0 0.0
  %12715 = vmatprep.subr.mxu0 0.0
  %12716 = vmatpush1.msra.mxu0 0.0
  %12717 = vmatprep.subr.mxu0 0.0
  %12718 = vmatpush1.msra.mxu0 0.0
  %12719 = vmatprep.subr.mxu0 0.0
  %12720 = vmatpush1.msra.mxu0 0.0
  %12721 = vmatprep.subr.mxu0 0.0
  %12722 = vmatpush1.msra.mxu0 0.0
  %12723 = vmatprep.subr.mxu0 0.0
  %12724 = vmatpush1.msra.mxu0 0.0
  %12725 = vmatprep.subr.mxu0 0.0
  %12726 = vmatpush1.msra.mxu0 0.0
  %12727 = vmatprep.subr.mxu0 0.0
  %12728 = vmatpush1.msra.mxu0 0.0
  %12729 = vmatprep.subr.mxu0 0.0
  %12730 = vmatpush1.msra.mxu0 0.0
  %12731 = vmatprep.subr.mxu0 0.0
  %12732 = vmatpush1.msra.mxu0 0.0
  %12733 = vmatprep.subr.mxu0 0.0
  %12734 = vmatpush1.msra.mxu0 0.0
  %12735 = vmatprep.subr.mxu0 0.0
  %12736 = vmatpush1.msra.mxu0 0.0
  %12737 = vmatprep.subr.mxu0 0.0
  %12738 = vmatpush1.msra.mxu0 0.0
  %12739 = vmatprep.subr.mxu0 0.0
  %12740 = vmatpush1.msra.mxu0 0.0
  %12741 = vmatprep.subr.mxu0 0.0
  %12742 = vmatpush1.msra.mxu0 0.0
  %12743 = vmatprep.subr.mxu0 0.0
  %12744 = vmatpush1.msra.mxu0 0.0
  %12745 = vmatprep.mubr.f32.mxu0 0.0
  %12746 = vmatmul.mubr.f32.gmra.mrb[0].mxu0 %v12673
  %v12747 = vpop.f32.mrb[0].mxu0
  %v12748 = vadd.f32 0.0, %v12747
  %v12749 = vpop.f32.mrb[0].mxu0
  %12750 = vmatprep.mubr.f32.mxu0 0.0
  %12751 = vmatmul.mubr.f32.gmra.mrb[0].mxu0 %v12675
  %v12752 = vpop.f32.mrb[0].mxu0
  %v12753 = vadd.f32 0.0, %v12752
  %v12754 = vpop.f32.mrb[0].mxu0
  %12755 = vmatprep.mubr.f32.mxu0 0.0
  %12756 = vmatmul.mubr.f32.gmra.mrb[0].mxu0 %v12677
  %v12757 = vpop.f32.mrb[0].mxu0
  %v12758 = vadd.f32 0.0, %v12757
  %v12759 = vpop.f32.mrb[0].mxu0
  %12760 = vmatprep.mubr.f32.mxu0 0.0
  %12761 = vmatmul.mubr.f32.gmra.mrb[0].mxu0 %v12679
  %v12762 = vpop.f32.mrb[0].mxu0
  %v12763 = vadd.f32 0.0, %v12762
  %v12764 = vpop.f32.mrb[0].mxu0
  %12765 = vdwg.mxu0
  %v12782 = vcombine.low %v12541, %v12542
  %v12783 = vcombine.low %v12543, %v12544
  %v12785 = vunpack.c.l.s4 1983009808
  %v12786 = vunpack.c.0.s8 %v12785
  %v12787 = vlaneseq
  %v12788 = vshrl.u32 %v12787, 7
  %v12789 = vsub.s32 %v12786, %v12788
  %v12790 = vrot.slane %v12782, %v12789
  %v12792 = vunpack.c.l.s4 1983009808
  %v12793 = vunpack.c.0.s8 %v12792
  %v12794 = vlaneseq
  %v12795 = vshrl.u32 %v12794, 7
  %v12796 = vsub.s32 %v12793, %v12795
  %v12797 = vrot.slane %v12783, %v12796
  %v12798 = vcombine.low %v12790, %v12797
  %v12799 = vcombine.low %v12545, %v12546
  %v12800 = vcombine.low %v12547, %v12548
  %v12802 = vunpack.c.l.s4 1983009808
  %v12803 = vunpack.c.0.s8 %v12802
  %v12804 = vlaneseq
  %v12805 = vshrl.u32 %v12804, 7
  %v12806 = vsub.s32 %v12803, %v12805
  %v12807 = vrot.slane %v12799, %v12806
  %v12809 = vunpack.c.l.s4 1983009808
  %v12810 = vunpack.c.0.s8 %v12809
  %v12811 = vlaneseq
  %v12812 = vshrl.u32 %v12811, 7
  %v12813 = vsub.s32 %v12810, %v12812
  %v12814 = vrot.slane %v12800, %v12813
  %v12815 = vcombine.low %v12807, %v12814
  %v12816 = vcombine.low %v12549, %v12550
  %v12817 = vcombine.low %v12551, %v12552
  %v12819 = vunpack.c.l.s4 1983009808
  %v12820 = vunpack.c.0.s8 %v12819
  %v12821 = vlaneseq
  %v12822 = vshrl.u32 %v12821, 7
  %v12823 = vsub.s32 %v12820, %v12822
  %v12824 = vrot.slane %v12816, %v12823
  %v12826 = vunpack.c.l.s4 1983009808
  %v12827 = vunpack.c.0.s8 %v12826
  %v12828 = vlaneseq
  %v12829 = vshrl.u32 %v12828, 7
  %v12830 = vsub.s32 %v12827, %v12829
  %v12831 = vrot.slane %v12817, %v12830
  %v12832 = vcombine.low %v12824, %v12831
  %v12833 = vcombine.low %v12553, %v12554
  %v12834 = vcombine.low %v12555, %v12556
  %v12836 = vunpack.c.l.s4 1983009808
  %v12837 = vunpack.c.0.s8 %v12836
  %v12838 = vlaneseq
  %v12839 = vshrl.u32 %v12838, 7
  %v12840 = vsub.s32 %v12837, %v12839
  %v12841 = vrot.slane %v12833, %v12840
  %v12843 = vunpack.c.l.s4 1983009808
  %v12844 = vunpack.c.0.s8 %v12843
  %v12845 = vlaneseq
  %v12846 = vshrl.u32 %v12845, 7
  %v12847 = vsub.s32 %v12844, %v12846
  %v12848 = vrot.slane %v12834, %v12847
  %v12849 = vcombine.low %v12841, %v12848
  %v12850 = vsel %vm12243, %v12798, 0
  %v12852 = vsel %vm12243, %v12815, 0
  %v12854 = vsel %vm12243, %v12832, 0
  %v12856 = vsel %vm12243, %v12849, 0
  %12858 = vmatprep.subr.mxu0 0.0
  %12859 = vmatpush1.msra.mxu0 %v12557
  %12860 = vmatprep.subr.mxu0 0.0
  %12861 = vmatpush1.msra.mxu0 %v12558
  %12862 = vmatprep.subr.mxu0 0.0
  %12863 = vmatpush1.msra.mxu0 %v12559
  %12864 = vmatprep.subr.mxu0 0.0
  %12865 = vmatpush1.msra.mxu0 %v12560
  %12866 = vmatprep.subr.mxu0 0.0
  %12867 = vmatpush1.msra.mxu0 %v12561
  %12868 = vmatprep.subr.mxu0 0.0
  %12869 = vmatpush1.msra.mxu0 %v12562
  %12870 = vmatprep.subr.mxu0 0.0
  %12871 = vmatpush1.msra.mxu0 %v12563
  %12872 = vmatprep.subr.mxu0 0.0
  %12873 = vmatpush1.msra.mxu0 %v12564
  %12874 = vmatprep.subr.mxu0 0.0
  %12875 = vmatpush1.msra.mxu0 0.0
  %12876 = vmatprep.subr.mxu0 0.0
  %12877 = vmatpush1.msra.mxu0 0.0
  %12878 = vmatprep.subr.mxu0 0.0
  %12879 = vmatpush1.msra.mxu0 0.0
  %12880 = vmatprep.subr.mxu0 0.0
  %12881 = vmatpush1.msra.mxu0 0.0
  %12882 = vmatprep.subr.mxu0 0.0
  %12883 = vmatpush1.msra.mxu0 0.0
  %12884 = vmatprep.subr.mxu0 0.0
  %12885 = vmatpush1.msra.mxu0 0.0
  %12886 = vmatprep.subr.mxu0 0.0
  %12887 = vmatpush1.msra.mxu0 0.0
  %12888 = vmatprep.subr.mxu0 0.0
  %12889 = vmatpush1.msra.mxu0 0.0
  %12890 = vmatprep.subr.mxu0 0.0
  %12891 = vmatpush1.msra.mxu0 0.0
  %12892 = vmatprep.subr.mxu0 0.0
  %12893 = vmatpush1.msra.mxu0 0.0
  %12894 = vmatprep.subr.mxu0 0.0
  %12895 = vmatpush1.msra.mxu0 0.0
  %12896 = vmatprep.subr.mxu0 0.0
  %12897 = vmatpush1.msra.mxu0 0.0
  %12898 = vmatprep.subr.mxu0 0.0
  %12899 = vmatpush1.msra.mxu0 0.0
  %12900 = vmatprep.subr.mxu0 0.0
  %12901 = vmatpush1.msra.mxu0 0.0
  %12902 = vmatprep.subr.mxu0 0.0
  %12903 = vmatpush1.msra.mxu0 0.0
  %12904 = vmatprep.subr.mxu0 0.0
  %12905 = vmatpush1.msra.mxu0 0.0
  %12906 = vmatprep.subr.mxu0 0.0
  %12907 = vmatpush1.msra.mxu0 0.0
  %12908 = vmatprep.subr.mxu0 0.0
  %12909 = vmatpush1.msra.mxu0 0.0
  %12910 = vmatprep.subr.mxu0 0.0
  %12911 = vmatpush1.msra.mxu0 0.0
  %12912 = vmatprep.subr.mxu0 0.0
  %12913 = vmatpush1.msra.mxu0 0.0
  %12914 = vmatprep.subr.mxu0 0.0
  %12915 = vmatpush1.msra.mxu0 0.0
  %12916 = vmatprep.subr.mxu0 0.0
  %12917 = vmatpush1.msra.mxu0 0.0
  %12918 = vmatprep.subr.mxu0 0.0
  %12919 = vmatpush1.msra.mxu0 0.0
  %12920 = vmatprep.subr.mxu0 0.0
  %12921 = vmatpush1.msra.mxu0 0.0
  %12922 = vmatprep.mubr.f32.mxu0 0.0
  %12923 = vmatmul.mubr.f32.gmra.mrb[0].mxu0 %v12850
  %v12924 = vpop.f32.mrb[0].mxu0
  %v12925 = vadd.f32 %v12748, %v12924
  %v12926 = vpop.f32.mrb[0].mxu0
  %12927 = vmatprep.mubr.f32.mxu0 0.0
  %12928 = vmatmul.mubr.f32.gmra.mrb[0].mxu0 %v12852
  %v12929 = vpop.f32.mrb[0].mxu0
  %v12930 = vadd.f32 %v12753, %v12929
  %v12931 = vpop.f32.mrb[0].mxu0
  %12932 = vmatprep.mubr.f32.mxu0 0.0
  %12933 = vmatmul.mubr.f32.gmra.mrb[0].mxu0 %v12854
  %v12934 = vpop.f32.mrb[0].mxu0
  %v12935 = vadd.f32 %v12758, %v12934
  %v12936 = vpop.f32.mrb[0].mxu0
  %12937 = vmatprep.mubr.f32.mxu0 0.0
  %12938 = vmatmul.mubr.f32.gmra.mrb[0].mxu0 %v12856
  %v12939 = vpop.f32.mrb[0].mxu0
  %v12940 = vadd.f32 %v12763, %v12939
  %v12941 = vpop.f32.mrb[0].mxu0
  %12942 = vdwg.mxu0
  %v12943 = vld [vmem:[#allocation3 + $0x2] sm:$0x3]
  %v12944 = vld [vmem:[#allocation3 + $0x6] sm:$0x3]
  %v12945 = vld [vmem:[#allocation3 + $0x12] sm:$0x3]
  %v12946 = vld [vmem:[#allocation3 + $0x16] sm:$0x3]
  %v12947 = vld [vmem:[#allocation3 + $0x22] sm:$0x3]
  %v12948 = vld [vmem:[#allocation3 + $0x26] sm:$0x3]
  %v12949 = vld [vmem:[#allocation3 + $0x32] sm:$0x3]
  %v12950 = vld [vmem:[#allocation3 + $0x36] sm:$0x3]
  %v12951 = vld [vmem:[#allocation3 + $0x42] sm:$0x3]
  %v12952 = vld [vmem:[#allocation3 + $0x46] sm:$0x3]
  %v12953 = vld [vmem:[#allocation3 + $0x52] sm:$0x3]
  %v12954 = vld [vmem:[#allocation3 + $0x56] sm:$0x3]
  %v12955 = vld [vmem:[#allocation3 + $0x62] sm:$0x3]
  %v12956 = vld [vmem:[#allocation3 + $0x66] sm:$0x3]
  %v12957 = vld [vmem:[#allocation3 + $0x72] sm:$0x3]
  %v12958 = vld [vmem:[#allocation3 + $0x76] sm:$0x3]
  %v12959 = vld [vmem:[%s5 + $0x80] sm:$0xff]
  %v12960 = vld [vmem:[%s5 + $0x88] sm:$0xff]
  %v12961 = vld [vmem:[%s5 + $0x90] sm:$0xff]
  %v12962 = vld [vmem:[%s5 + $0x98] sm:$0xff]
  %v12963 = vld [vmem:[%s5 + $0xa0] sm:$0xff]
  %v12964 = vld [vmem:[%s5 + $0xa8] sm:$0xff]
  %v12965 = vld [vmem:[%s5 + $0xb0] sm:$0xff]
  %v12966 = vld [vmem:[%s5 + $0xb8] sm:$0xff]
  %v12983 = vcombine.low %v12943, %v12944
  %v12984 = vcombine.low %v12945, %v12946
  %v12986 = vunpack.c.l.s4 1983009808
  %v12987 = vunpack.c.0.s8 %v12986
  %v12988 = vlaneseq
  %v12989 = vshrl.u32 %v12988, 7
  %v12990 = vsub.s32 %v12987, %v12989
  %v12991 = vrot.slane %v12983, %v12990
  %v12993 = vunpack.c.l.s4 1983009808
  %v12994 = vunpack.c.0.s8 %v12993
  %v12995 = vlaneseq
  %v12996 = vshrl.u32 %v12995, 7
  %v12997 = vsub.s32 %v12994, %v12996
  %v12998 = vrot.slane %v12984, %v12997
  %v12999 = vcombine.low %v12991, %v12998
  %v13000 = vcombine.low %v12947, %v12948
  %v13001 = vcombine.low %v12949, %v12950
  %v13003 = vunpack.c.l.s4 1983009808
  %v13004 = vunpack.c.0.s8 %v13003
  %v13005 = vlaneseq
  %v13006 = vshrl.u32 %v13005, 7
  %v13007 = vsub.s32 %v13004, %v13006
  %v13008 = vrot.slane %v13000, %v13007
  %v13010 = vunpack.c.l.s4 1983009808
  %v13011 = vunpack.c.0.s8 %v13010
  %v13012 = vlaneseq
  %v13013 = vshrl.u32 %v13012, 7
  %v13014 = vsub.s32 %v13011, %v13013
  %v13015 = vrot.slane %v13001, %v13014
  %v13016 = vcombine.low %v13008, %v13015
  %v13017 = vcombine.low %v12951, %v12952
  %v13018 = vcombine.low %v12953, %v12954
  %v13020 = vunpack.c.l.s4 1983009808
  %v13021 = vunpack.c.0.s8 %v13020
  %v13022 = vlaneseq
  %v13023 = vshrl.u32 %v13022, 7
  %v13024 = vsub.s32 %v13021, %v13023
  %v13025 = vrot.slane %v13017, %v13024
  %v13027 = vunpack.c.l.s4 1983009808
  %v13028 = vunpack.c.0.s8 %v13027
  %v13029 = vlaneseq
  %v13030 = vshrl.u32 %v13029, 7
  %v13031 = vsub.s32 %v13028, %v13030
  %v13032 = vrot.slane %v13018, %v13031
  %v13033 = vcombine.low %v13025, %v13032
  %v13034 = vcombine.low %v12955, %v12956
  %v13035 = vcombine.low %v12957, %v12958
  %v13037 = vunpack.c.l.s4 1983009808
  %v13038 = vunpack.c.0.s8 %v13037
  %v13039 = vlaneseq
  %v13040 = vshrl.u32 %v13039, 7
  %v13041 = vsub.s32 %v13038, %v13040
  %v13042 = vrot.slane %v13034, %v13041
  %v13044 = vunpack.c.l.s4 1983009808
  %v13045 = vunpack.c.0.s8 %v13044
  %v13046 = vlaneseq
  %v13047 = vshrl.u32 %v13046, 7
  %v13048 = vsub.s32 %v13045, %v13047
  %v13049 = vrot.slane %v13035, %v13048
  %v13050 = vcombine.low %v13042, %v13049
  %v13051 = vsel %vm12243, %v12999, 0
  %v13053 = vsel %vm12243, %v13016, 0
  %v13055 = vsel %vm12243, %v13033, 0
  %v13057 = vsel %vm12243, %v13050, 0
  %13059 = vmatprep.subr.mxu0 0.0
  %13060 = vmatpush1.msra.mxu0 %v12959
  %13061 = vmatprep.subr.mxu0 0.0
  %13062 = vmatpush1.msra.mxu0 %v12960
  %13063 = vmatprep.subr.mxu0 0.0
  %13064 = vmatpush1.msra.mxu0 %v12961
  %13065 = vmatprep.subr.mxu0 0.0
  %13066 = vmatpush1.msra.mxu0 %v12962
  %13067 = vmatprep.subr.mxu0 0.0
  %13068 = vmatpush1.msra.mxu0 %v12963
  %13069 = vmatprep.subr.mxu0 0.0
  %13070 = vmatpush1.msra.mxu0 %v12964
  %13071 = vmatprep.subr.mxu0 0.0
  %13072 = vmatpush1.msra.mxu0 %v12965
  %13073 = vmatprep.subr.mxu0 0.0
  %13074 = vmatpush1.msra.mxu0 %v12966
  %13075 = vmatprep.subr.mxu0 0.0
  %13076 = vmatpush1.msra.mxu0 0.0
  %13077 = vmatprep.subr.mxu0 0.0
  %13078 = vmatpush1.msra.mxu0 0.0
  %13079 = vmatprep.subr.mxu0 0.0
  %13080 = vmatpush1.msra.mxu0 0.0
  %13081 = vmatprep.subr.mxu0 0.0
  %13082 = vmatpush1.msra.mxu0 0.0
  %13083 = vmatprep.subr.mxu0 0.0
  %13084 = vmatpush1.msra.mxu0 0.0
  %13085 = vmatprep.subr.mxu0 0.0
  %13086 = vmatpush1.msra.mxu0 0.0
  %13087 = vmatprep.subr.mxu0 0.0
  %13088 = vmatpush1.msra.mxu0 0.0
  %13089 = vmatprep.subr.mxu0 0.0
  %13090 = vmatpush1.msra.mxu0 0.0
  %13091 = vmatprep.subr.mxu0 0.0
  %13092 = vmatpush1.msra.mxu0 0.0
  %13093 = vmatprep.subr.mxu0 0.0
  %13094 = vmatpush1.msra.mxu0 0.0
  %13095 = vmatprep.subr.mxu0 0.0
  %13096 = vmatpush1.msra.mxu0 0.0
  %13097 = vmatprep.subr.mxu0 0.0
  %13098 = vmatpush1.msra.mxu0 0.0
  %13099 = vmatprep.subr.mxu0 0.0
  %13100 = vmatpush1.msra.mxu0 0.0
  %13101 = vmatprep.subr.mxu0 0.0
  %13102 = vmatpush1.msra.mxu0 0.0
  %13103 = vmatprep.subr.mxu0 0.0
  %13104 = vmatpush1.msra.mxu0 0.0
  %13105 = vmatprep.subr.mxu0 0.0
  %13106 = vmatpush1.msra.mxu0 0.0
  %13107 = vmatprep.subr.mxu0 0.0
  %13108 = vmatpush1.msra.mxu0 0.0
  %13109 = vmatprep.subr.mxu0 0.0
  %13110 = vmatpush1.msra.mxu0 0.0
  %13111 = vmatprep.subr.mxu0 0.0
  %13112 = vmatpush1.msra.mxu0 0.0
  %13113 = vmatprep.subr.mxu0 0.0
  %13114 = vmatpush1.msra.mxu0 0.0
  %13115 = vmatprep.subr.mxu0 0.0
  %13116 = vmatpush1.msra.mxu0 0.0
  %13117 = vmatprep.subr.mxu0 0.0
  %13118 = vmatpush1.msra.mxu0 0.0
  %13119 = vmatprep.subr.mxu0 0.0
  %13120 = vmatpush1.msra.mxu0 0.0
  %13121 = vmatprep.subr.mxu0 0.0
  %13122 = vmatpush1.msra.mxu0 0.0
  %13123 = vmatprep.mubr.f32.mxu0 0.0
  %13124 = vmatmul.mubr.f32.gmra.mrb[0].mxu0 %v13051
  %v13125 = vpop.f32.mrb[0].mxu0
  %v13126 = vadd.f32 0.0, %v13125
  %v13127 = vpop.f32.mrb[0].mxu0
  %13128 = vmatprep.mubr.f32.mxu0 0.0
  %13129 = vmatmul.mubr.f32.gmra.mrb[0].mxu0 %v13053
  %v13130 = vpop.f32.mrb[0].mxu0
  %v13131 = vadd.f32 0.0, %v13130
  %v13132 = vpop.f32.mrb[0].mxu0
  %13133 = vmatprep.mubr.f32.mxu0 0.0
  %13134 = vmatmul.mubr.f32.gmra.mrb[0].mxu0 %v13055
  %v13135 = vpop.f32.mrb[0].mxu0
  %v13136 = vadd.f32 0.0, %v13135
  %v13137 = vpop.f32.mrb[0].mxu0
  %13138 = vmatprep.mubr.f32.mxu0 0.0
  %13139 = vmatmul.mubr.f32.gmra.mrb[0].mxu0 %v13057
  %v13140 = vpop.f32.mrb[0].mxu0
  %v13141 = vadd.f32 0.0, %v13140
  %v13142 = vpop.f32.mrb[0].mxu0
  %13143 = vdwg.mxu0
  %v13144 = vadd.f32 %v12925, %v13126
  %v13145 = vadd.f32 %v12930, %v13131
  %v13146 = vadd.f32 %v12935, %v13136
  %v13147 = vadd.f32 %v12940, %v13141
  %v13148 = vld [vmem:[%s12524] sm:$0x3]
  %v13149 = vld [vmem:[%s12524 + $0x4] sm:$0x3]
  %v13150 = vld [vmem:[%s12524 + $0x10] sm:$0x3]
  %v13151 = vld [vmem:[%s12524 + $0x14] sm:$0x3]
  %v13152 = vld [vmem:[%s12524 + $0x20] sm:$0x3]
  %v13153 = vld [vmem:[%s12524 + $0x24] sm:$0x3]
  %v13154 = vld [vmem:[%s12524 + $0x30] sm:$0x3]
  %v13155 = vld [vmem:[%s12524 + $0x34] sm:$0x3]
  %v13156 = vld [vmem:[%s12524 + $0x40] sm:$0x3]
  %v13157 = vld [vmem:[%s12524 + $0x44] sm:$0x3]
  %v13158 = vld [vmem:[%s12524 + $0x50] sm:$0x3]
  %v13159 = vld [vmem:[%s12524 + $0x54] sm:$0x3]
  %v13160 = vld [vmem:[%s12524 + $0x60] sm:$0x3]
  %v13161 = vld [vmem:[%s12524 + $0x64] sm:$0x3]
  %v13162 = vld [vmem:[%s12524 + $0x70] sm:$0x3]
  %v13163 = vld [vmem:[%s12524 + $0x74] sm:$0x3]
  %v13164 = vld [vmem:[%s5 + $0xc0] sm:$0xff]
  %v13165 = vld [vmem:[%s5 + $0xc8] sm:$0xff]
  %v13166 = vld [vmem:[%s5 + $0xd0] sm:$0xff]
  %v13167 = vld [vmem:[%s5 + $0xd8] sm:$0xff]
  %v13168 = vld [vmem:[%s5 + $0xe0] sm:$0xff]
  %v13169 = vld [vmem:[%s5 + $0xe8] sm:$0xff]
  %v13170 = vld [vmem:[%s5 + $0xf0] sm:$0xff]
  %v13171 = vld [vmem:[%s5 + $0xf8] sm:$0xff]
  %v13188 = vcombine.low %v13148, %v13149
  %v13189 = vcombine.low %v13150, %v13151
  %v13191 = vunpack.c.l.s4 1983009808
  %v13192 = vunpack.c.0.s8 %v13191
  %v13193 = vlaneseq
  %v13194 = vshrl.u32 %v13193, 7
  %v13195 = vsub.s32 %v13192, %v13194
  %v13196 = vrot.slane %v13188, %v13195
  %v13198 = vunpack.c.l.s4 1983009808
  %v13199 = vunpack.c.0.s8 %v13198
  %v13200 = vlaneseq
  %v13201 = vshrl.u32 %v13200, 7
  %v13202 = vsub.s32 %v13199, %v13201
  %v13203 = vrot.slane %v13189, %v13202
  %v13204 = vcombine.low %v13196, %v13203
  %v13205 = vcombine.low %v13152, %v13153
  %v13206 = vcombine.low %v13154, %v13155
  %v13208 = vunpack.c.l.s4 1983009808
  %v13209 = vunpack.c.0.s8 %v13208
  %v13210 = vlaneseq
  %v13211 = vshrl.u32 %v13210, 7
  %v13212 = vsub.s32 %v13209, %v13211
  %v13213 = vrot.slane %v13205, %v13212
  %v13215 = vunpack.c.l.s4 1983009808
  %v13216 = vunpack.c.0.s8 %v13215
  %v13217 = vlaneseq
  %v13218 = vshrl.u32 %v13217, 7
  %v13219 = vsub.s32 %v13216, %v13218
  %v13220 = vrot.slane %v13206, %v13219
  %v13221 = vcombine.low %v13213, %v13220
  %v13222 = vcombine.low %v13156, %v13157
  %v13223 = vcombine.low %v13158, %v13159
  %v13225 = vunpack.c.l.s4 1983009808
  %v13226 = vunpack.c.0.s8 %v13225
  %v13227 = vlaneseq
  %v13228 = vshrl.u32 %v13227, 7
  %v13229 = vsub.s32 %v13226, %v13228
  %v13230 = vrot.slane %v13222, %v13229
  %v13232 = vunpack.c.l.s4 1983009808
  %v13233 = vunpack.c.0.s8 %v13232
  %v13234 = vlaneseq
  %v13235 = vshrl.u32 %v13234, 7
  %v13236 = vsub.s32 %v13233, %v13235
  %v13237 = vrot.slane %v13223, %v13236
  %v13238 = vcombine.low %v13230, %v13237
  %v13239 = vcombine.low %v13160, %v13161
  %v13240 = vcombine.low %v13162, %v13163
  %v13242 = vunpack.c.l.s4 1983009808
  %v13243 = vunpack.c.0.s8 %v13242
  %v13244 = vlaneseq
  %v13245 = vshrl.u32 %v13244, 7
  %v13246 = vsub.s32 %v13243, %v13245
  %v13247 = vrot.slane %v13239, %v13246
  %v13249 = vunpack.c.l.s4 1983009808
  %v13250 = vunpack.c.0.s8 %v13249
  %v13251 = vlaneseq
  %v13252 = vshrl.u32 %v13251, 7
  %v13253 = vsub.s32 %v13250, %v13252
  %v13254 = vrot.slane %v13240, %v13253
  %v13255 = vcombine.low %v13247, %v13254
  %v13256 = vsel %vm12243, %v13204, 0
  %v13258 = vsel %vm12243, %v13221, 0
  %v13260 = vsel %vm12243, %v13238, 0
  %v13262 = vsel %vm12243, %v13255, 0
  %13264 = vmatprep.subr.mxu0 0.0
  %13265 = vmatpush1.msra.mxu0 %v13164
  %13266 = vmatprep.subr.mxu0 0.0
  %13267 = vmatpush1.msra.mxu0 %v13165
  %13268 = vmatprep.subr.mxu0 0.0
  %13269 = vmatpush1.msra.mxu0 %v13166
  %13270 = vmatprep.subr.mxu0 0.0
  %13271 = vmatpush1.msra.mxu0 %v13167
  %13272 = vmatprep.subr.mxu0 0.0
  %13273 = vmatpush1.msra.mxu0 %v13168
  %13274 = vmatprep.subr.mxu0 0.0
  %13275 = vmatpush1.msra.mxu0 %v13169
  %13276 = vmatprep.subr.mxu0 0.0
  %13277 = vmatpush1.msra.mxu0 %v13170
  %13278 = vmatprep.subr.mxu0 0.0
  %13279 = vmatpush1.msra.mxu0 %v13171
  %13280 = vmatprep.subr.mxu0 0.0
  %13281 = vmatpush1.msra.mxu0 0.0
  %13282 = vmatprep.subr.mxu0 0.0
  %13283 = vmatpush1.msra.mxu0 0.0
  %13284 = vmatprep.subr.mxu0 0.0
  %13285 = vmatpush1.msra.mxu0 0.0
  %13286 = vmatprep.subr.mxu0 0.0
  %13287 = vmatpush1.msra.mxu0 0.0
  %13288 = vmatprep.subr.mxu0 0.0
  %13289 = vmatpush1.msra.mxu0 0.0
  %13290 = vmatprep.subr.mxu0 0.0
  %13291 = vmatpush1.msra.mxu0 0.0
  %13292 = vmatprep.subr.mxu0 0.0
  %13293 = vmatpush1.msra.mxu0 0.0
  %13294 = vmatprep.subr.mxu0 0.0
  %13295 = vmatpush1.msra.mxu0 0.0
  %13296 = vmatprep.subr.mxu0 0.0
  %13297 = vmatpush1.msra.mxu0 0.0
  %13298 = vmatprep.subr.mxu0 0.0
  %13299 = vmatpush1.msra.mxu0 0.0
  %13300 = vmatprep.subr.mxu0 0.0
  %13301 = vmatpush1.msra.mxu0 0.0
  %13302 = vmatprep.subr.mxu0 0.0
  %13303 = vmatpush1.msra.mxu0 0.0
  %13304 = vmatprep.subr.mxu0 0.0
  %13305 = vmatpush1.msra.mxu0 0.0
  %13306 = vmatprep.subr.mxu0 0.0
  %13307 = vmatpush1.msra.mxu0 0.0
  %13308 = vmatprep.subr.mxu0 0.0
  %13309 = vmatpush1.msra.mxu0 0.0
  %13310 = vmatprep.subr.mxu0 0.0
  %13311 = vmatpush1.msra.mxu0 0.0
  %13312 = vmatprep.subr.mxu0 0.0
  %13313 = vmatpush1.msra.mxu0 0.0
  %13314 = vmatprep.subr.mxu0 0.0
  %13315 = vmatpush1.msra.mxu0 0.0
  %13316 = vmatprep.subr.mxu0 0.0
  %13317 = vmatpush1.msra.mxu0 0.0
  %13318 = vmatprep.subr.mxu0 0.0
  %13319 = vmatpush1.msra.mxu0 0.0
  %13320 = vmatprep.subr.mxu0 0.0
  %13321 = vmatpush1.msra.mxu0 0.0
  %13322 = vmatprep.subr.mxu0 0.0
  %13323 = vmatpush1.msra.mxu0 0.0
  %13324 = vmatprep.subr.mxu0 0.0
  %13325 = vmatpush1.msra.mxu0 0.0
  %13326 = vmatprep.subr.mxu0 0.0
  %13327 = vmatpush1.msra.mxu0 0.0
  %13328 = vmatprep.mubr.f32.mxu0 0.0
  %13329 = vmatmul.mubr.f32.gmra.mrb[0].mxu0 %v13256
  %v13330 = vpop.f32.mrb[0].mxu0
  %v13331 = vadd.f32 0.0, %v13330
  %v13332 = vpop.f32.mrb[0].mxu0
  %13333 = vmatprep.mubr.f32.mxu0 0.0
  %13334 = vmatmul.mubr.f32.gmra.mrb[0].mxu0 %v13258
  %v13335 = vpop.f32.mrb[0].mxu0
  %v13336 = vadd.f32 0.0, %v13335
  %v13337 = vpop.f32.mrb[0].mxu0
  %13338 = vmatprep.mubr.f32.mxu0 0.0
  %13339 = vmatmul.mubr.f32.gmra.mrb[0].mxu0 %v13260
  %v13340 = vpop.f32.mrb[0].mxu0
  %v13341 = vadd.f32 0.0, %v13340
  %v13342 = vpop.f32.mrb[0].mxu0
  %13343 = vmatprep.mubr.f32.mxu0 0.0
  %13344 = vmatmul.mubr.f32.gmra.mrb[0].mxu0 %v13262
  %v13345 = vpop.f32.mrb[0].mxu0
  %v13346 = vadd.f32 0.0, %v13345
  %v13347 = vpop.f32.mrb[0].mxu0
  %13348 = vdwg.mxu0
  %v13349 = vadd.f32 %v13144, %v13331
  %v13350 = vadd.f32 %v13145, %v13336
  %v13351 = vadd.f32 %v13146, %v13341
  %v13352 = vadd.f32 %v13147, %v13346
  %v13353 = vld [vmem:[%s12524 + $0x1] sm:$0x3]
  %v13354 = vld [vmem:[%s12524 + $0x5] sm:$0x3]
  %v13355 = vld [vmem:[%s12524 + $0x11] sm:$0x3]
  %v13356 = vld [vmem:[%s12524 + $0x15] sm:$0x3]
  %v13357 = vld [vmem:[%s12524 + $0x21] sm:$0x3]
  %v13358 = vld [vmem:[%s12524 + $0x25] sm:$0x3]
  %v13359 = vld [vmem:[%s12524 + $0x31] sm:$0x3]
  %v13360 = vld [vmem:[%s12524 + $0x35] sm:$0x3]
  %v13361 = vld [vmem:[%s12524 + $0x41] sm:$0x3]
  %v13362 = vld [vmem:[%s12524 + $0x45] sm:$0x3]
  %v13363 = vld [vmem:[%s12524 + $0x51] sm:$0x3]
  %v13364 = vld [vmem:[%s12524 + $0x55] sm:$0x3]
  %v13365 = vld [vmem:[%s12524 + $0x61] sm:$0x3]
  %v13366 = vld [vmem:[%s12524 + $0x65] sm:$0x3]
  %v13367 = vld [vmem:[%s12524 + $0x71] sm:$0x3]
  %v13368 = vld [vmem:[%s12524 + $0x75] sm:$0x3]
  %v13369 = vld [vmem:[%s5 + $0x100] sm:$0xff]
  %v13370 = vld [vmem:[%s5 + $0x108] sm:$0xff]
  %v13371 = vld [vmem:[%s5 + $0x110] sm:$0xff]
  %v13372 = vld [vmem:[%s5 + $0x118] sm:$0xff]
  %v13373 = vld [vmem:[%s5 + $0x120] sm:$0xff]
  %v13374 = vld [vmem:[%s5 + $0x128] sm:$0xff]
  %v13375 = vld [vmem:[%s5 + $0x130] sm:$0xff]
  %v13376 = vld [vmem:[%s5 + $0x138] sm:$0xff]
  %v13393 = vcombine.low %v13353, %v13354
  %v13394 = vcombine.low %v13355, %v13356
  %v13396 = vunpack.c.l.s4 1983009808
  %v13397 = vunpack.c.0.s8 %v13396
  %v13398 = vlaneseq
  %v13399 = vshrl.u32 %v13398, 7
  %v13400 = vsub.s32 %v13397, %v13399
  %v13401 = vrot.slane %v13393, %v13400
  %v13403 = vunpack.c.l.s4 1983009808
  %v13404 = vunpack.c.0.s8 %v13403
  %v13405 = vlaneseq
  %v13406 = vshrl.u32 %v13405, 7
  %v13407 = vsub.s32 %v13404, %v13406
  %v13408 = vrot.slane %v13394, %v13407
  %v13409 = vcombine.low %v13401, %v13408
  %v13410 = vcombine.low %v13357, %v13358
  %v13411 = vcombine.low %v13359, %v13360
  %v13413 = vunpack.c.l.s4 1983009808
  %v13414 = vunpack.c.0.s8 %v13413
  %v13415 = vlaneseq
  %v13416 = vshrl.u32 %v13415, 7
  %v13417 = vsub.s32 %v13414, %v13416
  %v13418 = vrot.slane %v13410, %v13417
  %v13420 = vunpack.c.l.s4 1983009808
  %v13421 = vunpack.c.0.s8 %v13420
  %v13422 = vlaneseq
  %v13423 = vshrl.u32 %v13422, 7
  %v13424 = vsub.s32 %v13421, %v13423
  %v13425 = vrot.slane %v13411, %v13424
  %v13426 = vcombine.low %v13418, %v13425
  %v13427 = vcombine.low %v13361, %v13362
  %v13428 = vcombine.low %v13363, %v13364
  %v13430 = vunpack.c.l.s4 1983009808
  %v13431 = vunpack.c.0.s8 %v13430
  %v13432 = vlaneseq
  %v13433 = vshrl.u32 %v13432, 7
  %v13434 = vsub.s32 %v13431, %v13433
  %v13435 = vrot.slane %v13427, %v13434
  %v13437 = vunpack.c.l.s4 1983009808
  %v13438 = vunpack.c.0.s8 %v13437
  %v13439 = vlaneseq
  %v13440 = vshrl.u32 %v13439, 7
  %v13441 = vsub.s32 %v13438, %v13440
  %v13442 = vrot.slane %v13428, %v13441
  %v13443 = vcombine.low %v13435, %v13442
  %v13444 = vcombine.low %v13365, %v13366
  %v13445 = vcombine.low %v13367, %v13368
  %v13447 = vunpack.c.l.s4 1983009808
  %v13448 = vunpack.c.0.s8 %v13447
  %v13449 = vlaneseq
  %v13450 = vshrl.u32 %v13449, 7
  %v13451 = vsub.s32 %v13448, %v13450
  %v13452 = vrot.slane %v13444, %v13451
  %v13454 = vunpack.c.l.s4 1983009808
  %v13455 = vunpack.c.0.s8 %v13454
  %v13456 = vlaneseq
  %v13457 = vshrl.u32 %v13456, 7
  %v13458 = vsub.s32 %v13455, %v13457
  %v13459 = vrot.slane %v13445, %v13458
  %v13460 = vcombine.low %v13452, %v13459
  %v13461 = vsel %vm12243, %v13409, 0
  %v13463 = vsel %vm12243, %v13426, 0
  %v13465 = vsel %vm12243, %v13443, 0
  %v13467 = vsel %vm12243, %v13460, 0
  %13469 = vmatprep.subr.mxu0 0.0
  %13470 = vmatpush1.msra.mxu0 %v13369
  %13471 = vmatprep.subr.mxu0 0.0
  %13472 = vmatpush1.msra.mxu0 %v13370
  %13473 = vmatprep.subr.mxu0 0.0
  %13474 = vmatpush1.msra.mxu0 %v13371
  %13475 = vmatprep.subr.mxu0 0.0
  %13476 = vmatpush1.msra.mxu0 %v13372
  %13477 = vmatprep.subr.mxu0 0.0
  %13478 = vmatpush1.msra.mxu0 %v13373
  %13479 = vmatprep.subr.mxu0 0.0
  %13480 = vmatpush1.msra.mxu0 %v13374
  %13481 = vmatprep.subr.mxu0 0.0
  %13482 = vmatpush1.msra.mxu0 %v13375
  %13483 = vmatprep.subr.mxu0 0.0
  %13484 = vmatpush1.msra.mxu0 %v13376
  %13485 = vmatprep.subr.mxu0 0.0
  %13486 = vmatpush1.msra.mxu0 0.0
  %13487 = vmatprep.subr.mxu0 0.0
  %13488 = vmatpush1.msra.mxu0 0.0
  %13489 = vmatprep.subr.mxu0 0.0
  %13490 = vmatpush1.msra.mxu0 0.0
  %13491 = vmatprep.subr.mxu0 0.0
  %13492 = vmatpush1.msra.mxu0 0.0
  %13493 = vmatprep.subr.mxu0 0.0
  %13494 = vmatpush1.msra.mxu0 0.0
  %13495 = vmatprep.subr.mxu0 0.0
  %13496 = vmatpush1.msra.mxu0 0.0
  %13497 = vmatprep.subr.mxu0 0.0
  %13498 = vmatpush1.msra.mxu0 0.0
  %13499 = vmatprep.subr.mxu0 0.0
  %13500 = vmatpush1.msra.mxu0 0.0
  %13501 = vmatprep.subr.mxu0 0.0
  %13502 = vmatpush1.msra.mxu0 0.0
  %13503 = vmatprep.subr.mxu0 0.0
  %13504 = vmatpush1.msra.mxu0 0.0
  %13505 = vmatprep.subr.mxu0 0.0
  %13506 = vmatpush1.msra.mxu0 0.0
  %13507 = vmatprep.subr.mxu0 0.0
  %13508 = vmatpush1.msra.mxu0 0.0
  %13509 = vmatprep.subr.mxu0 0.0
  %13510 = vmatpush1.msra.mxu0 0.0
  %13511 = vmatprep.subr.mxu0 0.0
  %13512 = vmatpush1.msra.mxu0 0.0
  %13513 = vmatprep.subr.mxu0 0.0
  %13514 = vmatpush1.msra.mxu0 0.0
  %13515 = vmatprep.subr.mxu0 0.0
  %13516 = vmatpush1.msra.mxu0 0.0
  %13517 = vmatprep.subr.mxu0 0.0
  %13518 = vmatpush1.msra.mxu0 0.0
  %13519 = vmatprep.subr.mxu0 0.0
  %13520 = vmatpush1.msra.mxu0 0.0
  %13521 = vmatprep.subr.mxu0 0.0
  %13522 = vmatpush1.msra.mxu0 0.0
  %13523 = vmatprep.subr.mxu0 0.0
  %13524 = vmatpush1.msra.mxu0 0.0
  %13525 = vmatprep.subr.mxu0 0.0
  %13526 = vmatpush1.msra.mxu0 0.0
  %13527 = vmatprep.subr.mxu0 0.0
  %13528 = vmatpush1.msra.mxu0 0.0
  %13529 = vmatprep.subr.mxu0 0.0
  %13530 = vmatpush1.msra.mxu0 0.0
  %13531 = vmatprep.subr.mxu0 0.0
  %13532 = vmatpush1.msra.mxu0 0.0
  %13533 = vmatprep.mubr.f32.mxu0 0.0
  %13534 = vmatmul.mubr.f32.gmra.mrb[0].mxu0 %v13461
  %v13535 = vpop.f32.mrb[0].mxu0
  %v13536 = vadd.f32 0.0, %v13535
  %v13537 = vpop.f32.mrb[0].mxu0
  %13538 = vmatprep.mubr.f32.mxu0 0.0
  %13539 = vmatmul.mubr.f32.gmra.mrb[0].mxu0 %v13463
  %v13540 = vpop.f32.mrb[0].mxu0
  %v13541 = vadd.f32 0.0, %v13540
  %v13542 = vpop.f32.mrb[0].mxu0
  %13543 = vmatprep.mubr.f32.mxu0 0.0
  %13544 = vmatmul.mubr.f32.gmra.mrb[0].mxu0 %v13465
  %v13545 = vpop.f32.mrb[0].mxu0
  %v13546 = vadd.f32 0.0, %v13545
  %v13547 = vpop.f32.mrb[0].mxu0
  %13548 = vmatprep.mubr.f32.mxu0 0.0
  %13549 = vmatmul.mubr.f32.gmra.mrb[0].mxu0 %v13467
  %v13550 = vpop.f32.mrb[0].mxu0
  %v13551 = vadd.f32 0.0, %v13550
  %v13552 = vpop.f32.mrb[0].mxu0
  %13553 = vdwg.mxu0
  %v13554 = vadd.f32 %v13349, %v13536
  %v13555 = vadd.f32 %v13350, %v13541
  %v13556 = vadd.f32 %v13351, %v13546
  %v13557 = vadd.f32 %v13352, %v13551
  %v13558 = vld [vmem:[%s12524 + $0x2] sm:$0x3]
  %v13559 = vld [vmem:[%s12524 + $0x6] sm:$0x3]
  %v13560 = vld [vmem:[%s12524 + $0x12] sm:$0x3]
  %v13561 = vld [vmem:[%s12524 + $0x16] sm:$0x3]
  %v13562 = vld [vmem:[%s12524 + $0x22] sm:$0x3]
  %v13563 = vld [vmem:[%s12524 + $0x26] sm:$0x3]
  %v13564 = vld [vmem:[%s12524 + $0x32] sm:$0x3]
  %v13565 = vld [vmem:[%s12524 + $0x36] sm:$0x3]
  %v13566 = vld [vmem:[%s12524 + $0x42] sm:$0x3]
  %v13567 = vld [vmem:[%s12524 + $0x46] sm:$0x3]
  %v13568 = vld [vmem:[%s12524 + $0x52] sm:$0x3]
  %v13569 = vld [vmem:[%s12524 + $0x56] sm:$0x3]
  %v13570 = vld [vmem:[%s12524 + $0x62] sm:$0x3]
  %v13571 = vld [vmem:[%s12524 + $0x66] sm:$0x3]
  %v13572 = vld [vmem:[%s12524 + $0x72] sm:$0x3]
  %v13573 = vld [vmem:[%s12524 + $0x76] sm:$0x3]
  %v13574 = vld [vmem:[%s5 + $0x140] sm:$0xff]
  %v13575 = vld [vmem:[%s5 + $0x148] sm:$0xff]
  %v13576 = vld [vmem:[%s5 + $0x150] sm:$0xff]
  %v13577 = vld [vmem:[%s5 + $0x158] sm:$0xff]
  %v13578 = vld [vmem:[%s5 + $0x160] sm:$0xff]
  %v13579 = vld [vmem:[%s5 + $0x168] sm:$0xff]
  %v13580 = vld [vmem:[%s5 + $0x170] sm:$0xff]
  %v13581 = vld [vmem:[%s5 + $0x178] sm:$0xff]
  %v13598 = vcombine.low %v13558, %v13559
  %v13599 = vcombine.low %v13560, %v13561
  %v13601 = vunpack.c.l.s4 1983009808
  %v13602 = vunpack.c.0.s8 %v13601
  %v13603 = vlaneseq
  %v13604 = vshrl.u32 %v13603, 7
  %v13605 = vsub.s32 %v13602, %v13604
  %v13606 = vrot.slane %v13598, %v13605
  %v13608 = vunpack.c.l.s4 1983009808
  %v13609 = vunpack.c.0.s8 %v13608
  %v13610 = vlaneseq
  %v13611 = vshrl.u32 %v13610, 7
  %v13612 = vsub.s32 %v13609, %v13611
  %v13613 = vrot.slane %v13599, %v13612
  %v13614 = vcombine.low %v13606, %v13613
  %v13615 = vcombine.low %v13562, %v13563
  %v13616 = vcombine.low %v13564, %v13565
  %v13618 = vunpack.c.l.s4 1983009808
  %v13619 = vunpack.c.0.s8 %v13618
  %v13620 = vlaneseq
  %v13621 = vshrl.u32 %v13620, 7
  %v13622 = vsub.s32 %v13619, %v13621
  %v13623 = vrot.slane %v13615, %v13622
  %v13625 = vunpack.c.l.s4 1983009808
  %v13626 = vunpack.c.0.s8 %v13625
  %v13627 = vlaneseq
  %v13628 = vshrl.u32 %v13627, 7
  %v13629 = vsub.s32 %v13626, %v13628
  %v13630 = vrot.slane %v13616, %v13629
  %v13631 = vcombine.low %v13623, %v13630
  %v13632 = vcombine.low %v13566, %v13567
  %v13633 = vcombine.low %v13568, %v13569
  %v13635 = vunpack.c.l.s4 1983009808
  %v13636 = vunpack.c.0.s8 %v13635
  %v13637 = vlaneseq
  %v13638 = vshrl.u32 %v13637, 7
  %v13639 = vsub.s32 %v13636, %v13638
  %v13640 = vrot.slane %v13632, %v13639
  %v13642 = vunpack.c.l.s4 1983009808
  %v13643 = vunpack.c.0.s8 %v13642
  %v13644 = vlaneseq
  %v13645 = vshrl.u32 %v13644, 7
  %v13646 = vsub.s32 %v13643, %v13645
  %v13647 = vrot.slane %v13633, %v13646
  %v13648 = vcombine.low %v13640, %v13647
  %v13649 = vcombine.low %v13570, %v13571
  %v13650 = vcombine.low %v13572, %v13573
  %v13652 = vunpack.c.l.s4 1983009808
  %v13653 = vunpack.c.0.s8 %v13652
  %v13654 = vlaneseq
  %v13655 = vshrl.u32 %v13654, 7
  %v13656 = vsub.s32 %v13653, %v13655
  %v13657 = vrot.slane %v13649, %v13656
  %v13659 = vunpack.c.l.s4 1983009808
  %v13660 = vunpack.c.0.s8 %v13659
  %v13661 = vlaneseq
  %v13662 = vshrl.u32 %v13661, 7
  %v13663 = vsub.s32 %v13660, %v13662
  %v13664 = vrot.slane %v13650, %v13663
  %v13665 = vcombine.low %v13657, %v13664
  %v13666 = vsel %vm12243, %v13614, 0
  %v13668 = vsel %vm12243, %v13631, 0
  %v13670 = vsel %vm12243, %v13648, 0
  %v13672 = vsel %vm12243, %v13665, 0
  %13674 = vmatprep.subr.mxu0 0.0
  %13675 = vmatpush1.msra.mxu0 %v13574
  %13676 = vmatprep.subr.mxu0 0.0
  %13677 = vmatpush1.msra.mxu0 %v13575
  %13678 = vmatprep.subr.mxu0 0.0
  %13679 = vmatpush1.msra.mxu0 %v13576
  %13680 = vmatprep.subr.mxu0 0.0
  %13681 = vmatpush1.msra.mxu0 %v13577
  %13682 = vmatprep.subr.mxu0 0.0
  %13683 = vmatpush1.msra.mxu0 %v13578
  %13684 = vmatprep.subr.mxu0 0.0
  %13685 = vmatpush1.msra.mxu0 %v13579
  %13686 = vmatprep.subr.mxu0 0.0
  %13687 = vmatpush1.msra.mxu0 %v13580
  %13688 = vmatprep.subr.mxu0 0.0
  %13689 = vmatpush1.msra.mxu0 %v13581
  %13690 = vmatprep.subr.mxu0 0.0
  %13691 = vmatpush1.msra.mxu0 0.0
  %13692 = vmatprep.subr.mxu0 0.0
  %13693 = vmatpush1.msra.mxu0 0.0
  %13694 = vmatprep.subr.mxu0 0.0
  %13695 = vmatpush1.msra.mxu0 0.0
  %13696 = vmatprep.subr.mxu0 0.0
  %13697 = vmatpush1.msra.mxu0 0.0
  %13698 = vmatprep.subr.mxu0 0.0
  %13699 = vmatpush1.msra.mxu0 0.0
  %13700 = vmatprep.subr.mxu0 0.0
  %13701 = vmatpush1.msra.mxu0 0.0
  %13702 = vmatprep.subr.mxu0 0.0
  %13703 = vmatpush1.msra.mxu0 0.0
  %13704 = vmatprep.subr.mxu0 0.0
  %13705 = vmatpush1.msra.mxu0 0.0
  %13706 = vmatprep.subr.mxu0 0.0
  %13707 = vmatpush1.msra.mxu0 0.0
  %13708 = vmatprep.subr.mxu0 0.0
  %13709 = vmatpush1.msra.mxu0 0.0
  %13710 = vmatprep.subr.mxu0 0.0
  %13711 = vmatpush1.msra.mxu0 0.0
  %13712 = vmatprep.subr.mxu0 0.0
  %13713 = vmatpush1.msra.mxu0 0.0
  %13714 = vmatprep.subr.mxu0 0.0
  %13715 = vmatpush1.msra.mxu0 0.0
  %13716 = vmatprep.subr.mxu0 0.0
  %13717 = vmatpush1.msra.mxu0 0.0
  %13718 = vmatprep.subr.mxu0 0.0
  %13719 = vmatpush1.msra.mxu0 0.0
  %13720 = vmatprep.subr.mxu0 0.0
  %13721 = vmatpush1.msra.mxu0 0.0
  %13722 = vmatprep.subr.mxu0 0.0
  %13723 = vmatpush1.msra.mxu0 0.0
  %13724 = vmatprep.subr.mxu0 0.0
  %13725 = vmatpush1.msra.mxu0 0.0
  %13726 = vmatprep.subr.mxu0 0.0
  %13727 = vmatpush1.msra.mxu0 0.0
  %13728 = vmatprep.subr.mxu0 0.0
  %13729 = vmatpush1.msra.mxu0 0.0
  %13730 = vmatprep.subr.mxu0 0.0
  %13731 = vmatpush1.msra.mxu0 0.0
  %13732 = vmatprep.subr.mxu0 0.0
  %13733 = vmatpush1.msra.mxu0 0.0
  %13734 = vmatprep.subr.mxu0 0.0
  %13735 = vmatpush1.msra.mxu0 0.0
  %13736 = vmatprep.subr.mxu0 0.0
  %13737 = vmatpush1.msra.mxu0 0.0
  %13738 = vmatprep.mubr.f32.mxu0 0.0
  %13739 = vmatmul.mubr.f32.gmra.mrb[0].mxu0 %v13666
  %v13740 = vpop.f32.mrb[0].mxu0
  %v13741 = vadd.f32 0.0, %v13740
  %v13742 = vpop.f32.mrb[0].mxu0
  %13743 = vmatprep.mubr.f32.mxu0 0.0
  %13744 = vmatmul.mubr.f32.gmra.mrb[0].mxu0 %v13668
  %v13745 = vpop.f32.mrb[0].mxu0
  %v13746 = vadd.f32 0.0, %v13745
  %v13747 = vpop.f32.mrb[0].mxu0
  %13748 = vmatprep.mubr.f32.mxu0 0.0
  %13749 = vmatmul.mubr.f32.gmra.mrb[0].mxu0 %v13670
  %v13750 = vpop.f32.mrb[0].mxu0
  %v13751 = vadd.f32 0.0, %v13750
  %v13752 = vpop.f32.mrb[0].mxu0
  %13753 = vmatprep.mubr.f32.mxu0 0.0
  %13754 = vmatmul.mubr.f32.gmra.mrb[0].mxu0 %v13672
  %v13755 = vpop.f32.mrb[0].mxu0
  %v13756 = vadd.f32 0.0, %v13755
  %v13757 = vpop.f32.mrb[0].mxu0
  %13758 = vdwg.mxu0
  %v13759 = vadd.f32 %v13554, %v13741
  %v13760 = vadd.f32 %v13555, %v13746
  %v13761 = vadd.f32 %v13556, %v13751
  %v13762 = vadd.f32 %v13557, %v13756
  %s13763 = scalar_lea.vmem [#allocation3], 8
  %v13764 = vld [vmem:[%s13763] sm:$0x3]
  %v13765 = vld [vmem:[%s13763 + $0x4] sm:$0x3]
  %v13766 = vld [vmem:[%s13763 + $0x10] sm:$0x3]
  %v13767 = vld [vmem:[%s13763 + $0x14] sm:$0x3]
  %v13768 = vld [vmem:[%s13763 + $0x20] sm:$0x3]
  %v13769 = vld [vmem:[%s13763 + $0x24] sm:$0x3]
  %v13770 = vld [vmem:[%s13763 + $0x30] sm:$0x3]
  %v13771 = vld [vmem:[%s13763 + $0x34] sm:$0x3]
  %v13772 = vld [vmem:[%s13763 + $0x40] sm:$0x3]
  %v13773 = vld [vmem:[%s13763 + $0x44] sm:$0x3]
  %v13774 = vld [vmem:[%s13763 + $0x50] sm:$0x3]
  %v13775 = vld [vmem:[%s13763 + $0x54] sm:$0x3]
  %v13776 = vld [vmem:[%s13763 + $0x60] sm:$0x3]
  %v13777 = vld [vmem:[%s13763 + $0x64] sm:$0x3]
  %v13778 = vld [vmem:[%s13763 + $0x70] sm:$0x3]
  %v13779 = vld [vmem:[%s13763 + $0x74] sm:$0x3]
  %v13780 = vld [vmem:[%s5 + $0x180] sm:$0xff]
  %v13781 = vld [vmem:[%s5 + $0x188] sm:$0xff]
  %v13782 = vld [vmem:[%s5 + $0x190] sm:$0xff]
  %v13783 = vld [vmem:[%s5 + $0x198] sm:$0xff]
  %v13784 = vld [vmem:[%s5 + $0x1a0] sm:$0xff]
  %v13785 = vld [vmem:[%s5 + $0x1a8] sm:$0xff]
  %v13786 = vld [vmem:[%s5 + $0x1b0] sm:$0xff]
  %v13787 = vld [vmem:[%s5 + $0x1b8] sm:$0xff]
  %v13804 = vcombine.low %v13764, %v13765
  %v13805 = vcombine.low %v13766, %v13767
  %v13807 = vunpack.c.l.s4 1983009808
  %v13808 = vunpack.c.0.s8 %v13807
  %v13809 = vlaneseq
  %v13810 = vshrl.u32 %v13809, 7
  %v13811 = vsub.s32 %v13808, %v13810
  %v13812 = vrot.slane %v13804, %v13811
  %v13814 = vunpack.c.l.s4 1983009808
  %v13815 = vunpack.c.0.s8 %v13814
  %v13816 = vlaneseq
  %v13817 = vshrl.u32 %v13816, 7
  %v13818 = vsub.s32 %v13815, %v13817
  %v13819 = vrot.slane %v13805, %v13818
  %v13820 = vcombine.low %v13812, %v13819
  %v13821 = vcombine.low %v13768, %v13769
  %v13822 = vcombine.low %v13770, %v13771
  %v13824 = vunpack.c.l.s4 1983009808
  %v13825 = vunpack.c.0.s8 %v13824
  %v13826 = vlaneseq
  %v13827 = vshrl.u32 %v13826, 7
  %v13828 = vsub.s32 %v13825, %v13827
  %v13829 = vrot.slane %v13821, %v13828
  %v13831 = vunpack.c.l.s4 1983009808
  %v13832 = vunpack.c.0.s8 %v13831
  %v13833 = vlaneseq
  %v13834 = vshrl.u32 %v13833, 7
  %v13835 = vsub.s32 %v13832, %v13834
  %v13836 = vrot.slane %v13822, %v13835
  %v13837 = vcombine.low %v13829, %v13836
  %v13838 = vcombine.low %v13772, %v13773
  %v13839 = vcombine.low %v13774, %v13775
  %v13841 = vunpack.c.l.s4 1983009808
  %v13842 = vunpack.c.0.s8 %v13841
  %v13843 = vlaneseq
  %v13844 = vshrl.u32 %v13843, 7
  %v13845 = vsub.s32 %v13842, %v13844
  %v13846 = vrot.slane %v13838, %v13845
  %v13848 = vunpack.c.l.s4 1983009808
  %v13849 = vunpack.c.0.s8 %v13848
  %v13850 = vlaneseq
  %v13851 = vshrl.u32 %v13850, 7
  %v13852 = vsub.s32 %v13849, %v13851
  %v13853 = vrot.slane %v13839, %v13852
  %v13854 = vcombine.low %v13846, %v13853
  %v13855 = vcombine.low %v13776, %v13777
  %v13856 = vcombine.low %v13778, %v13779
  %v13858 = vunpack.c.l.s4 1983009808
  %v13859 = vunpack.c.0.s8 %v13858
  %v13860 = vlaneseq
  %v13861 = vshrl.u32 %v13860, 7
  %v13862 = vsub.s32 %v13859, %v13861
  %v13863 = vrot.slane %v13855, %v13862
  %v13865 = vunpack.c.l.s4 1983009808
  %v13866 = vunpack.c.0.s8 %v13865
  %v13867 = vlaneseq
  %v13868 = vshrl.u32 %v13867, 7
  %v13869 = vsub.s32 %v13866, %v13868
  %v13870 = vrot.slane %v13856, %v13869
  %v13871 = vcombine.low %v13863, %v13870
  %v13872 = vsel %vm12243, %v13820, 0
  %v13874 = vsel %vm12243, %v13837, 0
  %v13876 = vsel %vm12243, %v13854, 0
  %v13878 = vsel %vm12243, %v13871, 0
  %13880 = vmatprep.subr.mxu0 0.0
  %13881 = vmatpush1.msra.mxu0 %v13780
  %13882 = vmatprep.subr.mxu0 0.0
  %13883 = vmatpush1.msra.mxu0 %v13781
  %13884 = vmatprep.subr.mxu0 0.0
  %13885 = vmatpush1.msra.mxu0 %v13782
  %13886 = vmatprep.subr.mxu0 0.0
  %13887 = vmatpush1.msra.mxu0 %v13783
  %13888 = vmatprep.subr.mxu0 0.0
  %13889 = vmatpush1.msra.mxu0 %v13784
  %13890 = vmatprep.subr.mxu0 0.0
  %13891 = vmatpush1.msra.mxu0 %v13785
  %13892 = vmatprep.subr.mxu0 0.0
  %13893 = vmatpush1.msra.mxu0 %v13786
  %13894 = vmatprep.subr.mxu0 0.0
  %13895 = vmatpush1.msra.mxu0 %v13787
  %13896 = vmatprep.subr.mxu0 0.0
  %13897 = vmatpush1.msra.mxu0 0.0
  %13898 = vmatprep.subr.mxu0 0.0
  %13899 = vmatpush1.msra.mxu0 0.0
  %13900 = vmatprep.subr.mxu0 0.0
  %13901 = vmatpush1.msra.mxu0 0.0
  %13902 = vmatprep.subr.mxu0 0.0
  %13903 = vmatpush1.msra.mxu0 0.0
  %13904 = vmatprep.subr.mxu0 0.0
  %13905 = vmatpush1.msra.mxu0 0.0
  %13906 = vmatprep.subr.mxu0 0.0
  %13907 = vmatpush1.msra.mxu0 0.0
  %13908 = vmatprep.subr.mxu0 0.0
  %13909 = vmatpush1.msra.mxu0 0.0
  %13910 = vmatprep.subr.mxu0 0.0
  %13911 = vmatpush1.msra.mxu0 0.0
  %13912 = vmatprep.subr.mxu0 0.0
  %13913 = vmatpush1.msra.mxu0 0.0
  %13914 = vmatprep.subr.mxu0 0.0
  %13915 = vmatpush1.msra.mxu0 0.0
  %13916 = vmatprep.subr.mxu0 0.0
  %13917 = vmatpush1.msra.mxu0 0.0
  %13918 = vmatprep.subr.mxu0 0.0
  %13919 = vmatpush1.msra.mxu0 0.0
  %13920 = vmatprep.subr.mxu0 0.0
  %13921 = vmatpush1.msra.mxu0 0.0
  %13922 = vmatprep.subr.mxu0 0.0
  %13923 = vmatpush1.msra.mxu0 0.0
  %13924 = vmatprep.subr.mxu0 0.0
  %13925 = vmatpush1.msra.mxu0 0.0
  %13926 = vmatprep.subr.mxu0 0.0
  %13927 = vmatpush1.msra.mxu0 0.0
  %13928 = vmatprep.subr.mxu0 0.0
  %13929 = vmatpush1.msra.mxu0 0.0
  %13930 = vmatprep.subr.mxu0 0.0
  %13931 = vmatpush1.msra.mxu0 0.0
  %13932 = vmatprep.subr.mxu0 0.0
  %13933 = vmatpush1.msra.mxu0 0.0
  %13934 = vmatprep.subr.mxu0 0.0
  %13935 = vmatpush1.msra.mxu0 0.0
  %13936 = vmatprep.subr.mxu0 0.0
  %13937 = vmatpush1.msra.mxu0 0.0
  %13938 = vmatprep.subr.mxu0 0.0
  %13939 = vmatpush1.msra.mxu0 0.0
  %13940 = vmatprep.subr.mxu0 0.0
  %13941 = vmatpush1.msra.mxu0 0.0
  %13942 = vmatprep.subr.mxu0 0.0
  %13943 = vmatpush1.msra.mxu0 0.0
  %13944 = vmatprep.mubr.f32.mxu0 0.0
  %13945 = vmatmul.mubr.f32.gmra.mrb[0].mxu0 %v13872
  %v13946 = vpop.f32.mrb[0].mxu0
  %v13947 = vadd.f32 0.0, %v13946
  %v13948 = vpop.f32.mrb[0].mxu0
  %13949 = vmatprep.mubr.f32.mxu0 0.0
  %13950 = vmatmul.mubr.f32.gmra.mrb[0].mxu0 %v13874
  %v13951 = vpop.f32.mrb[0].mxu0
  %v13952 = vadd.f32 0.0, %v13951
  %v13953 = vpop.f32.mrb[0].mxu0
  %13954 = vmatprep.mubr.f32.mxu0 0.0
  %13955 = vmatmul.mubr.f32.gmra.mrb[0].mxu0 %v13876
  %v13956 = vpop.f32.mrb[0].mxu0
  %v13957 = vadd.f32 0.0, %v13956
  %v13958 = vpop.f32.mrb[0].mxu0
  %13959 = vmatprep.mubr.f32.mxu0 0.0
  %13960 = vmatmul.mubr.f32.gmra.mrb[0].mxu0 %v13878
  %v13961 = vpop.f32.mrb[0].mxu0
  %v13962 = vadd.f32 0.0, %v13961
  %v13963 = vpop.f32.mrb[0].mxu0
  %13964 = vdwg.mxu0
  %v13965 = vadd.f32 %v13759, %v13947
  %v13966 = vadd.f32 %v13760, %v13952
  %v13967 = vadd.f32 %v13761, %v13957
  %v13968 = vadd.f32 %v13762, %v13962
  %v13969 = vld [vmem:[%s13763 + $0x1] sm:$0x3]
  %v13970 = vld [vmem:[%s13763 + $0x5] sm:$0x3]
  %v13971 = vld [vmem:[%s13763 + $0x11] sm:$0x3]
  %v13972 = vld [vmem:[%s13763 + $0x15] sm:$0x3]
  %v13973 = vld [vmem:[%s13763 + $0x21] sm:$0x3]
  %v13974 = vld [vmem:[%s13763 + $0x25] sm:$0x3]
  %v13975 = vld [vmem:[%s13763 + $0x31] sm:$0x3]
  %v13976 = vld [vmem:[%s13763 + $0x35] sm:$0x3]
  %v13977 = vld [vmem:[%s13763 + $0x41] sm:$0x3]
  %v13978 = vld [vmem:[%s13763 + $0x45] sm:$0x3]
  %v13979 = vld [vmem:[%s13763 + $0x51] sm:$0x3]
  %v13980 = vld [vmem:[%s13763 + $0x55] sm:$0x3]
  %v13981 = vld [vmem:[%s13763 + $0x61] sm:$0x3]
  %v13982 = vld [vmem:[%s13763 + $0x65] sm:$0x3]
  %v13983 = vld [vmem:[%s13763 + $0x71] sm:$0x3]
  %v13984 = vld [vmem:[%s13763 + $0x75] sm:$0x3]
  %v13985 = vld [vmem:[%s5 + $0x1c0] sm:$0xff]
  %v13986 = vld [vmem:[%s5 + $0x1c8] sm:$0xff]
  %v13987 = vld [vmem:[%s5 + $0x1d0] sm:$0xff]
  %v13988 = vld [vmem:[%s5 + $0x1d8] sm:$0xff]
  %v13989 = vld [vmem:[%s5 + $0x1e0] sm:$0xff]
  %v13990 = vld [vmem:[%s5 + $0x1e8] sm:$0xff]
  %v13991 = vld [vmem:[%s5 + $0x1f0] sm:$0xff]
  %v13992 = vld [vmem:[%s5 + $0x1f8] sm:$0xff]
  %v14009 = vcombine.low %v13969, %v13970
  %v14010 = vcombine.low %v13971, %v13972
  %v14012 = vunpack.c.l.s4 1983009808
  %v14013 = vunpack.c.0.s8 %v14012
  %v14014 = vlaneseq
  %v14015 = vshrl.u32 %v14014, 7
  %v14016 = vsub.s32 %v14013, %v14015
  %v14017 = vrot.slane %v14009, %v14016
  %v14019 = vunpack.c.l.s4 1983009808
  %v14020 = vunpack.c.0.s8 %v14019
  %v14021 = vlaneseq
  %v14022 = vshrl.u32 %v14021, 7
  %v14023 = vsub.s32 %v14020, %v14022
  %v14024 = vrot.slane %v14010, %v14023
  %v14025 = vcombine.low %v14017, %v14024
  %v14026 = vcombine.low %v13973, %v13974
  %v14027 = vcombine.low %v13975, %v13976
  %v14029 = vunpack.c.l.s4 1983009808
  %v14030 = vunpack.c.0.s8 %v14029
  %v14031 = vlaneseq
  %v14032 = vshrl.u32 %v14031, 7
  %v14033 = vsub.s32 %v14030, %v14032
  %v14034 = vrot.slane %v14026, %v14033
  %v14036 = vunpack.c.l.s4 1983009808
  %v14037 = vunpack.c.0.s8 %v14036
  %v14038 = vlaneseq
  %v14039 = vshrl.u32 %v14038, 7
  %v14040 = vsub.s32 %v14037, %v14039
  %v14041 = vrot.slane %v14027, %v14040
  %v14042 = vcombine.low %v14034, %v14041
  %v14043 = vcombine.low %v13977, %v13978
  %v14044 = vcombine.low %v13979, %v13980
  %v14046 = vunpack.c.l.s4 1983009808
  %v14047 = vunpack.c.0.s8 %v14046
  %v14048 = vlaneseq
  %v14049 = vshrl.u32 %v14048, 7
  %v14050 = vsub.s32 %v14047, %v14049
  %v14051 = vrot.slane %v14043, %v14050
  %v14053 = vunpack.c.l.s4 1983009808
  %v14054 = vunpack.c.0.s8 %v14053
  %v14055 = vlaneseq
  %v14056 = vshrl.u32 %v14055, 7
  %v14057 = vsub.s32 %v14054, %v14056
  %v14058 = vrot.slane %v14044, %v14057
  %v14059 = vcombine.low %v14051, %v14058
  %v14060 = vcombine.low %v13981, %v13982
  %v14061 = vcombine.low %v13983, %v13984
  %v14063 = vunpack.c.l.s4 1983009808
  %v14064 = vunpack.c.0.s8 %v14063
  %v14065 = vlaneseq
  %v14066 = vshrl.u32 %v14065, 7
  %v14067 = vsub.s32 %v14064, %v14066
  %v14068 = vrot.slane %v14060, %v14067
  %v14070 = vunpack.c.l.s4 1983009808
  %v14071 = vunpack.c.0.s8 %v14070
  %v14072 = vlaneseq
  %v14073 = vshrl.u32 %v14072, 7
  %v14074 = vsub.s32 %v14071, %v14073
  %v14075 = vrot.slane %v14061, %v14074
  %v14076 = vcombine.low %v14068, %v14075
  %v14077 = vsel %vm12243, %v14025, 0
  %v14079 = vsel %vm12243, %v14042, 0
  %v14081 = vsel %vm12243, %v14059, 0
  %v14083 = vsel %vm12243, %v14076, 0
  %14085 = vmatprep.subr.mxu0 0.0
  %14086 = vmatpush1.msra.mxu0 %v13985
  %14087 = vmatprep.subr.mxu0 0.0
  %14088 = vmatpush1.msra.mxu0 %v13986
  %14089 = vmatprep.subr.mxu0 0.0
  %14090 = vmatpush1.msra.mxu0 %v13987
  %14091 = vmatprep.subr.mxu0 0.0
  %14092 = vmatpush1.msra.mxu0 %v13988
  %14093 = vmatprep.subr.mxu0 0.0
  %14094 = vmatpush1.msra.mxu0 %v13989
  %14095 = vmatprep.subr.mxu0 0.0
  %14096 = vmatpush1.msra.mxu0 %v13990
  %14097 = vmatprep.subr.mxu0 0.0
  %14098 = vmatpush1.msra.mxu0 %v13991
  %14099 = vmatprep.subr.mxu0 0.0
  %14100 = vmatpush1.msra.mxu0 %v13992
  %14101 = vmatprep.subr.mxu0 0.0
  %14102 = vmatpush1.msra.mxu0 0.0
  %14103 = vmatprep.subr.mxu0 0.0
  %14104 = vmatpush1.msra.mxu0 0.0
  %14105 = vmatprep.subr.mxu0 0.0
  %14106 = vmatpush1.msra.mxu0 0.0
  %14107 = vmatprep.subr.mxu0 0.0
  %14108 = vmatpush1.msra.mxu0 0.0
  %14109 = vmatprep.subr.mxu0 0.0
  %14110 = vmatpush1.msra.mxu0 0.0
  %14111 = vmatprep.subr.mxu0 0.0
  %14112 = vmatpush1.msra.mxu0 0.0
  %14113 = vmatprep.subr.mxu0 0.0
  %14114 = vmatpush1.msra.mxu0 0.0
  %14115 = vmatprep.subr.mxu0 0.0
  %14116 = vmatpush1.msra.mxu0 0.0
  %14117 = vmatprep.subr.mxu0 0.0
  %14118 = vmatpush1.msra.mxu0 0.0
  %14119 = vmatprep.subr.mxu0 0.0
  %14120 = vmatpush1.msra.mxu0 0.0
  %14121 = vmatprep.subr.mxu0 0.0
  %14122 = vmatpush1.msra.mxu0 0.0
  %14123 = vmatprep.subr.mxu0 0.0
  %14124 = vmatpush1.msra.mxu0 0.0
  %14125 = vmatprep.subr.mxu0 0.0
  %14126 = vmatpush1.msra.mxu0 0.0
  %14127 = vmatprep.subr.mxu0 0.0
  %14128 = vmatpush1.msra.mxu0 0.0
  %14129 = vmatprep.subr.mxu0 0.0
  %14130 = vmatpush1.msra.mxu0 0.0
  %14131 = vmatprep.subr.mxu0 0.0
  %14132 = vmatpush1.msra.mxu0 0.0
  %14133 = vmatprep.subr.mxu0 0.0
  %14134 = vmatpush1.msra.mxu0 0.0
  %14135 = vmatprep.subr.mxu0 0.0
  %14136 = vmatpush1.msra.mxu0 0.0
  %14137 = vmatprep.subr.mxu0 0.0
  %14138 = vmatpush1.msra.mxu0 0.0
  %14139 = vmatprep.subr.mxu0 0.0
  %14140 = vmatpush1.msra.mxu0 0.0
  %14141 = vmatprep.subr.mxu0 0.0
  %14142 = vmatpush1.msra.mxu0 0.0
  %14143 = vmatprep.subr.mxu0 0.0
  %14144 = vmatpush1.msra.mxu0 0.0
  %14145 = vmatprep.subr.mxu0 0.0
  %14146 = vmatpush1.msra.mxu0 0.0
  %14147 = vmatprep.subr.mxu0 0.0
  %14148 = vmatpush1.msra.mxu0 0.0
  %14149 = vmatprep.mubr.f32.mxu0 0.0
  %14150 = vmatmul.mubr.f32.gmra.mrb[0].mxu0 %v14077
  %v14151 = vpop.f32.mrb[0].mxu0
  %v14152 = vadd.f32 0.0, %v14151
  %v14153 = vpop.f32.mrb[0].mxu0
  %14154 = vmatprep.mubr.f32.mxu0 0.0
  %14155 = vmatmul.mubr.f32.gmra.mrb[0].mxu0 %v14079
  %v14156 = vpop.f32.mrb[0].mxu0
  %v14157 = vadd.f32 0.0, %v14156
  %v14158 = vpop.f32.mrb[0].mxu0
  %14159 = vmatprep.mubr.f32.mxu0 0.0
  %14160 = vmatmul.mubr.f32.gmra.mrb[0].mxu0 %v14081
  %v14161 = vpop.f32.mrb[0].mxu0
  %v14162 = vadd.f32 0.0, %v14161
  %v14163 = vpop.f32.mrb[0].mxu0
  %14164 = vmatprep.mubr.f32.mxu0 0.0
  %14165 = vmatmul.mubr.f32.gmra.mrb[0].mxu0 %v14083
  %v14166 = vpop.f32.mrb[0].mxu0
  %v14167 = vadd.f32 0.0, %v14166
  %v14168 = vpop.f32.mrb[0].mxu0
  %14169 = vdwg.mxu0
  %v14170 = vadd.f32 %v13965, %v14152
  %v14171 = vadd.f32 %v13966, %v14157
  %v14172 = vadd.f32 %v13967, %v14162
  %v14173 = vadd.f32 %v13968, %v14167
  %v14174 = vld [vmem:[%s13763 + $0x2] sm:$0x3]
  %v14175 = vld [vmem:[%s13763 + $0x6] sm:$0x3]
  %v14176 = vld [vmem:[%s13763 + $0x12] sm:$0x3]
  %v14177 = vld [vmem:[%s13763 + $0x16] sm:$0x3]
  %v14178 = vld [vmem:[%s13763 + $0x22] sm:$0x3]
  %v14179 = vld [vmem:[%s13763 + $0x26] sm:$0x3]
  %v14180 = vld [vmem:[%s13763 + $0x32] sm:$0x3]
  %v14181 = vld [vmem:[%s13763 + $0x36] sm:$0x3]
  %v14182 = vld [vmem:[%s13763 + $0x42] sm:$0x3]
  %v14183 = vld [vmem:[%s13763 + $0x46] sm:$0x3]
  %v14184 = vld [vmem:[%s13763 + $0x52] sm:$0x3]
  %v14185 = vld [vmem:[%s13763 + $0x56] sm:$0x3]
  %v14186 = vld [vmem:[%s13763 + $0x62] sm:$0x3]
  %v14187 = vld [vmem:[%s13763 + $0x66] sm:$0x3]
  %v14188 = vld [vmem:[%s13763 + $0x72] sm:$0x3]
  %v14189 = vld [vmem:[%s13763 + $0x76] sm:$0x3]
  %v14190 = vld [vmem:[%s5 + $0x200] sm:$0xff]
  %v14191 = vld [vmem:[%s5 + $0x208] sm:$0xff]
  %v14192 = vld [vmem:[%s5 + $0x210] sm:$0xff]
  %v14193 = vld [vmem:[%s5 + $0x218] sm:$0xff]
  %v14194 = vld [vmem:[%s5 + $0x220] sm:$0xff]
  %v14195 = vld [vmem:[%s5 + $0x228] sm:$0xff]
  %v14196 = vld [vmem:[%s5 + $0x230] sm:$0xff]
  %v14197 = vld [vmem:[%s5 + $0x238] sm:$0xff]
  %v14214 = vcombine.low %v14174, %v14175
  %v14215 = vcombine.low %v14176, %v14177
  %v14217 = vunpack.c.l.s4 1983009808
  %v14218 = vunpack.c.0.s8 %v14217
  %v14219 = vlaneseq
  %v14220 = vshrl.u32 %v14219, 7
  %v14221 = vsub.s32 %v14218, %v14220
  %v14222 = vrot.slane %v14214, %v14221
  %v14224 = vunpack.c.l.s4 1983009808
  %v14225 = vunpack.c.0.s8 %v14224
  %v14226 = vlaneseq
  %v14227 = vshrl.u32 %v14226, 7
  %v14228 = vsub.s32 %v14225, %v14227
  %v14229 = vrot.slane %v14215, %v14228
  %v14230 = vcombine.low %v14222, %v14229
  %v14231 = vcombine.low %v14178, %v14179
  %v14232 = vcombine.low %v14180, %v14181
  %v14234 = vunpack.c.l.s4 1983009808
  %v14235 = vunpack.c.0.s8 %v14234
  %v14236 = vlaneseq
  %v14237 = vshrl.u32 %v14236, 7
  %v14238 = vsub.s32 %v14235, %v14237
  %v14239 = vrot.slane %v14231, %v14238
  %v14241 = vunpack.c.l.s4 1983009808
  %v14242 = vunpack.c.0.s8 %v14241
  %v14243 = vlaneseq
  %v14244 = vshrl.u32 %v14243, 7
  %v14245 = vsub.s32 %v14242, %v14244
  %v14246 = vrot.slane %v14232, %v14245
  %v14247 = vcombine.low %v14239, %v14246
  %v14248 = vcombine.low %v14182, %v14183
  %v14249 = vcombine.low %v14184, %v14185
  %v14251 = vunpack.c.l.s4 1983009808
  %v14252 = vunpack.c.0.s8 %v14251
  %v14253 = vlaneseq
  %v14254 = vshrl.u32 %v14253, 7
  %v14255 = vsub.s32 %v14252, %v14254
  %v14256 = vrot.slane %v14248, %v14255
  %v14258 = vunpack.c.l.s4 1983009808
  %v14259 = vunpack.c.0.s8 %v14258
  %v14260 = vlaneseq
  %v14261 = vshrl.u32 %v14260, 7
  %v14262 = vsub.s32 %v14259, %v14261
  %v14263 = vrot.slane %v14249, %v14262
  %v14264 = vcombine.low %v14256, %v14263
  %v14265 = vcombine.low %v14186, %v14187
  %v14266 = vcombine.low %v14188, %v14189
  %v14268 = vunpack.c.l.s4 1983009808
  %v14269 = vunpack.c.0.s8 %v14268
  %v14270 = vlaneseq
  %v14271 = vshrl.u32 %v14270, 7
  %v14272 = vsub.s32 %v14269, %v14271
  %v14273 = vrot.slane %v14265, %v14272
  %v14275 = vunpack.c.l.s4 1983009808
  %v14276 = vunpack.c.0.s8 %v14275
  %v14277 = vlaneseq
  %v14278 = vshrl.u32 %v14277, 7
  %v14279 = vsub.s32 %v14276, %v14278
  %v14280 = vrot.slane %v14266, %v14279
  %v14281 = vcombine.low %v14273, %v14280
  %v14282 = vsel %vm12243, %v14230, 0
  %v14284 = vsel %vm12243, %v14247, 0
  %v14286 = vsel %vm12243, %v14264, 0
  %v14288 = vsel %vm12243, %v14281, 0
  %14290 = vmatprep.subr.mxu0 0.0
  %14291 = vmatpush1.msra.mxu0 %v14190
  %14292 = vmatprep.subr.mxu0 0.0
  %14293 = vmatpush1.msra.mxu0 %v14191
  %14294 = vmatprep.subr.mxu0 0.0
  %14295 = vmatpush1.msra.mxu0 %v14192
  %14296 = vmatprep.subr.mxu0 0.0
  %14297 = vmatpush1.msra.mxu0 %v14193
  %14298 = vmatprep.subr.mxu0 0.0
  %14299 = vmatpush1.msra.mxu0 %v14194
  %14300 = vmatprep.subr.mxu0 0.0
  %14301 = vmatpush1.msra.mxu0 %v14195
  %14302 = vmatprep.subr.mxu0 0.0
  %14303 = vmatpush1.msra.mxu0 %v14196
  %14304 = vmatprep.subr.mxu0 0.0
  %14305 = vmatpush1.msra.mxu0 %v14197
  %14306 = vmatprep.subr.mxu0 0.0
  %14307 = vmatpush1.msra.mxu0 0.0
  %14308 = vmatprep.subr.mxu0 0.0
  %14309 = vmatpush1.msra.mxu0 0.0
  %14310 = vmatprep.subr.mxu0 0.0
  %14311 = vmatpush1.msra.mxu0 0.0
  %14312 = vmatprep.subr.mxu0 0.0
  %14313 = vmatpush1.msra.mxu0 0.0
  %14314 = vmatprep.subr.mxu0 0.0
  %14315 = vmatpush1.msra.mxu0 0.0
  %14316 = vmatprep.subr.mxu0 0.0
  %14317 = vmatpush1.msra.mxu0 0.0
  %14318 = vmatprep.subr.mxu0 0.0
  %14319 = vmatpush1.msra.mxu0 0.0
  %14320 = vmatprep.subr.mxu0 0.0
  %14321 = vmatpush1.msra.mxu0 0.0
  %14322 = vmatprep.subr.mxu0 0.0
  %14323 = vmatpush1.msra.mxu0 0.0
  %14324 = vmatprep.subr.mxu0 0.0
  %14325 = vmatpush1.msra.mxu0 0.0
  %14326 = vmatprep.subr.mxu0 0.0
  %14327 = vmatpush1.msra.mxu0 0.0
  %14328 = vmatprep.subr.mxu0 0.0
  %14329 = vmatpush1.msra.mxu0 0.0
  %14330 = vmatprep.subr.mxu0 0.0
  %14331 = vmatpush1.msra.mxu0 0.0
  %14332 = vmatprep.subr.mxu0 0.0
  %14333 = vmatpush1.msra.mxu0 0.0
  %14334 = vmatprep.subr.mxu0 0.0
  %14335 = vmatpush1.msra.mxu0 0.0
  %14336 = vmatprep.subr.mxu0 0.0
  %14337 = vmatpush1.msra.mxu0 0.0
  %14338 = vmatprep.subr.mxu0 0.0
  %14339 = vmatpush1.msra.mxu0 0.0
  %14340 = vmatprep.subr.mxu0 0.0
  %14341 = vmatpush1.msra.mxu0 0.0
  %14342 = vmatprep.subr.mxu0 0.0
  %14343 = vmatpush1.msra.mxu0 0.0
  %14344 = vmatprep.subr.mxu0 0.0
  %14345 = vmatpush1.msra.mxu0 0.0
  %14346 = vmatprep.subr.mxu0 0.0
  %14347 = vmatpush1.msra.mxu0 0.0
  %14348 = vmatprep.subr.mxu0 0.0
  %14349 = vmatpush1.msra.mxu0 0.0
  %14350 = vmatprep.subr.mxu0 0.0
  %14351 = vmatpush1.msra.mxu0 0.0
  %14352 = vmatprep.subr.mxu0 0.0
  %14353 = vmatpush1.msra.mxu0 0.0
  %14354 = vmatprep.mubr.f32.mxu0 0.0
  %14355 = vmatmul.mubr.f32.gmra.mrb[0].mxu0 %v14282
  %v14356 = vpop.f32.mrb[0].mxu0
  %v14357 = vadd.f32 0.0, %v14356
  %v14358 = vpop.f32.mrb[0].mxu0
  %14359 = vmatprep.mubr.f32.mxu0 0.0
  %14360 = vmatmul.mubr.f32.gmra.mrb[0].mxu0 %v14284
  %v14361 = vpop.f32.mrb[0].mxu0
  %v14362 = vadd.f32 0.0, %v14361
  %v14363 = vpop.f32.mrb[0].mxu0
  %14364 = vmatprep.mubr.f32.mxu0 0.0
  %14365 = vmatmul.mubr.f32.gmra.mrb[0].mxu0 %v14286
  %v14366 = vpop.f32.mrb[0].mxu0
  %v14367 = vadd.f32 0.0, %v14366
  %v14368 = vpop.f32.mrb[0].mxu0
  %14369 = vmatprep.mubr.f32.mxu0 0.0
  %14370 = vmatmul.mubr.f32.gmra.mrb[0].mxu0 %v14288
  %v14371 = vpop.f32.mrb[0].mxu0
  %v14372 = vadd.f32 0.0, %v14371
  %v14373 = vpop.f32.mrb[0].mxu0
  %14374 = vdwg.mxu0
  %v14375 = vadd.f32 %v14170, %v14357
  %v14376 = vadd.f32 %v14171, %v14362
  %v14377 = vadd.f32 %v14172, %v14367
  %v14378 = vadd.f32 %v14173, %v14372
  %v14383 = vcombine.high %v14375, %v14375
  %v14384 = vcombine.high %v14376, %v14376
  %v14385 = vcombine.high %v14377, %v14377
  %v14386 = vcombine.high %v14378, %v14378
  %vm14391 = vcmask 1043456
  %v14392 = vsel %vm14391, %v14375, -inf
  %v14393 = vrot.slane %v14392, 4
  %v14394 = vmax.f32 %v14392, %v14393
  %v14395 = vrot.slane %v14394, 2
  %v14396 = vmax.f32 %v14394, %v14395
  %v14397 = vrot.slane %v14396, 1
  %v14398 = vmax.f32 %v14396, %v14397
  %v14399 = vsel %vm14391, %v14383, -inf
  %v14400 = vrot.slane %v14399, 4
  %v14401 = vmax.f32 %v14399, %v14400
  %v14402 = vrot.slane %v14401, 2
  %v14403 = vmax.f32 %v14401, %v14402
  %v14404 = vrot.slane %v14403, 1
  %v14405 = vmax.f32 %v14403, %v14404
  %v14406 = vsel %vm14391, %v14376, -inf
  %v14407 = vrot.slane %v14406, 4
  %v14408 = vmax.f32 %v14406, %v14407
  %v14409 = vrot.slane %v14408, 2
  %v14410 = vmax.f32 %v14408, %v14409
  %v14411 = vrot.slane %v14410, 1
  %v14412 = vmax.f32 %v14410, %v14411
  %v14413 = vsel %vm14391, %v14384, -inf
  %v14414 = vrot.slane %v14413, 4
  %v14415 = vmax.f32 %v14413, %v14414
  %v14416 = vrot.slane %v14415, 2
  %v14417 = vmax.f32 %v14415, %v14416
  %v14418 = vrot.slane %v14417, 1
  %v14419 = vmax.f32 %v14417, %v14418
  %v14420 = vsel %vm14391, %v14377, -inf
  %v14421 = vrot.slane %v14420, 4
  %v14422 = vmax.f32 %v14420, %v14421
  %v14423 = vrot.slane %v14422, 2
  %v14424 = vmax.f32 %v14422, %v14423
  %v14425 = vrot.slane %v14424, 1
  %v14426 = vmax.f32 %v14424, %v14425
  %v14427 = vsel %vm14391, %v14385, -inf
  %v14428 = vrot.slane %v14427, 4
  %v14429 = vmax.f32 %v14427, %v14428
  %v14430 = vrot.slane %v14429, 2
  %v14431 = vmax.f32 %v14429, %v14430
  %v14432 = vrot.slane %v14431, 1
  %v14433 = vmax.f32 %v14431, %v14432
  %v14434 = vsel %vm14391, %v14378, -inf
  %v14435 = vrot.slane %v14434, 4
  %v14436 = vmax.f32 %v14434, %v14435
  %v14437 = vrot.slane %v14436, 2
  %v14438 = vmax.f32 %v14436, %v14437
  %v14439 = vrot.slane %v14438, 1
  %v14440 = vmax.f32 %v14438, %v14439
  %v14441 = vsel %vm14391, %v14386, -inf
  %v14442 = vrot.slane %v14441, 4
  %v14443 = vmax.f32 %v14441, %v14442
  %v14444 = vrot.slane %v14443, 2
  %v14445 = vmax.f32 %v14443, %v14444
  %v14446 = vrot.slane %v14445, 1
  %v14447 = vmax.f32 %v14445, %v14446
  %v14448 = vld [vmem:[%s6] sm:$0x1]
  %v14450 = vlaneseq
  %v14451 = vshrl.u32 %v14450, 7
  %v14452 = vsub.s32 0, %v14451
  %v14453 = vrot.slane %v14448, %v14452
  %v14455 = vadd.f32 %v14398, %v14453
  %v14456 = vadd.f32 %v14405, %v14453
  %v14457 = vadd.f32 %v14412, %v14453
  %v14458 = vadd.f32 %v14419, %v14453
  %v14459 = vadd.f32 %v14426, %v14453
  %v14460 = vadd.f32 %v14433, %v14453
  %v14461 = vadd.f32 %v14440, %v14453
  %v14462 = vadd.f32 %v14447, %v14453
  %v14463 = vmax.f32 %v14455, 0.0
  %v14464 = vmax.f32 %v14456, 0.0
  %v14465 = vmax.f32 %v14457, 0.0
  %v14466 = vmax.f32 %v14458, 0.0
  %v14467 = vmax.f32 %v14459, 0.0
  %v14468 = vmax.f32 %v14460, 0.0
  %v14469 = vmax.f32 %v14461, 0.0
  %v14470 = vmax.f32 %v14462, 0.0
  %v14471 = vld [vmem:[%s7] sm:$0xff]
  %v14472 = vld [vmem:[%s7 + $0x8] sm:$0xff]
  %v14473 = vld [vmem:[%s7 + $0x10] sm:$0xff]
  %v14474 = vld [vmem:[%s7 + $0x18] sm:$0xff]
  %v14475 = vld [vmem:[%s7 + $0x20] sm:$0xff]
  %v14476 = vld [vmem:[%s7 + $0x28] sm:$0xff]
  %v14477 = vld [vmem:[%s7 + $0x30] sm:$0xff]
  %v14478 = vld [vmem:[%s7 + $0x38] sm:$0xff]
  %v14479 = vld [vmem:[%s7 + $0x40] sm:$0xff]
  %v14480 = vld [vmem:[%s7 + $0x48] sm:$0xff]
  %v14481 = vld [vmem:[%s7 + $0x50] sm:$0xff]
  %v14482 = vld [vmem:[%s7 + $0x58] sm:$0xff]
  %v14483 = vld [vmem:[%s7 + $0x60] sm:$0xff]
  %v14484 = vld [vmem:[%s7 + $0x68] sm:$0xff]
  %v14485 = vld [vmem:[%s7 + $0x70] sm:$0xff]
  %v14486 = vld [vmem:[%s7 + $0x78] sm:$0xff]
  %v14487 = vld [vmem:[%s8] sm:$0x1]
  %v14489 = vlaneseq
  %v14490 = vshrl.u32 %v14489, 7
  %v14491 = vsub.s32 0, %v14490
  %v14492 = vrot.slane %v14487, %v14491
  %v14502 = vrot.slane %v14464, 7
  %v14503 = vsel %vm8720, %v14502, %v14463
  %v14504 = vrot.slane %v14465, 6
  %v14505 = vsel %vm8723, %v14504, %v14503
  %v14506 = vrot.slane %v14466, 5
  %v14507 = vsel %vm8726, %v14506, %v14505
  %v14508 = vrot.slane %v14467, 4
  %vm14509 = vcmask 1044484
  %v14510 = vsel %vm14509, %v14508, %v14507
  %v14511 = vrot.slane %v14468, 3
  %vm14512 = vcmask 1045509
  %v14513 = vsel %vm14512, %v14511, %v14510
  %v14514 = vrot.slane %v14469, 2
  %vm14515 = vcmask 1046534
  %v14516 = vsel %vm14515, %v14514, %v14513
  %v14517 = vrot.slane %v14470, 1
  %vm14518 = vcmask 1047559
  %v14519 = vsel %vm14518, %v14517, %v14516
  %14521 = vmatprep.subr.mxu0 0.0
  %14522 = vmatpush1.msra.mxu0 %v14471
  %14523 = vmatprep.subr.mxu0 0.0
  %14524 = vmatpush1.msra.mxu0 %v14472
  %14525 = vmatprep.subr.mxu0 0.0
  %14526 = vmatpush1.msra.mxu0 %v14473
  %14527 = vmatprep.subr.mxu0 0.0
  %14528 = vmatpush1.msra.mxu0 %v14474
  %14529 = vmatprep.subr.mxu0 0.0
  %14530 = vmatpush1.msra.mxu0 %v14475
  %14531 = vmatprep.subr.mxu0 0.0
  %14532 = vmatpush1.msra.mxu0 %v14476
  %14533 = vmatprep.subr.mxu0 0.0
  %14534 = vmatpush1.msra.mxu0 %v14477
  %14535 = vmatprep.subr.mxu0 0.0
  %14536 = vmatpush1.msra.mxu0 %v14478
  %14537 = vmatprep.subr.mxu0 0.0
  %14538 = vmatpush1.msra.mxu0 %v14479
  %14539 = vmatprep.subr.mxu0 0.0
  %14540 = vmatpush1.msra.mxu0 %v14480
  %14541 = vmatprep.subr.mxu0 0.0
  %14542 = vmatpush1.msra.mxu0 %v14481
  %14543 = vmatprep.subr.mxu0 0.0
  %14544 = vmatpush1.msra.mxu0 %v14482
  %14545 = vmatprep.subr.mxu0 0.0
  %14546 = vmatpush1.msra.mxu0 %v14483
  %14547 = vmatprep.subr.mxu0 0.0
  %14548 = vmatpush1.msra.mxu0 %v14484
  %14549 = vmatprep.subr.mxu0 0.0
  %14550 = vmatpush1.msra.mxu0 %v14485
  %14551 = vmatprep.subr.mxu0 0.0
  %14552 = vmatpush1.msra.mxu0 %v14486
  %14553 = vmatprep.subr.mxu0 0.0
  %14554 = vmatpush1.msra.mxu0 0.0
  %14555 = vmatprep.subr.mxu0 0.0
  %14556 = vmatpush1.msra.mxu0 0.0
  %14557 = vmatprep.subr.mxu0 0.0
  %14558 = vmatpush1.msra.mxu0 0.0
  %14559 = vmatprep.subr.mxu0 0.0
  %14560 = vmatpush1.msra.mxu0 0.0
  %14561 = vmatprep.subr.mxu0 0.0
  %14562 = vmatpush1.msra.mxu0 0.0
  %14563 = vmatprep.subr.mxu0 0.0
  %14564 = vmatpush1.msra.mxu0 0.0
  %14565 = vmatprep.subr.mxu0 0.0
  %14566 = vmatpush1.msra.mxu0 0.0
  %14567 = vmatprep.subr.mxu0 0.0
  %14568 = vmatpush1.msra.mxu0 0.0
  %14569 = vmatprep.subr.mxu0 0.0
  %14570 = vmatpush1.msra.mxu0 0.0
  %14571 = vmatprep.subr.mxu0 0.0
  %14572 = vmatpush1.msra.mxu0 0.0
  %14573 = vmatprep.subr.mxu0 0.0
  %14574 = vmatpush1.msra.mxu0 0.0
  %14575 = vmatprep.subr.mxu0 0.0
  %14576 = vmatpush1.msra.mxu0 0.0
  %14577 = vmatprep.subr.mxu0 0.0
  %14578 = vmatpush1.msra.mxu0 0.0
  %14579 = vmatprep.subr.mxu0 0.0
  %14580 = vmatpush1.msra.mxu0 0.0
  %14581 = vmatprep.subr.mxu0 0.0
  %14582 = vmatpush1.msra.mxu0 0.0
  %14583 = vmatprep.subr.mxu0 0.0
  %14584 = vmatpush1.msra.mxu0 0.0
  %14585 = vmatprep.mubr.f32.mxu0 0.0
  %14586 = vmatmul.mubr.f32.gmra.mrb[0].mxu0 %v14519
  %v14587 = vpop.f32.mrb[0].mxu0
  %v14588 = vadd.f32 %v14492, %v14587
  %v14589 = vpop.f32.mrb[0].mxu0
  %14590 = vdwg.mxu0
  %v14591 = vmax.f32 %v14588, 0.0
  %v14592 = vld [vmem:[%s9] sm:$0xff]
  %v14593 = vld [vmem:[%s9 + $0x8] sm:$0xff]
  %v14594 = vld [vmem:[%s9 + $0x10] sm:$0xff]
  %v14595 = vld [vmem:[%s9 + $0x18] sm:$0xff]
  %v14596 = vld [vmem:[%s9 + $0x20] sm:$0xff]
  %v14597 = vld [vmem:[%s9 + $0x28] sm:$0xff]
  %v14598 = vld [vmem:[%s9 + $0x30] sm:$0xff]
  %v14599 = vld [vmem:[%s9 + $0x38] sm:$0xff]
  %v14600 = vld [vmem:[%s9 + $0x40] sm:$0xff]
  %v14601 = vld [vmem:[%s9 + $0x48] sm:$0xff]
  %v14602 = vld [vmem:[%s9 + $0x50] sm:$0xff]
  %v14603 = vld [vmem:[%s9 + $0x58] sm:$0xff]
  %v14604 = vld [vmem:[%s9 + $0x60] sm:$0xff]
  %v14605 = vld [vmem:[%s9 + $0x68] sm:$0xff]
  %v14606 = vld [vmem:[%s9 + $0x70] sm:$0xff]
  %v14607 = vld [vmem:[%s9 + $0x78] sm:$0xff]
  %v14608 = vld [vmem:[%s10] sm:$0x1]
  %v14610 = vlaneseq
  %v14611 = vshrl.u32 %v14610, 7
  %v14612 = vsub.s32 0, %v14611
  %v14613 = vrot.slane %v14608, %v14612
  %14615 = vmatprep.subr.mxu0 0.0
  %14616 = vmatpush1.msra.mxu0 %v14592
  %14617 = vmatprep.subr.mxu0 0.0
  %14618 = vmatpush1.msra.mxu0 %v14593
  %14619 = vmatprep.subr.mxu0 0.0
  %14620 = vmatpush1.msra.mxu0 %v14594
  %14621 = vmatprep.subr.mxu0 0.0
  %14622 = vmatpush1.msra.mxu0 %v14595
  %14623 = vmatprep.subr.mxu0 0.0
  %14624 = vmatpush1.msra.mxu0 %v14596
  %14625 = vmatprep.subr.mxu0 0.0
  %14626 = vmatpush1.msra.mxu0 %v14597
  %14627 = vmatprep.subr.mxu0 0.0
  %14628 = vmatpush1.msra.mxu0 %v14598
  %14629 = vmatprep.subr.mxu0 0.0
  %14630 = vmatpush1.msra.mxu0 %v14599
  %14631 = vmatprep.subr.mxu0 0.0
  %14632 = vmatpush1.msra.mxu0 %v14600
  %14633 = vmatprep.subr.mxu0 0.0
  %14634 = vmatpush1.msra.mxu0 %v14601
  %14635 = vmatprep.subr.mxu0 0.0
  %14636 = vmatpush1.msra.mxu0 %v14602
  %14637 = vmatprep.subr.mxu0 0.0
  %14638 = vmatpush1.msra.mxu0 %v14603
  %14639 = vmatprep.subr.mxu0 0.0
  %14640 = vmatpush1.msra.mxu0 %v14604
  %14641 = vmatprep.subr.mxu0 0.0
  %14642 = vmatpush1.msra.mxu0 %v14605
  %14643 = vmatprep.subr.mxu0 0.0
  %14644 = vmatpush1.msra.mxu0 %v14606
  %14645 = vmatprep.subr.mxu0 0.0
  %14646 = vmatpush1.msra.mxu0 %v14607
  %14647 = vmatprep.subr.mxu0 0.0
  %14648 = vmatpush1.msra.mxu0 0.0
  %14649 = vmatprep.subr.mxu0 0.0
  %14650 = vmatpush1.msra.mxu0 0.0
  %14651 = vmatprep.subr.mxu0 0.0
  %14652 = vmatpush1.msra.mxu0 0.0
  %14653 = vmatprep.subr.mxu0 0.0
  %14654 = vmatpush1.msra.mxu0 0.0
  %14655 = vmatprep.subr.mxu0 0.0
  %14656 = vmatpush1.msra.mxu0 0.0
  %14657 = vmatprep.subr.mxu0 0.0
  %14658 = vmatpush1.msra.mxu0 0.0
  %14659 = vmatprep.subr.mxu0 0.0
  %14660 = vmatpush1.msra.mxu0 0.0
  %14661 = vmatprep.subr.mxu0 0.0
  %14662 = vmatpush1.msra.mxu0 0.0
  %14663 = vmatprep.subr.mxu0 0.0
  %14664 = vmatpush1.msra.mxu0 0.0
  %14665 = vmatprep.subr.mxu0 0.0
  %14666 = vmatpush1.msra.mxu0 0.0
  %14667 = vmatprep.subr.mxu0 0.0
  %14668 = vmatpush1.msra.mxu0 0.0
  %14669 = vmatprep.subr.mxu0 0.0
  %14670 = vmatpush1.msra.mxu0 0.0
  %14671 = vmatprep.subr.mxu0 0.0
  %14672 = vmatpush1.msra.mxu0 0.0
  %14673 = vmatprep.subr.mxu0 0.0
  %14674 = vmatpush1.msra.mxu0 0.0
  %14675 = vmatprep.subr.mxu0 0.0
  %14676 = vmatpush1.msra.mxu0 0.0
  %14677 = vmatprep.subr.mxu0 0.0
  %14678 = vmatpush1.msra.mxu0 0.0
  %14679 = vmatprep.mubr.f32.mxu0 0.0
  %14680 = vmatmul.mubr.f32.gmra.mrb[0].mxu0 %v14591
  %v14681 = vpop.f32.mrb[0].mxu0
  %v14682 = vadd.f32 %v14613, %v14681
  %v14683 = vpop.f32.mrb[0].mxu0
  %14684 = vdwg.mxu0
  %14685 = vst [vmem:[%s11] sm:$0xff] %v14682
  // Predicated region
  $region46: #{cnnnet_forward.1} parent=0 // pred_check
    _
  $region47: #{cnnnet_forward.1} parent=0 // pred_check_branch
    %14687 = sbr.rel (0) target = $region49
  $region48: #{cnnnet_forward.1} parent=0 // pred_region
    _
  $region49: #{cnnnet_forward.1} parent=0 // pred_fallthru
    _
  // Predicated region
  $region50: #{cnnnet_forward.1} parent=0 // pred_check
    _
  $region51: #{cnnnet_forward.1} parent=0 // pred_check_branch
    %14689 = sbr.rel (0) target = $region53
  $region52: #{cnnnet_forward.1} parent=0 // pred_region
    _
  $region53: #{cnnnet_forward.1} parent=0 // pred_fallthru
    _

</llo_original>
